<compile_context>
chip_gen: v7x
topology: tpu7x:2x2x1
jax: 0.10.0
libtpu: 0.0.40
codegen_flags: <defaults>
</compile_context>

<pallas_src>
import functools
import numpy as np
import jax
import jax.numpy as jnp
from jax import lax
from jax.experimental import pallas as pl
from jax.experimental.pallas import tpu as pltpu

NDIM = 256       # subnet_fc hidden width (default)
CLAMP = 2.0      # AllInOneBlock affine_clamping (default)
LOW_RANK = 128   # MultivariateNormal low_rank_dims (default)


def _leaky_relu(h, slope=0.2):
    return jnp.where(h > 0, h, slope * h)


def _layernorm_cols(h, gamma, beta, eps=1e-5):
    """LayerNorm over axis 0 (features) of an (NDIM, tb) slab.
    mean and mean-of-squares are independent sublane reductions (breaks the
    reduce->reduce dependency); var = E[h^2] - mu^2.  Cancellation is benign
    for post-Linear activations with near-zero mean."""
    mu = jnp.mean(h, axis=0, keepdims=True)
    ms = jnp.mean(h * h, axis=0, keepdims=True)
    var = ms - mu * mu
    return (h - mu) * lax.rsqrt(var + eps) * gamma + beta


def _layernorm_rows(h, gamma, beta, eps=1e-5):
    """Row-orientation LayerNorm used only by the pure-JAX reference."""
    mu = jnp.mean(h, axis=-1, keepdims=True)
    var = jnp.mean((h - mu) ** 2, axis=-1, keepdims=True)
    return (h - mu) * lax.rsqrt(var + eps) * gamma + beta


def _flow_kernel(d1, d2, nb, ndim, unroll,
                 xT_ref, r1_ref, w2_ref, w3_ref, mkr_ref, aux_ref,
                 prec_ref, c_ref, out_ref):
    d = d1 + d2
    tb = xT_ref.shape[1]
    zT0 = xT_ref[...].astype(jnp.float32)            # (D, tb): features x batch
    ldj0 = jnp.zeros((1, tb), jnp.float32)

    def block(k, carry):
        zT, ldj = carry
        x1T = zT[:d1, :]            # sublane-aligned slices (d1 multiple of 8)
        x2T = zT[d1:, :]
        aux = aux_ref[k]            # (NDIM, 9): packed biases / LN params / offset

        # Fused x1 matmul: [W1 ; MkL] @ x1  (K = d1).  f32: this carries the
        # permutation/data path, so bf16 error would compound across blocks.
        fused = jnp.dot(r1_ref[k], x1T, preferred_element_type=jnp.float32)
        h = fused[:ndim, :] + aux[:, 0:1]            # subnet Linear-1 pre-act
        zc = fused[ndim:, :]                         # x1 contribution to z'

        # subnet_fc: LN -> LReLU -> Linear -> LN -> LReLU -> Linear (bf16 MXU,
        # f32 accumulate; elementwise / LN / tanh / exp stay f32)
        h = _leaky_relu(_layernorm_cols(h, aux[:, 1:2], aux[:, 2:3]))
        h = jnp.dot(w2_ref[k], h.astype(jnp.bfloat16),
                    preferred_element_type=jnp.float32) + aux[:, 3:4]
        h = _leaky_relu(_layernorm_cols(h, aux[:, 4:5], aux[:, 5:6]))
        a = jnp.dot(w3_ref[k], h.astype(jnp.bfloat16),
                    preferred_element_type=jnp.float32)       # 0.1 folded in

        # GLOW-style affine coupling with clamp 2.0
        sT = CLAMP * jnp.tanh(a[:d2, :] + aux[:d2, 6:7])
        tT = a[d2:, :] + aux[:d2, 7:8]
        x2nT = x2T * jnp.exp(sT) + tT
        ldj = ldj + jnp.sum(sT, axis=0, keepdims=True)

        # Permutation with global affine folded in:  z' = MkL@x1 + MkR@x2' + off
        zT = zc + jnp.dot(mkr_ref[k], x2nT,
                          preferred_element_type=jnp.float32) + aux[:d, 8:9]
        return zT, ldj

    zT, ldj = lax.fori_loop(0, nb, block, (zT0, ldj0), unroll=unroll)

    # Base-distribution log-prob via host-precomputed precision matrix.
    u = jnp.dot(prec_ref[...], zT, preferred_element_type=jnp.float32)  # (D, tb)
    maha = jnp.sum(u * zT, axis=0, keepdims=True)                       # (1, tb)
    res = c_ref[0, 0] + ldj - 0.5 * maha                                # (1, tb)
    out_ref[...] = jnp.broadcast_to(res, (8, tb))     # lane-dense, unmasked store


def _fold_params(params, d1, d2):
    """Host-side precompute: transpose weights to the feature-major layout,
    fold the global affine into the permutation, fold the 0.1 subnet scale into
    w3/b3, fold the data-independent log|scale| Jacobian into the log-prob
    constant, fuse [W1 ; MkL], and pack all per-feature vectors into one aux."""
    D = d1 + d2
    bf = jnp.bfloat16
    ndim = params["w1t"].shape[2]
    nb = params["w1t"].shape[0]

    w1 = jnp.swapaxes(params["w1t"], 1, 2)             # (NB, NDIM, d1)
    w2 = jnp.swapaxes(params["w2t"], 1, 2)             # (NB, NDIM, NDIM)
    w3 = jnp.swapaxes(params["w3t"], 1, 2) * 0.1       # (NB, 2*d2, NDIM)

    gs = params["gscale"]                               # (NB, 1, D)
    scale = 0.2 * jax.nn.softplus(0.5 * gs)             # overflow-safe softplus
    A = jnp.swapaxes(scale, 1, 2) * params["wpermT"]    # diag(scale) @ Wp^T
    M = jnp.swapaxes(A, 1, 2)                           # transposed-layout perm
    off_row = jnp.einsum("bij,bjk->bik",
                         params["goffset"], params["wpermT"])   # (NB, 1, D)

    r1 = jnp.concatenate([w1, M[:, :, :d1]], axis=1)    # fused [W1 ; MkL]
    mkr = M[:, :, d1:]                                   # (NB, D, d2)

    def col(v, n):                                       # (NB,1,n) -> (NB,NDIM,1)
        out = jnp.zeros((nb, ndim, 1), jnp.float32)
        return out.at[:, :n, 0].set(v[:, 0, :].astype(jnp.float32))

    aux = jnp.concatenate([
        col(params["b1"], ndim), col(params["g1"], ndim), col(params["be1"], ndim),
        col(params["b2"], ndim), col(params["g2"], ndim), col(params["be2"], ndim),
        col(0.1 * params["b3"][:, :, :d2], d2),
        col(0.1 * params["b3"][:, :, d2:], d2),
        col(off_row, D),
    ], axis=2)                                           # (NB, NDIM, 9)

    perm_lj = jnp.sum(jnp.log(scale))                    # constant over data
    c = (params["lp_const"] + perm_lj).astype(jnp.float32)   # (1, 1)

    return dict(
        r1=r1.astype(jnp.float32), w2=w2.astype(bf), w3=w3.astype(bf),
        mkr=mkr.astype(jnp.float32), aux=aux.astype(jnp.float32),
        prec=params["prec"].astype(jnp.float32), c=c)


def _choose_tiling(B):
    """Batch lives on the lane axis, so multi-tile blocks must be 128-aligned.
    Pick the largest tile up to 512 lanes that still gives >= 2 grid steps
    (v7x shards the 'parallel' axis across its 2 TensorCores) with at most one
    128-row chunk of padding; on 1-TC parts 256-512 already amortizes the
    per-step overhead and MXU weight staging."""
    Bp = ((B + 127) // 128) * 128
    n = Bp // 128
    if n <= 1:
        return Bp, Bp
    cpt = 1
    for cand in (4, 3, 2):
        if cand > n:
            continue
        tiles = -(-n // cand)
        if tiles >= 2 and tiles * cand - n <= 1:
            cpt = cand
            break
    tb = 128 * cpt
    Bp = -(-Bp // tb) * tb
    return tb, Bp


def flow_model_forward(x, params, tb=None):
    B, D = x.shape
    d1 = D - D // 2
    d2 = D // 2
    NB = params["w1t"].shape[0]
    fp = _fold_params(params, d1, d2)
    ndim = fp["w2"].shape[1]

    if tb is None:
        tb, Bp = _choose_tiling(B)
    else:
        tb = max(128, ((tb + 127) // 128) * 128)
        Bp = ((B + tb - 1) // tb) * tb

    xT = jnp.pad(x.astype(jnp.float32), ((0, Bp - B), (0, 0))).T   # (D, Bp)

    def full(shape):
        n = len(shape)
        return pl.BlockSpec(shape, lambda b, n=n: (0,) * n)

    grid_spec = pltpu.PrefetchScalarGridSpec(
        num_scalar_prefetch=0,
        grid=(Bp // tb,),
        in_specs=[
            pl.BlockSpec((D, tb), lambda b: (0, b)),   # activations (transposed)
            full(fp["r1"].shape),    # fused [W1 ; MkL]     (NB, NDIM+D, d1) f32
            full(fp["w2"].shape),    # W2                   (NB, NDIM, NDIM) bf16
            full(fp["w3"].shape),    # 0.1*W3               (NB, 2*d2, NDIM) bf16
            full(fp["mkr"].shape),   # MkR                  (NB, D, d2) f32
            full(fp["aux"].shape),   # biases/LN/offset     (NB, NDIM, 9) f32
            full(fp["prec"].shape),  # precision matrix     (D, D) f32
            pl.BlockSpec(memory_space=pltpu.MemorySpace.SMEM),   # scalar const
        ],
        out_specs=pl.BlockSpec((8, tb), lambda b: (0, b)),
    )

    # VMEM escape hatch: all weights are grid-invariant and VMEM-resident
    # (~NB * 0.4 MiB incl. double buffers).  If NB or NDIM grow enough to
    # approach the scoped VMEM default (16 MiB v5e / 32 MiB v6e,v7x), raise
    # vmem_limit_bytes here, mark weight specs pipeline_mode=pl.Buffered(1),
    # or fall back to a (batch, block) grid with weight streaming.
    unroll = NB if NB <= 8 else 4
    out = pl.pallas_call(
        functools.partial(_flow_kernel, d1, d2, NB, ndim, unroll),
        out_shape=jax.ShapeDtypeStruct((8, Bp), jnp.float32),
        grid_spec=grid_spec,
        compiler_params=pltpu.CompilerParams(
            dimension_semantics=("parallel",)),
    )(xT, fp["r1"], fp["w2"], fp["w3"], fp["mkr"], fp["aux"], fp["prec"], fp["c"])
    return out[0, :B]


def init_flow_params(key, D, num_blocks):
    """Deterministic synthetic init matching FlowModel.__init__ / init_weights."""
    d1 = D - D // 2
    d2 = D // 2
    NB = num_blocks
    keys = jax.random.split(key, NB * 4 + 1)

    def xavier(k, fan_in, fan_out):   # stored transposed: (in, out)
        bound = float(np.sqrt(6.0 / (fan_in + fan_out)))
        return jax.random.uniform(k, (fan_in, fan_out), jnp.float32, -bound, bound)

    w1t, w2t, w3t, wpermT = [], [], [], []
    for b in range(NB):
        k1, k2, k3, kp = keys[4 * b: 4 * b + 4]
        w1t.append(xavier(k1, d1, NDIM))
        w2t.append(xavier(k2, NDIM, NDIM))
        if b == NB - 1:
            # init_weights zeros only the very last Linear of the whole flow
            w3t.append(jnp.zeros((NDIM, 2 * d2), jnp.float32))
        else:
            w3t.append(xavier(k3, NDIM, 2 * d2))
        # permute_soft=True: random orthogonal matrix
        # TODO(synk): scipy.stats.special_ortho_group replaced by QR-based orthogonal init
        g = np.asarray(jax.random.normal(kp, (D, D), jnp.float32), np.float64)
        q, _ = np.linalg.qr(g)
        wpermT.append(jnp.asarray(q.T, jnp.float32))   # F.linear(y, Wp) == y @ Wp^T

    zeros = lambda s: jnp.zeros(s, jnp.float32)
    ones = lambda s: jnp.ones(s, jnp.float32)
    # global_affine_type='SOFTPLUS', global_affine_init=1.0
    g0 = float(2.0 * np.log(np.exp(0.5 * 10.0 * 1.0) - 1.0))

    params = dict(
        w1t=jnp.stack(w1t), w2t=jnp.stack(w2t), w3t=jnp.stack(w3t),
        b1=zeros((NB, 1, NDIM)), g1=ones((NB, 1, NDIM)), be1=zeros((NB, 1, NDIM)),
        b2=zeros((NB, 1, NDIM)), g2=ones((NB, 1, NDIM)), be2=zeros((NB, 1, NDIM)),
        b3=zeros((NB, 1, 2 * d2)),
        gscale=jnp.full((NB, 1, D), g0, jnp.float32),
        goffset=zeros((NB, 1, D)),
        wpermT=jnp.stack(wpermT),
    )

    # base distribution: LowRankMultivariateNormal(0, cov_factor, softplus(1)+1e-5)
    # Precision / log-det precomputed on host in float64 for robustness.
    cov_factor = np.asarray(jax.random.normal(keys[-1], (D, LOW_RANK), jnp.float32),
                            np.float64)
    diag_val = float(np.log1p(np.exp(1.0)) + 1e-5)     # softplus(1) + 1e-5
    sigma = cov_factor @ cov_factor.T + np.diag(np.full(D, diag_val))
    prec = np.linalg.inv(sigma)
    _, logdet = np.linalg.slogdet(sigma)
    lp_const = -0.5 * (D * np.log(2.0 * np.pi) + logdet)
    params["prec"] = jnp.asarray(prec, jnp.float32)
    params["lp_const"] = jnp.full((1, 1), lp_const, jnp.float32)
    return params


def flow_model_forward_ref(x, params):
    """Pure-JAX reference mirroring the PyTorch forward (f32, unfolded)."""
    B, D = x.shape
    d1 = D - D // 2
    d2 = D // 2
    NB = params["w1t"].shape[0]
    hp = lax.Precision.HIGHEST
    z = x.astype(jnp.float32)
    ldj = jnp.zeros((B,), jnp.float32)
    for k in range(NB):
        x1, x2 = z[:, :d1], z[:, d1:]
        h = jnp.dot(x1, params["w1t"][k], precision=hp) + params["b1"][k]
        h = _leaky_relu(_layernorm_rows(h, params["g1"][k], params["be1"][k]))
        h = jnp.dot(h, params["w2t"][k], precision=hp) + params["b2"][k]
        h = _leaky_relu(_layernorm_rows(h, params["g2"][k], params["be2"][k]))
        a = (jnp.dot(h, params["w3t"][k], precision=hp) + params["b3"][k]) * 0.1
        s = CLAMP * jnp.tanh(a[:, :d2])
        x2 = x2 * jnp.exp(s) + a[:, d2:]
        j2 = jnp.sum(s, axis=1)
        y = jnp.concatenate([x1, x2], axis=1)
        scale = 0.2 * jax.nn.softplus(0.5 * params["gscale"][k])
        perm_lj = jnp.sum(jnp.log(scale))
        z = jnp.dot(y * scale + params["goffset"][k], params["wpermT"][k], precision=hp)
        ldj = ldj + j2 + perm_lj
    maha = jnp.sum(jnp.dot(z, params["prec"], precision=hp) * z, axis=1)
    logp = params["lp_const"][0, 0] - 0.5 * maha
    return logp + ldj


if __name__ == "__main__":
    key = jax.random.PRNGKey(0)
    B, D, NUM_BLOCKS = 256, 16, 4        # small: n_timesteps=16, 4 AllInOneBlocks
    kp_, kx = jax.random.split(key)
    params = init_flow_params(kp_, D, NUM_BLOCKS)
    x = jax.random.normal(kx, (B, D), jnp.float32)

    # Default tiling: 2 batch tiles of 128 lanes -> exercises the parallel axis.
    out = jax.block_until_ready(flow_model_forward(x, params))
    ref = jax.block_until_ready(flow_model_forward_ref(x, params))
    assert out.shape == (B,)
    np.testing.assert_allclose(np.asarray(out), np.asarray(ref), rtol=1e-2, atol=1e-2)
    print("KERNEL_OK")
</pallas_src>

<mosaic_0001>
module attributes {stable_mosaic.version = 11 : i64} {
  func.func @_flow_kernel(%arg0: i32, %arg1: memref<16x128xf32, #tpu.memory_space<vmem>>, %arg2: memref<4x272x8xf32, #tpu.memory_space<vmem>>, %arg3: memref<4x256x256xbf16, #tpu.memory_space<vmem>>, %arg4: memref<4x16x256xbf16, #tpu.memory_space<vmem>>, %arg5: memref<4x16x8xf32, #tpu.memory_space<vmem>>, %arg6: memref<4x256x9xf32, #tpu.memory_space<vmem>>, %arg7: memref<16x16xf32, #tpu.memory_space<vmem>>, %arg8: memref<1x1xf32, #tpu.memory_space<smem>>, %arg9: memref<8x128xf32, #tpu.memory_space<vmem>>) attributes {dimension_semantics = [#tpu.dimension_semantics<parallel>], iteration_bounds = array<i64: 2>, scalar_prefetch = 0 : i64, scratch_operands = 0 : i64, tpu.core_type = #tpu.core_type<tc>, window_params = [{transform_indices = @transform_0, window_bounds = array<i64: 16, 128>}, {pipeline_mode = #tpu.pipeline_mode<synchronous>, transform_indices = @transform_1, window_bounds = array<i64: 4, 272, 8>}, {pipeline_mode = #tpu.pipeline_mode<synchronous>, transform_indices = @transform_2, window_bounds = array<i64: 4, 256, 256>}, {pipeline_mode = #tpu.pipeline_mode<synchronous>, transform_indices = @transform_3, window_bounds = array<i64: 4, 16, 256>}, {pipeline_mode = #tpu.pipeline_mode<synchronous>, transform_indices = @transform_4, window_bounds = array<i64: 4, 16, 8>}, {pipeline_mode = #tpu.pipeline_mode<synchronous>, transform_indices = @transform_5, window_bounds = array<i64: 4, 256, 9>}, {pipeline_mode = #tpu.pipeline_mode<synchronous>, transform_indices = @transform_6, window_bounds = array<i64: 16, 16>}, {transform_indices = @transform_7, window_bounds = array<i64: 1, 1>}, {transform_indices = @transform_8, window_bounds = array<i64: 8, 128>}]} {
    %c0 = arith.constant 0 : index
    %c0_0 = arith.constant 0 : index
    %0 = vector.load %arg1[%c0, %c0_0] : memref<16x128xf32, #tpu.memory_space<vmem>>, vector<16x128xf32>
    %cst = arith.constant 0.000000e+00 : f32
    %1 = vector.broadcast %cst : f32 to vector<1x128xf32>
    %c0_i32 = arith.constant 0 : i32
    %2 = vector.extract_strided_slice %0 {offsets = [0, 0], sizes = [8, 128], strides = [1, 1]} : vector<16x128xf32> to vector<8x128xf32>
    %3 = vector.extract_strided_slice %0 {offsets = [8, 0], sizes = [8, 128], strides = [1, 1]} : vector<16x128xf32> to vector<8x128xf32>
    %4 = arith.index_cast %c0_i32 : i32 to index
    %c0_1 = arith.constant 0 : index
    %c0_2 = arith.constant 0 : index
    %5 = vector.load %arg6[%4, %c0_1, %c0_2] : memref<4x256x9xf32, #tpu.memory_space<vmem>>, vector<1x256x9xf32>
    %6 = vector.shape_cast %5 : vector<1x256x9xf32> to vector<256x9xf32>
    %7 = arith.index_cast %c0_i32 : i32 to index
    %c0_3 = arith.constant 0 : index
    %c0_4 = arith.constant 0 : index
    %8 = vector.load %arg2[%7, %c0_3, %c0_4] : memref<4x272x8xf32, #tpu.memory_space<vmem>>, vector<1x272x8xf32>
    %9 = vector.shape_cast %8 : vector<1x272x8xf32> to vector<272x8xf32>
    %cst_5 = arith.constant dense<0.000000e+00> : vector<272x128xf32>
    %10 = tpu.matmul %9, %2, %cst_5 {dimension_numbers = #tpu.dot_dimension_numbers<[1], [0], [0], [1], [0, 0, 1, 1], [], []>} : vector<272x8xf32>, vector<8x128xf32>, vector<272x128xf32> -> vector<272x128xf32>
    %11 = vector.extract_strided_slice %10 {offsets = [0, 0], sizes = [256, 128], strides = [1, 1]} : vector<272x128xf32> to vector<256x128xf32>
    %12 = vector.extract_strided_slice %6 {offsets = [0, 0], sizes = [256, 1], strides = [1, 1]} : vector<256x9xf32> to vector<256x1xf32>
    %13 = vector.broadcast %12 : vector<256x1xf32> to vector<256x128xf32>
    %14 = arith.addf %11, %13 : vector<256x128xf32>
    %15 = vector.extract_strided_slice %10 {offsets = [256, 0], sizes = [16, 128], strides = [1, 1]} : vector<272x128xf32> to vector<16x128xf32>
    %16 = vector.extract_strided_slice %6 {offsets = [0, 1], sizes = [256, 1], strides = [1, 1]} : vector<256x9xf32> to vector<256x1xf32>
    %17 = vector.extract_strided_slice %6 {offsets = [0, 2], sizes = [256, 1], strides = [1, 1]} : vector<256x9xf32> to vector<256x1xf32>
    %cst_6 = arith.constant dense<0.000000e+00> : vector<128xf32>
    %18 = vector.multi_reduction <add>, %14, %cst_6 [0] : vector<256x128xf32> to vector<128xf32>
    %19 = vector.shape_cast %18 : vector<128xf32> to vector<1x128xf32>
    %cst_7 = arith.constant 2.560000e+02 : f32
    %20 = vector.broadcast %cst_7 : f32 to vector<1x128xf32>
    %21 = arith.divf %19, %20 : vector<1x128xf32>
    %22 = arith.mulf %14, %14 : vector<256x128xf32>
    %cst_8 = arith.constant dense<0.000000e+00> : vector<128xf32>
    %23 = vector.multi_reduction <add>, %22, %cst_8 [0] : vector<256x128xf32> to vector<128xf32>
    %24 = vector.shape_cast %23 : vector<128xf32> to vector<1x128xf32>
    %cst_9 = arith.constant 2.560000e+02 : f32
    %25 = vector.broadcast %cst_9 : f32 to vector<1x128xf32>
    %26 = arith.divf %24, %25 : vector<1x128xf32>
    %27 = arith.mulf %21, %21 : vector<1x128xf32>
    %28 = arith.subf %26, %27 : vector<1x128xf32>
    %29 = vector.broadcast %21 : vector<1x128xf32> to vector<256x128xf32>
    %30 = arith.subf %14, %29 : vector<256x128xf32>
    %cst_10 = arith.constant 9.99999974E-6 : f32
    %31 = vector.broadcast %cst_10 : f32 to vector<1x128xf32>
    %32 = arith.addf %28, %31 : vector<1x128xf32>
    %33 = math.rsqrt %32 : vector<1x128xf32>
    %34 = vector.broadcast %33 : vector<1x128xf32> to vector<256x128xf32>
    %35 = arith.mulf %30, %34 : vector<256x128xf32>
    %36 = vector.broadcast %16 : vector<256x1xf32> to vector<256x128xf32>
    %37 = arith.mulf %35, %36 : vector<256x128xf32>
    %38 = vector.broadcast %17 : vector<256x1xf32> to vector<256x128xf32>
    %39 = arith.addf %37, %38 : vector<256x128xf32>
    %cst_11 = arith.constant 0.000000e+00 : f32
    %40 = vector.broadcast %cst_11 : f32 to vector<256x128xf32>
    %41 = arith.cmpf ogt, %39, %40 : vector<256x128xf32>
    %cst_12 = arith.constant 2.000000e-01 : f32
    %42 = vector.broadcast %cst_12 : f32 to vector<256x128xf32>
    %43 = arith.mulf %42, %39 : vector<256x128xf32>
    %44 = arith.select %41, %39, %43 : vector<256x128xi1>, vector<256x128xf32>
    %45 = arith.index_cast %c0_i32 : i32 to index
    %c0_13 = arith.constant 0 : index
    %c0_14 = arith.constant 0 : index
    %46 = vector.load %arg3[%45, %c0_13, %c0_14] : memref<4x256x256xbf16, #tpu.memory_space<vmem>>, vector<1x256x256xbf16>
    %47 = vector.shape_cast %46 : vector<1x256x256xbf16> to vector<256x256xbf16>
    %48 = arith.truncf %44 : vector<256x128xf32> to vector<256x128xbf16>
    %cst_15 = arith.constant dense<0.000000e+00> : vector<256x128xf32>
    %49 = tpu.matmul %47, %48, %cst_15 {dimension_numbers = #tpu.dot_dimension_numbers<[1], [0], [0], [1], [0, 0, 1, 1], [], []>} : vector<256x256xbf16>, vector<256x128xbf16>, vector<256x128xf32> -> vector<256x128xf32>
    %50 = vector.extract_strided_slice %6 {offsets = [0, 3], sizes = [256, 1], strides = [1, 1]} : vector<256x9xf32> to vector<256x1xf32>
    %51 = vector.broadcast %50 : vector<256x1xf32> to vector<256x128xf32>
    %52 = arith.addf %49, %51 : vector<256x128xf32>
    %53 = vector.extract_strided_slice %6 {offsets = [0, 4], sizes = [256, 1], strides = [1, 1]} : vector<256x9xf32> to vector<256x1xf32>
    %54 = vector.extract_strided_slice %6 {offsets = [0, 5], sizes = [256, 1], strides = [1, 1]} : vector<256x9xf32> to vector<256x1xf32>
    %cst_16 = arith.constant dense<0.000000e+00> : vector<128xf32>
    %55 = vector.multi_reduction <add>, %52, %cst_16 [0] : vector<256x128xf32> to vector<128xf32>
    %56 = vector.shape_cast %55 : vector<128xf32> to vector<1x128xf32>
    %cst_17 = arith.constant 2.560000e+02 : f32
    %57 = vector.broadcast %cst_17 : f32 to vector<1x128xf32>
    %58 = arith.divf %56, %57 : vector<1x128xf32>
    %59 = arith.mulf %52, %52 : vector<256x128xf32>
    %cst_18 = arith.constant dense<0.000000e+00> : vector<128xf32>
    %60 = vector.multi_reduction <add>, %59, %cst_18 [0] : vector<256x128xf32> to vector<128xf32>
    %61 = vector.shape_cast %60 : vector<128xf32> to vector<1x128xf32>
    %cst_19 = arith.constant 2.560000e+02 : f32
    %62 = vector.broadcast %cst_19 : f32 to vector<1x128xf32>
    %63 = arith.divf %61, %62 : vector<1x128xf32>
    %64 = arith.mulf %58, %58 : vector<1x128xf32>
    %65 = arith.subf %63, %64 : vector<1x128xf32>
    %66 = vector.broadcast %58 : vector<1x128xf32> to vector<256x128xf32>
    %67 = arith.subf %52, %66 : vector<256x128xf32>
    %cst_20 = arith.constant 9.99999974E-6 : f32
    %68 = vector.broadcast %cst_20 : f32 to vector<1x128xf32>
    %69 = arith.addf %65, %68 : vector<1x128xf32>
    %70 = math.rsqrt %69 : vector<1x128xf32>
    %71 = vector.broadcast %70 : vector<1x128xf32> to vector<256x128xf32>
    %72 = arith.mulf %67, %71 : vector<256x128xf32>
    %73 = vector.broadcast %53 : vector<256x1xf32> to vector<256x128xf32>
    %74 = arith.mulf %72, %73 : vector<256x128xf32>
    %75 = vector.broadcast %54 : vector<256x1xf32> to vector<256x128xf32>
    %76 = arith.addf %74, %75 : vector<256x128xf32>
    %cst_21 = arith.constant 0.000000e+00 : f32
    %77 = vector.broadcast %cst_21 : f32 to vector<256x128xf32>
    %78 = arith.cmpf ogt, %76, %77 : vector<256x128xf32>
    %cst_22 = arith.constant 2.000000e-01 : f32
    %79 = vector.broadcast %cst_22 : f32 to vector<256x128xf32>
    %80 = arith.mulf %79, %76 : vector<256x128xf32>
    %81 = arith.select %78, %76, %80 : vector<256x128xi1>, vector<256x128xf32>
    %82 = arith.index_cast %c0_i32 : i32 to index
    %c0_23 = arith.constant 0 : index
    %c0_24 = arith.constant 0 : index
    %83 = vector.load %arg4[%82, %c0_23, %c0_24] : memref<4x16x256xbf16, #tpu.memory_space<vmem>>, vector<1x16x256xbf16>
    %84 = vector.shape_cast %83 : vector<1x16x256xbf16> to vector<16x256xbf16>
    %85 = arith.truncf %81 : vector<256x128xf32> to vector<256x128xbf16>
    %cst_25 = arith.constant dense<0.000000e+00> : vector<16x128xf32>
    %86 = tpu.matmul %84, %85, %cst_25 {dimension_numbers = #tpu.dot_dimension_numbers<[1], [0], [0], [1], [0, 0, 1, 1], [], []>} : vector<16x256xbf16>, vector<256x128xbf16>, vector<16x128xf32> -> vector<16x128xf32>
    %87 = vector.extract_strided_slice %86 {offsets = [0, 0], sizes = [8, 128], strides = [1, 1]} : vector<16x128xf32> to vector<8x128xf32>
    %88 = vector.extract_strided_slice %6 {offsets = [0, 6], sizes = [8, 1], strides = [1, 1]} : vector<256x9xf32> to vector<8x1xf32>
    %89 = vector.broadcast %88 : vector<8x1xf32> to vector<8x128xf32>
    %90 = arith.addf %87, %89 : vector<8x128xf32>
    %91 = math.tanh %90 : vector<8x128xf32>
    %cst_26 = arith.constant 2.000000e+00 : f32
    %92 = vector.broadcast %cst_26 : f32 to vector<8x128xf32>
    %93 = arith.mulf %92, %91 : vector<8x128xf32>
    %94 = vector.extract_strided_slice %86 {offsets = [8, 0], sizes = [8, 128], strides = [1, 1]} : vector<16x128xf32> to vector<8x128xf32>
    %95 = vector.extract_strided_slice %6 {offsets = [0, 7], sizes = [8, 1], strides = [1, 1]} : vector<256x9xf32> to vector<8x1xf32>
    %96 = vector.broadcast %95 : vector<8x1xf32> to vector<8x128xf32>
    %97 = arith.addf %94, %96 : vector<8x128xf32>
    %98 = math.exp %93 : vector<8x128xf32>
    %99 = arith.mulf %3, %98 : vector<8x128xf32>
    %100 = arith.addf %99, %97 : vector<8x128xf32>
    %cst_27 = arith.constant dense<0.000000e+00> : vector<128xf32>
    %101 = vector.multi_reduction <add>, %93, %cst_27 [0] : vector<8x128xf32> to vector<128xf32>
    %102 = vector.shape_cast %101 : vector<128xf32> to vector<1x128xf32>
    %103 = arith.addf %1, %102 : vector<1x128xf32>
    %104 = arith.index_cast %c0_i32 : i32 to index
    %c0_28 = arith.constant 0 : index
    %c0_29 = arith.constant 0 : index
    %105 = vector.load %arg5[%104, %c0_28, %c0_29] : memref<4x16x8xf32, #tpu.memory_space<vmem>>, vector<1x16x8xf32>
    %106 = vector.shape_cast %105 : vector<1x16x8xf32> to vector<16x8xf32>
    %cst_30 = arith.constant dense<0.000000e+00> : vector<16x128xf32>
    %107 = tpu.matmul %106, %100, %cst_30 {dimension_numbers = #tpu.dot_dimension_numbers<[1], [0], [0], [1], [0, 0, 1, 1], [], []>} : vector<16x8xf32>, vector<8x128xf32>, vector<16x128xf32> -> vector<16x128xf32>
    %108 = arith.addf %15, %107 : vector<16x128xf32>
    %109 = vector.extract_strided_slice %6 {offsets = [0, 8], sizes = [16, 1], strides = [1, 1]} : vector<256x9xf32> to vector<16x1xf32>
    %110 = vector.broadcast %109 : vector<16x1xf32> to vector<16x128xf32>
    %111 = arith.addf %108, %110 : vector<16x128xf32>
    %c1_i32 = arith.constant 1 : i32
    %112 = vector.extract_strided_slice %111 {offsets = [0, 0], sizes = [8, 128], strides = [1, 1]} : vector<16x128xf32> to vector<8x128xf32>
    %113 = vector.extract_strided_slice %111 {offsets = [8, 0], sizes = [8, 128], strides = [1, 1]} : vector<16x128xf32> to vector<8x128xf32>
    %114 = arith.index_cast %c1_i32 : i32 to index
    %c0_31 = arith.constant 0 : index
    %c0_32 = arith.constant 0 : index
    %115 = vector.load %arg6[%114, %c0_31, %c0_32] : memref<4x256x9xf32, #tpu.memory_space<vmem>>, vector<1x256x9xf32>
    %116 = vector.shape_cast %115 : vector<1x256x9xf32> to vector<256x9xf32>
    %117 = arith.index_cast %c1_i32 : i32 to index
    %c0_33 = arith.constant 0 : index
    %c0_34 = arith.constant 0 : index
    %118 = vector.load %arg2[%117, %c0_33, %c0_34] : memref<4x272x8xf32, #tpu.memory_space<vmem>>, vector<1x272x8xf32>
    %119 = vector.shape_cast %118 : vector<1x272x8xf32> to vector<272x8xf32>
    %cst_35 = arith.constant dense<0.000000e+00> : vector<272x128xf32>
    %120 = tpu.matmul %119, %112, %cst_35 {dimension_numbers = #tpu.dot_dimension_numbers<[1], [0], [0], [1], [0, 0, 1, 1], [], []>} : vector<272x8xf32>, vector<8x128xf32>, vector<272x128xf32> -> vector<272x128xf32>
    %121 = vector.extract_strided_slice %120 {offsets = [0, 0], sizes = [256, 128], strides = [1, 1]} : vector<272x128xf32> to vector<256x128xf32>
    %122 = vector.extract_strided_slice %116 {offsets = [0, 0], sizes = [256, 1], strides = [1, 1]} : vector<256x9xf32> to vector<256x1xf32>
    %123 = vector.broadcast %122 : vector<256x1xf32> to vector<256x128xf32>
    %124 = arith.addf %121, %123 : vector<256x128xf32>
    %125 = vector.extract_strided_slice %120 {offsets = [256, 0], sizes = [16, 128], strides = [1, 1]} : vector<272x128xf32> to vector<16x128xf32>
    %126 = vector.extract_strided_slice %116 {offsets = [0, 1], sizes = [256, 1], strides = [1, 1]} : vector<256x9xf32> to vector<256x1xf32>
    %127 = vector.extract_strided_slice %116 {offsets = [0, 2], sizes = [256, 1], strides = [1, 1]} : vector<256x9xf32> to vector<256x1xf32>
    %cst_36 = arith.constant dense<0.000000e+00> : vector<128xf32>
    %128 = vector.multi_reduction <add>, %124, %cst_36 [0] : vector<256x128xf32> to vector<128xf32>
    %129 = vector.shape_cast %128 : vector<128xf32> to vector<1x128xf32>
    %cst_37 = arith.constant 2.560000e+02 : f32
    %130 = vector.broadcast %cst_37 : f32 to vector<1x128xf32>
    %131 = arith.divf %129, %130 : vector<1x128xf32>
    %132 = arith.mulf %124, %124 : vector<256x128xf32>
    %cst_38 = arith.constant dense<0.000000e+00> : vector<128xf32>
    %133 = vector.multi_reduction <add>, %132, %cst_38 [0] : vector<256x128xf32> to vector<128xf32>
    %134 = vector.shape_cast %133 : vector<128xf32> to vector<1x128xf32>
    %cst_39 = arith.constant 2.560000e+02 : f32
    %135 = vector.broadcast %cst_39 : f32 to vector<1x128xf32>
    %136 = arith.divf %134, %135 : vector<1x128xf32>
    %137 = arith.mulf %131, %131 : vector<1x128xf32>
    %138 = arith.subf %136, %137 : vector<1x128xf32>
    %139 = vector.broadcast %131 : vector<1x128xf32> to vector<256x128xf32>
    %140 = arith.subf %124, %139 : vector<256x128xf32>
    %cst_40 = arith.constant 9.99999974E-6 : f32
    %141 = vector.broadcast %cst_40 : f32 to vector<1x128xf32>
    %142 = arith.addf %138, %141 : vector<1x128xf32>
    %143 = math.rsqrt %142 : vector<1x128xf32>
    %144 = vector.broadcast %143 : vector<1x128xf32> to vector<256x128xf32>
    %145 = arith.mulf %140, %144 : vector<256x128xf32>
    %146 = vector.broadcast %126 : vector<256x1xf32> to vector<256x128xf32>
    %147 = arith.mulf %145, %146 : vector<256x128xf32>
    %148 = vector.broadcast %127 : vector<256x1xf32> to vector<256x128xf32>
    %149 = arith.addf %147, %148 : vector<256x128xf32>
    %cst_41 = arith.constant 0.000000e+00 : f32
    %150 = vector.broadcast %cst_41 : f32 to vector<256x128xf32>
    %151 = arith.cmpf ogt, %149, %150 : vector<256x128xf32>
    %cst_42 = arith.constant 2.000000e-01 : f32
    %152 = vector.broadcast %cst_42 : f32 to vector<256x128xf32>
    %153 = arith.mulf %152, %149 : vector<256x128xf32>
    %154 = arith.select %151, %149, %153 : vector<256x128xi1>, vector<256x128xf32>
    %155 = arith.index_cast %c1_i32 : i32 to index
    %c0_43 = arith.constant 0 : index
    %c0_44 = arith.constant 0 : index
    %156 = vector.load %arg3[%155, %c0_43, %c0_44] : memref<4x256x256xbf16, #tpu.memory_space<vmem>>, vector<1x256x256xbf16>
    %157 = vector.shape_cast %156 : vector<1x256x256xbf16> to vector<256x256xbf16>
    %158 = arith.truncf %154 : vector<256x128xf32> to vector<256x128xbf16>
    %cst_45 = arith.constant dense<0.000000e+00> : vector<256x128xf32>
    %159 = tpu.matmul %157, %158, %cst_45 {dimension_numbers = #tpu.dot_dimension_numbers<[1], [0], [0], [1], [0, 0, 1, 1], [], []>} : vector<256x256xbf16>, vector<256x128xbf16>, vector<256x128xf32> -> vector<256x128xf32>
    %160 = vector.extract_strided_slice %116 {offsets = [0, 3], sizes = [256, 1], strides = [1, 1]} : vector<256x9xf32> to vector<256x1xf32>
    %161 = vector.broadcast %160 : vector<256x1xf32> to vector<256x128xf32>
    %162 = arith.addf %159, %161 : vector<256x128xf32>
    %163 = vector.extract_strided_slice %116 {offsets = [0, 4], sizes = [256, 1], strides = [1, 1]} : vector<256x9xf32> to vector<256x1xf32>
    %164 = vector.extract_strided_slice %116 {offsets = [0, 5], sizes = [256, 1], strides = [1, 1]} : vector<256x9xf32> to vector<256x1xf32>
    %cst_46 = arith.constant dense<0.000000e+00> : vector<128xf32>
    %165 = vector.multi_reduction <add>, %162, %cst_46 [0] : vector<256x128xf32> to vector<128xf32>
    %166 = vector.shape_cast %165 : vector<128xf32> to vector<1x128xf32>
    %cst_47 = arith.constant 2.560000e+02 : f32
    %167 = vector.broadcast %cst_47 : f32 to vector<1x128xf32>
    %168 = arith.divf %166, %167 : vector<1x128xf32>
    %169 = arith.mulf %162, %162 : vector<256x128xf32>
    %cst_48 = arith.constant dense<0.000000e+00> : vector<128xf32>
    %170 = vector.multi_reduction <add>, %169, %cst_48 [0] : vector<256x128xf32> to vector<128xf32>
    %171 = vector.shape_cast %170 : vector<128xf32> to vector<1x128xf32>
    %cst_49 = arith.constant 2.560000e+02 : f32
    %172 = vector.broadcast %cst_49 : f32 to vector<1x128xf32>
    %173 = arith.divf %171, %172 : vector<1x128xf32>
    %174 = arith.mulf %168, %168 : vector<1x128xf32>
    %175 = arith.subf %173, %174 : vector<1x128xf32>
    %176 = vector.broadcast %168 : vector<1x128xf32> to vector<256x128xf32>
    %177 = arith.subf %162, %176 : vector<256x128xf32>
    %cst_50 = arith.constant 9.99999974E-6 : f32
    %178 = vector.broadcast %cst_50 : f32 to vector<1x128xf32>
    %179 = arith.addf %175, %178 : vector<1x128xf32>
    %180 = math.rsqrt %179 : vector<1x128xf32>
    %181 = vector.broadcast %180 : vector<1x128xf32> to vector<256x128xf32>
    %182 = arith.mulf %177, %181 : vector<256x128xf32>
    %183 = vector.broadcast %163 : vector<256x1xf32> to vector<256x128xf32>
    %184 = arith.mulf %182, %183 : vector<256x128xf32>
    %185 = vector.broadcast %164 : vector<256x1xf32> to vector<256x128xf32>
    %186 = arith.addf %184, %185 : vector<256x128xf32>
    %cst_51 = arith.constant 0.000000e+00 : f32
    %187 = vector.broadcast %cst_51 : f32 to vector<256x128xf32>
    %188 = arith.cmpf ogt, %186, %187 : vector<256x128xf32>
    %cst_52 = arith.constant 2.000000e-01 : f32
    %189 = vector.broadcast %cst_52 : f32 to vector<256x128xf32>
    %190 = arith.mulf %189, %186 : vector<256x128xf32>
    %191 = arith.select %188, %186, %190 : vector<256x128xi1>, vector<256x128xf32>
    %192 = arith.index_cast %c1_i32 : i32 to index
    %c0_53 = arith.constant 0 : index
    %c0_54 = arith.constant 0 : index
    %193 = vector.load %arg4[%192, %c0_53, %c0_54] : memref<4x16x256xbf16, #tpu.memory_space<vmem>>, vector<1x16x256xbf16>
    %194 = vector.shape_cast %193 : vector<1x16x256xbf16> to vector<16x256xbf16>
    %195 = arith.truncf %191 : vector<256x128xf32> to vector<256x128xbf16>
    %cst_55 = arith.constant dense<0.000000e+00> : vector<16x128xf32>
    %196 = tpu.matmul %194, %195, %cst_55 {dimension_numbers = #tpu.dot_dimension_numbers<[1], [0], [0], [1], [0, 0, 1, 1], [], []>} : vector<16x256xbf16>, vector<256x128xbf16>, vector<16x128xf32> -> vector<16x128xf32>
    %197 = vector.extract_strided_slice %196 {offsets = [0, 0], sizes = [8, 128], strides = [1, 1]} : vector<16x128xf32> to vector<8x128xf32>
    %198 = vector.extract_strided_slice %116 {offsets = [0, 6], sizes = [8, 1], strides = [1, 1]} : vector<256x9xf32> to vector<8x1xf32>
    %199 = vector.broadcast %198 : vector<8x1xf32> to vector<8x128xf32>
    %200 = arith.addf %197, %199 : vector<8x128xf32>
    %201 = math.tanh %200 : vector<8x128xf32>
    %cst_56 = arith.constant 2.000000e+00 : f32
    %202 = vector.broadcast %cst_56 : f32 to vector<8x128xf32>
    %203 = arith.mulf %202, %201 : vector<8x128xf32>
    %204 = vector.extract_strided_slice %196 {offsets = [8, 0], sizes = [8, 128], strides = [1, 1]} : vector<16x128xf32> to vector<8x128xf32>
    %205 = vector.extract_strided_slice %116 {offsets = [0, 7], sizes = [8, 1], strides = [1, 1]} : vector<256x9xf32> to vector<8x1xf32>
    %206 = vector.broadcast %205 : vector<8x1xf32> to vector<8x128xf32>
    %207 = arith.addf %204, %206 : vector<8x128xf32>
    %208 = math.exp %203 : vector<8x128xf32>
    %209 = arith.mulf %113, %208 : vector<8x128xf32>
    %210 = arith.addf %209, %207 : vector<8x128xf32>
    %cst_57 = arith.constant dense<0.000000e+00> : vector<128xf32>
    %211 = vector.multi_reduction <add>, %203, %cst_57 [0] : vector<8x128xf32> to vector<128xf32>
    %212 = vector.shape_cast %211 : vector<128xf32> to vector<1x128xf32>
    %213 = arith.addf %103, %212 : vector<1x128xf32>
    %214 = arith.index_cast %c1_i32 : i32 to index
    %c0_58 = arith.constant 0 : index
    %c0_59 = arith.constant 0 : index
    %215 = vector.load %arg5[%214, %c0_58, %c0_59] : memref<4x16x8xf32, #tpu.memory_space<vmem>>, vector<1x16x8xf32>
    %216 = vector.shape_cast %215 : vector<1x16x8xf32> to vector<16x8xf32>
    %cst_60 = arith.constant dense<0.000000e+00> : vector<16x128xf32>
    %217 = tpu.matmul %216, %210, %cst_60 {dimension_numbers = #tpu.dot_dimension_numbers<[1], [0], [0], [1], [0, 0, 1, 1], [], []>} : vector<16x8xf32>, vector<8x128xf32>, vector<16x128xf32> -> vector<16x128xf32>
    %218 = arith.addf %125, %217 : vector<16x128xf32>
    %219 = vector.extract_strided_slice %116 {offsets = [0, 8], sizes = [16, 1], strides = [1, 1]} : vector<256x9xf32> to vector<16x1xf32>
    %220 = vector.broadcast %219 : vector<16x1xf32> to vector<16x128xf32>
    %221 = arith.addf %218, %220 : vector<16x128xf32>
    %c2_i32 = arith.constant 2 : i32
    %222 = vector.extract_strided_slice %221 {offsets = [0, 0], sizes = [8, 128], strides = [1, 1]} : vector<16x128xf32> to vector<8x128xf32>
    %223 = vector.extract_strided_slice %221 {offsets = [8, 0], sizes = [8, 128], strides = [1, 1]} : vector<16x128xf32> to vector<8x128xf32>
    %224 = arith.index_cast %c2_i32 : i32 to index
    %c0_61 = arith.constant 0 : index
    %c0_62 = arith.constant 0 : index
    %225 = vector.load %arg6[%224, %c0_61, %c0_62] : memref<4x256x9xf32, #tpu.memory_space<vmem>>, vector<1x256x9xf32>
    %226 = vector.shape_cast %225 : vector<1x256x9xf32> to vector<256x9xf32>
    %227 = arith.index_cast %c2_i32 : i32 to index
    %c0_63 = arith.constant 0 : index
    %c0_64 = arith.constant 0 : index
    %228 = vector.load %arg2[%227, %c0_63, %c0_64] : memref<4x272x8xf32, #tpu.memory_space<vmem>>, vector<1x272x8xf32>
    %229 = vector.shape_cast %228 : vector<1x272x8xf32> to vector<272x8xf32>
    %cst_65 = arith.constant dense<0.000000e+00> : vector<272x128xf32>
    %230 = tpu.matmul %229, %222, %cst_65 {dimension_numbers = #tpu.dot_dimension_numbers<[1], [0], [0], [1], [0, 0, 1, 1], [], []>} : vector<272x8xf32>, vector<8x128xf32>, vector<272x128xf32> -> vector<272x128xf32>
    %231 = vector.extract_strided_slice %230 {offsets = [0, 0], sizes = [256, 128], strides = [1, 1]} : vector<272x128xf32> to vector<256x128xf32>
    %232 = vector.extract_strided_slice %226 {offsets = [0, 0], sizes = [256, 1], strides = [1, 1]} : vector<256x9xf32> to vector<256x1xf32>
    %233 = vector.broadcast %232 : vector<256x1xf32> to vector<256x128xf32>
    %234 = arith.addf %231, %233 : vector<256x128xf32>
    %235 = vector.extract_strided_slice %230 {offsets = [256, 0], sizes = [16, 128], strides = [1, 1]} : vector<272x128xf32> to vector<16x128xf32>
    %236 = vector.extract_strided_slice %226 {offsets = [0, 1], sizes = [256, 1], strides = [1, 1]} : vector<256x9xf32> to vector<256x1xf32>
    %237 = vector.extract_strided_slice %226 {offsets = [0, 2], sizes = [256, 1], strides = [1, 1]} : vector<256x9xf32> to vector<256x1xf32>
    %cst_66 = arith.constant dense<0.000000e+00> : vector<128xf32>
    %238 = vector.multi_reduction <add>, %234, %cst_66 [0] : vector<256x128xf32> to vector<128xf32>
    %239 = vector.shape_cast %238 : vector<128xf32> to vector<1x128xf32>
    %cst_67 = arith.constant 2.560000e+02 : f32
    %240 = vector.broadcast %cst_67 : f32 to vector<1x128xf32>
    %241 = arith.divf %239, %240 : vector<1x128xf32>
    %242 = arith.mulf %234, %234 : vector<256x128xf32>
    %cst_68 = arith.constant dense<0.000000e+00> : vector<128xf32>
    %243 = vector.multi_reduction <add>, %242, %cst_68 [0] : vector<256x128xf32> to vector<128xf32>
    %244 = vector.shape_cast %243 : vector<128xf32> to vector<1x128xf32>
    %cst_69 = arith.constant 2.560000e+02 : f32
    %245 = vector.broadcast %cst_69 : f32 to vector<1x128xf32>
    %246 = arith.divf %244, %245 : vector<1x128xf32>
    %247 = arith.mulf %241, %241 : vector<1x128xf32>
    %248 = arith.subf %246, %247 : vector<1x128xf32>
    %249 = vector.broadcast %241 : vector<1x128xf32> to vector<256x128xf32>
    %250 = arith.subf %234, %249 : vector<256x128xf32>
    %cst_70 = arith.constant 9.99999974E-6 : f32
    %251 = vector.broadcast %cst_70 : f32 to vector<1x128xf32>
    %252 = arith.addf %248, %251 : vector<1x128xf32>
    %253 = math.rsqrt %252 : vector<1x128xf32>
    %254 = vector.broadcast %253 : vector<1x128xf32> to vector<256x128xf32>
    %255 = arith.mulf %250, %254 : vector<256x128xf32>
    %256 = vector.broadcast %236 : vector<256x1xf32> to vector<256x128xf32>
    %257 = arith.mulf %255, %256 : vector<256x128xf32>
    %258 = vector.broadcast %237 : vector<256x1xf32> to vector<256x128xf32>
    %259 = arith.addf %257, %258 : vector<256x128xf32>
    %cst_71 = arith.constant 0.000000e+00 : f32
    %260 = vector.broadcast %cst_71 : f32 to vector<256x128xf32>
    %261 = arith.cmpf ogt, %259, %260 : vector<256x128xf32>
    %cst_72 = arith.constant 2.000000e-01 : f32
    %262 = vector.broadcast %cst_72 : f32 to vector<256x128xf32>
    %263 = arith.mulf %262, %259 : vector<256x128xf32>
    %264 = arith.select %261, %259, %263 : vector<256x128xi1>, vector<256x128xf32>
    %265 = arith.index_cast %c2_i32 : i32 to index
    %c0_73 = arith.constant 0 : index
    %c0_74 = arith.constant 0 : index
    %266 = vector.load %arg3[%265, %c0_73, %c0_74] : memref<4x256x256xbf16, #tpu.memory_space<vmem>>, vector<1x256x256xbf16>
    %267 = vector.shape_cast %266 : vector<1x256x256xbf16> to vector<256x256xbf16>
    %268 = arith.truncf %264 : vector<256x128xf32> to vector<256x128xbf16>
    %cst_75 = arith.constant dense<0.000000e+00> : vector<256x128xf32>
    %269 = tpu.matmul %267, %268, %cst_75 {dimension_numbers = #tpu.dot_dimension_numbers<[1], [0], [0], [1], [0, 0, 1, 1], [], []>} : vector<256x256xbf16>, vector<256x128xbf16>, vector<256x128xf32> -> vector<256x128xf32>
    %270 = vector.extract_strided_slice %226 {offsets = [0, 3], sizes = [256, 1], strides = [1, 1]} : vector<256x9xf32> to vector<256x1xf32>
    %271 = vector.broadcast %270 : vector<256x1xf32> to vector<256x128xf32>
    %272 = arith.addf %269, %271 : vector<256x128xf32>
    %273 = vector.extract_strided_slice %226 {offsets = [0, 4], sizes = [256, 1], strides = [1, 1]} : vector<256x9xf32> to vector<256x1xf32>
    %274 = vector.extract_strided_slice %226 {offsets = [0, 5], sizes = [256, 1], strides = [1, 1]} : vector<256x9xf32> to vector<256x1xf32>
    %cst_76 = arith.constant dense<0.000000e+00> : vector<128xf32>
    %275 = vector.multi_reduction <add>, %272, %cst_76 [0] : vector<256x128xf32> to vector<128xf32>
    %276 = vector.shape_cast %275 : vector<128xf32> to vector<1x128xf32>
    %cst_77 = arith.constant 2.560000e+02 : f32
    %277 = vector.broadcast %cst_77 : f32 to vector<1x128xf32>
    %278 = arith.divf %276, %277 : vector<1x128xf32>
    %279 = arith.mulf %272, %272 : vector<256x128xf32>
    %cst_78 = arith.constant dense<0.000000e+00> : vector<128xf32>
    %280 = vector.multi_reduction <add>, %279, %cst_78 [0] : vector<256x128xf32> to vector<128xf32>
    %281 = vector.shape_cast %280 : vector<128xf32> to vector<1x128xf32>
    %cst_79 = arith.constant 2.560000e+02 : f32
    %282 = vector.broadcast %cst_79 : f32 to vector<1x128xf32>
    %283 = arith.divf %281, %282 : vector<1x128xf32>
    %284 = arith.mulf %278, %278 : vector<1x128xf32>
    %285 = arith.subf %283, %284 : vector<1x128xf32>
    %286 = vector.broadcast %278 : vector<1x128xf32> to vector<256x128xf32>
    %287 = arith.subf %272, %286 : vector<256x128xf32>
    %cst_80 = arith.constant 9.99999974E-6 : f32
    %288 = vector.broadcast %cst_80 : f32 to vector<1x128xf32>
    %289 = arith.addf %285, %288 : vector<1x128xf32>
    %290 = math.rsqrt %289 : vector<1x128xf32>
    %291 = vector.broadcast %290 : vector<1x128xf32> to vector<256x128xf32>
    %292 = arith.mulf %287, %291 : vector<256x128xf32>
    %293 = vector.broadcast %273 : vector<256x1xf32> to vector<256x128xf32>
    %294 = arith.mulf %292, %293 : vector<256x128xf32>
    %295 = vector.broadcast %274 : vector<256x1xf32> to vector<256x128xf32>
    %296 = arith.addf %294, %295 : vector<256x128xf32>
    %cst_81 = arith.constant 0.000000e+00 : f32
    %297 = vector.broadcast %cst_81 : f32 to vector<256x128xf32>
    %298 = arith.cmpf ogt, %296, %297 : vector<256x128xf32>
    %cst_82 = arith.constant 2.000000e-01 : f32
    %299 = vector.broadcast %cst_82 : f32 to vector<256x128xf32>
    %300 = arith.mulf %299, %296 : vector<256x128xf32>
    %301 = arith.select %298, %296, %300 : vector<256x128xi1>, vector<256x128xf32>
    %302 = arith.index_cast %c2_i32 : i32 to index
    %c0_83 = arith.constant 0 : index
    %c0_84 = arith.constant 0 : index
    %303 = vector.load %arg4[%302, %c0_83, %c0_84] : memref<4x16x256xbf16, #tpu.memory_space<vmem>>, vector<1x16x256xbf16>
    %304 = vector.shape_cast %303 : vector<1x16x256xbf16> to vector<16x256xbf16>
    %305 = arith.truncf %301 : vector<256x128xf32> to vector<256x128xbf16>
    %cst_85 = arith.constant dense<0.000000e+00> : vector<16x128xf32>
    %306 = tpu.matmul %304, %305, %cst_85 {dimension_numbers = #tpu.dot_dimension_numbers<[1], [0], [0], [1], [0, 0, 1, 1], [], []>} : vector<16x256xbf16>, vector<256x128xbf16>, vector<16x128xf32> -> vector<16x128xf32>
    %307 = vector.extract_strided_slice %306 {offsets = [0, 0], sizes = [8, 128], strides = [1, 1]} : vector<16x128xf32> to vector<8x128xf32>
    %308 = vector.extract_strided_slice %226 {offsets = [0, 6], sizes = [8, 1], strides = [1, 1]} : vector<256x9xf32> to vector<8x1xf32>
    %309 = vector.broadcast %308 : vector<8x1xf32> to vector<8x128xf32>
    %310 = arith.addf %307, %309 : vector<8x128xf32>
    %311 = math.tanh %310 : vector<8x128xf32>
    %cst_86 = arith.constant 2.000000e+00 : f32
    %312 = vector.broadcast %cst_86 : f32 to vector<8x128xf32>
    %313 = arith.mulf %312, %311 : vector<8x128xf32>
    %314 = vector.extract_strided_slice %306 {offsets = [8, 0], sizes = [8, 128], strides = [1, 1]} : vector<16x128xf32> to vector<8x128xf32>
    %315 = vector.extract_strided_slice %226 {offsets = [0, 7], sizes = [8, 1], strides = [1, 1]} : vector<256x9xf32> to vector<8x1xf32>
    %316 = vector.broadcast %315 : vector<8x1xf32> to vector<8x128xf32>
    %317 = arith.addf %314, %316 : vector<8x128xf32>
    %318 = math.exp %313 : vector<8x128xf32>
    %319 = arith.mulf %223, %318 : vector<8x128xf32>
    %320 = arith.addf %319, %317 : vector<8x128xf32>
    %cst_87 = arith.constant dense<0.000000e+00> : vector<128xf32>
    %321 = vector.multi_reduction <add>, %313, %cst_87 [0] : vector<8x128xf32> to vector<128xf32>
    %322 = vector.shape_cast %321 : vector<128xf32> to vector<1x128xf32>
    %323 = arith.addf %213, %322 : vector<1x128xf32>
    %324 = arith.index_cast %c2_i32 : i32 to index
    %c0_88 = arith.constant 0 : index
    %c0_89 = arith.constant 0 : index
    %325 = vector.load %arg5[%324, %c0_88, %c0_89] : memref<4x16x8xf32, #tpu.memory_space<vmem>>, vector<1x16x8xf32>
    %326 = vector.shape_cast %325 : vector<1x16x8xf32> to vector<16x8xf32>
    %cst_90 = arith.constant dense<0.000000e+00> : vector<16x128xf32>
    %327 = tpu.matmul %326, %320, %cst_90 {dimension_numbers = #tpu.dot_dimension_numbers<[1], [0], [0], [1], [0, 0, 1, 1], [], []>} : vector<16x8xf32>, vector<8x128xf32>, vector<16x128xf32> -> vector<16x128xf32>
    %328 = arith.addf %235, %327 : vector<16x128xf32>
    %329 = vector.extract_strided_slice %226 {offsets = [0, 8], sizes = [16, 1], strides = [1, 1]} : vector<256x9xf32> to vector<16x1xf32>
    %330 = vector.broadcast %329 : vector<16x1xf32> to vector<16x128xf32>
    %331 = arith.addf %328, %330 : vector<16x128xf32>
    %c3_i32 = arith.constant 3 : i32
    %332 = vector.extract_strided_slice %331 {offsets = [0, 0], sizes = [8, 128], strides = [1, 1]} : vector<16x128xf32> to vector<8x128xf32>
    %333 = vector.extract_strided_slice %331 {offsets = [8, 0], sizes = [8, 128], strides = [1, 1]} : vector<16x128xf32> to vector<8x128xf32>
    %334 = arith.index_cast %c3_i32 : i32 to index
    %c0_91 = arith.constant 0 : index
    %c0_92 = arith.constant 0 : index
    %335 = vector.load %arg6[%334, %c0_91, %c0_92] : memref<4x256x9xf32, #tpu.memory_space<vmem>>, vector<1x256x9xf32>
    %336 = vector.shape_cast %335 : vector<1x256x9xf32> to vector<256x9xf32>
    %337 = arith.index_cast %c3_i32 : i32 to index
    %c0_93 = arith.constant 0 : index
    %c0_94 = arith.constant 0 : index
    %338 = vector.load %arg2[%337, %c0_93, %c0_94] : memref<4x272x8xf32, #tpu.memory_space<vmem>>, vector<1x272x8xf32>
    %339 = vector.shape_cast %338 : vector<1x272x8xf32> to vector<272x8xf32>
    %cst_95 = arith.constant dense<0.000000e+00> : vector<272x128xf32>
    %340 = tpu.matmul %339, %332, %cst_95 {dimension_numbers = #tpu.dot_dimension_numbers<[1], [0], [0], [1], [0, 0, 1, 1], [], []>} : vector<272x8xf32>, vector<8x128xf32>, vector<272x128xf32> -> vector<272x128xf32>
    %341 = vector.extract_strided_slice %340 {offsets = [0, 0], sizes = [256, 128], strides = [1, 1]} : vector<272x128xf32> to vector<256x128xf32>
    %342 = vector.extract_strided_slice %336 {offsets = [0, 0], sizes = [256, 1], strides = [1, 1]} : vector<256x9xf32> to vector<256x1xf32>
    %343 = vector.broadcast %342 : vector<256x1xf32> to vector<256x128xf32>
    %344 = arith.addf %341, %343 : vector<256x128xf32>
    %345 = vector.extract_strided_slice %340 {offsets = [256, 0], sizes = [16, 128], strides = [1, 1]} : vector<272x128xf32> to vector<16x128xf32>
    %346 = vector.extract_strided_slice %336 {offsets = [0, 1], sizes = [256, 1], strides = [1, 1]} : vector<256x9xf32> to vector<256x1xf32>
    %347 = vector.extract_strided_slice %336 {offsets = [0, 2], sizes = [256, 1], strides = [1, 1]} : vector<256x9xf32> to vector<256x1xf32>
    %cst_96 = arith.constant dense<0.000000e+00> : vector<128xf32>
    %348 = vector.multi_reduction <add>, %344, %cst_96 [0] : vector<256x128xf32> to vector<128xf32>
    %349 = vector.shape_cast %348 : vector<128xf32> to vector<1x128xf32>
    %cst_97 = arith.constant 2.560000e+02 : f32
    %350 = vector.broadcast %cst_97 : f32 to vector<1x128xf32>
    %351 = arith.divf %349, %350 : vector<1x128xf32>
    %352 = arith.mulf %344, %344 : vector<256x128xf32>
    %cst_98 = arith.constant dense<0.000000e+00> : vector<128xf32>
    %353 = vector.multi_reduction <add>, %352, %cst_98 [0] : vector<256x128xf32> to vector<128xf32>
    %354 = vector.shape_cast %353 : vector<128xf32> to vector<1x128xf32>
    %cst_99 = arith.constant 2.560000e+02 : f32
    %355 = vector.broadcast %cst_99 : f32 to vector<1x128xf32>
    %356 = arith.divf %354, %355 : vector<1x128xf32>
    %357 = arith.mulf %351, %351 : vector<1x128xf32>
    %358 = arith.subf %356, %357 : vector<1x128xf32>
    %359 = vector.broadcast %351 : vector<1x128xf32> to vector<256x128xf32>
    %360 = arith.subf %344, %359 : vector<256x128xf32>
    %cst_100 = arith.constant 9.99999974E-6 : f32
    %361 = vector.broadcast %cst_100 : f32 to vector<1x128xf32>
    %362 = arith.addf %358, %361 : vector<1x128xf32>
    %363 = math.rsqrt %362 : vector<1x128xf32>
    %364 = vector.broadcast %363 : vector<1x128xf32> to vector<256x128xf32>
    %365 = arith.mulf %360, %364 : vector<256x128xf32>
    %366 = vector.broadcast %346 : vector<256x1xf32> to vector<256x128xf32>
    %367 = arith.mulf %365, %366 : vector<256x128xf32>
    %368 = vector.broadcast %347 : vector<256x1xf32> to vector<256x128xf32>
    %369 = arith.addf %367, %368 : vector<256x128xf32>
    %cst_101 = arith.constant 0.000000e+00 : f32
    %370 = vector.broadcast %cst_101 : f32 to vector<256x128xf32>
    %371 = arith.cmpf ogt, %369, %370 : vector<256x128xf32>
    %cst_102 = arith.constant 2.000000e-01 : f32
    %372 = vector.broadcast %cst_102 : f32 to vector<256x128xf32>
    %373 = arith.mulf %372, %369 : vector<256x128xf32>
    %374 = arith.select %371, %369, %373 : vector<256x128xi1>, vector<256x128xf32>
    %375 = arith.index_cast %c3_i32 : i32 to index
    %c0_103 = arith.constant 0 : index
    %c0_104 = arith.constant 0 : index
    %376 = vector.load %arg3[%375, %c0_103, %c0_104] : memref<4x256x256xbf16, #tpu.memory_space<vmem>>, vector<1x256x256xbf16>
    %377 = vector.shape_cast %376 : vector<1x256x256xbf16> to vector<256x256xbf16>
    %378 = arith.truncf %374 : vector<256x128xf32> to vector<256x128xbf16>
    %cst_105 = arith.constant dense<0.000000e+00> : vector<256x128xf32>
    %379 = tpu.matmul %377, %378, %cst_105 {dimension_numbers = #tpu.dot_dimension_numbers<[1], [0], [0], [1], [0, 0, 1, 1], [], []>} : vector<256x256xbf16>, vector<256x128xbf16>, vector<256x128xf32> -> vector<256x128xf32>
    %380 = vector.extract_strided_slice %336 {offsets = [0, 3], sizes = [256, 1], strides = [1, 1]} : vector<256x9xf32> to vector<256x1xf32>
    %381 = vector.broadcast %380 : vector<256x1xf32> to vector<256x128xf32>
    %382 = arith.addf %379, %381 : vector<256x128xf32>
    %383 = vector.extract_strided_slice %336 {offsets = [0, 4], sizes = [256, 1], strides = [1, 1]} : vector<256x9xf32> to vector<256x1xf32>
    %384 = vector.extract_strided_slice %336 {offsets = [0, 5], sizes = [256, 1], strides = [1, 1]} : vector<256x9xf32> to vector<256x1xf32>
    %cst_106 = arith.constant dense<0.000000e+00> : vector<128xf32>
    %385 = vector.multi_reduction <add>, %382, %cst_106 [0] : vector<256x128xf32> to vector<128xf32>
    %386 = vector.shape_cast %385 : vector<128xf32> to vector<1x128xf32>
    %cst_107 = arith.constant 2.560000e+02 : f32
    %387 = vector.broadcast %cst_107 : f32 to vector<1x128xf32>
    %388 = arith.divf %386, %387 : vector<1x128xf32>
    %389 = arith.mulf %382, %382 : vector<256x128xf32>
    %cst_108 = arith.constant dense<0.000000e+00> : vector<128xf32>
    %390 = vector.multi_reduction <add>, %389, %cst_108 [0] : vector<256x128xf32> to vector<128xf32>
    %391 = vector.shape_cast %390 : vector<128xf32> to vector<1x128xf32>
    %cst_109 = arith.constant 2.560000e+02 : f32
    %392 = vector.broadcast %cst_109 : f32 to vector<1x128xf32>
    %393 = arith.divf %391, %392 : vector<1x128xf32>
    %394 = arith.mulf %388, %388 : vector<1x128xf32>
    %395 = arith.subf %393, %394 : vector<1x128xf32>
    %396 = vector.broadcast %388 : vector<1x128xf32> to vector<256x128xf32>
    %397 = arith.subf %382, %396 : vector<256x128xf32>
    %cst_110 = arith.constant 9.99999974E-6 : f32
    %398 = vector.broadcast %cst_110 : f32 to vector<1x128xf32>
    %399 = arith.addf %395, %398 : vector<1x128xf32>
    %400 = math.rsqrt %399 : vector<1x128xf32>
    %401 = vector.broadcast %400 : vector<1x128xf32> to vector<256x128xf32>
    %402 = arith.mulf %397, %401 : vector<256x128xf32>
    %403 = vector.broadcast %383 : vector<256x1xf32> to vector<256x128xf32>
    %404 = arith.mulf %402, %403 : vector<256x128xf32>
    %405 = vector.broadcast %384 : vector<256x1xf32> to vector<256x128xf32>
    %406 = arith.addf %404, %405 : vector<256x128xf32>
    %cst_111 = arith.constant 0.000000e+00 : f32
    %407 = vector.broadcast %cst_111 : f32 to vector<256x128xf32>
    %408 = arith.cmpf ogt, %406, %407 : vector<256x128xf32>
    %cst_112 = arith.constant 2.000000e-01 : f32
    %409 = vector.broadcast %cst_112 : f32 to vector<256x128xf32>
    %410 = arith.mulf %409, %406 : vector<256x128xf32>
    %411 = arith.select %408, %406, %410 : vector<256x128xi1>, vector<256x128xf32>
    %412 = arith.index_cast %c3_i32 : i32 to index
    %c0_113 = arith.constant 0 : index
    %c0_114 = arith.constant 0 : index
    %413 = vector.load %arg4[%412, %c0_113, %c0_114] : memref<4x16x256xbf16, #tpu.memory_space<vmem>>, vector<1x16x256xbf16>
    %414 = vector.shape_cast %413 : vector<1x16x256xbf16> to vector<16x256xbf16>
    %415 = arith.truncf %411 : vector<256x128xf32> to vector<256x128xbf16>
    %cst_115 = arith.constant dense<0.000000e+00> : vector<16x128xf32>
    %416 = tpu.matmul %414, %415, %cst_115 {dimension_numbers = #tpu.dot_dimension_numbers<[1], [0], [0], [1], [0, 0, 1, 1], [], []>} : vector<16x256xbf16>, vector<256x128xbf16>, vector<16x128xf32> -> vector<16x128xf32>
    %417 = vector.extract_strided_slice %416 {offsets = [0, 0], sizes = [8, 128], strides = [1, 1]} : vector<16x128xf32> to vector<8x128xf32>
    %418 = vector.extract_strided_slice %336 {offsets = [0, 6], sizes = [8, 1], strides = [1, 1]} : vector<256x9xf32> to vector<8x1xf32>
    %419 = vector.broadcast %418 : vector<8x1xf32> to vector<8x128xf32>
    %420 = arith.addf %417, %419 : vector<8x128xf32>
    %421 = math.tanh %420 : vector<8x128xf32>
    %cst_116 = arith.constant 2.000000e+00 : f32
    %422 = vector.broadcast %cst_116 : f32 to vector<8x128xf32>
    %423 = arith.mulf %422, %421 : vector<8x128xf32>
    %424 = vector.extract_strided_slice %416 {offsets = [8, 0], sizes = [8, 128], strides = [1, 1]} : vector<16x128xf32> to vector<8x128xf32>
    %425 = vector.extract_strided_slice %336 {offsets = [0, 7], sizes = [8, 1], strides = [1, 1]} : vector<256x9xf32> to vector<8x1xf32>
    %426 = vector.broadcast %425 : vector<8x1xf32> to vector<8x128xf32>
    %427 = arith.addf %424, %426 : vector<8x128xf32>
    %428 = math.exp %423 : vector<8x128xf32>
    %429 = arith.mulf %333, %428 : vector<8x128xf32>
    %430 = arith.addf %429, %427 : vector<8x128xf32>
    %cst_117 = arith.constant dense<0.000000e+00> : vector<128xf32>
    %431 = vector.multi_reduction <add>, %423, %cst_117 [0] : vector<8x128xf32> to vector<128xf32>
    %432 = vector.shape_cast %431 : vector<128xf32> to vector<1x128xf32>
    %433 = arith.addf %323, %432 : vector<1x128xf32>
    %434 = arith.index_cast %c3_i32 : i32 to index
    %c0_118 = arith.constant 0 : index
    %c0_119 = arith.constant 0 : index
    %435 = vector.load %arg5[%434, %c0_118, %c0_119] : memref<4x16x8xf32, #tpu.memory_space<vmem>>, vector<1x16x8xf32>
    %436 = vector.shape_cast %435 : vector<1x16x8xf32> to vector<16x8xf32>
    %cst_120 = arith.constant dense<0.000000e+00> : vector<16x128xf32>
    %437 = tpu.matmul %436, %430, %cst_120 {dimension_numbers = #tpu.dot_dimension_numbers<[1], [0], [0], [1], [0, 0, 1, 1], [], []>} : vector<16x8xf32>, vector<8x128xf32>, vector<16x128xf32> -> vector<16x128xf32>
    %438 = arith.addf %345, %437 : vector<16x128xf32>
    %439 = vector.extract_strided_slice %336 {offsets = [0, 8], sizes = [16, 1], strides = [1, 1]} : vector<256x9xf32> to vector<16x1xf32>
    %440 = vector.broadcast %439 : vector<16x1xf32> to vector<16x128xf32>
    %441 = arith.addf %438, %440 : vector<16x128xf32>
    %c4_i32 = arith.constant 4 : i32
    %c0_121 = arith.constant 0 : index
    %c0_122 = arith.constant 0 : index
    %442 = vector.load %arg7[%c0_121, %c0_122] : memref<16x16xf32, #tpu.memory_space<vmem>>, vector<16x16xf32>
    %cst_123 = arith.constant dense<0.000000e+00> : vector<16x128xf32>
    %443 = tpu.matmul %442, %441, %cst_123 {dimension_numbers = #tpu.dot_dimension_numbers<[1], [0], [0], [1], [0, 0, 1, 1], [], []>} : vector<16x16xf32>, vector<16x128xf32>, vector<16x128xf32> -> vector<16x128xf32>
    %444 = arith.mulf %443, %441 : vector<16x128xf32>
    %cst_124 = arith.constant dense<0.000000e+00> : vector<128xf32>
    %445 = vector.multi_reduction <add>, %444, %cst_124 [0] : vector<16x128xf32> to vector<128xf32>
    %446 = vector.shape_cast %445 : vector<128xf32> to vector<1x128xf32>
    %c0_125 = arith.constant 0 : index
    %c0_126 = arith.constant 0 : index
    %447 = memref.load %arg8[%c0_125, %c0_126] : memref<1x1xf32, #tpu.memory_space<smem>>
    %448 = vector.broadcast %447 : f32 to vector<1x128xf32>
    %449 = arith.addf %448, %433 : vector<1x128xf32>
    %cst_127 = arith.constant 5.000000e-01 : f32
    %450 = vector.broadcast %cst_127 : f32 to vector<1x128xf32>
    %451 = arith.mulf %450, %446 : vector<1x128xf32>
    %452 = arith.subf %449, %451 : vector<1x128xf32>
    %453 = vector.shape_cast %452 : vector<1x128xf32> to vector<1x128xf32>
    %454 = vector.broadcast %453 : vector<1x128xf32> to vector<8x128xf32>
    %c0_128 = arith.constant 0 : index
    %c0_129 = arith.constant 0 : index
    %455 = vector.load %arg9[%c0_128, %c0_129] : memref<8x128xf32, #tpu.memory_space<vmem>>, vector<8x128xf32>
    tpu.vector_store %arg9[%c0_128, %c0_129], %454 {strides = array<i32>} : memref<8x128xf32, #tpu.memory_space<vmem>>, vector<8x128xf32>,
    return
  }
  func.func @transform_0(%arg0: i32) -> (i32, i32) {
    %c0_i32 = arith.constant 0 : i32
    %c0_i32_0 = arith.constant 0 : i32
    return %c0_i32, %arg0 : i32, i32
  }
  func.func @transform_1(%arg0: i32) -> (i32, i32, i32) {
    %c0_i32 = arith.constant 0 : i32
    %c0_i32_0 = arith.constant 0 : i32
    %c0_i32_1 = arith.constant 0 : i32
    %c0_i32_2 = arith.constant 0 : i32
    return %c0_i32, %c0_i32_0, %c0_i32_1 : i32, i32, i32
  }
  func.func @transform_2(%arg0: i32) -> (i32, i32, i32) {
    %c0_i32 = arith.constant 0 : i32
    %c0_i32_0 = arith.constant 0 : i32
    %c0_i32_1 = arith.constant 0 : i32
    %c0_i32_2 = arith.constant 0 : i32
    return %c0_i32, %c0_i32_0, %c0_i32_1 : i32, i32, i32
  }
  func.func @transform_3(%arg0: i32) -> (i32, i32, i32) {
    %c0_i32 = arith.constant 0 : i32
    %c0_i32_0 = arith.constant 0 : i32
    %c0_i32_1 = arith.constant 0 : i32
    %c0_i32_2 = arith.constant 0 : i32
    return %c0_i32, %c0_i32_0, %c0_i32_1 : i32, i32, i32
  }
  func.func @transform_4(%arg0: i32) -> (i32, i32, i32) {
    %c0_i32 = arith.constant 0 : i32
    %c0_i32_0 = arith.constant 0 : i32
    %c0_i32_1 = arith.constant 0 : i32
    %c0_i32_2 = arith.constant 0 : i32
    return %c0_i32, %c0_i32_0, %c0_i32_1 : i32, i32, i32
  }
  func.func @transform_5(%arg0: i32) -> (i32, i32, i32) {
    %c0_i32 = arith.constant 0 : i32
    %c0_i32_0 = arith.constant 0 : i32
    %c0_i32_1 = arith.constant 0 : i32
    %c0_i32_2 = arith.constant 0 : i32
    return %c0_i32, %c0_i32_0, %c0_i32_1 : i32, i32, i32
  }
  func.func @transform_6(%arg0: i32) -> (i32, i32) {
    %c0_i32 = arith.constant 0 : i32
    %c0_i32_0 = arith.constant 0 : i32
    %c0_i32_1 = arith.constant 0 : i32
    return %c0_i32, %c0_i32_0 : i32, i32
  }
  func.func @transform_7(%arg0: i32) -> (i32, i32) {
    %c0_i32 = arith.constant 0 : i32
    %c0_i32_0 = arith.constant 0 : i32
    %c0_i32_1 = arith.constant 0 : i32
    return %c0_i32, %c0_i32_0 : i32, i32
  }
  func.func @transform_8(%arg0: i32) -> (i32, i32) {
    %c0_i32 = arith.constant 0 : i32
    %c0_i32_0 = arith.constant 0 : i32
    return %c0_i32, %arg0 : i32, i32
  }
}

</mosaic_0001>

<llo_original>
// kernel: tpu_custom_call.1
$region0: #{tpu_custom_call.1}
  #allocation0 [shape = 'u32[]', space=smem, size = 0x4, offset = 0x4, fixed_abs, tag = 'smem constant byte address 0x4 - core index']
  #allocation1 [shape = 'u32[144,128]{1,0:T(1,128)}', space=vmem, size = 0x12000, scoped, tag = 'internal scratch']
  #allocation2 [shape = 'f32[1,1]{1,0:T(1,128)S(6)}', space=smem, size = 0x200, scoped, tag = 'scoped memory for tpu_custom_call.1']
  %s0 = inlined_call_operand.vmem [shape: f32[16,256], index: 0, kind: input, shape index: {}]
  %s1 = inlined_call_operand.vmem [shape: f32[4,272,8], index: 1, kind: input, shape index: {}]
  %s2 = inlined_call_operand.vmem [shape: bf16[4,256,256], index: 2, kind: input, shape index: {}]
  %s3 = inlined_call_operand.vmem [shape: bf16[4,16,256], index: 3, kind: input, shape index: {}]
  %s4 = inlined_call_operand.vmem [shape: f32[4,16,8], index: 4, kind: input, shape index: {}]
  %s5 = inlined_call_operand.vmem [shape: f32[4,256,9], index: 5, kind: input, shape index: {}]
  %s6 = inlined_call_operand.vmem [shape: f32[16,16], index: 6, kind: input, shape index: {}]
  %s7 = inlined_call_operand.<no memory space> [shape: f32[1,1], index: 7, kind: input, shape index: {}]
  %s8 = inlined_call_operand.hbm [shape: f32[8,256], index: 8, kind: output, shape index: {}]
  %s9 = sld [smem:[#allocation0]]
  $region103: #{tpu_custom_call.1} parent=0
    _
  %s11 = ssub.s32 1, %s9
  %s12 = scalar_select 0, %s11, %s9
  %13 = sst [smem:[#allocation2]] %s7
  $region1: #{tpu_custom_call.1} parent=0
    #allocation3 [shape = 'u8[16384]{0}', space=vmem, size = 0x4000, scoped, tag = 'input window, operand 0']
    #allocation4 [shape = 'u8[8192]{0}', space=vmem, size = 0x2000, scoped, tag = 'output window, operand 0']
    #allocation5 [shape = 's32[2]{0}', space=sflag, size = 0x8, scoped, tag = 'scoped memory for tpu_custom_call.1']
    %14 = vsyncpa [#allocation5], 0
    %s15 = scalar_lea.sflag [#allocation5], 1
    %16 = vsyncpa %s15, 0
    loop: start=0, step=1, limit=4
    $region2: #{tpu_custom_call.1} parent=1 // loop_pre_header
      _
    $region3: #{tpu_custom_call.1} parent=1 // loop_header
      %s18 = sphi 0, %s22
      %p19 = scmp.ge.s32.totalorder %s18, 4
      %s28 = sphi 0, %s30
      %s31 = sphi 0, %s28
      %s32 = sphi 0, %s31
      %s48 = sphi 0, %s32
      %s52 = sphi 0, %s52
      %s54 = sphi 0, %s52
      %s55 = sphi 0, %s54
      %s69 = sphi 0, %s55
      %s73 = sphi 0, %s73
      %s75 = sphi 0, %s73
      %s76 = sphi 0, %s75
      %s90 = sphi 0, %s76
      %s94 = sphi 0, %s94
      %s96 = sphi 0, %s94
      %s97 = sphi 0, %s96
      %s111 = sphi 0, %s97
      %s115 = sphi 0, %s115
      %s117 = sphi 0, %s115
      %s118 = sphi 0, %s117
      %s132 = sphi 0, %s118
      %s136 = sphi 0, %s136
      %s138 = sphi 0, %s136
      %s139 = sphi 0, %s138
      %s153 = sphi 0, %s139
      %s157 = sphi 0, %s157
      %s159 = sphi 0, %s157
      %s160 = sphi 0, %s159
      %s174 = sphi 0, %s160
      %s178 = sphi 0, %s178
      %s180 = sphi 0, %s178
      %s181 = sphi 0, %s180
      %s195 = sphi 0, %s181
      %s201 = sphi 0, %s203
      %s204 = sphi 0, %s201
      %s205 = sphi 0, %s204
      %s221 = sphi 0, %s205
    $region4: #{tpu_custom_call.1} parent=1 // loop_header_branch
      %21 = sbr.rel (%p19) target = $region8
    $region5: #{tpu_custom_call.1} parent=1 // loop_body
      %s23 = ssub.s32 %s18, 1
      %s24 = ssub.s32 %s18, 2
      %s25 = sadd.s32 %s18, 1
      %s26 = ssub.s32 %s18, %s25
      %p27 = scmp.eq.s32.totalorder %s26, 0
      %s29 = sadd.s32 %s28, 1
      %s30 = scalar_select %p27, %s28, %s29
      %p33 = pneg %p27
      %p34 = scmp.eq.s32.totalorder %s18, 1
      %p35 = por %p33, %p34
      %p36 = scmp.ne.s32.totalorder %s28, %s31
      %p37 = scmp.eq.s32.totalorder %s18, 0
      %p38 = por %p36, %p37
      %p39 = scmp.ne.s32.totalorder %s28, %s31
      %p40 = scmp.eq.s32.totalorder %s23, 1
      %p41 = por %p39, %p40
      %p42 = scmp.ne.s32.totalorder %s31, %s32
      %p43 = scmp.eq.s32.totalorder %s23, 0
      %p44 = por %p42, %p43
      %p45 = scmp.ne.s32.totalorder %s31, %s32
      %p46 = scmp.eq.s32.totalorder %s24, 1
      %p47 = por %p45, %p46
      %p49 = scmp.ne.s32.totalorder %s32, %s48
      %p50 = scmp.eq.s32.totalorder %s24, 0
      %p51 = por %p49, %p50
      %s53 = sadd.s32 %s52, 1
      %p56 = scmp.eq.s32.totalorder %s18, 1
      %p57 = scmp.ne.s32.totalorder %s52, %s54
      %p58 = scmp.eq.s32.totalorder %s18, 0
      %p59 = por %p57, %p58
      %p60 = scmp.ne.s32.totalorder %s52, %s54
      %p61 = scmp.eq.s32.totalorder %s23, 1
      %p62 = por %p60, %p61
      %p63 = scmp.ne.s32.totalorder %s54, %s55
      %p64 = scmp.eq.s32.totalorder %s23, 0
      %p65 = por %p63, %p64
      %p66 = scmp.ne.s32.totalorder %s54, %s55
      %p67 = scmp.eq.s32.totalorder %s24, 1
      %p68 = por %p66, %p67
      %p70 = scmp.ne.s32.totalorder %s55, %s69
      %p71 = scmp.eq.s32.totalorder %s24, 0
      %p72 = por %p70, %p71
      %s74 = sadd.s32 %s73, 1
      %p77 = scmp.eq.s32.totalorder %s18, 1
      %p78 = scmp.ne.s32.totalorder %s73, %s75
      %p79 = scmp.eq.s32.totalorder %s18, 0
      %p80 = por %p78, %p79
      %p81 = scmp.ne.s32.totalorder %s73, %s75
      %p82 = scmp.eq.s32.totalorder %s23, 1
      %p83 = por %p81, %p82
      %p84 = scmp.ne.s32.totalorder %s75, %s76
      %p85 = scmp.eq.s32.totalorder %s23, 0
      %p86 = por %p84, %p85
      %p87 = scmp.ne.s32.totalorder %s75, %s76
      %p88 = scmp.eq.s32.totalorder %s24, 1
      %p89 = por %p87, %p88
      %p91 = scmp.ne.s32.totalorder %s76, %s90
      %p92 = scmp.eq.s32.totalorder %s24, 0
      %p93 = por %p91, %p92
      %s95 = sadd.s32 %s94, 1
      %p98 = scmp.eq.s32.totalorder %s18, 1
      %p99 = scmp.ne.s32.totalorder %s94, %s96
      %p100 = scmp.eq.s32.totalorder %s18, 0
      %p101 = por %p99, %p100
      %p102 = scmp.ne.s32.totalorder %s94, %s96
      %p103 = scmp.eq.s32.totalorder %s23, 1
      %p104 = por %p102, %p103
      %p105 = scmp.ne.s32.totalorder %s96, %s97
      %p106 = scmp.eq.s32.totalorder %s23, 0
      %p107 = por %p105, %p106
      %p108 = scmp.ne.s32.totalorder %s96, %s97
      %p109 = scmp.eq.s32.totalorder %s24, 1
      %p110 = por %p108, %p109
      %p112 = scmp.ne.s32.totalorder %s97, %s111
      %p113 = scmp.eq.s32.totalorder %s24, 0
      %p114 = por %p112, %p113
      %s116 = sadd.s32 %s115, 1
      %p119 = scmp.eq.s32.totalorder %s18, 1
      %p120 = scmp.ne.s32.totalorder %s115, %s117
      %p121 = scmp.eq.s32.totalorder %s18, 0
      %p122 = por %p120, %p121
      %p123 = scmp.ne.s32.totalorder %s115, %s117
      %p124 = scmp.eq.s32.totalorder %s23, 1
      %p125 = por %p123, %p124
      %p126 = scmp.ne.s32.totalorder %s117, %s118
      %p127 = scmp.eq.s32.totalorder %s23, 0
      %p128 = por %p126, %p127
      %p129 = scmp.ne.s32.totalorder %s117, %s118
      %p130 = scmp.eq.s32.totalorder %s24, 1
      %p131 = por %p129, %p130
      %p133 = scmp.ne.s32.totalorder %s118, %s132
      %p134 = scmp.eq.s32.totalorder %s24, 0
      %p135 = por %p133, %p134
      %s137 = sadd.s32 %s136, 1
      %p140 = scmp.eq.s32.totalorder %s18, 1
      %p141 = scmp.ne.s32.totalorder %s136, %s138
      %p142 = scmp.eq.s32.totalorder %s18, 0
      %p143 = por %p141, %p142
      %p144 = scmp.ne.s32.totalorder %s136, %s138
      %p145 = scmp.eq.s32.totalorder %s23, 1
      %p146 = por %p144, %p145
      %p147 = scmp.ne.s32.totalorder %s138, %s139
      %p148 = scmp.eq.s32.totalorder %s23, 0
      %p149 = por %p147, %p148
      %p150 = scmp.ne.s32.totalorder %s138, %s139
      %p151 = scmp.eq.s32.totalorder %s24, 1
      %p152 = por %p150, %p151
      %p154 = scmp.ne.s32.totalorder %s139, %s153
      %p155 = scmp.eq.s32.totalorder %s24, 0
      %p156 = por %p154, %p155
      %s158 = sadd.s32 %s157, 1
      %p161 = scmp.eq.s32.totalorder %s18, 1
      %p162 = scmp.ne.s32.totalorder %s157, %s159
      %p163 = scmp.eq.s32.totalorder %s18, 0
      %p164 = por %p162, %p163
      %p165 = scmp.ne.s32.totalorder %s157, %s159
      %p166 = scmp.eq.s32.totalorder %s23, 1
      %p167 = por %p165, %p166
      %p168 = scmp.ne.s32.totalorder %s159, %s160
      %p169 = scmp.eq.s32.totalorder %s23, 0
      %p170 = por %p168, %p169
      %p171 = scmp.ne.s32.totalorder %s159, %s160
      %p172 = scmp.eq.s32.totalorder %s24, 1
      %p173 = por %p171, %p172
      %p175 = scmp.ne.s32.totalorder %s160, %s174
      %p176 = scmp.eq.s32.totalorder %s24, 0
      %p177 = por %p175, %p176
      %s179 = sadd.s32 %s178, 1
      %p182 = scmp.eq.s32.totalorder %s18, 1
      %p183 = scmp.ne.s32.totalorder %s178, %s180
      %p184 = scmp.eq.s32.totalorder %s18, 0
      %p185 = por %p183, %p184
      %p186 = scmp.ne.s32.totalorder %s178, %s180
      %p187 = scmp.eq.s32.totalorder %s23, 1
      %p188 = por %p186, %p187
      %p189 = scmp.ne.s32.totalorder %s180, %s181
      %p190 = scmp.eq.s32.totalorder %s23, 0
      %p191 = por %p189, %p190
      %p192 = scmp.ne.s32.totalorder %s180, %s181
      %p193 = scmp.eq.s32.totalorder %s24, 1
      %p194 = por %p192, %p193
      %p196 = scmp.ne.s32.totalorder %s181, %s195
      %p197 = scmp.eq.s32.totalorder %s24, 0
      %p198 = por %p196, %p197
      %s199 = ssub.s32 %s18, %s25
      %p200 = scmp.eq.s32.totalorder %s199, 0
      %s202 = sadd.s32 %s201, 1
      %s203 = scalar_select %p200, %s201, %s202
      %p206 = pneg %p200
      %p207 = scmp.eq.s32.totalorder %s18, 1
      %p208 = por %p206, %p207
      %p209 = scmp.ne.s32.totalorder %s201, %s204
      %p210 = scmp.eq.s32.totalorder %s18, 0
      %p211 = por %p209, %p210
      %p212 = scmp.ne.s32.totalorder %s201, %s204
      %p213 = scmp.eq.s32.totalorder %s23, 1
      %p214 = por %p212, %p213
      %p215 = scmp.ne.s32.totalorder %s204, %s205
      %p216 = scmp.eq.s32.totalorder %s23, 0
      %p217 = por %p215, %p216
      %p218 = scmp.ne.s32.totalorder %s204, %s205
      %p219 = scmp.eq.s32.totalorder %s24, 1
      %p220 = por %p218, %p219
      %p222 = scmp.ne.s32.totalorder %s205, %s221
      %p223 = scmp.eq.s32.totalorder %s24, 0
      %p224 = por %p222, %p223
      %p225 = scmp.le.s32.totalorder 1, %s18
      %p226 = scmp.lt.s32.totalorder %s18, 3
      %p227 = pnand %p225, %p226
      %p228 = pneg %p227
      // Predicated region
      $region9: #{tpu_custom_call.1} parent=5 // pred_check
        _
      $region10: #{tpu_custom_call.1} parent=5 // pred_check_branch
        %230 = sbr.rel (%p227) target = $region12
      $region11: #{tpu_custom_call.1} parent=5 // pred_region
        %s231 = ssub.s32 %s18, 1
        // Predicated region
        $region13: #{tpu_custom_call.1} parent=11 // pred_check
          %p232 = pneg %p65
        $region14: #{tpu_custom_call.1} parent=11 // pred_check_branch
          %234 = sbr.rel (%p232) target = $region16
        $region15: #{tpu_custom_call.1} parent=11 // pred_region
          _
        $region16: #{tpu_custom_call.1} parent=11 // pred_fallthru
          _
        // Predicated region
        $region17: #{tpu_custom_call.1} parent=11 // pred_check
          %p235 = pneg %p86
        $region18: #{tpu_custom_call.1} parent=11 // pred_check_branch
          %237 = sbr.rel (%p235) target = $region20
        $region19: #{tpu_custom_call.1} parent=11 // pred_region
          _
        $region20: #{tpu_custom_call.1} parent=11 // pred_fallthru
          _
        // Predicated region
        $region21: #{tpu_custom_call.1} parent=11 // pred_check
          %p238 = pneg %p107
        $region22: #{tpu_custom_call.1} parent=11 // pred_check_branch
          %240 = sbr.rel (%p238) target = $region24
        $region23: #{tpu_custom_call.1} parent=11 // pred_region
          _
        $region24: #{tpu_custom_call.1} parent=11 // pred_fallthru
          _
        // Predicated region
        $region25: #{tpu_custom_call.1} parent=11 // pred_check
          %p241 = pneg %p128
        $region26: #{tpu_custom_call.1} parent=11 // pred_check_branch
          %243 = sbr.rel (%p241) target = $region28
        $region27: #{tpu_custom_call.1} parent=11 // pred_region
          _
        $region28: #{tpu_custom_call.1} parent=11 // pred_fallthru
          _
        // Predicated region
        $region29: #{tpu_custom_call.1} parent=11 // pred_check
          %p244 = pneg %p149
        $region30: #{tpu_custom_call.1} parent=11 // pred_check_branch
          %246 = sbr.rel (%p244) target = $region32
        $region31: #{tpu_custom_call.1} parent=11 // pred_region
          _
        $region32: #{tpu_custom_call.1} parent=11 // pred_fallthru
          _
        // Predicated region
        $region33: #{tpu_custom_call.1} parent=11 // pred_check
          %p247 = pneg %p170
        $region34: #{tpu_custom_call.1} parent=11 // pred_check_branch
          %249 = sbr.rel (%p247) target = $region36
        $region35: #{tpu_custom_call.1} parent=11 // pred_region
          _
        $region36: #{tpu_custom_call.1} parent=11 // pred_fallthru
          _
        // Predicated region
        $region37: #{tpu_custom_call.1} parent=11 // pred_check
          %p250 = pneg %p191
        $region38: #{tpu_custom_call.1} parent=11 // pred_check_branch
          %252 = sbr.rel (%p250) target = $region40
        $region39: #{tpu_custom_call.1} parent=11 // pred_region
          _
        $region40: #{tpu_custom_call.1} parent=11 // pred_fallthru
          _
      $region12: #{tpu_custom_call.1} parent=5 // pred_fallthru
        _
      %p253 = scmp.lt.s32.totalorder %s18, 2
      // Predicated region
      $region41: #{tpu_custom_call.1} parent=5 // pred_check
        %p254 = pneg %p253
      $region42: #{tpu_custom_call.1} parent=5 // pred_check_branch
        %256 = sbr.rel (%p254) target = $region44
      $region43: #{tpu_custom_call.1} parent=5 // pred_region
        // Predicated region
        $region45: #{tpu_custom_call.1} parent=43 // pred_check
          %p257 = pneg %p38
        $region46: #{tpu_custom_call.1} parent=43 // pred_check_branch
          %259 = sbr.rel (%p257) target = $region48
        $region47: #{tpu_custom_call.1} parent=43 // pred_region
          %s260 = sand.u32 %s28, 1
          %s261 = sand.u32 %s28, 1
          %s262 = smul.addr %s261, 16
          %s263 = scalar_lea.vmem [#allocation3], %s262
          %s264 = smul.addr %s18, 8
          %s265 = scalar_lea.vmem %s0, %s264
          // Predicated region
          $region49: #{tpu_custom_call.1} parent=47 // pred_check
            _
          $region50: #{tpu_custom_call.1} parent=47 // pred_check_branch
            %267 = sbr.rel (0) target = $region52
          $region51: #{tpu_custom_call.1} parent=47 // pred_region
            // Predicated region
            $region53: #{tpu_custom_call.1} parent=51 // pred_check
              _
            $region54: #{tpu_custom_call.1} parent=51 // pred_check_branch
              %269 = sbr.rel (0) target = $region56
            $region55: #{tpu_custom_call.1} parent=51 // pred_region
              // Predicated region
              $region68: #{tpu_custom_call.1} parent=55 // pred_check
                _
              $region69: #{tpu_custom_call.1} parent=55 // pred_check_branch
                %286 = sbr.rel (0) target = $region71
              $region70: #{tpu_custom_call.1} parent=55 // pred_region
                loop: start=0, step=1, limit=1
                $region72: #{tpu_custom_call.1} parent=70 // loop_pre_header
                  _
                $region73: #{tpu_custom_call.1} parent=70 // loop_header
                  %s288 = sphi 0, %s292
                  %p289 = scmp.ge.s32.totalorder %s288, 1
                  %s293 = sphi %s265, %s265
                  %s294 = sphi %s263, %s263
                $region74: #{tpu_custom_call.1} parent=70 // loop_header_branch
                  %291 = sbr.rel (%p289) target = $region78
                $region75: #{tpu_custom_call.1} parent=70 // loop_body
                  %v295 = vld [vmem:[%s293] sm:$0xff]
                  %296 = vst [vmem:[%s294] sm:$0xff] %v295
                  %v297 = vld [vmem:[%s293 + $0x10] sm:$0xff]
                  %298 = vst [vmem:[%s294 + $0x8] sm:$0xff] %v297
                $region76: #{tpu_custom_call.1} parent=70 // loop_footer
                  %s292 = sadd.s32 1, %s288
                $region77: #{tpu_custom_call.1} parent=70 // loop_footer_branch
                  %287 = sbr.rel target = $region73
                $region78: #{tpu_custom_call.1} parent=70 // loop_exit
                  _
              $region71: #{tpu_custom_call.1} parent=55 // pred_fallthru
                _
              // Predicated region
              $region79: #{tpu_custom_call.1} parent=55 // pred_check
                _
              $region80: #{tpu_custom_call.1} parent=55 // pred_check_branch
                %300 = sbr.rel target = $region82
              $region81: #{tpu_custom_call.1} parent=55 // pred_region
                _
              $region82: #{tpu_custom_call.1} parent=55 // pred_fallthru
                _
            $region56: #{tpu_custom_call.1} parent=51 // pred_fallthru
              _
            // Predicated region
            $region57: #{tpu_custom_call.1} parent=51 // pred_check
              _
            $region58: #{tpu_custom_call.1} parent=51 // pred_check_branch
              %271 = sbr.rel target = $region60
            $region59: #{tpu_custom_call.1} parent=51 // pred_region
              loop: start=0, step=1, limit=1
              $region61: #{tpu_custom_call.1} parent=59 // loop_pre_header
                _
              $region62: #{tpu_custom_call.1} parent=59 // loop_header
                %s274 = sphi 0, %s278
                %p275 = scmp.ge.s32.totalorder %s274, 1
                %s279 = sphi %s265, %s265
                %s280 = sphi %s263, %s263
              $region63: #{tpu_custom_call.1} parent=59 // loop_header_branch
                %277 = sbr.rel (%p275) target = $region67
              $region64: #{tpu_custom_call.1} parent=59 // loop_body
                %v281 = vld [vmem:[%s279] sm:$0xff]
                %282 = vst [vmem:[%s280] sm:$0xff] %v281
                %v283 = vld [vmem:[%s279 + $0x10] sm:$0xff]
                %284 = vst [vmem:[%s280 + $0x8] sm:$0xff] %v283
              $region65: #{tpu_custom_call.1} parent=59 // loop_footer
                %s278 = sadd.s32 1, %s274
              $region66: #{tpu_custom_call.1} parent=59 // loop_footer_branch
                %273 = sbr.rel target = $region62
              $region67: #{tpu_custom_call.1} parent=59 // loop_exit
                _
            $region60: #{tpu_custom_call.1} parent=51 // pred_fallthru
              _
          $region52: #{tpu_custom_call.1} parent=47 // pred_fallthru
            _
          %301 = vnop
        $region48: #{tpu_custom_call.1} parent=43 // pred_fallthru
          _
      $region44: #{tpu_custom_call.1} parent=5 // pred_fallthru
        _
      %p302 = scmp.le.s32.totalorder 1, %s18
      %p303 = scmp.lt.s32.totalorder %s18, 3
      %p304 = pnand %p302, %p303
      %p305 = pneg %p304
      // Predicated region
      $region83: #{tpu_custom_call.1} parent=5 // pred_check
        _
      $region84: #{tpu_custom_call.1} parent=5 // pred_check_branch
        %307 = sbr.rel (%p304) target = $region86
      $region85: #{tpu_custom_call.1} parent=5 // pred_region
        %s308 = ssub.s32 %s18, 1
        %s309 = sand.u32 %s31, 1
        %s310 = sand.u32 %s31, 1
        %s311 = smul.addr %s310, 16
        %s312 = scalar_lea.vmem [#allocation3], %s311
        // Predicated region
        $region87: #{tpu_custom_call.1} parent=85 // pred_check
          %p313 = pneg %p44
        $region88: #{tpu_custom_call.1} parent=85 // pred_check_branch
          %315 = sbr.rel (%p313) target = $region90
        $region89: #{tpu_custom_call.1} parent=85 // pred_region
          _
        $region90: #{tpu_custom_call.1} parent=85 // pred_fallthru
          _
        %s316 = sand.u32 %s31, 1
        %s317 = sand.u32 %s31, 1
        %s318 = smul.addr %s317, 16
        %s319 = scalar_lea.vmem [#allocation3], %s318
        %p320 = pneg %p44
        %p321 = pneg %p41
        %p322 = pneg %p65
        %p323 = pneg %p62
        %p324 = pneg %p86
        %p325 = pneg %p83
        %p326 = pneg %p107
        %p327 = pneg %p104
        %p328 = pneg %p128
        %p329 = pneg %p125
        %p330 = pneg %p149
        %p331 = pneg %p146
        %p332 = pneg %p170
        %p333 = pneg %p167
        %p334 = pneg %p191
        %p335 = pneg %p188
        %p336 = pneg %p217
        %p337 = pneg %p214
        %s338 = sand.u32 %s204, 1
        %s339 = scalar_lea.sflag [#allocation5], %s338
        %s340 = sand.u32 %s204, 1
        %s341 = smul.addr %s340, 8
        %s342 = scalar_lea.vmem [#allocation4], %s341
        %v344 = vld [vmem:[%s312] sm:$0xff]
        %v345 = vld [vmem:[%s312 + $0x8] sm:$0xff]
        %v346 = vld [vmem:[%s5] sm:$0xff]
        %v347 = vld [vmem:[%s5 + $0x8] sm:$0xff]
        %v348 = vld [vmem:[%s5 + $0x10] sm:$0xff]
        %v349 = vld [vmem:[%s5 + $0x18] sm:$0xff]
        %v350 = vld [vmem:[%s5 + $0x20] sm:$0xff]
        %v351 = vld [vmem:[%s5 + $0x28] sm:$0xff]
        %v352 = vld [vmem:[%s5 + $0x30] sm:$0xff]
        %v353 = vld [vmem:[%s5 + $0x38] sm:$0xff]
        %v354 = vld [vmem:[%s5 + $0x40] sm:$0xff]
        %v355 = vld [vmem:[%s5 + $0x48] sm:$0xff]
        %v356 = vld [vmem:[%s5 + $0x50] sm:$0xff]
        %v357 = vld [vmem:[%s5 + $0x58] sm:$0xff]
        %v358 = vld [vmem:[%s5 + $0x60] sm:$0xff]
        %v359 = vld [vmem:[%s5 + $0x68] sm:$0xff]
        %v360 = vld [vmem:[%s5 + $0x70] sm:$0xff]
        %v361 = vld [vmem:[%s5 + $0x78] sm:$0xff]
        %v362 = vld [vmem:[%s5 + $0x80] sm:$0xff]
        %v363 = vld [vmem:[%s5 + $0x88] sm:$0xff]
        %v364 = vld [vmem:[%s5 + $0x90] sm:$0xff]
        %v365 = vld [vmem:[%s5 + $0x98] sm:$0xff]
        %v366 = vld [vmem:[%s5 + $0xa0] sm:$0xff]
        %v367 = vld [vmem:[%s5 + $0xa8] sm:$0xff]
        %v368 = vld [vmem:[%s5 + $0xb0] sm:$0xff]
        %v369 = vld [vmem:[%s5 + $0xb8] sm:$0xff]
        %v370 = vld [vmem:[%s5 + $0xc0] sm:$0xff]
        %v371 = vld [vmem:[%s5 + $0xc8] sm:$0xff]
        %v372 = vld [vmem:[%s5 + $0xd0] sm:$0xff]
        %v373 = vld [vmem:[%s5 + $0xd8] sm:$0xff]
        %v374 = vld [vmem:[%s5 + $0xe0] sm:$0xff]
        %v375 = vld [vmem:[%s5 + $0xe8] sm:$0xff]
        %v376 = vld [vmem:[%s5 + $0xf0] sm:$0xff]
        %v377 = vld [vmem:[%s5 + $0xf8] sm:$0xff]
        %v378 = vld [vmem:[%s1] sm:$0xff]
        %v379 = vld [vmem:[%s1 + $0x8] sm:$0xff]
        %v380 = vld [vmem:[%s1 + $0x10] sm:$0xff]
        %v381 = vld [vmem:[%s1 + $0x18] sm:$0xff]
        %v382 = vld [vmem:[%s1 + $0x20] sm:$0xff]
        %v383 = vld [vmem:[%s1 + $0x28] sm:$0xff]
        %v384 = vld [vmem:[%s1 + $0x30] sm:$0xff]
        %v385 = vld [vmem:[%s1 + $0x38] sm:$0xff]
        %v386 = vld [vmem:[%s1 + $0x40] sm:$0xff]
        %v387 = vld [vmem:[%s1 + $0x48] sm:$0xff]
        %v388 = vld [vmem:[%s1 + $0x50] sm:$0xff]
        %v389 = vld [vmem:[%s1 + $0x58] sm:$0xff]
        %v390 = vld [vmem:[%s1 + $0x60] sm:$0xff]
        %v391 = vld [vmem:[%s1 + $0x68] sm:$0xff]
        %v392 = vld [vmem:[%s1 + $0x70] sm:$0xff]
        %v393 = vld [vmem:[%s1 + $0x78] sm:$0xff]
        %v394 = vld [vmem:[%s1 + $0x80] sm:$0xff]
        %v395 = vld [vmem:[%s1 + $0x88] sm:$0xff]
        %v396 = vld [vmem:[%s1 + $0x90] sm:$0xff]
        %v397 = vld [vmem:[%s1 + $0x98] sm:$0xff]
        %v398 = vld [vmem:[%s1 + $0xa0] sm:$0xff]
        %v399 = vld [vmem:[%s1 + $0xa8] sm:$0xff]
        %v400 = vld [vmem:[%s1 + $0xb0] sm:$0xff]
        %v401 = vld [vmem:[%s1 + $0xb8] sm:$0xff]
        %v402 = vld [vmem:[%s1 + $0xc0] sm:$0xff]
        %v403 = vld [vmem:[%s1 + $0xc8] sm:$0xff]
        %v404 = vld [vmem:[%s1 + $0xd0] sm:$0xff]
        %v405 = vld [vmem:[%s1 + $0xd8] sm:$0xff]
        %v406 = vld [vmem:[%s1 + $0xe0] sm:$0xff]
        %v407 = vld [vmem:[%s1 + $0xe8] sm:$0xff]
        %v408 = vld [vmem:[%s1 + $0xf0] sm:$0xff]
        %v409 = vld [vmem:[%s1 + $0xf8] sm:$0xff]
        %v410 = vld [vmem:[%s1 + $0x100] sm:$0xff]
        %v411 = vld [vmem:[%s1 + $0x108] sm:$0xff]
        %vm412 = vcmask 64512
        %v414 = vsel %vm412, %v378, 0
        %v417 = vsel %vm412, %v379, 0
        %v420 = vsel %vm412, %v380, 0
        %v423 = vsel %vm412, %v381, 0
        %v426 = vsel %vm412, %v382, 0
        %v429 = vsel %vm412, %v383, 0
        %v432 = vsel %vm412, %v384, 0
        %v435 = vsel %vm412, %v385, 0
        %v438 = vsel %vm412, %v386, 0
        %v441 = vsel %vm412, %v387, 0
        %v444 = vsel %vm412, %v388, 0
        %v447 = vsel %vm412, %v389, 0
        %v450 = vsel %vm412, %v390, 0
        %v453 = vsel %vm412, %v391, 0
        %v456 = vsel %vm412, %v392, 0
        %v459 = vsel %vm412, %v393, 0
        %v462 = vsel %vm412, %v394, 0
        %v465 = vsel %vm412, %v395, 0
        %v468 = vsel %vm412, %v396, 0
        %v471 = vsel %vm412, %v397, 0
        %v474 = vsel %vm412, %v398, 0
        %v477 = vsel %vm412, %v399, 0
        %v480 = vsel %vm412, %v400, 0
        %v483 = vsel %vm412, %v401, 0
        %v486 = vsel %vm412, %v402, 0
        %v489 = vsel %vm412, %v403, 0
        %v492 = vsel %vm412, %v404, 0
        %v495 = vsel %vm412, %v405, 0
        %v498 = vsel %vm412, %v406, 0
        %v501 = vsel %vm412, %v407, 0
        %v504 = vsel %vm412, %v408, 0
        %v507 = vsel %vm412, %v409, 0
        %v510 = vsel %vm412, %v410, 0
        %v513 = vsel %vm412, %v411, 0
        %515 = vmatprep.subr.mxu0 0.0
        %516 = vmatpush1.msra.mxu0 %v344
        %517 = vmatprep.subr.mxu0 0.0
        %518 = vmatpush1.msra.mxu0 0.0
        %519 = vmatprep.subr.mxu0 0.0
        %520 = vmatpush1.msra.mxu0 0.0
        %521 = vmatprep.subr.mxu0 0.0
        %522 = vmatpush1.msra.mxu0 0.0
        %523 = vmatprep.subr.mxu0 0.0
        %524 = vmatpush1.msra.mxu0 0.0
        %525 = vmatprep.subr.mxu0 0.0
        %526 = vmatpush1.msra.mxu0 0.0
        %527 = vmatprep.subr.mxu0 0.0
        %528 = vmatpush1.msra.mxu0 0.0
        %529 = vmatprep.subr.mxu0 0.0
        %530 = vmatpush1.msra.mxu0 0.0
        %531 = vmatprep.subr.mxu0 0.0
        %532 = vmatpush1.msra.mxu0 0.0
        %533 = vmatprep.subr.mxu0 0.0
        %534 = vmatpush1.msra.mxu0 0.0
        %535 = vmatprep.subr.mxu0 0.0
        %536 = vmatpush1.msra.mxu0 0.0
        %537 = vmatprep.subr.mxu0 0.0
        %538 = vmatpush1.msra.mxu0 0.0
        %539 = vmatprep.subr.mxu0 0.0
        %540 = vmatpush1.msra.mxu0 0.0
        %541 = vmatprep.subr.mxu0 0.0
        %542 = vmatpush1.msra.mxu0 0.0
        %543 = vmatprep.subr.mxu0 0.0
        %544 = vmatpush1.msra.mxu0 0.0
        %545 = vmatprep.subr.mxu0 0.0
        %546 = vmatpush1.msra.mxu0 0.0
        %547 = vmatprep.subr.mxu0 0.0
        %548 = vmatpush1.msra.mxu0 0.0
        %549 = vmatprep.subr.mxu0 0.0
        %550 = vmatpush1.msra.mxu0 0.0
        %551 = vmatprep.subr.mxu0 0.0
        %552 = vmatpush1.msra.mxu0 0.0
        %553 = vmatprep.subr.mxu0 0.0
        %554 = vmatpush1.msra.mxu0 0.0
        %555 = vmatprep.subr.mxu0 0.0
        %556 = vmatpush1.msra.mxu0 0.0
        %557 = vmatprep.subr.mxu0 0.0
        %558 = vmatpush1.msra.mxu0 0.0
        %559 = vmatprep.subr.mxu0 0.0
        %560 = vmatpush1.msra.mxu0 0.0
        %561 = vmatprep.subr.mxu0 0.0
        %562 = vmatpush1.msra.mxu0 0.0
        %563 = vmatprep.subr.mxu0 0.0
        %564 = vmatpush1.msra.mxu0 0.0
        %565 = vmatprep.subr.mxu0 0.0
        %566 = vmatpush1.msra.mxu0 0.0
        %567 = vmatprep.subr.mxu0 0.0
        %568 = vmatpush1.msra.mxu0 0.0
        %569 = vmatprep.subr.mxu0 0.0
        %570 = vmatpush1.msra.mxu0 0.0
        %571 = vmatprep.subr.mxu0 0.0
        %572 = vmatpush1.msra.mxu0 0.0
        %573 = vmatprep.subr.mxu0 0.0
        %574 = vmatpush1.msra.mxu0 0.0
        %575 = vmatprep.subr.mxu0 0.0
        %576 = vmatpush1.msra.mxu0 0.0
        %577 = vmatprep.subr.mxu0 0.0
        %578 = vmatpush1.msra.mxu0 0.0
        %579 = vmatprep.mubr.f32.mxu0 0.0
        %580 = vmatmul.mubr.f32.gmra.mrb[0].mxu0 %v414
        %v581 = vpop.f32.mrb[0].mxu0
        %v582 = vadd.f32 0.0, %v581
        %v583 = vpop.f32.mrb[0].mxu0
        %584 = vmatprep.mubr.f32.mxu0 0.0
        %585 = vmatmul.mubr.f32.gmra.mrb[0].mxu0 %v417
        %v586 = vpop.f32.mrb[0].mxu0
        %v587 = vadd.f32 0.0, %v586
        %v588 = vpop.f32.mrb[0].mxu0
        %589 = vmatprep.mubr.f32.mxu0 0.0
        %590 = vmatmul.mubr.f32.gmra.mrb[0].mxu0 %v420
        %v591 = vpop.f32.mrb[0].mxu0
        %v592 = vadd.f32 0.0, %v591
        %v593 = vpop.f32.mrb[0].mxu0
        %594 = vmatprep.mubr.f32.mxu0 0.0
        %595 = vmatmul.mubr.f32.gmra.mrb[0].mxu0 %v423
        %v596 = vpop.f32.mrb[0].mxu0
        %v597 = vadd.f32 0.0, %v596
        %v598 = vpop.f32.mrb[0].mxu0
        %599 = vmatprep.mubr.f32.mxu0 0.0
        %600 = vmatmul.mubr.f32.gmra.mrb[0].mxu0 %v426
        %v601 = vpop.f32.mrb[0].mxu0
        %v602 = vadd.f32 0.0, %v601
        %v603 = vpop.f32.mrb[0].mxu0
        %604 = vmatprep.mubr.f32.mxu0 0.0
        %605 = vmatmul.mubr.f32.gmra.mrb[0].mxu0 %v429
        %v606 = vpop.f32.mrb[0].mxu0
        %v607 = vadd.f32 0.0, %v606
        %v608 = vpop.f32.mrb[0].mxu0
        %609 = vmatprep.mubr.f32.mxu0 0.0
        %610 = vmatmul.mubr.f32.gmra.mrb[0].mxu0 %v432
        %v611 = vpop.f32.mrb[0].mxu0
        %v612 = vadd.f32 0.0, %v611
        %v613 = vpop.f32.mrb[0].mxu0
        %614 = vmatprep.mubr.f32.mxu0 0.0
        %615 = vmatmul.mubr.f32.gmra.mrb[0].mxu0 %v435
        %v616 = vpop.f32.mrb[0].mxu0
        %v617 = vadd.f32 0.0, %v616
        %v618 = vpop.f32.mrb[0].mxu0
        %619 = vmatprep.mubr.f32.mxu0 0.0
        %620 = vmatmul.mubr.f32.gmra.mrb[0].mxu0 %v438
        %v621 = vpop.f32.mrb[0].mxu0
        %v622 = vadd.f32 0.0, %v621
        %v623 = vpop.f32.mrb[0].mxu0
        %624 = vmatprep.mubr.f32.mxu0 0.0
        %625 = vmatmul.mubr.f32.gmra.mrb[0].mxu0 %v441
        %v626 = vpop.f32.mrb[0].mxu0
        %v627 = vadd.f32 0.0, %v626
        %v628 = vpop.f32.mrb[0].mxu0
        %629 = vmatprep.mubr.f32.mxu0 0.0
        %630 = vmatmul.mubr.f32.gmra.mrb[0].mxu0 %v444
        %v631 = vpop.f32.mrb[0].mxu0
        %v632 = vadd.f32 0.0, %v631
        %v633 = vpop.f32.mrb[0].mxu0
        %634 = vmatprep.mubr.f32.mxu0 0.0
        %635 = vmatmul.mubr.f32.gmra.mrb[0].mxu0 %v447
        %v636 = vpop.f32.mrb[0].mxu0
        %v637 = vadd.f32 0.0, %v636
        %v638 = vpop.f32.mrb[0].mxu0
        %639 = vmatprep.mubr.f32.mxu0 0.0
        %640 = vmatmul.mubr.f32.gmra.mrb[0].mxu0 %v450
        %v641 = vpop.f32.mrb[0].mxu0
        %v642 = vadd.f32 0.0, %v641
        %v643 = vpop.f32.mrb[0].mxu0
        %644 = vmatprep.mubr.f32.mxu0 0.0
        %645 = vmatmul.mubr.f32.gmra.mrb[0].mxu0 %v453
        %v646 = vpop.f32.mrb[0].mxu0
        %v647 = vadd.f32 0.0, %v646
        %v648 = vpop.f32.mrb[0].mxu0
        %649 = vmatprep.mubr.f32.mxu0 0.0
        %650 = vmatmul.mubr.f32.gmra.mrb[0].mxu0 %v456
        %v651 = vpop.f32.mrb[0].mxu0
        %v652 = vadd.f32 0.0, %v651
        %v653 = vpop.f32.mrb[0].mxu0
        %654 = vmatprep.mubr.f32.mxu0 0.0
        %655 = vmatmul.mubr.f32.gmra.mrb[0].mxu0 %v459
        %v656 = vpop.f32.mrb[0].mxu0
        %v657 = vadd.f32 0.0, %v656
        %v658 = vpop.f32.mrb[0].mxu0
        %659 = vmatprep.mubr.f32.mxu0 0.0
        %660 = vmatmul.mubr.f32.gmra.mrb[0].mxu0 %v462
        %v661 = vpop.f32.mrb[0].mxu0
        %v662 = vadd.f32 0.0, %v661
        %v663 = vpop.f32.mrb[0].mxu0
        %664 = vmatprep.mubr.f32.mxu0 0.0
        %665 = vmatmul.mubr.f32.gmra.mrb[0].mxu0 %v465
        %v666 = vpop.f32.mrb[0].mxu0
        %v667 = vadd.f32 0.0, %v666
        %v668 = vpop.f32.mrb[0].mxu0
        %669 = vmatprep.mubr.f32.mxu0 0.0
        %670 = vmatmul.mubr.f32.gmra.mrb[0].mxu0 %v468
        %v671 = vpop.f32.mrb[0].mxu0
        %v672 = vadd.f32 0.0, %v671
        %v673 = vpop.f32.mrb[0].mxu0
        %674 = vmatprep.mubr.f32.mxu0 0.0
        %675 = vmatmul.mubr.f32.gmra.mrb[0].mxu0 %v471
        %v676 = vpop.f32.mrb[0].mxu0
        %v677 = vadd.f32 0.0, %v676
        %v678 = vpop.f32.mrb[0].mxu0
        %679 = vmatprep.mubr.f32.mxu0 0.0
        %680 = vmatmul.mubr.f32.gmra.mrb[0].mxu0 %v474
        %v681 = vpop.f32.mrb[0].mxu0
        %v682 = vadd.f32 0.0, %v681
        %v683 = vpop.f32.mrb[0].mxu0
        %684 = vmatprep.mubr.f32.mxu0 0.0
        %685 = vmatmul.mubr.f32.gmra.mrb[0].mxu0 %v477
        %v686 = vpop.f32.mrb[0].mxu0
        %v687 = vadd.f32 0.0, %v686
        %v688 = vpop.f32.mrb[0].mxu0
        %689 = vmatprep.mubr.f32.mxu0 0.0
        %690 = vmatmul.mubr.f32.gmra.mrb[0].mxu0 %v480
        %v691 = vpop.f32.mrb[0].mxu0
        %v692 = vadd.f32 0.0, %v691
        %v693 = vpop.f32.mrb[0].mxu0
        %694 = vmatprep.mubr.f32.mxu0 0.0
        %695 = vmatmul.mubr.f32.gmra.mrb[0].mxu0 %v483
        %v696 = vpop.f32.mrb[0].mxu0
        %v697 = vadd.f32 0.0, %v696
        %v698 = vpop.f32.mrb[0].mxu0
        %699 = vmatprep.mubr.f32.mxu0 0.0
        %700 = vmatmul.mubr.f32.gmra.mrb[0].mxu0 %v486
        %v701 = vpop.f32.mrb[0].mxu0
        %v702 = vadd.f32 0.0, %v701
        %v703 = vpop.f32.mrb[0].mxu0
        %704 = vmatprep.mubr.f32.mxu0 0.0
        %705 = vmatmul.mubr.f32.gmra.mrb[0].mxu0 %v489
        %v706 = vpop.f32.mrb[0].mxu0
        %v707 = vadd.f32 0.0, %v706
        %v708 = vpop.f32.mrb[0].mxu0
        %709 = vmatprep.mubr.f32.mxu0 0.0
        %710 = vmatmul.mubr.f32.gmra.mrb[0].mxu0 %v492
        %v711 = vpop.f32.mrb[0].mxu0
        %v712 = vadd.f32 0.0, %v711
        %v713 = vpop.f32.mrb[0].mxu0
        %714 = vmatprep.mubr.f32.mxu0 0.0
        %715 = vmatmul.mubr.f32.gmra.mrb[0].mxu0 %v495
        %v716 = vpop.f32.mrb[0].mxu0
        %v717 = vadd.f32 0.0, %v716
        %v718 = vpop.f32.mrb[0].mxu0
        %719 = vmatprep.mubr.f32.mxu0 0.0
        %720 = vmatmul.mubr.f32.gmra.mrb[0].mxu0 %v498
        %v721 = vpop.f32.mrb[0].mxu0
        %v722 = vadd.f32 0.0, %v721
        %v723 = vpop.f32.mrb[0].mxu0
        %724 = vmatprep.mubr.f32.mxu0 0.0
        %725 = vmatmul.mubr.f32.gmra.mrb[0].mxu0 %v501
        %v726 = vpop.f32.mrb[0].mxu0
        %v727 = vadd.f32 0.0, %v726
        %v728 = vpop.f32.mrb[0].mxu0
        %729 = vmatprep.mubr.f32.mxu0 0.0
        %730 = vmatmul.mubr.f32.gmra.mrb[0].mxu0 %v504
        %v731 = vpop.f32.mrb[0].mxu0
        %v732 = vadd.f32 0.0, %v731
        %v733 = vpop.f32.mrb[0].mxu0
        %734 = vmatprep.mubr.f32.mxu0 0.0
        %735 = vmatmul.mubr.f32.gmra.mrb[0].mxu0 %v507
        %v736 = vpop.f32.mrb[0].mxu0
        %v737 = vadd.f32 0.0, %v736
        %v738 = vpop.f32.mrb[0].mxu0
        %739 = vmatprep.mubr.f32.mxu0 0.0
        %740 = vmatmul.mubr.f32.gmra.mrb[0].mxu0 %v510
        %v741 = vpop.f32.mrb[0].mxu0
        %v742 = vadd.f32 0.0, %v741
        %v743 = vpop.f32.mrb[0].mxu0
        %744 = vmatprep.mubr.f32.mxu0 0.0
        %745 = vmatmul.mubr.f32.gmra.mrb[0].mxu0 %v513
        %v746 = vpop.f32.mrb[0].mxu0
        %v747 = vadd.f32 0.0, %v746
        %v748 = vpop.f32.mrb[0].mxu0
        %749 = vdwg.mxu0
        %751 = vset.pattern.permute.xlu0 0
        %752 = vperm.xlu0 %751, %v346
        %v753 = vpop.permute.xlu0 %752
        %756 = vset.pattern.permute.xlu0 0
        %757 = vperm.xlu0 %756, %v347
        %v758 = vpop.permute.xlu0 %757
        %761 = vset.pattern.permute.xlu0 0
        %762 = vperm.xlu0 %761, %v348
        %v763 = vpop.permute.xlu0 %762
        %766 = vset.pattern.permute.xlu0 0
        %767 = vperm.xlu0 %766, %v349
        %v768 = vpop.permute.xlu0 %767
        %771 = vset.pattern.permute.xlu0 0
        %772 = vperm.xlu0 %771, %v350
        %v773 = vpop.permute.xlu0 %772
        %776 = vset.pattern.permute.xlu0 0
        %777 = vperm.xlu0 %776, %v351
        %v778 = vpop.permute.xlu0 %777
        %781 = vset.pattern.permute.xlu0 0
        %782 = vperm.xlu0 %781, %v352
        %v783 = vpop.permute.xlu0 %782
        %786 = vset.pattern.permute.xlu0 0
        %787 = vperm.xlu0 %786, %v353
        %v788 = vpop.permute.xlu0 %787
        %791 = vset.pattern.permute.xlu0 0
        %792 = vperm.xlu0 %791, %v354
        %v793 = vpop.permute.xlu0 %792
        %796 = vset.pattern.permute.xlu0 0
        %797 = vperm.xlu0 %796, %v355
        %v798 = vpop.permute.xlu0 %797
        %801 = vset.pattern.permute.xlu0 0
        %802 = vperm.xlu0 %801, %v356
        %v803 = vpop.permute.xlu0 %802
        %806 = vset.pattern.permute.xlu0 0
        %807 = vperm.xlu0 %806, %v357
        %v808 = vpop.permute.xlu0 %807
        %811 = vset.pattern.permute.xlu0 0
        %812 = vperm.xlu0 %811, %v358
        %v813 = vpop.permute.xlu0 %812
        %816 = vset.pattern.permute.xlu0 0
        %817 = vperm.xlu0 %816, %v359
        %v818 = vpop.permute.xlu0 %817
        %821 = vset.pattern.permute.xlu0 0
        %822 = vperm.xlu0 %821, %v360
        %v823 = vpop.permute.xlu0 %822
        %826 = vset.pattern.permute.xlu0 0
        %827 = vperm.xlu0 %826, %v361
        %v828 = vpop.permute.xlu0 %827
        %831 = vset.pattern.permute.xlu0 0
        %832 = vperm.xlu0 %831, %v362
        %v833 = vpop.permute.xlu0 %832
        %836 = vset.pattern.permute.xlu0 0
        %837 = vperm.xlu0 %836, %v363
        %v838 = vpop.permute.xlu0 %837
        %841 = vset.pattern.permute.xlu0 0
        %842 = vperm.xlu0 %841, %v364
        %v843 = vpop.permute.xlu0 %842
        %846 = vset.pattern.permute.xlu0 0
        %847 = vperm.xlu0 %846, %v365
        %v848 = vpop.permute.xlu0 %847
        %851 = vset.pattern.permute.xlu0 0
        %852 = vperm.xlu0 %851, %v366
        %v853 = vpop.permute.xlu0 %852
        %856 = vset.pattern.permute.xlu0 0
        %857 = vperm.xlu0 %856, %v367
        %v858 = vpop.permute.xlu0 %857
        %861 = vset.pattern.permute.xlu0 0
        %862 = vperm.xlu0 %861, %v368
        %v863 = vpop.permute.xlu0 %862
        %866 = vset.pattern.permute.xlu0 0
        %867 = vperm.xlu0 %866, %v369
        %v868 = vpop.permute.xlu0 %867
        %871 = vset.pattern.permute.xlu0 0
        %872 = vperm.xlu0 %871, %v370
        %v873 = vpop.permute.xlu0 %872
        %876 = vset.pattern.permute.xlu0 0
        %877 = vperm.xlu0 %876, %v371
        %v878 = vpop.permute.xlu0 %877
        %881 = vset.pattern.permute.xlu0 0
        %882 = vperm.xlu0 %881, %v372
        %v883 = vpop.permute.xlu0 %882
        %886 = vset.pattern.permute.xlu0 0
        %887 = vperm.xlu0 %886, %v373
        %v888 = vpop.permute.xlu0 %887
        %891 = vset.pattern.permute.xlu0 0
        %892 = vperm.xlu0 %891, %v374
        %v893 = vpop.permute.xlu0 %892
        %896 = vset.pattern.permute.xlu0 0
        %897 = vperm.xlu0 %896, %v375
        %v898 = vpop.permute.xlu0 %897
        %901 = vset.pattern.permute.xlu0 0
        %902 = vperm.xlu0 %901, %v376
        %v903 = vpop.permute.xlu0 %902
        %906 = vset.pattern.permute.xlu0 0
        %907 = vperm.xlu0 %906, %v377
        %v908 = vpop.permute.xlu0 %907
        %v910 = vadd.f32 %v582, %v753
        %v911 = vadd.f32 %v587, %v758
        %v912 = vadd.f32 %v592, %v763
        %v913 = vadd.f32 %v597, %v768
        %v914 = vadd.f32 %v602, %v773
        %v915 = vadd.f32 %v607, %v778
        %v916 = vadd.f32 %v612, %v783
        %v917 = vadd.f32 %v617, %v788
        %v918 = vadd.f32 %v622, %v793
        %v919 = vadd.f32 %v627, %v798
        %v920 = vadd.f32 %v632, %v803
        %v921 = vadd.f32 %v637, %v808
        %v922 = vadd.f32 %v642, %v813
        %v923 = vadd.f32 %v647, %v818
        %v924 = vadd.f32 %v652, %v823
        %v925 = vadd.f32 %v657, %v828
        %v926 = vadd.f32 %v662, %v833
        %v927 = vadd.f32 %v667, %v838
        %v928 = vadd.f32 %v672, %v843
        %v929 = vadd.f32 %v677, %v848
        %v930 = vadd.f32 %v682, %v853
        %v931 = vadd.f32 %v687, %v858
        %v932 = vadd.f32 %v692, %v863
        %v933 = vadd.f32 %v697, %v868
        %v934 = vadd.f32 %v702, %v873
        %v935 = vadd.f32 %v707, %v878
        %v936 = vadd.f32 %v712, %v883
        %v937 = vadd.f32 %v717, %v888
        %v938 = vadd.f32 %v722, %v893
        %v939 = vadd.f32 %v727, %v898
        %v940 = vadd.f32 %v732, %v903
        %v941 = vadd.f32 %v737, %v908
        %v942 = vadd.f32 %v910, %v911
        %v943 = vadd.f32 %v942, %v912
        %v944 = vadd.f32 %v943, %v913
        %v945 = vadd.f32 %v944, %v914
        %v946 = vadd.f32 %v945, %v915
        %v947 = vadd.f32 %v946, %v916
        %v948 = vadd.f32 %v947, %v917
        %v949 = vadd.f32 %v948, %v918
        %v950 = vadd.f32 %v949, %v919
        %v951 = vadd.f32 %v950, %v920
        %v952 = vadd.f32 %v951, %v921
        %v953 = vadd.f32 %v952, %v922
        %v954 = vadd.f32 %v953, %v923
        %v955 = vadd.f32 %v954, %v924
        %v956 = vadd.f32 %v955, %v925
        %v957 = vadd.f32 %v956, %v926
        %v958 = vadd.f32 %v957, %v927
        %v959 = vadd.f32 %v958, %v928
        %v960 = vadd.f32 %v959, %v929
        %v961 = vadd.f32 %v960, %v930
        %v962 = vadd.f32 %v961, %v931
        %v963 = vadd.f32 %v962, %v932
        %v964 = vadd.f32 %v963, %v933
        %v965 = vadd.f32 %v964, %v934
        %v966 = vadd.f32 %v965, %v935
        %v967 = vadd.f32 %v966, %v936
        %v968 = vadd.f32 %v967, %v937
        %v969 = vadd.f32 %v968, %v938
        %v970 = vadd.f32 %v969, %v939
        %v971 = vadd.f32 %v970, %v940
        %v972 = vadd.f32 %v971, %v941
        %v973 = vrot.slane %v972, 4
        %v974 = vadd.f32 %v972, %v973
        %v975 = vrot.slane %v974, 2
        %v976 = vadd.f32 %v974, %v975
        %v977 = vrot.slane %v976, 1
        %v978 = vadd.f32 %v976, %v977
        %v979 = vrcp.pop 256.0
        %v980 = vmul.f32 %v978, %v979
        %v981 = vmul.f32 %v910, %v910
        %v982 = vmul.f32 %v911, %v911
        %v983 = vmul.f32 %v912, %v912
        %v984 = vmul.f32 %v913, %v913
        %v985 = vmul.f32 %v914, %v914
        %v986 = vmul.f32 %v915, %v915
        %v987 = vmul.f32 %v916, %v916
        %v988 = vmul.f32 %v917, %v917
        %v989 = vmul.f32 %v918, %v918
        %v990 = vmul.f32 %v919, %v919
        %v991 = vmul.f32 %v920, %v920
        %v992 = vmul.f32 %v921, %v921
        %v993 = vmul.f32 %v922, %v922
        %v994 = vmul.f32 %v923, %v923
        %v995 = vmul.f32 %v924, %v924
        %v996 = vmul.f32 %v925, %v925
        %v997 = vmul.f32 %v926, %v926
        %v998 = vmul.f32 %v927, %v927
        %v999 = vmul.f32 %v928, %v928
        %v1000 = vmul.f32 %v929, %v929
        %v1001 = vmul.f32 %v930, %v930
        %v1002 = vmul.f32 %v931, %v931
        %v1003 = vmul.f32 %v932, %v932
        %v1004 = vmul.f32 %v933, %v933
        %v1005 = vmul.f32 %v934, %v934
        %v1006 = vmul.f32 %v935, %v935
        %v1007 = vmul.f32 %v936, %v936
        %v1008 = vmul.f32 %v937, %v937
        %v1009 = vmul.f32 %v938, %v938
        %v1010 = vmul.f32 %v939, %v939
        %v1011 = vmul.f32 %v940, %v940
        %v1012 = vmul.f32 %v941, %v941
        %v1013 = vadd.f32 %v981, %v982
        %v1014 = vadd.f32 %v1013, %v983
        %v1015 = vadd.f32 %v1014, %v984
        %v1016 = vadd.f32 %v1015, %v985
        %v1017 = vadd.f32 %v1016, %v986
        %v1018 = vadd.f32 %v1017, %v987
        %v1019 = vadd.f32 %v1018, %v988
        %v1020 = vadd.f32 %v1019, %v989
        %v1021 = vadd.f32 %v1020, %v990
        %v1022 = vadd.f32 %v1021, %v991
        %v1023 = vadd.f32 %v1022, %v992
        %v1024 = vadd.f32 %v1023, %v993
        %v1025 = vadd.f32 %v1024, %v994
        %v1026 = vadd.f32 %v1025, %v995
        %v1027 = vadd.f32 %v1026, %v996
        %v1028 = vadd.f32 %v1027, %v997
        %v1029 = vadd.f32 %v1028, %v998
        %v1030 = vadd.f32 %v1029, %v999
        %v1031 = vadd.f32 %v1030, %v1000
        %v1032 = vadd.f32 %v1031, %v1001
        %v1033 = vadd.f32 %v1032, %v1002
        %v1034 = vadd.f32 %v1033, %v1003
        %v1035 = vadd.f32 %v1034, %v1004
        %v1036 = vadd.f32 %v1035, %v1005
        %v1037 = vadd.f32 %v1036, %v1006
        %v1038 = vadd.f32 %v1037, %v1007
        %v1039 = vadd.f32 %v1038, %v1008
        %v1040 = vadd.f32 %v1039, %v1009
        %v1041 = vadd.f32 %v1040, %v1010
        %v1042 = vadd.f32 %v1041, %v1011
        %v1043 = vadd.f32 %v1042, %v1012
        %v1044 = vrot.slane %v1043, 4
        %v1045 = vadd.f32 %v1043, %v1044
        %v1046 = vrot.slane %v1045, 2
        %v1047 = vadd.f32 %v1045, %v1046
        %v1048 = vrot.slane %v1047, 1
        %v1049 = vadd.f32 %v1047, %v1048
        %v1050 = vmul.f32 %v1049, %v979
        %v1051 = vmul.f32 %v980, %v980
        %v1052 = vsub.f32 %v1050, %v1051
        %v1053 = vsub.f32 %v910, %v980
        %v1054 = vsub.f32 %v911, %v980
        %v1055 = vsub.f32 %v912, %v980
        %v1056 = vsub.f32 %v913, %v980
        %v1057 = vsub.f32 %v914, %v980
        %v1058 = vsub.f32 %v915, %v980
        %v1059 = vsub.f32 %v916, %v980
        %v1060 = vsub.f32 %v917, %v980
        %v1061 = vsub.f32 %v918, %v980
        %v1062 = vsub.f32 %v919, %v980
        %v1063 = vsub.f32 %v920, %v980
        %v1064 = vsub.f32 %v921, %v980
        %v1065 = vsub.f32 %v922, %v980
        %v1066 = vsub.f32 %v923, %v980
        %v1067 = vsub.f32 %v924, %v980
        %v1068 = vsub.f32 %v925, %v980
        %v1069 = vsub.f32 %v926, %v980
        %v1070 = vsub.f32 %v927, %v980
        %v1071 = vsub.f32 %v928, %v980
        %v1072 = vsub.f32 %v929, %v980
        %v1073 = vsub.f32 %v930, %v980
        %v1074 = vsub.f32 %v931, %v980
        %v1075 = vsub.f32 %v932, %v980
        %v1076 = vsub.f32 %v933, %v980
        %v1077 = vsub.f32 %v934, %v980
        %v1078 = vsub.f32 %v935, %v980
        %v1079 = vsub.f32 %v936, %v980
        %v1080 = vsub.f32 %v937, %v980
        %v1081 = vsub.f32 %v938, %v980
        %v1082 = vsub.f32 %v939, %v980
        %v1083 = vsub.f32 %v940, %v980
        %v1084 = vsub.f32 %v941, %v980
        %v1085 = vadd.f32 %v1052, 1e-05
        %v1086 = vrsqrt.pop %v1085
        %v1087 = vmul.f32 %v1053, %v1086
        %v1088 = vmul.f32 %v1054, %v1086
        %v1089 = vmul.f32 %v1055, %v1086
        %v1090 = vmul.f32 %v1056, %v1086
        %v1091 = vmul.f32 %v1057, %v1086
        %v1092 = vmul.f32 %v1058, %v1086
        %v1093 = vmul.f32 %v1059, %v1086
        %v1094 = vmul.f32 %v1060, %v1086
        %v1095 = vmul.f32 %v1061, %v1086
        %v1096 = vmul.f32 %v1062, %v1086
        %v1097 = vmul.f32 %v1063, %v1086
        %v1098 = vmul.f32 %v1064, %v1086
        %v1099 = vmul.f32 %v1065, %v1086
        %v1100 = vmul.f32 %v1066, %v1086
        %v1101 = vmul.f32 %v1067, %v1086
        %v1102 = vmul.f32 %v1068, %v1086
        %v1103 = vmul.f32 %v1069, %v1086
        %v1104 = vmul.f32 %v1070, %v1086
        %v1105 = vmul.f32 %v1071, %v1086
        %v1106 = vmul.f32 %v1072, %v1086
        %v1107 = vmul.f32 %v1073, %v1086
        %v1108 = vmul.f32 %v1074, %v1086
        %v1109 = vmul.f32 %v1075, %v1086
        %v1110 = vmul.f32 %v1076, %v1086
        %v1111 = vmul.f32 %v1077, %v1086
        %v1112 = vmul.f32 %v1078, %v1086
        %v1113 = vmul.f32 %v1079, %v1086
        %v1114 = vmul.f32 %v1080, %v1086
        %v1115 = vmul.f32 %v1081, %v1086
        %v1116 = vmul.f32 %v1082, %v1086
        %v1117 = vmul.f32 %v1083, %v1086
        %v1118 = vmul.f32 %v1084, %v1086
        %1119 = vset.pattern.permute.xlu0 1
        %1120 = vperm.xlu0 %1119, %v346
        %v1121 = vpop.permute.xlu0 %1120
        %1123 = vset.pattern.permute.xlu0 1
        %1124 = vperm.xlu0 %1123, %v347
        %v1125 = vpop.permute.xlu0 %1124
        %1127 = vset.pattern.permute.xlu0 1
        %1128 = vperm.xlu0 %1127, %v348
        %v1129 = vpop.permute.xlu0 %1128
        %1131 = vset.pattern.permute.xlu0 1
        %1132 = vperm.xlu0 %1131, %v349
        %v1133 = vpop.permute.xlu0 %1132
        %1135 = vset.pattern.permute.xlu0 1
        %1136 = vperm.xlu0 %1135, %v350
        %v1137 = vpop.permute.xlu0 %1136
        %1139 = vset.pattern.permute.xlu0 1
        %1140 = vperm.xlu0 %1139, %v351
        %v1141 = vpop.permute.xlu0 %1140
        %1143 = vset.pattern.permute.xlu0 1
        %1144 = vperm.xlu0 %1143, %v352
        %v1145 = vpop.permute.xlu0 %1144
        %1147 = vset.pattern.permute.xlu0 1
        %1148 = vperm.xlu0 %1147, %v353
        %v1149 = vpop.permute.xlu0 %1148
        %1151 = vset.pattern.permute.xlu0 1
        %1152 = vperm.xlu0 %1151, %v354
        %v1153 = vpop.permute.xlu0 %1152
        %1155 = vset.pattern.permute.xlu0 1
        %1156 = vperm.xlu0 %1155, %v355
        %v1157 = vpop.permute.xlu0 %1156
        %1159 = vset.pattern.permute.xlu0 1
        %1160 = vperm.xlu0 %1159, %v356
        %v1161 = vpop.permute.xlu0 %1160
        %1163 = vset.pattern.permute.xlu0 1
        %1164 = vperm.xlu0 %1163, %v357
        %v1165 = vpop.permute.xlu0 %1164
        %1167 = vset.pattern.permute.xlu0 1
        %1168 = vperm.xlu0 %1167, %v358
        %v1169 = vpop.permute.xlu0 %1168
        %1171 = vset.pattern.permute.xlu0 1
        %1172 = vperm.xlu0 %1171, %v359
        %v1173 = vpop.permute.xlu0 %1172
        %1175 = vset.pattern.permute.xlu0 1
        %1176 = vperm.xlu0 %1175, %v360
        %v1177 = vpop.permute.xlu0 %1176
        %1179 = vset.pattern.permute.xlu0 1
        %1180 = vperm.xlu0 %1179, %v361
        %v1181 = vpop.permute.xlu0 %1180
        %1183 = vset.pattern.permute.xlu0 1
        %1184 = vperm.xlu0 %1183, %v362
        %v1185 = vpop.permute.xlu0 %1184
        %1187 = vset.pattern.permute.xlu0 1
        %1188 = vperm.xlu0 %1187, %v363
        %v1189 = vpop.permute.xlu0 %1188
        %1191 = vset.pattern.permute.xlu0 1
        %1192 = vperm.xlu0 %1191, %v364
        %v1193 = vpop.permute.xlu0 %1192
        %1195 = vset.pattern.permute.xlu0 1
        %1196 = vperm.xlu0 %1195, %v365
        %v1197 = vpop.permute.xlu0 %1196
        %1199 = vset.pattern.permute.xlu0 1
        %1200 = vperm.xlu0 %1199, %v366
        %v1201 = vpop.permute.xlu0 %1200
        %1203 = vset.pattern.permute.xlu0 1
        %1204 = vperm.xlu0 %1203, %v367
        %v1205 = vpop.permute.xlu0 %1204
        %1207 = vset.pattern.permute.xlu0 1
        %1208 = vperm.xlu0 %1207, %v368
        %v1209 = vpop.permute.xlu0 %1208
        %1211 = vset.pattern.permute.xlu0 1
        %1212 = vperm.xlu0 %1211, %v369
        %v1213 = vpop.permute.xlu0 %1212
        %1215 = vset.pattern.permute.xlu0 1
        %1216 = vperm.xlu0 %1215, %v370
        %v1217 = vpop.permute.xlu0 %1216
        %1219 = vset.pattern.permute.xlu0 1
        %1220 = vperm.xlu0 %1219, %v371
        %v1221 = vpop.permute.xlu0 %1220
        %1223 = vset.pattern.permute.xlu0 1
        %1224 = vperm.xlu0 %1223, %v372
        %v1225 = vpop.permute.xlu0 %1224
        %1227 = vset.pattern.permute.xlu0 1
        %1228 = vperm.xlu0 %1227, %v373
        %v1229 = vpop.permute.xlu0 %1228
        %1231 = vset.pattern.permute.xlu0 1
        %1232 = vperm.xlu0 %1231, %v374
        %v1233 = vpop.permute.xlu0 %1232
        %1235 = vset.pattern.permute.xlu0 1
        %1236 = vperm.xlu0 %1235, %v375
        %v1237 = vpop.permute.xlu0 %1236
        %1239 = vset.pattern.permute.xlu0 1
        %1240 = vperm.xlu0 %1239, %v376
        %v1241 = vpop.permute.xlu0 %1240
        %1243 = vset.pattern.permute.xlu0 1
        %1244 = vperm.xlu0 %1243, %v377
        %v1245 = vpop.permute.xlu0 %1244
        %v1247 = vmul.f32 %v1087, %v1121
        %v1248 = vmul.f32 %v1088, %v1125
        %v1249 = vmul.f32 %v1089, %v1129
        %v1250 = vmul.f32 %v1090, %v1133
        %v1251 = vmul.f32 %v1091, %v1137
        %v1252 = vmul.f32 %v1092, %v1141
        %v1253 = vmul.f32 %v1093, %v1145
        %v1254 = vmul.f32 %v1094, %v1149
        %v1255 = vmul.f32 %v1095, %v1153
        %v1256 = vmul.f32 %v1096, %v1157
        %v1257 = vmul.f32 %v1097, %v1161
        %v1258 = vmul.f32 %v1098, %v1165
        %v1259 = vmul.f32 %v1099, %v1169
        %v1260 = vmul.f32 %v1100, %v1173
        %v1261 = vmul.f32 %v1101, %v1177
        %v1262 = vmul.f32 %v1102, %v1181
        %v1263 = vmul.f32 %v1103, %v1185
        %v1264 = vmul.f32 %v1104, %v1189
        %v1265 = vmul.f32 %v1105, %v1193
        %v1266 = vmul.f32 %v1106, %v1197
        %v1267 = vmul.f32 %v1107, %v1201
        %v1268 = vmul.f32 %v1108, %v1205
        %v1269 = vmul.f32 %v1109, %v1209
        %v1270 = vmul.f32 %v1110, %v1213
        %v1271 = vmul.f32 %v1111, %v1217
        %v1272 = vmul.f32 %v1112, %v1221
        %v1273 = vmul.f32 %v1113, %v1225
        %v1274 = vmul.f32 %v1114, %v1229
        %v1275 = vmul.f32 %v1115, %v1233
        %v1276 = vmul.f32 %v1116, %v1237
        %v1277 = vmul.f32 %v1117, %v1241
        %v1278 = vmul.f32 %v1118, %v1245
        %1279 = vset.pattern.permute.xlu0 2
        %1280 = vperm.xlu0 %1279, %v346
        %v1281 = vpop.permute.xlu0 %1280
        %1283 = vset.pattern.permute.xlu0 2
        %1284 = vperm.xlu0 %1283, %v347
        %v1285 = vpop.permute.xlu0 %1284
        %1287 = vset.pattern.permute.xlu0 2
        %1288 = vperm.xlu0 %1287, %v348
        %v1289 = vpop.permute.xlu0 %1288
        %1291 = vset.pattern.permute.xlu0 2
        %1292 = vperm.xlu0 %1291, %v349
        %v1293 = vpop.permute.xlu0 %1292
        %1295 = vset.pattern.permute.xlu0 2
        %1296 = vperm.xlu0 %1295, %v350
        %v1297 = vpop.permute.xlu0 %1296
        %1299 = vset.pattern.permute.xlu0 2
        %1300 = vperm.xlu0 %1299, %v351
        %v1301 = vpop.permute.xlu0 %1300
        %1303 = vset.pattern.permute.xlu0 2
        %1304 = vperm.xlu0 %1303, %v352
        %v1305 = vpop.permute.xlu0 %1304
        %1307 = vset.pattern.permute.xlu0 2
        %1308 = vperm.xlu0 %1307, %v353
        %v1309 = vpop.permute.xlu0 %1308
        %1311 = vset.pattern.permute.xlu0 2
        %1312 = vperm.xlu0 %1311, %v354
        %v1313 = vpop.permute.xlu0 %1312
        %1315 = vset.pattern.permute.xlu0 2
        %1316 = vperm.xlu0 %1315, %v355
        %v1317 = vpop.permute.xlu0 %1316
        %1319 = vset.pattern.permute.xlu0 2
        %1320 = vperm.xlu0 %1319, %v356
        %v1321 = vpop.permute.xlu0 %1320
        %1323 = vset.pattern.permute.xlu0 2
        %1324 = vperm.xlu0 %1323, %v357
        %v1325 = vpop.permute.xlu0 %1324
        %1327 = vset.pattern.permute.xlu0 2
        %1328 = vperm.xlu0 %1327, %v358
        %v1329 = vpop.permute.xlu0 %1328
        %1331 = vset.pattern.permute.xlu0 2
        %1332 = vperm.xlu0 %1331, %v359
        %v1333 = vpop.permute.xlu0 %1332
        %1335 = vset.pattern.permute.xlu0 2
        %1336 = vperm.xlu0 %1335, %v360
        %v1337 = vpop.permute.xlu0 %1336
        %1339 = vset.pattern.permute.xlu0 2
        %1340 = vperm.xlu0 %1339, %v361
        %v1341 = vpop.permute.xlu0 %1340
        %1343 = vset.pattern.permute.xlu0 2
        %1344 = vperm.xlu0 %1343, %v362
        %v1345 = vpop.permute.xlu0 %1344
        %1347 = vset.pattern.permute.xlu0 2
        %1348 = vperm.xlu0 %1347, %v363
        %v1349 = vpop.permute.xlu0 %1348
        %1351 = vset.pattern.permute.xlu0 2
        %1352 = vperm.xlu0 %1351, %v364
        %v1353 = vpop.permute.xlu0 %1352
        %1355 = vset.pattern.permute.xlu0 2
        %1356 = vperm.xlu0 %1355, %v365
        %v1357 = vpop.permute.xlu0 %1356
        %1359 = vset.pattern.permute.xlu0 2
        %1360 = vperm.xlu0 %1359, %v366
        %v1361 = vpop.permute.xlu0 %1360
        %1363 = vset.pattern.permute.xlu0 2
        %1364 = vperm.xlu0 %1363, %v367
        %v1365 = vpop.permute.xlu0 %1364
        %1367 = vset.pattern.permute.xlu0 2
        %1368 = vperm.xlu0 %1367, %v368
        %v1369 = vpop.permute.xlu0 %1368
        %1371 = vset.pattern.permute.xlu0 2
        %1372 = vperm.xlu0 %1371, %v369
        %v1373 = vpop.permute.xlu0 %1372
        %1375 = vset.pattern.permute.xlu0 2
        %1376 = vperm.xlu0 %1375, %v370
        %v1377 = vpop.permute.xlu0 %1376
        %1379 = vset.pattern.permute.xlu0 2
        %1380 = vperm.xlu0 %1379, %v371
        %v1381 = vpop.permute.xlu0 %1380
        %1383 = vset.pattern.permute.xlu0 2
        %1384 = vperm.xlu0 %1383, %v372
        %v1385 = vpop.permute.xlu0 %1384
        %1387 = vset.pattern.permute.xlu0 2
        %1388 = vperm.xlu0 %1387, %v373
        %v1389 = vpop.permute.xlu0 %1388
        %1391 = vset.pattern.permute.xlu0 2
        %1392 = vperm.xlu0 %1391, %v374
        %v1393 = vpop.permute.xlu0 %1392
        %1395 = vset.pattern.permute.xlu0 2
        %1396 = vperm.xlu0 %1395, %v375
        %v1397 = vpop.permute.xlu0 %1396
        %1399 = vset.pattern.permute.xlu0 2
        %1400 = vperm.xlu0 %1399, %v376
        %v1401 = vpop.permute.xlu0 %1400
        %1403 = vset.pattern.permute.xlu0 2
        %1404 = vperm.xlu0 %1403, %v377
        %v1405 = vpop.permute.xlu0 %1404
        %v1407 = vadd.f32 %v1247, %v1281
        %v1408 = vadd.f32 %v1248, %v1285
        %v1409 = vadd.f32 %v1249, %v1289
        %v1410 = vadd.f32 %v1250, %v1293
        %v1411 = vadd.f32 %v1251, %v1297
        %v1412 = vadd.f32 %v1252, %v1301
        %v1413 = vadd.f32 %v1253, %v1305
        %v1414 = vadd.f32 %v1254, %v1309
        %v1415 = vadd.f32 %v1255, %v1313
        %v1416 = vadd.f32 %v1256, %v1317
        %v1417 = vadd.f32 %v1257, %v1321
        %v1418 = vadd.f32 %v1258, %v1325
        %v1419 = vadd.f32 %v1259, %v1329
        %v1420 = vadd.f32 %v1260, %v1333
        %v1421 = vadd.f32 %v1261, %v1337
        %v1422 = vadd.f32 %v1262, %v1341
        %v1423 = vadd.f32 %v1263, %v1345
        %v1424 = vadd.f32 %v1264, %v1349
        %v1425 = vadd.f32 %v1265, %v1353
        %v1426 = vadd.f32 %v1266, %v1357
        %v1427 = vadd.f32 %v1267, %v1361
        %v1428 = vadd.f32 %v1268, %v1365
        %v1429 = vadd.f32 %v1269, %v1369
        %v1430 = vadd.f32 %v1270, %v1373
        %v1431 = vadd.f32 %v1271, %v1377
        %v1432 = vadd.f32 %v1272, %v1381
        %v1433 = vadd.f32 %v1273, %v1385
        %v1434 = vadd.f32 %v1274, %v1389
        %v1435 = vadd.f32 %v1275, %v1393
        %v1436 = vadd.f32 %v1276, %v1397
        %v1437 = vadd.f32 %v1277, %v1401
        %v1438 = vadd.f32 %v1278, %v1405
        %vm1439 = vcmp.gt.f32.partialorder %v1407, 0.0
        %vm1440 = vcmp.gt.f32.partialorder %v1408, 0.0
        %vm1441 = vcmp.gt.f32.partialorder %v1409, 0.0
        %vm1442 = vcmp.gt.f32.partialorder %v1410, 0.0
        %vm1443 = vcmp.gt.f32.partialorder %v1411, 0.0
        %vm1444 = vcmp.gt.f32.partialorder %v1412, 0.0
        %vm1445 = vcmp.gt.f32.partialorder %v1413, 0.0
        %vm1446 = vcmp.gt.f32.partialorder %v1414, 0.0
        %vm1447 = vcmp.gt.f32.partialorder %v1415, 0.0
        %vm1448 = vcmp.gt.f32.partialorder %v1416, 0.0
        %vm1449 = vcmp.gt.f32.partialorder %v1417, 0.0
        %vm1450 = vcmp.gt.f32.partialorder %v1418, 0.0
        %vm1451 = vcmp.gt.f32.partialorder %v1419, 0.0
        %vm1452 = vcmp.gt.f32.partialorder %v1420, 0.0
        %vm1453 = vcmp.gt.f32.partialorder %v1421, 0.0
        %vm1454 = vcmp.gt.f32.partialorder %v1422, 0.0
        %vm1455 = vcmp.gt.f32.partialorder %v1423, 0.0
        %vm1456 = vcmp.gt.f32.partialorder %v1424, 0.0
        %vm1457 = vcmp.gt.f32.partialorder %v1425, 0.0
        %vm1458 = vcmp.gt.f32.partialorder %v1426, 0.0
        %vm1459 = vcmp.gt.f32.partialorder %v1427, 0.0
        %vm1460 = vcmp.gt.f32.partialorder %v1428, 0.0
        %vm1461 = vcmp.gt.f32.partialorder %v1429, 0.0
        %vm1462 = vcmp.gt.f32.partialorder %v1430, 0.0
        %vm1463 = vcmp.gt.f32.partialorder %v1431, 0.0
        %vm1464 = vcmp.gt.f32.partialorder %v1432, 0.0
        %vm1465 = vcmp.gt.f32.partialorder %v1433, 0.0
        %vm1466 = vcmp.gt.f32.partialorder %v1434, 0.0
        %vm1467 = vcmp.gt.f32.partialorder %v1435, 0.0
        %vm1468 = vcmp.gt.f32.partialorder %v1436, 0.0
        %vm1469 = vcmp.gt.f32.partialorder %v1437, 0.0
        %vm1470 = vcmp.gt.f32.partialorder %v1438, 0.0
        %v1471 = vmul.f32 %v1407, 0.2
        %v1472 = vmul.f32 %v1408, 0.2
        %v1473 = vmul.f32 %v1409, 0.2
        %v1474 = vmul.f32 %v1410, 0.2
        %v1475 = vmul.f32 %v1411, 0.2
        %v1476 = vmul.f32 %v1412, 0.2
        %v1477 = vmul.f32 %v1413, 0.2
        %v1478 = vmul.f32 %v1414, 0.2
        %v1479 = vmul.f32 %v1415, 0.2
        %v1480 = vmul.f32 %v1416, 0.2
        %v1481 = vmul.f32 %v1417, 0.2
        %v1482 = vmul.f32 %v1418, 0.2
        %v1483 = vmul.f32 %v1419, 0.2
        %v1484 = vmul.f32 %v1420, 0.2
        %v1485 = vmul.f32 %v1421, 0.2
        %v1486 = vmul.f32 %v1422, 0.2
        %v1487 = vmul.f32 %v1423, 0.2
        %v1488 = vmul.f32 %v1424, 0.2
        %v1489 = vmul.f32 %v1425, 0.2
        %v1490 = vmul.f32 %v1426, 0.2
        %v1491 = vmul.f32 %v1427, 0.2
        %v1492 = vmul.f32 %v1428, 0.2
        %v1493 = vmul.f32 %v1429, 0.2
        %v1494 = vmul.f32 %v1430, 0.2
        %v1495 = vmul.f32 %v1431, 0.2
        %v1496 = vmul.f32 %v1432, 0.2
        %v1497 = vmul.f32 %v1433, 0.2
        %v1498 = vmul.f32 %v1434, 0.2
        %v1499 = vmul.f32 %v1435, 0.2
        %v1500 = vmul.f32 %v1436, 0.2
        %v1501 = vmul.f32 %v1437, 0.2
        %v1502 = vmul.f32 %v1438, 0.2
        %v1503 = vsel %vm1439, %v1407, %v1471
        %v1504 = vsel %vm1440, %v1408, %v1472
        %v1505 = vsel %vm1441, %v1409, %v1473
        %v1506 = vsel %vm1442, %v1410, %v1474
        %v1507 = vsel %vm1443, %v1411, %v1475
        %v1508 = vsel %vm1444, %v1412, %v1476
        %v1509 = vsel %vm1445, %v1413, %v1477
        %v1510 = vsel %vm1446, %v1414, %v1478
        %v1511 = vsel %vm1447, %v1415, %v1479
        %v1512 = vsel %vm1448, %v1416, %v1480
        %v1513 = vsel %vm1449, %v1417, %v1481
        %v1514 = vsel %vm1450, %v1418, %v1482
        %v1515 = vsel %vm1451, %v1419, %v1483
        %v1516 = vsel %vm1452, %v1420, %v1484
        %v1517 = vsel %vm1453, %v1421, %v1485
        %v1518 = vsel %vm1454, %v1422, %v1486
        %v1519 = vsel %vm1455, %v1423, %v1487
        %v1520 = vsel %vm1456, %v1424, %v1488
        %v1521 = vsel %vm1457, %v1425, %v1489
        %v1522 = vsel %vm1458, %v1426, %v1490
        %v1523 = vsel %vm1459, %v1427, %v1491
        %v1524 = vsel %vm1460, %v1428, %v1492
        %v1525 = vsel %vm1461, %v1429, %v1493
        %v1526 = vsel %vm1462, %v1430, %v1494
        %v1527 = vsel %vm1463, %v1431, %v1495
        %v1528 = vsel %vm1464, %v1432, %v1496
        %v1529 = vsel %vm1465, %v1433, %v1497
        %v1530 = vsel %vm1466, %v1434, %v1498
        %v1531 = vsel %vm1467, %v1435, %v1499
        %v1532 = vsel %vm1468, %v1436, %v1500
        %v1533 = vsel %vm1469, %v1437, %v1501
        %v1534 = vsel %vm1470, %v1438, %v1502
        %v1535 = vld [vmem:[%s2] sm:$0xff]
        %v1536 = vld [vmem:[%s2 + $0x8] sm:$0xff]
        %v1537 = vld [vmem:[%s2 + $0x10] sm:$0xff]
        %v1538 = vld [vmem:[%s2 + $0x18] sm:$0xff]
        %v1539 = vld [vmem:[%s2 + $0x20] sm:$0xff]
        %v1540 = vld [vmem:[%s2 + $0x28] sm:$0xff]
        %v1541 = vld [vmem:[%s2 + $0x30] sm:$0xff]
        %v1542 = vld [vmem:[%s2 + $0x38] sm:$0xff]
        %v1543 = vld [vmem:[%s2 + $0x40] sm:$0xff]
        %v1544 = vld [vmem:[%s2 + $0x48] sm:$0xff]
        %v1545 = vld [vmem:[%s2 + $0x50] sm:$0xff]
        %v1546 = vld [vmem:[%s2 + $0x58] sm:$0xff]
        %v1547 = vld [vmem:[%s2 + $0x60] sm:$0xff]
        %v1548 = vld [vmem:[%s2 + $0x68] sm:$0xff]
        %v1549 = vld [vmem:[%s2 + $0x70] sm:$0xff]
        %v1550 = vld [vmem:[%s2 + $0x78] sm:$0xff]
        %v1551 = vld [vmem:[%s2 + $0x80] sm:$0xff]
        %v1552 = vld [vmem:[%s2 + $0x88] sm:$0xff]
        %v1553 = vld [vmem:[%s2 + $0x90] sm:$0xff]
        %v1554 = vld [vmem:[%s2 + $0x98] sm:$0xff]
        %v1555 = vld [vmem:[%s2 + $0xa0] sm:$0xff]
        %v1556 = vld [vmem:[%s2 + $0xa8] sm:$0xff]
        %v1557 = vld [vmem:[%s2 + $0xb0] sm:$0xff]
        %v1558 = vld [vmem:[%s2 + $0xb8] sm:$0xff]
        %v1559 = vld [vmem:[%s2 + $0xc0] sm:$0xff]
        %v1560 = vld [vmem:[%s2 + $0xc8] sm:$0xff]
        %v1561 = vld [vmem:[%s2 + $0xd0] sm:$0xff]
        %v1562 = vld [vmem:[%s2 + $0xd8] sm:$0xff]
        %v1563 = vld [vmem:[%s2 + $0xe0] sm:$0xff]
        %v1564 = vld [vmem:[%s2 + $0xe8] sm:$0xff]
        %v1565 = vld [vmem:[%s2 + $0xf0] sm:$0xff]
        %v1566 = vld [vmem:[%s2 + $0xf8] sm:$0xff]
        %v1567 = vpack.c.bf16 %v1504, %v1503
        %v1568 = vpack.c.bf16 %v1506, %v1505
        %v1569 = vpack.c.bf16 %v1508, %v1507
        %v1570 = vpack.c.bf16 %v1510, %v1509
        %v1571 = vpack.c.bf16 %v1512, %v1511
        %v1572 = vpack.c.bf16 %v1514, %v1513
        %v1573 = vpack.c.bf16 %v1516, %v1515
        %v1574 = vpack.c.bf16 %v1518, %v1517
        %v1575 = vpack.c.bf16 %v1520, %v1519
        %v1576 = vpack.c.bf16 %v1522, %v1521
        %v1577 = vpack.c.bf16 %v1524, %v1523
        %v1578 = vpack.c.bf16 %v1526, %v1525
        %v1579 = vpack.c.bf16 %v1528, %v1527
        %v1580 = vpack.c.bf16 %v1530, %v1529
        %v1581 = vpack.c.bf16 %v1532, %v1531
        %v1582 = vpack.c.bf16 %v1534, %v1533
        %1583 = vset.pattern.permute.xlu0 3
        %1584 = vperm.xlu0 %1583, %v346
        %v1585 = vpop.permute.xlu0 %1584
        %1587 = vset.pattern.permute.xlu0 3
        %1588 = vperm.xlu0 %1587, %v347
        %v1589 = vpop.permute.xlu0 %1588
        %1591 = vset.pattern.permute.xlu0 3
        %1592 = vperm.xlu0 %1591, %v348
        %v1593 = vpop.permute.xlu0 %1592
        %1595 = vset.pattern.permute.xlu0 3
        %1596 = vperm.xlu0 %1595, %v349
        %v1597 = vpop.permute.xlu0 %1596
        %1599 = vset.pattern.permute.xlu0 3
        %1600 = vperm.xlu0 %1599, %v350
        %v1601 = vpop.permute.xlu0 %1600
        %1603 = vset.pattern.permute.xlu0 3
        %1604 = vperm.xlu0 %1603, %v351
        %v1605 = vpop.permute.xlu0 %1604
        %1607 = vset.pattern.permute.xlu0 3
        %1608 = vperm.xlu0 %1607, %v352
        %v1609 = vpop.permute.xlu0 %1608
        %1611 = vset.pattern.permute.xlu0 3
        %1612 = vperm.xlu0 %1611, %v353
        %v1613 = vpop.permute.xlu0 %1612
        %1615 = vset.pattern.permute.xlu0 3
        %1616 = vperm.xlu0 %1615, %v354
        %v1617 = vpop.permute.xlu0 %1616
        %1619 = vset.pattern.permute.xlu0 3
        %1620 = vperm.xlu0 %1619, %v355
        %v1621 = vpop.permute.xlu0 %1620
        %1623 = vset.pattern.permute.xlu0 3
        %1624 = vperm.xlu0 %1623, %v356
        %v1625 = vpop.permute.xlu0 %1624
        %1627 = vset.pattern.permute.xlu0 3
        %1628 = vperm.xlu0 %1627, %v357
        %v1629 = vpop.permute.xlu0 %1628
        %1631 = vset.pattern.permute.xlu0 3
        %1632 = vperm.xlu0 %1631, %v358
        %v1633 = vpop.permute.xlu0 %1632
        %1635 = vset.pattern.permute.xlu0 3
        %1636 = vperm.xlu0 %1635, %v359
        %v1637 = vpop.permute.xlu0 %1636
        %1639 = vset.pattern.permute.xlu0 3
        %1640 = vperm.xlu0 %1639, %v360
        %v1641 = vpop.permute.xlu0 %1640
        %1643 = vset.pattern.permute.xlu0 3
        %1644 = vperm.xlu0 %1643, %v361
        %v1645 = vpop.permute.xlu0 %1644
        %1647 = vset.pattern.permute.xlu0 3
        %1648 = vperm.xlu0 %1647, %v362
        %v1649 = vpop.permute.xlu0 %1648
        %1651 = vset.pattern.permute.xlu0 3
        %1652 = vperm.xlu0 %1651, %v363
        %v1653 = vpop.permute.xlu0 %1652
        %1655 = vset.pattern.permute.xlu0 3
        %1656 = vperm.xlu0 %1655, %v364
        %v1657 = vpop.permute.xlu0 %1656
        %1659 = vset.pattern.permute.xlu0 3
        %1660 = vperm.xlu0 %1659, %v365
        %v1661 = vpop.permute.xlu0 %1660
        %1663 = vset.pattern.permute.xlu0 3
        %1664 = vperm.xlu0 %1663, %v366
        %v1665 = vpop.permute.xlu0 %1664
        %1667 = vset.pattern.permute.xlu0 3
        %1668 = vperm.xlu0 %1667, %v367
        %v1669 = vpop.permute.xlu0 %1668
        %1671 = vset.pattern.permute.xlu0 3
        %1672 = vperm.xlu0 %1671, %v368
        %v1673 = vpop.permute.xlu0 %1672
        %1675 = vset.pattern.permute.xlu0 3
        %1676 = vperm.xlu0 %1675, %v369
        %v1677 = vpop.permute.xlu0 %1676
        %1679 = vset.pattern.permute.xlu0 3
        %1680 = vperm.xlu0 %1679, %v370
        %v1681 = vpop.permute.xlu0 %1680
        %1683 = vset.pattern.permute.xlu0 3
        %1684 = vperm.xlu0 %1683, %v371
        %v1685 = vpop.permute.xlu0 %1684
        %1687 = vset.pattern.permute.xlu0 3
        %1688 = vperm.xlu0 %1687, %v372
        %v1689 = vpop.permute.xlu0 %1688
        %1691 = vset.pattern.permute.xlu0 3
        %1692 = vperm.xlu0 %1691, %v373
        %v1693 = vpop.permute.xlu0 %1692
        %1695 = vset.pattern.permute.xlu0 3
        %1696 = vperm.xlu0 %1695, %v374
        %v1697 = vpop.permute.xlu0 %1696
        %1699 = vset.pattern.permute.xlu0 3
        %1700 = vperm.xlu0 %1699, %v375
        %v1701 = vpop.permute.xlu0 %1700
        %1703 = vset.pattern.permute.xlu0 3
        %1704 = vperm.xlu0 %1703, %v376
        %v1705 = vpop.permute.xlu0 %1704
        %1707 = vset.pattern.permute.xlu0 3
        %1708 = vperm.xlu0 %1707, %v377
        %v1709 = vpop.permute.xlu0 %1708
        %v1743 = vunpack.c.l.b16 %v1535
        %v1744 = vunpack.c.h.b16 %v1535
        %v1745 = vunpack.c.l.b16 %v1536
        %v1746 = vunpack.c.h.b16 %v1536
        %v1747 = vunpack.c.l.b16 %v1537
        %v1748 = vunpack.c.h.b16 %v1537
        %v1749 = vunpack.c.l.b16 %v1538
        %v1750 = vunpack.c.h.b16 %v1538
        %v1751 = vunpack.c.l.b16 %v1539
        %v1752 = vunpack.c.h.b16 %v1539
        %v1753 = vunpack.c.l.b16 %v1540
        %v1754 = vunpack.c.h.b16 %v1540
        %v1755 = vunpack.c.l.b16 %v1541
        %v1756 = vunpack.c.h.b16 %v1541
        %v1757 = vunpack.c.l.b16 %v1542
        %v1758 = vunpack.c.h.b16 %v1542
        %v1759 = vunpack.c.l.b16 %v1543
        %v1760 = vunpack.c.h.b16 %v1543
        %v1761 = vunpack.c.l.b16 %v1544
        %v1762 = vunpack.c.h.b16 %v1544
        %v1763 = vunpack.c.l.b16 %v1545
        %v1764 = vunpack.c.h.b16 %v1545
        %v1765 = vunpack.c.l.b16 %v1546
        %v1766 = vunpack.c.h.b16 %v1546
        %v1767 = vunpack.c.l.b16 %v1547
        %v1768 = vunpack.c.h.b16 %v1547
        %v1769 = vunpack.c.l.b16 %v1548
        %v1770 = vunpack.c.h.b16 %v1548
        %v1771 = vunpack.c.l.b16 %v1549
        %v1772 = vunpack.c.h.b16 %v1549
        %v1773 = vunpack.c.l.b16 %v1550
        %v1774 = vunpack.c.h.b16 %v1550
        %v1775 = vunpack.c.l.b16 %v1551
        %v1776 = vunpack.c.h.b16 %v1551
        %v1777 = vunpack.c.l.b16 %v1552
        %v1778 = vunpack.c.h.b16 %v1552
        %v1779 = vunpack.c.l.b16 %v1553
        %v1780 = vunpack.c.h.b16 %v1553
        %v1781 = vunpack.c.l.b16 %v1554
        %v1782 = vunpack.c.h.b16 %v1554
        %v1783 = vunpack.c.l.b16 %v1555
        %v1784 = vunpack.c.h.b16 %v1555
        %v1785 = vunpack.c.l.b16 %v1556
        %v1786 = vunpack.c.h.b16 %v1556
        %v1787 = vunpack.c.l.b16 %v1557
        %v1788 = vunpack.c.h.b16 %v1557
        %v1789 = vunpack.c.l.b16 %v1558
        %v1790 = vunpack.c.h.b16 %v1558
        %v1791 = vunpack.c.l.b16 %v1559
        %v1792 = vunpack.c.h.b16 %v1559
        %v1793 = vunpack.c.l.b16 %v1560
        %v1794 = vunpack.c.h.b16 %v1560
        %v1795 = vunpack.c.l.b16 %v1561
        %v1796 = vunpack.c.h.b16 %v1561
        %v1797 = vunpack.c.l.b16 %v1562
        %v1798 = vunpack.c.h.b16 %v1562
        %v1799 = vunpack.c.l.b16 %v1563
        %v1800 = vunpack.c.h.b16 %v1563
        %v1801 = vunpack.c.l.b16 %v1564
        %v1802 = vunpack.c.h.b16 %v1564
        %v1803 = vunpack.c.l.b16 %v1565
        %v1804 = vunpack.c.h.b16 %v1565
        %v1805 = vunpack.c.l.b16 %v1566
        %v1806 = vunpack.c.h.b16 %v1566
        %v1807 = vpack.c.b16 %v1745, %v1743
        %v1808 = vpack.c.b16 %v1746, %v1744
        %v1809 = vpack.c.b16 %v1749, %v1747
        %v1810 = vpack.c.b16 %v1750, %v1748
        %v1811 = vpack.c.b16 %v1753, %v1751
        %v1812 = vpack.c.b16 %v1754, %v1752
        %v1813 = vpack.c.b16 %v1757, %v1755
        %v1814 = vpack.c.b16 %v1758, %v1756
        %v1815 = vpack.c.b16 %v1761, %v1759
        %v1816 = vpack.c.b16 %v1762, %v1760
        %v1817 = vpack.c.b16 %v1765, %v1763
        %v1818 = vpack.c.b16 %v1766, %v1764
        %v1819 = vpack.c.b16 %v1769, %v1767
        %v1820 = vpack.c.b16 %v1770, %v1768
        %v1821 = vpack.c.b16 %v1773, %v1771
        %v1822 = vpack.c.b16 %v1774, %v1772
        %v1823 = vpack.c.b16 %v1777, %v1775
        %v1824 = vpack.c.b16 %v1778, %v1776
        %v1825 = vpack.c.b16 %v1781, %v1779
        %v1826 = vpack.c.b16 %v1782, %v1780
        %v1827 = vpack.c.b16 %v1785, %v1783
        %v1828 = vpack.c.b16 %v1786, %v1784
        %v1829 = vpack.c.b16 %v1789, %v1787
        %v1830 = vpack.c.b16 %v1790, %v1788
        %v1831 = vpack.c.b16 %v1793, %v1791
        %v1832 = vpack.c.b16 %v1794, %v1792
        %v1833 = vpack.c.b16 %v1797, %v1795
        %v1834 = vpack.c.b16 %v1798, %v1796
        %v1835 = vpack.c.b16 %v1801, %v1799
        %v1836 = vpack.c.b16 %v1802, %v1800
        %v1837 = vpack.c.b16 %v1805, %v1803
        %v1838 = vpack.c.b16 %v1806, %v1804
        %1871 = vmatprep.subr.bf16.mxu0 0
        %1872 = vmatpush1.bf16.msra.mxu0 %v1567
        %1873 = vmatprep.subr.bf16.mxu0 0
        %1874 = vmatpush1.bf16.msra.mxu0 %v1568
        %1875 = vmatprep.subr.bf16.mxu0 0
        %1876 = vmatpush1.bf16.msra.mxu0 %v1569
        %1877 = vmatprep.subr.bf16.mxu0 0
        %1878 = vmatpush1.bf16.msra.mxu0 %v1570
        %1879 = vmatprep.subr.bf16.mxu0 0
        %1880 = vmatpush1.bf16.msra.mxu0 %v1571
        %1881 = vmatprep.subr.bf16.mxu0 0
        %1882 = vmatpush1.bf16.msra.mxu0 %v1572
        %1883 = vmatprep.subr.bf16.mxu0 0
        %1884 = vmatpush1.bf16.msra.mxu0 %v1573
        %1885 = vmatprep.subr.bf16.mxu0 0
        %1886 = vmatpush1.bf16.msra.mxu0 %v1574
        %1887 = vmatprep.subr.bf16.mxu0 0
        %1888 = vmatpush1.bf16.msra.mxu0 %v1575
        %1889 = vmatprep.subr.bf16.mxu0 0
        %1890 = vmatpush1.bf16.msra.mxu0 %v1576
        %1891 = vmatprep.subr.bf16.mxu0 0
        %1892 = vmatpush1.bf16.msra.mxu0 %v1577
        %1893 = vmatprep.subr.bf16.mxu0 0
        %1894 = vmatpush1.bf16.msra.mxu0 %v1578
        %1895 = vmatprep.subr.bf16.mxu0 0
        %1896 = vmatpush1.bf16.msra.mxu0 %v1579
        %1897 = vmatprep.subr.bf16.mxu0 0
        %1898 = vmatpush1.bf16.msra.mxu0 %v1580
        %1899 = vmatprep.subr.bf16.mxu0 0
        %1900 = vmatpush1.bf16.msra.mxu0 %v1581
        %1901 = vmatprep.subr.bf16.mxu0 0
        %1902 = vmatpush1.bf16.msra.mxu0 %v1582
        %1903 = vmatprep.mubr.bf16.mxu0 %v1808
        %1904 = vmatmul.mubr.bf16.gmra.mrb[0].mxu0 %v1807
        %v1905 = vpop.f32.mrb[0].mxu0
        %v1906 = vadd.f32 %v1585, %v1905
        %v1907 = vpop.f32.mrb[0].mxu0
        %v1908 = vpop.f32.mrb[0].mxu0
        %v1909 = vadd.f32 %v1589, %v1908
        %v1910 = vpop.f32.mrb[0].mxu0
        %1911 = vmatprep.mubr.bf16.mxu0 %v1810
        %1912 = vmatmul.mubr.bf16.gmra.mrb[0].mxu0 %v1809
        %v1913 = vpop.f32.mrb[0].mxu0
        %v1914 = vadd.f32 %v1593, %v1913
        %v1915 = vpop.f32.mrb[0].mxu0
        %v1916 = vpop.f32.mrb[0].mxu0
        %v1917 = vadd.f32 %v1597, %v1916
        %v1918 = vpop.f32.mrb[0].mxu0
        %1919 = vmatprep.mubr.bf16.mxu0 %v1812
        %1920 = vmatmul.mubr.bf16.gmra.mrb[0].mxu0 %v1811
        %v1921 = vpop.f32.mrb[0].mxu0
        %v1922 = vadd.f32 %v1601, %v1921
        %v1923 = vpop.f32.mrb[0].mxu0
        %v1924 = vpop.f32.mrb[0].mxu0
        %v1925 = vadd.f32 %v1605, %v1924
        %v1926 = vpop.f32.mrb[0].mxu0
        %1927 = vmatprep.mubr.bf16.mxu0 %v1814
        %1928 = vmatmul.mubr.bf16.gmra.mrb[0].mxu0 %v1813
        %v1929 = vpop.f32.mrb[0].mxu0
        %v1930 = vadd.f32 %v1609, %v1929
        %v1931 = vpop.f32.mrb[0].mxu0
        %v1932 = vpop.f32.mrb[0].mxu0
        %v1933 = vadd.f32 %v1613, %v1932
        %v1934 = vpop.f32.mrb[0].mxu0
        %1935 = vmatprep.mubr.bf16.mxu0 %v1816
        %1936 = vmatmul.mubr.bf16.gmra.mrb[0].mxu0 %v1815
        %v1937 = vpop.f32.mrb[0].mxu0
        %v1938 = vadd.f32 %v1617, %v1937
        %v1939 = vpop.f32.mrb[0].mxu0
        %v1940 = vpop.f32.mrb[0].mxu0
        %v1941 = vadd.f32 %v1621, %v1940
        %v1942 = vpop.f32.mrb[0].mxu0
        %1943 = vmatprep.mubr.bf16.mxu0 %v1818
        %1944 = vmatmul.mubr.bf16.gmra.mrb[0].mxu0 %v1817
        %v1945 = vpop.f32.mrb[0].mxu0
        %v1946 = vadd.f32 %v1625, %v1945
        %v1947 = vpop.f32.mrb[0].mxu0
        %v1948 = vpop.f32.mrb[0].mxu0
        %v1949 = vadd.f32 %v1629, %v1948
        %v1950 = vpop.f32.mrb[0].mxu0
        %1951 = vmatprep.mubr.bf16.mxu0 %v1820
        %1952 = vmatmul.mubr.bf16.gmra.mrb[0].mxu0 %v1819
        %v1953 = vpop.f32.mrb[0].mxu0
        %v1954 = vadd.f32 %v1633, %v1953
        %v1955 = vpop.f32.mrb[0].mxu0
        %v1956 = vpop.f32.mrb[0].mxu0
        %v1957 = vadd.f32 %v1637, %v1956
        %v1958 = vpop.f32.mrb[0].mxu0
        %1959 = vmatprep.mubr.bf16.mxu0 %v1822
        %1960 = vmatmul.mubr.bf16.gmra.mrb[0].mxu0 %v1821
        %v1961 = vpop.f32.mrb[0].mxu0
        %v1962 = vadd.f32 %v1641, %v1961
        %v1963 = vpop.f32.mrb[0].mxu0
        %v1964 = vpop.f32.mrb[0].mxu0
        %v1965 = vadd.f32 %v1645, %v1964
        %v1966 = vpop.f32.mrb[0].mxu0
        %1967 = vmatprep.mubr.bf16.mxu0 %v1824
        %1968 = vmatmul.mubr.bf16.gmra.mrb[0].mxu0 %v1823
        %v1969 = vpop.f32.mrb[0].mxu0
        %v1970 = vadd.f32 %v1649, %v1969
        %v1971 = vpop.f32.mrb[0].mxu0
        %v1972 = vpop.f32.mrb[0].mxu0
        %v1973 = vadd.f32 %v1653, %v1972
        %v1974 = vpop.f32.mrb[0].mxu0
        %1975 = vmatprep.mubr.bf16.mxu0 %v1826
        %1976 = vmatmul.mubr.bf16.gmra.mrb[0].mxu0 %v1825
        %v1977 = vpop.f32.mrb[0].mxu0
        %v1978 = vadd.f32 %v1657, %v1977
        %v1979 = vpop.f32.mrb[0].mxu0
        %v1980 = vpop.f32.mrb[0].mxu0
        %v1981 = vadd.f32 %v1661, %v1980
        %v1982 = vpop.f32.mrb[0].mxu0
        %1983 = vmatprep.mubr.bf16.mxu0 %v1828
        %1984 = vmatmul.mubr.bf16.gmra.mrb[0].mxu0 %v1827
        %v1985 = vpop.f32.mrb[0].mxu0
        %v1986 = vadd.f32 %v1665, %v1985
        %v1987 = vpop.f32.mrb[0].mxu0
        %v1988 = vpop.f32.mrb[0].mxu0
        %v1989 = vadd.f32 %v1669, %v1988
        %v1990 = vpop.f32.mrb[0].mxu0
        %1991 = vmatprep.mubr.bf16.mxu0 %v1830
        %1992 = vmatmul.mubr.bf16.gmra.mrb[0].mxu0 %v1829
        %v1993 = vpop.f32.mrb[0].mxu0
        %v1994 = vadd.f32 %v1673, %v1993
        %v1995 = vpop.f32.mrb[0].mxu0
        %v1996 = vpop.f32.mrb[0].mxu0
        %v1997 = vadd.f32 %v1677, %v1996
        %v1998 = vpop.f32.mrb[0].mxu0
        %1999 = vmatprep.mubr.bf16.mxu0 %v1832
        %2000 = vmatmul.mubr.bf16.gmra.mrb[0].mxu0 %v1831
        %v2001 = vpop.f32.mrb[0].mxu0
        %v2002 = vadd.f32 %v1681, %v2001
        %v2003 = vpop.f32.mrb[0].mxu0
        %v2004 = vpop.f32.mrb[0].mxu0
        %v2005 = vadd.f32 %v1685, %v2004
        %v2006 = vpop.f32.mrb[0].mxu0
        %2007 = vmatprep.mubr.bf16.mxu0 %v1834
        %2008 = vmatmul.mubr.bf16.gmra.mrb[0].mxu0 %v1833
        %v2009 = vpop.f32.mrb[0].mxu0
        %v2010 = vadd.f32 %v1689, %v2009
        %v2011 = vpop.f32.mrb[0].mxu0
        %v2012 = vpop.f32.mrb[0].mxu0
        %v2013 = vadd.f32 %v1693, %v2012
        %v2014 = vpop.f32.mrb[0].mxu0
        %2015 = vmatprep.mubr.bf16.mxu0 %v1836
        %2016 = vmatmul.mubr.bf16.gmra.mrb[0].mxu0 %v1835
        %v2017 = vpop.f32.mrb[0].mxu0
        %v2018 = vadd.f32 %v1697, %v2017
        %v2019 = vpop.f32.mrb[0].mxu0
        %v2020 = vpop.f32.mrb[0].mxu0
        %v2021 = vadd.f32 %v1701, %v2020
        %v2022 = vpop.f32.mrb[0].mxu0
        %2023 = vmatprep.mubr.bf16.mxu0 %v1838
        %2024 = vmatmul.mubr.bf16.gmra.mrb[0].mxu0 %v1837
        %v2025 = vpop.f32.mrb[0].mxu0
        %v2026 = vadd.f32 %v1705, %v2025
        %v2027 = vpop.f32.mrb[0].mxu0
        %v2028 = vpop.f32.mrb[0].mxu0
        %v2029 = vadd.f32 %v1709, %v2028
        %v2030 = vpop.f32.mrb[0].mxu0
        %2031 = vdwg.mxu0
        %v2032 = vadd.f32 %v1906, %v1909
        %v2033 = vadd.f32 %v2032, %v1914
        %v2034 = vadd.f32 %v2033, %v1917
        %v2035 = vadd.f32 %v2034, %v1922
        %v2036 = vadd.f32 %v2035, %v1925
        %v2037 = vadd.f32 %v2036, %v1930
        %v2038 = vadd.f32 %v2037, %v1933
        %v2039 = vadd.f32 %v2038, %v1938
        %v2040 = vadd.f32 %v2039, %v1941
        %v2041 = vadd.f32 %v2040, %v1946
        %v2042 = vadd.f32 %v2041, %v1949
        %v2043 = vadd.f32 %v2042, %v1954
        %v2044 = vadd.f32 %v2043, %v1957
        %v2045 = vadd.f32 %v2044, %v1962
        %v2046 = vadd.f32 %v2045, %v1965
        %v2047 = vadd.f32 %v2046, %v1970
        %v2048 = vadd.f32 %v2047, %v1973
        %v2049 = vadd.f32 %v2048, %v1978
        %v2050 = vadd.f32 %v2049, %v1981
        %v2051 = vadd.f32 %v2050, %v1986
        %v2052 = vadd.f32 %v2051, %v1989
        %v2053 = vadd.f32 %v2052, %v1994
        %v2054 = vadd.f32 %v2053, %v1997
        %v2055 = vadd.f32 %v2054, %v2002
        %v2056 = vadd.f32 %v2055, %v2005
        %v2057 = vadd.f32 %v2056, %v2010
        %v2058 = vadd.f32 %v2057, %v2013
        %v2059 = vadd.f32 %v2058, %v2018
        %v2060 = vadd.f32 %v2059, %v2021
        %v2061 = vadd.f32 %v2060, %v2026
        %v2062 = vadd.f32 %v2061, %v2029
        %v2063 = vrot.slane %v2062, 4
        %v2064 = vadd.f32 %v2062, %v2063
        %v2065 = vrot.slane %v2064, 2
        %v2066 = vadd.f32 %v2064, %v2065
        %v2067 = vrot.slane %v2066, 1
        %v2068 = vadd.f32 %v2066, %v2067
        %v2069 = vmul.f32 %v2068, %v979
        %v2070 = vmul.f32 %v1906, %v1906
        %v2071 = vmul.f32 %v1909, %v1909
        %v2072 = vmul.f32 %v1914, %v1914
        %v2073 = vmul.f32 %v1917, %v1917
        %v2074 = vmul.f32 %v1922, %v1922
        %v2075 = vmul.f32 %v1925, %v1925
        %v2076 = vmul.f32 %v1930, %v1930
        %v2077 = vmul.f32 %v1933, %v1933
        %v2078 = vmul.f32 %v1938, %v1938
        %v2079 = vmul.f32 %v1941, %v1941
        %v2080 = vmul.f32 %v1946, %v1946
        %v2081 = vmul.f32 %v1949, %v1949
        %v2082 = vmul.f32 %v1954, %v1954
        %v2083 = vmul.f32 %v1957, %v1957
        %v2084 = vmul.f32 %v1962, %v1962
        %v2085 = vmul.f32 %v1965, %v1965
        %v2086 = vmul.f32 %v1970, %v1970
        %v2087 = vmul.f32 %v1973, %v1973
        %v2088 = vmul.f32 %v1978, %v1978
        %v2089 = vmul.f32 %v1981, %v1981
        %v2090 = vmul.f32 %v1986, %v1986
        %v2091 = vmul.f32 %v1989, %v1989
        %v2092 = vmul.f32 %v1994, %v1994
        %v2093 = vmul.f32 %v1997, %v1997
        %v2094 = vmul.f32 %v2002, %v2002
        %v2095 = vmul.f32 %v2005, %v2005
        %v2096 = vmul.f32 %v2010, %v2010
        %v2097 = vmul.f32 %v2013, %v2013
        %v2098 = vmul.f32 %v2018, %v2018
        %v2099 = vmul.f32 %v2021, %v2021
        %v2100 = vmul.f32 %v2026, %v2026
        %v2101 = vmul.f32 %v2029, %v2029
        %v2102 = vadd.f32 %v2070, %v2071
        %v2103 = vadd.f32 %v2102, %v2072
        %v2104 = vadd.f32 %v2103, %v2073
        %v2105 = vadd.f32 %v2104, %v2074
        %v2106 = vadd.f32 %v2105, %v2075
        %v2107 = vadd.f32 %v2106, %v2076
        %v2108 = vadd.f32 %v2107, %v2077
        %v2109 = vadd.f32 %v2108, %v2078
        %v2110 = vadd.f32 %v2109, %v2079
        %v2111 = vadd.f32 %v2110, %v2080
        %v2112 = vadd.f32 %v2111, %v2081
        %v2113 = vadd.f32 %v2112, %v2082
        %v2114 = vadd.f32 %v2113, %v2083
        %v2115 = vadd.f32 %v2114, %v2084
        %v2116 = vadd.f32 %v2115, %v2085
        %v2117 = vadd.f32 %v2116, %v2086
        %v2118 = vadd.f32 %v2117, %v2087
        %v2119 = vadd.f32 %v2118, %v2088
        %v2120 = vadd.f32 %v2119, %v2089
        %v2121 = vadd.f32 %v2120, %v2090
        %v2122 = vadd.f32 %v2121, %v2091
        %v2123 = vadd.f32 %v2122, %v2092
        %v2124 = vadd.f32 %v2123, %v2093
        %v2125 = vadd.f32 %v2124, %v2094
        %v2126 = vadd.f32 %v2125, %v2095
        %v2127 = vadd.f32 %v2126, %v2096
        %v2128 = vadd.f32 %v2127, %v2097
        %v2129 = vadd.f32 %v2128, %v2098
        %v2130 = vadd.f32 %v2129, %v2099
        %v2131 = vadd.f32 %v2130, %v2100
        %v2132 = vadd.f32 %v2131, %v2101
        %v2133 = vrot.slane %v2132, 4
        %v2134 = vadd.f32 %v2132, %v2133
        %v2135 = vrot.slane %v2134, 2
        %v2136 = vadd.f32 %v2134, %v2135
        %v2137 = vrot.slane %v2136, 1
        %v2138 = vadd.f32 %v2136, %v2137
        %v2139 = vmul.f32 %v2138, %v979
        %v2140 = vmul.f32 %v2069, %v2069
        %v2141 = vsub.f32 %v2139, %v2140
        %v2142 = vsub.f32 %v1906, %v2069
        %v2143 = vsub.f32 %v1909, %v2069
        %v2144 = vsub.f32 %v1914, %v2069
        %v2145 = vsub.f32 %v1917, %v2069
        %v2146 = vsub.f32 %v1922, %v2069
        %v2147 = vsub.f32 %v1925, %v2069
        %v2148 = vsub.f32 %v1930, %v2069
        %v2149 = vsub.f32 %v1933, %v2069
        %v2150 = vsub.f32 %v1938, %v2069
        %v2151 = vsub.f32 %v1941, %v2069
        %v2152 = vsub.f32 %v1946, %v2069
        %v2153 = vsub.f32 %v1949, %v2069
        %v2154 = vsub.f32 %v1954, %v2069
        %v2155 = vsub.f32 %v1957, %v2069
        %v2156 = vsub.f32 %v1962, %v2069
        %v2157 = vsub.f32 %v1965, %v2069
        %v2158 = vsub.f32 %v1970, %v2069
        %v2159 = vsub.f32 %v1973, %v2069
        %v2160 = vsub.f32 %v1978, %v2069
        %v2161 = vsub.f32 %v1981, %v2069
        %v2162 = vsub.f32 %v1986, %v2069
        %v2163 = vsub.f32 %v1989, %v2069
        %v2164 = vsub.f32 %v1994, %v2069
        %v2165 = vsub.f32 %v1997, %v2069
        %v2166 = vsub.f32 %v2002, %v2069
        %v2167 = vsub.f32 %v2005, %v2069
        %v2168 = vsub.f32 %v2010, %v2069
        %v2169 = vsub.f32 %v2013, %v2069
        %v2170 = vsub.f32 %v2018, %v2069
        %v2171 = vsub.f32 %v2021, %v2069
        %v2172 = vsub.f32 %v2026, %v2069
        %v2173 = vsub.f32 %v2029, %v2069
        %v2174 = vadd.f32 %v2141, 1e-05
        %v2175 = vrsqrt.pop %v2174
        %v2176 = vmul.f32 %v2142, %v2175
        %v2177 = vmul.f32 %v2143, %v2175
        %v2178 = vmul.f32 %v2144, %v2175
        %v2179 = vmul.f32 %v2145, %v2175
        %v2180 = vmul.f32 %v2146, %v2175
        %v2181 = vmul.f32 %v2147, %v2175
        %v2182 = vmul.f32 %v2148, %v2175
        %v2183 = vmul.f32 %v2149, %v2175
        %v2184 = vmul.f32 %v2150, %v2175
        %v2185 = vmul.f32 %v2151, %v2175
        %v2186 = vmul.f32 %v2152, %v2175
        %v2187 = vmul.f32 %v2153, %v2175
        %v2188 = vmul.f32 %v2154, %v2175
        %v2189 = vmul.f32 %v2155, %v2175
        %v2190 = vmul.f32 %v2156, %v2175
        %v2191 = vmul.f32 %v2157, %v2175
        %v2192 = vmul.f32 %v2158, %v2175
        %v2193 = vmul.f32 %v2159, %v2175
        %v2194 = vmul.f32 %v2160, %v2175
        %v2195 = vmul.f32 %v2161, %v2175
        %v2196 = vmul.f32 %v2162, %v2175
        %v2197 = vmul.f32 %v2163, %v2175
        %v2198 = vmul.f32 %v2164, %v2175
        %v2199 = vmul.f32 %v2165, %v2175
        %v2200 = vmul.f32 %v2166, %v2175
        %v2201 = vmul.f32 %v2167, %v2175
        %v2202 = vmul.f32 %v2168, %v2175
        %v2203 = vmul.f32 %v2169, %v2175
        %v2204 = vmul.f32 %v2170, %v2175
        %v2205 = vmul.f32 %v2171, %v2175
        %v2206 = vmul.f32 %v2172, %v2175
        %v2207 = vmul.f32 %v2173, %v2175
        %2208 = vset.pattern.permute.xlu0 4
        %2209 = vperm.xlu0 %2208, %v346
        %v2210 = vpop.permute.xlu0 %2209
        %2212 = vset.pattern.permute.xlu0 4
        %2213 = vperm.xlu0 %2212, %v347
        %v2214 = vpop.permute.xlu0 %2213
        %2216 = vset.pattern.permute.xlu0 4
        %2217 = vperm.xlu0 %2216, %v348
        %v2218 = vpop.permute.xlu0 %2217
        %2220 = vset.pattern.permute.xlu0 4
        %2221 = vperm.xlu0 %2220, %v349
        %v2222 = vpop.permute.xlu0 %2221
        %2224 = vset.pattern.permute.xlu0 4
        %2225 = vperm.xlu0 %2224, %v350
        %v2226 = vpop.permute.xlu0 %2225
        %2228 = vset.pattern.permute.xlu0 4
        %2229 = vperm.xlu0 %2228, %v351
        %v2230 = vpop.permute.xlu0 %2229
        %2232 = vset.pattern.permute.xlu0 4
        %2233 = vperm.xlu0 %2232, %v352
        %v2234 = vpop.permute.xlu0 %2233
        %2236 = vset.pattern.permute.xlu0 4
        %2237 = vperm.xlu0 %2236, %v353
        %v2238 = vpop.permute.xlu0 %2237
        %2240 = vset.pattern.permute.xlu0 4
        %2241 = vperm.xlu0 %2240, %v354
        %v2242 = vpop.permute.xlu0 %2241
        %2244 = vset.pattern.permute.xlu0 4
        %2245 = vperm.xlu0 %2244, %v355
        %v2246 = vpop.permute.xlu0 %2245
        %2248 = vset.pattern.permute.xlu0 4
        %2249 = vperm.xlu0 %2248, %v356
        %v2250 = vpop.permute.xlu0 %2249
        %2252 = vset.pattern.permute.xlu0 4
        %2253 = vperm.xlu0 %2252, %v357
        %v2254 = vpop.permute.xlu0 %2253
        %2256 = vset.pattern.permute.xlu0 4
        %2257 = vperm.xlu0 %2256, %v358
        %v2258 = vpop.permute.xlu0 %2257
        %2260 = vset.pattern.permute.xlu0 4
        %2261 = vperm.xlu0 %2260, %v359
        %v2262 = vpop.permute.xlu0 %2261
        %2264 = vset.pattern.permute.xlu0 4
        %2265 = vperm.xlu0 %2264, %v360
        %v2266 = vpop.permute.xlu0 %2265
        %2268 = vset.pattern.permute.xlu0 4
        %2269 = vperm.xlu0 %2268, %v361
        %v2270 = vpop.permute.xlu0 %2269
        %2272 = vset.pattern.permute.xlu0 4
        %2273 = vperm.xlu0 %2272, %v362
        %v2274 = vpop.permute.xlu0 %2273
        %2276 = vset.pattern.permute.xlu0 4
        %2277 = vperm.xlu0 %2276, %v363
        %v2278 = vpop.permute.xlu0 %2277
        %2280 = vset.pattern.permute.xlu0 4
        %2281 = vperm.xlu0 %2280, %v364
        %v2282 = vpop.permute.xlu0 %2281
        %2284 = vset.pattern.permute.xlu0 4
        %2285 = vperm.xlu0 %2284, %v365
        %v2286 = vpop.permute.xlu0 %2285
        %2288 = vset.pattern.permute.xlu0 4
        %2289 = vperm.xlu0 %2288, %v366
        %v2290 = vpop.permute.xlu0 %2289
        %2292 = vset.pattern.permute.xlu0 4
        %2293 = vperm.xlu0 %2292, %v367
        %v2294 = vpop.permute.xlu0 %2293
        %2296 = vset.pattern.permute.xlu0 4
        %2297 = vperm.xlu0 %2296, %v368
        %v2298 = vpop.permute.xlu0 %2297
        %2300 = vset.pattern.permute.xlu0 4
        %2301 = vperm.xlu0 %2300, %v369
        %v2302 = vpop.permute.xlu0 %2301
        %2304 = vset.pattern.permute.xlu0 4
        %2305 = vperm.xlu0 %2304, %v370
        %v2306 = vpop.permute.xlu0 %2305
        %2308 = vset.pattern.permute.xlu0 4
        %2309 = vperm.xlu0 %2308, %v371
        %v2310 = vpop.permute.xlu0 %2309
        %2312 = vset.pattern.permute.xlu0 4
        %2313 = vperm.xlu0 %2312, %v372
        %v2314 = vpop.permute.xlu0 %2313
        %2316 = vset.pattern.permute.xlu0 4
        %2317 = vperm.xlu0 %2316, %v373
        %v2318 = vpop.permute.xlu0 %2317
        %2320 = vset.pattern.permute.xlu0 4
        %2321 = vperm.xlu0 %2320, %v374
        %v2322 = vpop.permute.xlu0 %2321
        %2324 = vset.pattern.permute.xlu0 4
        %2325 = vperm.xlu0 %2324, %v375
        %v2326 = vpop.permute.xlu0 %2325
        %2328 = vset.pattern.permute.xlu0 4
        %2329 = vperm.xlu0 %2328, %v376
        %v2330 = vpop.permute.xlu0 %2329
        %2332 = vset.pattern.permute.xlu0 4
        %2333 = vperm.xlu0 %2332, %v377
        %v2334 = vpop.permute.xlu0 %2333
        %v2336 = vmul.f32 %v2176, %v2210
        %v2337 = vmul.f32 %v2177, %v2214
        %v2338 = vmul.f32 %v2178, %v2218
        %v2339 = vmul.f32 %v2179, %v2222
        %v2340 = vmul.f32 %v2180, %v2226
        %v2341 = vmul.f32 %v2181, %v2230
        %v2342 = vmul.f32 %v2182, %v2234
        %v2343 = vmul.f32 %v2183, %v2238
        %v2344 = vmul.f32 %v2184, %v2242
        %v2345 = vmul.f32 %v2185, %v2246
        %v2346 = vmul.f32 %v2186, %v2250
        %v2347 = vmul.f32 %v2187, %v2254
        %v2348 = vmul.f32 %v2188, %v2258
        %v2349 = vmul.f32 %v2189, %v2262
        %v2350 = vmul.f32 %v2190, %v2266
        %v2351 = vmul.f32 %v2191, %v2270
        %v2352 = vmul.f32 %v2192, %v2274
        %v2353 = vmul.f32 %v2193, %v2278
        %v2354 = vmul.f32 %v2194, %v2282
        %v2355 = vmul.f32 %v2195, %v2286
        %v2356 = vmul.f32 %v2196, %v2290
        %v2357 = vmul.f32 %v2197, %v2294
        %v2358 = vmul.f32 %v2198, %v2298
        %v2359 = vmul.f32 %v2199, %v2302
        %v2360 = vmul.f32 %v2200, %v2306
        %v2361 = vmul.f32 %v2201, %v2310
        %v2362 = vmul.f32 %v2202, %v2314
        %v2363 = vmul.f32 %v2203, %v2318
        %v2364 = vmul.f32 %v2204, %v2322
        %v2365 = vmul.f32 %v2205, %v2326
        %v2366 = vmul.f32 %v2206, %v2330
        %v2367 = vmul.f32 %v2207, %v2334
        %2368 = vset.pattern.permute.xlu0 5
        %2369 = vperm.xlu0 %2368, %v346
        %v2370 = vpop.permute.xlu0 %2369
        %2372 = vset.pattern.permute.xlu0 5
        %2373 = vperm.xlu0 %2372, %v347
        %v2374 = vpop.permute.xlu0 %2373
        %2376 = vset.pattern.permute.xlu0 5
        %2377 = vperm.xlu0 %2376, %v348
        %v2378 = vpop.permute.xlu0 %2377
        %2380 = vset.pattern.permute.xlu0 5
        %2381 = vperm.xlu0 %2380, %v349
        %v2382 = vpop.permute.xlu0 %2381
        %2384 = vset.pattern.permute.xlu0 5
        %2385 = vperm.xlu0 %2384, %v350
        %v2386 = vpop.permute.xlu0 %2385
        %2388 = vset.pattern.permute.xlu0 5
        %2389 = vperm.xlu0 %2388, %v351
        %v2390 = vpop.permute.xlu0 %2389
        %2392 = vset.pattern.permute.xlu0 5
        %2393 = vperm.xlu0 %2392, %v352
        %v2394 = vpop.permute.xlu0 %2393
        %2396 = vset.pattern.permute.xlu0 5
        %2397 = vperm.xlu0 %2396, %v353
        %v2398 = vpop.permute.xlu0 %2397
        %2400 = vset.pattern.permute.xlu0 5
        %2401 = vperm.xlu0 %2400, %v354
        %v2402 = vpop.permute.xlu0 %2401
        %2404 = vset.pattern.permute.xlu0 5
        %2405 = vperm.xlu0 %2404, %v355
        %v2406 = vpop.permute.xlu0 %2405
        %2408 = vset.pattern.permute.xlu0 5
        %2409 = vperm.xlu0 %2408, %v356
        %v2410 = vpop.permute.xlu0 %2409
        %2412 = vset.pattern.permute.xlu0 5
        %2413 = vperm.xlu0 %2412, %v357
        %v2414 = vpop.permute.xlu0 %2413
        %2416 = vset.pattern.permute.xlu0 5
        %2417 = vperm.xlu0 %2416, %v358
        %v2418 = vpop.permute.xlu0 %2417
        %2420 = vset.pattern.permute.xlu0 5
        %2421 = vperm.xlu0 %2420, %v359
        %v2422 = vpop.permute.xlu0 %2421
        %2424 = vset.pattern.permute.xlu0 5
        %2425 = vperm.xlu0 %2424, %v360
        %v2426 = vpop.permute.xlu0 %2425
        %2428 = vset.pattern.permute.xlu0 5
        %2429 = vperm.xlu0 %2428, %v361
        %v2430 = vpop.permute.xlu0 %2429
        %2432 = vset.pattern.permute.xlu0 5
        %2433 = vperm.xlu0 %2432, %v362
        %v2434 = vpop.permute.xlu0 %2433
        %2436 = vset.pattern.permute.xlu0 5
        %2437 = vperm.xlu0 %2436, %v363
        %v2438 = vpop.permute.xlu0 %2437
        %2440 = vset.pattern.permute.xlu0 5
        %2441 = vperm.xlu0 %2440, %v364
        %v2442 = vpop.permute.xlu0 %2441
        %2444 = vset.pattern.permute.xlu0 5
        %2445 = vperm.xlu0 %2444, %v365
        %v2446 = vpop.permute.xlu0 %2445
        %2448 = vset.pattern.permute.xlu0 5
        %2449 = vperm.xlu0 %2448, %v366
        %v2450 = vpop.permute.xlu0 %2449
        %2452 = vset.pattern.permute.xlu0 5
        %2453 = vperm.xlu0 %2452, %v367
        %v2454 = vpop.permute.xlu0 %2453
        %2456 = vset.pattern.permute.xlu0 5
        %2457 = vperm.xlu0 %2456, %v368
        %v2458 = vpop.permute.xlu0 %2457
        %2460 = vset.pattern.permute.xlu0 5
        %2461 = vperm.xlu0 %2460, %v369
        %v2462 = vpop.permute.xlu0 %2461
        %2464 = vset.pattern.permute.xlu0 5
        %2465 = vperm.xlu0 %2464, %v370
        %v2466 = vpop.permute.xlu0 %2465
        %2468 = vset.pattern.permute.xlu0 5
        %2469 = vperm.xlu0 %2468, %v371
        %v2470 = vpop.permute.xlu0 %2469
        %2472 = vset.pattern.permute.xlu0 5
        %2473 = vperm.xlu0 %2472, %v372
        %v2474 = vpop.permute.xlu0 %2473
        %2476 = vset.pattern.permute.xlu0 5
        %2477 = vperm.xlu0 %2476, %v373
        %v2478 = vpop.permute.xlu0 %2477
        %2480 = vset.pattern.permute.xlu0 5
        %2481 = vperm.xlu0 %2480, %v374
        %v2482 = vpop.permute.xlu0 %2481
        %2484 = vset.pattern.permute.xlu0 5
        %2485 = vperm.xlu0 %2484, %v375
        %v2486 = vpop.permute.xlu0 %2485
        %2488 = vset.pattern.permute.xlu0 5
        %2489 = vperm.xlu0 %2488, %v376
        %v2490 = vpop.permute.xlu0 %2489
        %2492 = vset.pattern.permute.xlu0 5
        %2493 = vperm.xlu0 %2492, %v377
        %v2494 = vpop.permute.xlu0 %2493
        %v2496 = vadd.f32 %v2336, %v2370
        %v2497 = vadd.f32 %v2337, %v2374
        %v2498 = vadd.f32 %v2338, %v2378
        %v2499 = vadd.f32 %v2339, %v2382
        %v2500 = vadd.f32 %v2340, %v2386
        %v2501 = vadd.f32 %v2341, %v2390
        %v2502 = vadd.f32 %v2342, %v2394
        %v2503 = vadd.f32 %v2343, %v2398
        %v2504 = vadd.f32 %v2344, %v2402
        %v2505 = vadd.f32 %v2345, %v2406
        %v2506 = vadd.f32 %v2346, %v2410
        %v2507 = vadd.f32 %v2347, %v2414
        %v2508 = vadd.f32 %v2348, %v2418
        %v2509 = vadd.f32 %v2349, %v2422
        %v2510 = vadd.f32 %v2350, %v2426
        %v2511 = vadd.f32 %v2351, %v2430
        %v2512 = vadd.f32 %v2352, %v2434
        %v2513 = vadd.f32 %v2353, %v2438
        %v2514 = vadd.f32 %v2354, %v2442
        %v2515 = vadd.f32 %v2355, %v2446
        %v2516 = vadd.f32 %v2356, %v2450
        %v2517 = vadd.f32 %v2357, %v2454
        %v2518 = vadd.f32 %v2358, %v2458
        %v2519 = vadd.f32 %v2359, %v2462
        %v2520 = vadd.f32 %v2360, %v2466
        %v2521 = vadd.f32 %v2361, %v2470
        %v2522 = vadd.f32 %v2362, %v2474
        %v2523 = vadd.f32 %v2363, %v2478
        %v2524 = vadd.f32 %v2364, %v2482
        %v2525 = vadd.f32 %v2365, %v2486
        %v2526 = vadd.f32 %v2366, %v2490
        %v2527 = vadd.f32 %v2367, %v2494
        %vm2528 = vcmp.gt.f32.partialorder %v2496, 0.0
        %vm2529 = vcmp.gt.f32.partialorder %v2497, 0.0
        %vm2530 = vcmp.gt.f32.partialorder %v2498, 0.0
        %vm2531 = vcmp.gt.f32.partialorder %v2499, 0.0
        %vm2532 = vcmp.gt.f32.partialorder %v2500, 0.0
        %vm2533 = vcmp.gt.f32.partialorder %v2501, 0.0
        %vm2534 = vcmp.gt.f32.partialorder %v2502, 0.0
        %vm2535 = vcmp.gt.f32.partialorder %v2503, 0.0
        %vm2536 = vcmp.gt.f32.partialorder %v2504, 0.0
        %vm2537 = vcmp.gt.f32.partialorder %v2505, 0.0
        %vm2538 = vcmp.gt.f32.partialorder %v2506, 0.0
        %vm2539 = vcmp.gt.f32.partialorder %v2507, 0.0
        %vm2540 = vcmp.gt.f32.partialorder %v2508, 0.0
        %vm2541 = vcmp.gt.f32.partialorder %v2509, 0.0
        %vm2542 = vcmp.gt.f32.partialorder %v2510, 0.0
        %vm2543 = vcmp.gt.f32.partialorder %v2511, 0.0
        %vm2544 = vcmp.gt.f32.partialorder %v2512, 0.0
        %vm2545 = vcmp.gt.f32.partialorder %v2513, 0.0
        %vm2546 = vcmp.gt.f32.partialorder %v2514, 0.0
        %vm2547 = vcmp.gt.f32.partialorder %v2515, 0.0
        %vm2548 = vcmp.gt.f32.partialorder %v2516, 0.0
        %vm2549 = vcmp.gt.f32.partialorder %v2517, 0.0
        %vm2550 = vcmp.gt.f32.partialorder %v2518, 0.0
        %vm2551 = vcmp.gt.f32.partialorder %v2519, 0.0
        %vm2552 = vcmp.gt.f32.partialorder %v2520, 0.0
        %vm2553 = vcmp.gt.f32.partialorder %v2521, 0.0
        %vm2554 = vcmp.gt.f32.partialorder %v2522, 0.0
        %vm2555 = vcmp.gt.f32.partialorder %v2523, 0.0
        %vm2556 = vcmp.gt.f32.partialorder %v2524, 0.0
        %vm2557 = vcmp.gt.f32.partialorder %v2525, 0.0
        %vm2558 = vcmp.gt.f32.partialorder %v2526, 0.0
        %vm2559 = vcmp.gt.f32.partialorder %v2527, 0.0
        %v2560 = vmul.f32 %v2496, 0.2
        %v2561 = vmul.f32 %v2497, 0.2
        %v2562 = vmul.f32 %v2498, 0.2
        %v2563 = vmul.f32 %v2499, 0.2
        %v2564 = vmul.f32 %v2500, 0.2
        %v2565 = vmul.f32 %v2501, 0.2
        %v2566 = vmul.f32 %v2502, 0.2
        %v2567 = vmul.f32 %v2503, 0.2
        %v2568 = vmul.f32 %v2504, 0.2
        %v2569 = vmul.f32 %v2505, 0.2
        %v2570 = vmul.f32 %v2506, 0.2
        %v2571 = vmul.f32 %v2507, 0.2
        %v2572 = vmul.f32 %v2508, 0.2
        %v2573 = vmul.f32 %v2509, 0.2
        %v2574 = vmul.f32 %v2510, 0.2
        %v2575 = vmul.f32 %v2511, 0.2
        %v2576 = vmul.f32 %v2512, 0.2
        %v2577 = vmul.f32 %v2513, 0.2
        %v2578 = vmul.f32 %v2514, 0.2
        %v2579 = vmul.f32 %v2515, 0.2
        %v2580 = vmul.f32 %v2516, 0.2
        %v2581 = vmul.f32 %v2517, 0.2
        %v2582 = vmul.f32 %v2518, 0.2
        %v2583 = vmul.f32 %v2519, 0.2
        %v2584 = vmul.f32 %v2520, 0.2
        %v2585 = vmul.f32 %v2521, 0.2
        %v2586 = vmul.f32 %v2522, 0.2
        %v2587 = vmul.f32 %v2523, 0.2
        %v2588 = vmul.f32 %v2524, 0.2
        %v2589 = vmul.f32 %v2525, 0.2
        %v2590 = vmul.f32 %v2526, 0.2
        %v2591 = vmul.f32 %v2527, 0.2
        %v2592 = vsel %vm2528, %v2496, %v2560
        %v2593 = vsel %vm2529, %v2497, %v2561
        %v2594 = vsel %vm2530, %v2498, %v2562
        %v2595 = vsel %vm2531, %v2499, %v2563
        %v2596 = vsel %vm2532, %v2500, %v2564
        %v2597 = vsel %vm2533, %v2501, %v2565
        %v2598 = vsel %vm2534, %v2502, %v2566
        %v2599 = vsel %vm2535, %v2503, %v2567
        %v2600 = vsel %vm2536, %v2504, %v2568
        %v2601 = vsel %vm2537, %v2505, %v2569
        %v2602 = vsel %vm2538, %v2506, %v2570
        %v2603 = vsel %vm2539, %v2507, %v2571
        %v2604 = vsel %vm2540, %v2508, %v2572
        %v2605 = vsel %vm2541, %v2509, %v2573
        %v2606 = vsel %vm2542, %v2510, %v2574
        %v2607 = vsel %vm2543, %v2511, %v2575
        %v2608 = vsel %vm2544, %v2512, %v2576
        %v2609 = vsel %vm2545, %v2513, %v2577
        %v2610 = vsel %vm2546, %v2514, %v2578
        %v2611 = vsel %vm2547, %v2515, %v2579
        %v2612 = vsel %vm2548, %v2516, %v2580
        %v2613 = vsel %vm2549, %v2517, %v2581
        %v2614 = vsel %vm2550, %v2518, %v2582
        %v2615 = vsel %vm2551, %v2519, %v2583
        %v2616 = vsel %vm2552, %v2520, %v2584
        %v2617 = vsel %vm2553, %v2521, %v2585
        %v2618 = vsel %vm2554, %v2522, %v2586
        %v2619 = vsel %vm2555, %v2523, %v2587
        %v2620 = vsel %vm2556, %v2524, %v2588
        %v2621 = vsel %vm2557, %v2525, %v2589
        %v2622 = vsel %vm2558, %v2526, %v2590
        %v2623 = vsel %vm2559, %v2527, %v2591
        %v2624 = vld [vmem:[%s3] sm:$0xff]
        %v2625 = vld [vmem:[%s3 + $0x8] sm:$0xff]
        %v2626 = vpack.c.bf16 %v2593, %v2592
        %v2627 = vpack.c.bf16 %v2595, %v2594
        %v2628 = vpack.c.bf16 %v2597, %v2596
        %v2629 = vpack.c.bf16 %v2599, %v2598
        %v2630 = vpack.c.bf16 %v2601, %v2600
        %v2631 = vpack.c.bf16 %v2603, %v2602
        %v2632 = vpack.c.bf16 %v2605, %v2604
        %v2633 = vpack.c.bf16 %v2607, %v2606
        %v2634 = vpack.c.bf16 %v2609, %v2608
        %v2635 = vpack.c.bf16 %v2611, %v2610
        %v2636 = vpack.c.bf16 %v2613, %v2612
        %v2637 = vpack.c.bf16 %v2615, %v2614
        %v2638 = vpack.c.bf16 %v2617, %v2616
        %v2639 = vpack.c.bf16 %v2619, %v2618
        %v2640 = vpack.c.bf16 %v2621, %v2620
        %v2641 = vpack.c.bf16 %v2623, %v2622
        %v2644 = vunpack.c.l.b16 %v2624
        %v2645 = vunpack.c.h.b16 %v2624
        %v2646 = vunpack.c.l.b16 %v2625
        %v2647 = vunpack.c.h.b16 %v2625
        %v2648 = vpack.c.b16 %v2646, %v2644
        %v2649 = vpack.c.b16 %v2647, %v2645
        %2652 = vmatprep.subr.bf16.mxu0 0
        %2653 = vmatpush1.bf16.msra.mxu0 %v2626
        %2654 = vmatprep.subr.bf16.mxu0 0
        %2655 = vmatpush1.bf16.msra.mxu0 %v2627
        %2656 = vmatprep.subr.bf16.mxu0 0
        %2657 = vmatpush1.bf16.msra.mxu0 %v2628
        %2658 = vmatprep.subr.bf16.mxu0 0
        %2659 = vmatpush1.bf16.msra.mxu0 %v2629
        %2660 = vmatprep.subr.bf16.mxu0 0
        %2661 = vmatpush1.bf16.msra.mxu0 %v2630
        %2662 = vmatprep.subr.bf16.mxu0 0
        %2663 = vmatpush1.bf16.msra.mxu0 %v2631
        %2664 = vmatprep.subr.bf16.mxu0 0
        %2665 = vmatpush1.bf16.msra.mxu0 %v2632
        %2666 = vmatprep.subr.bf16.mxu0 0
        %2667 = vmatpush1.bf16.msra.mxu0 %v2633
        %2668 = vmatprep.subr.bf16.mxu0 0
        %2669 = vmatpush1.bf16.msra.mxu0 %v2634
        %2670 = vmatprep.subr.bf16.mxu0 0
        %2671 = vmatpush1.bf16.msra.mxu0 %v2635
        %2672 = vmatprep.subr.bf16.mxu0 0
        %2673 = vmatpush1.bf16.msra.mxu0 %v2636
        %2674 = vmatprep.subr.bf16.mxu0 0
        %2675 = vmatpush1.bf16.msra.mxu0 %v2637
        %2676 = vmatprep.subr.bf16.mxu0 0
        %2677 = vmatpush1.bf16.msra.mxu0 %v2638
        %2678 = vmatprep.subr.bf16.mxu0 0
        %2679 = vmatpush1.bf16.msra.mxu0 %v2639
        %2680 = vmatprep.subr.bf16.mxu0 0
        %2681 = vmatpush1.bf16.msra.mxu0 %v2640
        %2682 = vmatprep.subr.bf16.mxu0 0
        %2683 = vmatpush1.bf16.msra.mxu0 %v2641
        %2684 = vmatprep.mubr.bf16.mxu0 %v2649
        %2685 = vmatmul.mubr.bf16.gmra.mrb[0].mxu0 %v2648
        %v2686 = vpop.f32.mrb[0].mxu0
        %v2687 = vadd.f32 0.0, %v2686
        %v2688 = vpop.f32.mrb[0].mxu0
        %v2689 = vpop.f32.mrb[0].mxu0
        %v2690 = vadd.f32 0.0, %v2689
        %v2691 = vpop.f32.mrb[0].mxu0
        %2692 = vdwg.mxu0
        %2693 = vset.pattern.permute.xlu0 6
        %2694 = vperm.xlu0 %2693, %v346
        %v2695 = vpop.permute.xlu0 %2694
        %v2697 = vadd.f32 %v2687, %v2695
        %v2698 = vtanh.pop %v2697
        %v2699 = vmul.f32 %v2698, 2.0
        %2700 = vset.pattern.permute.xlu0 7
        %2701 = vperm.xlu0 %2700, %v346
        %v2702 = vpop.permute.xlu0 %2701
        %v2704 = vadd.f32 %v2690, %v2702
        %v2705 = vmul.f32 %v2699, 1.442695
        %v2706 = vpow.pop %v2705
        %v2707 = vmul.f32 %v345, %v2706
        %v2708 = vadd.f32 %v2707, %v2704
        %v2709 = vrot.slane %v2699, 4
        %v2710 = vadd.f32 %v2699, %v2709
        %v2711 = vrot.slane %v2710, 2
        %v2712 = vadd.f32 %v2710, %v2711
        %v2713 = vrot.slane %v2712, 1
        %v2714 = vadd.f32 %v2712, %v2713
        %v2715 = vadd.f32 %v2714, 0.0
        %v2716 = vld [vmem:[%s4] sm:$0xff]
        %v2717 = vld [vmem:[%s4 + $0x8] sm:$0xff]
        %v2719 = vsel %vm412, %v2716, 0
        %v2722 = vsel %vm412, %v2717, 0
        %2724 = vmatprep.subr.mxu0 0.0
        %2725 = vmatpush1.msra.mxu0 %v2708
        %2726 = vmatprep.subr.mxu0 0.0
        %2727 = vmatpush1.msra.mxu0 0.0
        %2728 = vmatprep.subr.mxu0 0.0
        %2729 = vmatpush1.msra.mxu0 0.0
        %2730 = vmatprep.subr.mxu0 0.0
        %2731 = vmatpush1.msra.mxu0 0.0
        %2732 = vmatprep.subr.mxu0 0.0
        %2733 = vmatpush1.msra.mxu0 0.0
        %2734 = vmatprep.subr.mxu0 0.0
        %2735 = vmatpush1.msra.mxu0 0.0
        %2736 = vmatprep.subr.mxu0 0.0
        %2737 = vmatpush1.msra.mxu0 0.0
        %2738 = vmatprep.subr.mxu0 0.0
        %2739 = vmatpush1.msra.mxu0 0.0
        %2740 = vmatprep.subr.mxu0 0.0
        %2741 = vmatpush1.msra.mxu0 0.0
        %2742 = vmatprep.subr.mxu0 0.0
        %2743 = vmatpush1.msra.mxu0 0.0
        %2744 = vmatprep.subr.mxu0 0.0
        %2745 = vmatpush1.msra.mxu0 0.0
        %2746 = vmatprep.subr.mxu0 0.0
        %2747 = vmatpush1.msra.mxu0 0.0
        %2748 = vmatprep.subr.mxu0 0.0
        %2749 = vmatpush1.msra.mxu0 0.0
        %2750 = vmatprep.subr.mxu0 0.0
        %2751 = vmatpush1.msra.mxu0 0.0
        %2752 = vmatprep.subr.mxu0 0.0
        %2753 = vmatpush1.msra.mxu0 0.0
        %2754 = vmatprep.subr.mxu0 0.0
        %2755 = vmatpush1.msra.mxu0 0.0
        %2756 = vmatprep.subr.mxu0 0.0
        %2757 = vmatpush1.msra.mxu0 0.0
        %2758 = vmatprep.subr.mxu0 0.0
        %2759 = vmatpush1.msra.mxu0 0.0
        %2760 = vmatprep.subr.mxu0 0.0
        %2761 = vmatpush1.msra.mxu0 0.0
        %2762 = vmatprep.subr.mxu0 0.0
        %2763 = vmatpush1.msra.mxu0 0.0
        %2764 = vmatprep.subr.mxu0 0.0
        %2765 = vmatpush1.msra.mxu0 0.0
        %2766 = vmatprep.subr.mxu0 0.0
        %2767 = vmatpush1.msra.mxu0 0.0
        %2768 = vmatprep.subr.mxu0 0.0
        %2769 = vmatpush1.msra.mxu0 0.0
        %2770 = vmatprep.subr.mxu0 0.0
        %2771 = vmatpush1.msra.mxu0 0.0
        %2772 = vmatprep.subr.mxu0 0.0
        %2773 = vmatpush1.msra.mxu0 0.0
        %2774 = vmatprep.subr.mxu0 0.0
        %2775 = vmatpush1.msra.mxu0 0.0
        %2776 = vmatprep.subr.mxu0 0.0
        %2777 = vmatpush1.msra.mxu0 0.0
        %2778 = vmatprep.subr.mxu0 0.0
        %2779 = vmatpush1.msra.mxu0 0.0
        %2780 = vmatprep.subr.mxu0 0.0
        %2781 = vmatpush1.msra.mxu0 0.0
        %2782 = vmatprep.subr.mxu0 0.0
        %2783 = vmatpush1.msra.mxu0 0.0
        %2784 = vmatprep.subr.mxu0 0.0
        %2785 = vmatpush1.msra.mxu0 0.0
        %2786 = vmatprep.subr.mxu0 0.0
        %2787 = vmatpush1.msra.mxu0 0.0
        %2788 = vmatprep.mubr.f32.mxu0 0.0
        %2789 = vmatmul.mubr.f32.gmra.mrb[0].mxu0 %v2719
        %v2790 = vpop.f32.mrb[0].mxu0
        %v2791 = vadd.f32 0.0, %v2790
        %v2792 = vpop.f32.mrb[0].mxu0
        %2793 = vmatprep.mubr.f32.mxu0 0.0
        %2794 = vmatmul.mubr.f32.gmra.mrb[0].mxu0 %v2722
        %v2795 = vpop.f32.mrb[0].mxu0
        %v2796 = vadd.f32 0.0, %v2795
        %v2797 = vpop.f32.mrb[0].mxu0
        %2798 = vdwg.mxu0
        %v2799 = vadd.f32 %v742, %v2791
        %v2800 = vadd.f32 %v747, %v2796
        %2801 = vset.pattern.permute.xlu0 8
        %2802 = vperm.xlu0 %2801, %v346
        %v2803 = vpop.permute.xlu0 %2802
        %2805 = vset.pattern.permute.xlu0 8
        %2806 = vperm.xlu0 %2805, %v347
        %v2807 = vpop.permute.xlu0 %2806
        %v2809 = vadd.f32 %v2799, %v2803
        %v2810 = vadd.f32 %v2800, %v2807
        %s2811 = scalar_lea.vmem %s5, 256
        %v2812 = vld [vmem:[%s2811] sm:$0xff]
        %v2813 = vld [vmem:[%s2811 + $0x8] sm:$0xff]
        %v2814 = vld [vmem:[%s2811 + $0x10] sm:$0xff]
        %v2815 = vld [vmem:[%s2811 + $0x18] sm:$0xff]
        %v2816 = vld [vmem:[%s2811 + $0x20] sm:$0xff]
        %v2817 = vld [vmem:[%s2811 + $0x28] sm:$0xff]
        %v2818 = vld [vmem:[%s2811 + $0x30] sm:$0xff]
        %v2819 = vld [vmem:[%s2811 + $0x38] sm:$0xff]
        %v2820 = vld [vmem:[%s2811 + $0x40] sm:$0xff]
        %v2821 = vld [vmem:[%s2811 + $0x48] sm:$0xff]
        %v2822 = vld [vmem:[%s2811 + $0x50] sm:$0xff]
        %v2823 = vld [vmem:[%s2811 + $0x58] sm:$0xff]
        %v2824 = vld [vmem:[%s2811 + $0x60] sm:$0xff]
        %v2825 = vld [vmem:[%s2811 + $0x68] sm:$0xff]
        %v2826 = vld [vmem:[%s2811 + $0x70] sm:$0xff]
        %v2827 = vld [vmem:[%s2811 + $0x78] sm:$0xff]
        %v2828 = vld [vmem:[%s2811 + $0x80] sm:$0xff]
        %v2829 = vld [vmem:[%s2811 + $0x88] sm:$0xff]
        %v2830 = vld [vmem:[%s2811 + $0x90] sm:$0xff]
        %v2831 = vld [vmem:[%s2811 + $0x98] sm:$0xff]
        %v2832 = vld [vmem:[%s2811 + $0xa0] sm:$0xff]
        %v2833 = vld [vmem:[%s2811 + $0xa8] sm:$0xff]
        %v2834 = vld [vmem:[%s2811 + $0xb0] sm:$0xff]
        %v2835 = vld [vmem:[%s2811 + $0xb8] sm:$0xff]
        %v2836 = vld [vmem:[%s2811 + $0xc0] sm:$0xff]
        %v2837 = vld [vmem:[%s2811 + $0xc8] sm:$0xff]
        %v2838 = vld [vmem:[%s2811 + $0xd0] sm:$0xff]
        %v2839 = vld [vmem:[%s2811 + $0xd8] sm:$0xff]
        %v2840 = vld [vmem:[%s2811 + $0xe0] sm:$0xff]
        %v2841 = vld [vmem:[%s2811 + $0xe8] sm:$0xff]
        %v2842 = vld [vmem:[%s2811 + $0xf0] sm:$0xff]
        %v2843 = vld [vmem:[%s2811 + $0xf8] sm:$0xff]
        %s2844 = scalar_lea.vmem %s1, 272
        %v2845 = vld [vmem:[%s2844] sm:$0xff]
        %v2846 = vld [vmem:[%s2844 + $0x8] sm:$0xff]
        %v2847 = vld [vmem:[%s2844 + $0x10] sm:$0xff]
        %v2848 = vld [vmem:[%s2844 + $0x18] sm:$0xff]
        %v2849 = vld [vmem:[%s2844 + $0x20] sm:$0xff]
        %v2850 = vld [vmem:[%s2844 + $0x28] sm:$0xff]
        %v2851 = vld [vmem:[%s2844 + $0x30] sm:$0xff]
        %v2852 = vld [vmem:[%s2844 + $0x38] sm:$0xff]
        %v2853 = vld [vmem:[%s2844 + $0x40] sm:$0xff]
        %v2854 = vld [vmem:[%s2844 + $0x48] sm:$0xff]
        %v2855 = vld [vmem:[%s2844 + $0x50] sm:$0xff]
        %v2856 = vld [vmem:[%s2844 + $0x58] sm:$0xff]
        %v2857 = vld [vmem:[%s2844 + $0x60] sm:$0xff]
        %v2858 = vld [vmem:[%s2844 + $0x68] sm:$0xff]
        %v2859 = vld [vmem:[%s2844 + $0x70] sm:$0xff]
        %v2860 = vld [vmem:[%s2844 + $0x78] sm:$0xff]
        %v2861 = vld [vmem:[%s2844 + $0x80] sm:$0xff]
        %v2862 = vld [vmem:[%s2844 + $0x88] sm:$0xff]
        %v2863 = vld [vmem:[%s2844 + $0x90] sm:$0xff]
        %v2864 = vld [vmem:[%s2844 + $0x98] sm:$0xff]
        %v2865 = vld [vmem:[%s2844 + $0xa0] sm:$0xff]
        %v2866 = vld [vmem:[%s2844 + $0xa8] sm:$0xff]
        %v2867 = vld [vmem:[%s2844 + $0xb0] sm:$0xff]
        %v2868 = vld [vmem:[%s2844 + $0xb8] sm:$0xff]
        %v2869 = vld [vmem:[%s2844 + $0xc0] sm:$0xff]
        %v2870 = vld [vmem:[%s2844 + $0xc8] sm:$0xff]
        %v2871 = vld [vmem:[%s2844 + $0xd0] sm:$0xff]
        %v2872 = vld [vmem:[%s2844 + $0xd8] sm:$0xff]
        %v2873 = vld [vmem:[%s2844 + $0xe0] sm:$0xff]
        %v2874 = vld [vmem:[%s2844 + $0xe8] sm:$0xff]
        %v2875 = vld [vmem:[%s2844 + $0xf0] sm:$0xff]
        %v2876 = vld [vmem:[%s2844 + $0xf8] sm:$0xff]
        %v2877 = vld [vmem:[%s2844 + $0x100] sm:$0xff]
        %v2878 = vld [vmem:[%s2844 + $0x108] sm:$0xff]
        %v2880 = vsel %vm412, %v2845, 0
        %v2883 = vsel %vm412, %v2846, 0
        %v2886 = vsel %vm412, %v2847, 0
        %v2889 = vsel %vm412, %v2848, 0
        %v2892 = vsel %vm412, %v2849, 0
        %v2895 = vsel %vm412, %v2850, 0
        %v2898 = vsel %vm412, %v2851, 0
        %v2901 = vsel %vm412, %v2852, 0
        %v2904 = vsel %vm412, %v2853, 0
        %v2907 = vsel %vm412, %v2854, 0
        %v2910 = vsel %vm412, %v2855, 0
        %v2913 = vsel %vm412, %v2856, 0
        %v2916 = vsel %vm412, %v2857, 0
        %v2919 = vsel %vm412, %v2858, 0
        %v2922 = vsel %vm412, %v2859, 0
        %v2925 = vsel %vm412, %v2860, 0
        %v2928 = vsel %vm412, %v2861, 0
        %v2931 = vsel %vm412, %v2862, 0
        %v2934 = vsel %vm412, %v2863, 0
        %v2937 = vsel %vm412, %v2864, 0
        %v2940 = vsel %vm412, %v2865, 0
        %v2943 = vsel %vm412, %v2866, 0
        %v2946 = vsel %vm412, %v2867, 0
        %v2949 = vsel %vm412, %v2868, 0
        %v2952 = vsel %vm412, %v2869, 0
        %v2955 = vsel %vm412, %v2870, 0
        %v2958 = vsel %vm412, %v2871, 0
        %v2961 = vsel %vm412, %v2872, 0
        %v2964 = vsel %vm412, %v2873, 0
        %v2967 = vsel %vm412, %v2874, 0
        %v2970 = vsel %vm412, %v2875, 0
        %v2973 = vsel %vm412, %v2876, 0
        %v2976 = vsel %vm412, %v2877, 0
        %v2979 = vsel %vm412, %v2878, 0
        %2981 = vmatprep.subr.mxu0 0.0
        %2982 = vmatpush1.msra.mxu0 %v2809
        %2983 = vmatprep.subr.mxu0 0.0
        %2984 = vmatpush1.msra.mxu0 0.0
        %2985 = vmatprep.subr.mxu0 0.0
        %2986 = vmatpush1.msra.mxu0 0.0
        %2987 = vmatprep.subr.mxu0 0.0
        %2988 = vmatpush1.msra.mxu0 0.0
        %2989 = vmatprep.subr.mxu0 0.0
        %2990 = vmatpush1.msra.mxu0 0.0
        %2991 = vmatprep.subr.mxu0 0.0
        %2992 = vmatpush1.msra.mxu0 0.0
        %2993 = vmatprep.subr.mxu0 0.0
        %2994 = vmatpush1.msra.mxu0 0.0
        %2995 = vmatprep.subr.mxu0 0.0
        %2996 = vmatpush1.msra.mxu0 0.0
        %2997 = vmatprep.subr.mxu0 0.0
        %2998 = vmatpush1.msra.mxu0 0.0
        %2999 = vmatprep.subr.mxu0 0.0
        %3000 = vmatpush1.msra.mxu0 0.0
        %3001 = vmatprep.subr.mxu0 0.0
        %3002 = vmatpush1.msra.mxu0 0.0
        %3003 = vmatprep.subr.mxu0 0.0
        %3004 = vmatpush1.msra.mxu0 0.0
        %3005 = vmatprep.subr.mxu0 0.0
        %3006 = vmatpush1.msra.mxu0 0.0
        %3007 = vmatprep.subr.mxu0 0.0
        %3008 = vmatpush1.msra.mxu0 0.0
        %3009 = vmatprep.subr.mxu0 0.0
        %3010 = vmatpush1.msra.mxu0 0.0
        %3011 = vmatprep.subr.mxu0 0.0
        %3012 = vmatpush1.msra.mxu0 0.0
        %3013 = vmatprep.subr.mxu0 0.0
        %3014 = vmatpush1.msra.mxu0 0.0
        %3015 = vmatprep.subr.mxu0 0.0
        %3016 = vmatpush1.msra.mxu0 0.0
        %3017 = vmatprep.subr.mxu0 0.0
        %3018 = vmatpush1.msra.mxu0 0.0
        %3019 = vmatprep.subr.mxu0 0.0
        %3020 = vmatpush1.msra.mxu0 0.0
        %3021 = vmatprep.subr.mxu0 0.0
        %3022 = vmatpush1.msra.mxu0 0.0
        %3023 = vmatprep.subr.mxu0 0.0
        %3024 = vmatpush1.msra.mxu0 0.0
        %3025 = vmatprep.subr.mxu0 0.0
        %3026 = vmatpush1.msra.mxu0 0.0
        %3027 = vmatprep.subr.mxu0 0.0
        %3028 = vmatpush1.msra.mxu0 0.0
        %3029 = vmatprep.subr.mxu0 0.0
        %3030 = vmatpush1.msra.mxu0 0.0
        %3031 = vmatprep.subr.mxu0 0.0
        %3032 = vmatpush1.msra.mxu0 0.0
        %3033 = vmatprep.subr.mxu0 0.0
        %3034 = vmatpush1.msra.mxu0 0.0
        %3035 = vmatprep.subr.mxu0 0.0
        %3036 = vmatpush1.msra.mxu0 0.0
        %3037 = vmatprep.subr.mxu0 0.0
        %3038 = vmatpush1.msra.mxu0 0.0
        %3039 = vmatprep.subr.mxu0 0.0
        %3040 = vmatpush1.msra.mxu0 0.0
        %3041 = vmatprep.subr.mxu0 0.0
        %3042 = vmatpush1.msra.mxu0 0.0
        %3043 = vmatprep.subr.mxu0 0.0
        %3044 = vmatpush1.msra.mxu0 0.0
        %3045 = vmatprep.mubr.f32.mxu0 0.0
        %3046 = vmatmul.mubr.f32.gmra.mrb[0].mxu0 %v2880
        %v3047 = vpop.f32.mrb[0].mxu0
        %v3048 = vadd.f32 0.0, %v3047
        %v3049 = vpop.f32.mrb[0].mxu0
        %3050 = vmatprep.mubr.f32.mxu0 0.0
        %3051 = vmatmul.mubr.f32.gmra.mrb[0].mxu0 %v2883
        %v3052 = vpop.f32.mrb[0].mxu0
        %v3053 = vadd.f32 0.0, %v3052
        %v3054 = vpop.f32.mrb[0].mxu0
        %3055 = vmatprep.mubr.f32.mxu0 0.0
        %3056 = vmatmul.mubr.f32.gmra.mrb[0].mxu0 %v2886
        %v3057 = vpop.f32.mrb[0].mxu0
        %v3058 = vadd.f32 0.0, %v3057
        %v3059 = vpop.f32.mrb[0].mxu0
        %3060 = vmatprep.mubr.f32.mxu0 0.0
        %3061 = vmatmul.mubr.f32.gmra.mrb[0].mxu0 %v2889
        %v3062 = vpop.f32.mrb[0].mxu0
        %v3063 = vadd.f32 0.0, %v3062
        %v3064 = vpop.f32.mrb[0].mxu0
        %3065 = vmatprep.mubr.f32.mxu0 0.0
        %3066 = vmatmul.mubr.f32.gmra.mrb[0].mxu0 %v2892
        %v3067 = vpop.f32.mrb[0].mxu0
        %v3068 = vadd.f32 0.0, %v3067
        %v3069 = vpop.f32.mrb[0].mxu0
        %3070 = vmatprep.mubr.f32.mxu0 0.0
        %3071 = vmatmul.mubr.f32.gmra.mrb[0].mxu0 %v2895
        %v3072 = vpop.f32.mrb[0].mxu0
        %v3073 = vadd.f32 0.0, %v3072
        %v3074 = vpop.f32.mrb[0].mxu0
        %3075 = vmatprep.mubr.f32.mxu0 0.0
        %3076 = vmatmul.mubr.f32.gmra.mrb[0].mxu0 %v2898
        %v3077 = vpop.f32.mrb[0].mxu0
        %v3078 = vadd.f32 0.0, %v3077
        %v3079 = vpop.f32.mrb[0].mxu0
        %3080 = vmatprep.mubr.f32.mxu0 0.0
        %3081 = vmatmul.mubr.f32.gmra.mrb[0].mxu0 %v2901
        %v3082 = vpop.f32.mrb[0].mxu0
        %v3083 = vadd.f32 0.0, %v3082
        %v3084 = vpop.f32.mrb[0].mxu0
        %3085 = vmatprep.mubr.f32.mxu0 0.0
        %3086 = vmatmul.mubr.f32.gmra.mrb[0].mxu0 %v2904
        %v3087 = vpop.f32.mrb[0].mxu0
        %v3088 = vadd.f32 0.0, %v3087
        %v3089 = vpop.f32.mrb[0].mxu0
        %3090 = vmatprep.mubr.f32.mxu0 0.0
        %3091 = vmatmul.mubr.f32.gmra.mrb[0].mxu0 %v2907
        %v3092 = vpop.f32.mrb[0].mxu0
        %v3093 = vadd.f32 0.0, %v3092
        %v3094 = vpop.f32.mrb[0].mxu0
        %3095 = vmatprep.mubr.f32.mxu0 0.0
        %3096 = vmatmul.mubr.f32.gmra.mrb[0].mxu0 %v2910
        %v3097 = vpop.f32.mrb[0].mxu0
        %v3098 = vadd.f32 0.0, %v3097
        %v3099 = vpop.f32.mrb[0].mxu0
        %3100 = vmatprep.mubr.f32.mxu0 0.0
        %3101 = vmatmul.mubr.f32.gmra.mrb[0].mxu0 %v2913
        %v3102 = vpop.f32.mrb[0].mxu0
        %v3103 = vadd.f32 0.0, %v3102
        %v3104 = vpop.f32.mrb[0].mxu0
        %3105 = vmatprep.mubr.f32.mxu0 0.0
        %3106 = vmatmul.mubr.f32.gmra.mrb[0].mxu0 %v2916
        %v3107 = vpop.f32.mrb[0].mxu0
        %v3108 = vadd.f32 0.0, %v3107
        %v3109 = vpop.f32.mrb[0].mxu0
        %3110 = vmatprep.mubr.f32.mxu0 0.0
        %3111 = vmatmul.mubr.f32.gmra.mrb[0].mxu0 %v2919
        %v3112 = vpop.f32.mrb[0].mxu0
        %v3113 = vadd.f32 0.0, %v3112
        %v3114 = vpop.f32.mrb[0].mxu0
        %3115 = vmatprep.mubr.f32.mxu0 0.0
        %3116 = vmatmul.mubr.f32.gmra.mrb[0].mxu0 %v2922
        %v3117 = vpop.f32.mrb[0].mxu0
        %v3118 = vadd.f32 0.0, %v3117
        %v3119 = vpop.f32.mrb[0].mxu0
        %3120 = vmatprep.mubr.f32.mxu0 0.0
        %3121 = vmatmul.mubr.f32.gmra.mrb[0].mxu0 %v2925
        %v3122 = vpop.f32.mrb[0].mxu0
        %v3123 = vadd.f32 0.0, %v3122
        %v3124 = vpop.f32.mrb[0].mxu0
        %3125 = vmatprep.mubr.f32.mxu0 0.0
        %3126 = vmatmul.mubr.f32.gmra.mrb[0].mxu0 %v2928
        %v3127 = vpop.f32.mrb[0].mxu0
        %v3128 = vadd.f32 0.0, %v3127
        %v3129 = vpop.f32.mrb[0].mxu0
        %3130 = vmatprep.mubr.f32.mxu0 0.0
        %3131 = vmatmul.mubr.f32.gmra.mrb[0].mxu0 %v2931
        %v3132 = vpop.f32.mrb[0].mxu0
        %v3133 = vadd.f32 0.0, %v3132
        %v3134 = vpop.f32.mrb[0].mxu0
        %3135 = vmatprep.mubr.f32.mxu0 0.0
        %3136 = vmatmul.mubr.f32.gmra.mrb[0].mxu0 %v2934
        %v3137 = vpop.f32.mrb[0].mxu0
        %v3138 = vadd.f32 0.0, %v3137
        %v3139 = vpop.f32.mrb[0].mxu0
        %3140 = vmatprep.mubr.f32.mxu0 0.0
        %3141 = vmatmul.mubr.f32.gmra.mrb[0].mxu0 %v2937
        %v3142 = vpop.f32.mrb[0].mxu0
        %v3143 = vadd.f32 0.0, %v3142
        %v3144 = vpop.f32.mrb[0].mxu0
        %3145 = vmatprep.mubr.f32.mxu0 0.0
        %3146 = vmatmul.mubr.f32.gmra.mrb[0].mxu0 %v2940
        %v3147 = vpop.f32.mrb[0].mxu0
        %v3148 = vadd.f32 0.0, %v3147
        %v3149 = vpop.f32.mrb[0].mxu0
        %3150 = vmatprep.mubr.f32.mxu0 0.0
        %3151 = vmatmul.mubr.f32.gmra.mrb[0].mxu0 %v2943
        %v3152 = vpop.f32.mrb[0].mxu0
        %v3153 = vadd.f32 0.0, %v3152
        %v3154 = vpop.f32.mrb[0].mxu0
        %3155 = vmatprep.mubr.f32.mxu0 0.0
        %3156 = vmatmul.mubr.f32.gmra.mrb[0].mxu0 %v2946
        %v3157 = vpop.f32.mrb[0].mxu0
        %v3158 = vadd.f32 0.0, %v3157
        %v3159 = vpop.f32.mrb[0].mxu0
        %3160 = vmatprep.mubr.f32.mxu0 0.0
        %3161 = vmatmul.mubr.f32.gmra.mrb[0].mxu0 %v2949
        %v3162 = vpop.f32.mrb[0].mxu0
        %v3163 = vadd.f32 0.0, %v3162
        %v3164 = vpop.f32.mrb[0].mxu0
        %3165 = vmatprep.mubr.f32.mxu0 0.0
        %3166 = vmatmul.mubr.f32.gmra.mrb[0].mxu0 %v2952
        %v3167 = vpop.f32.mrb[0].mxu0
        %v3168 = vadd.f32 0.0, %v3167
        %v3169 = vpop.f32.mrb[0].mxu0
        %3170 = vmatprep.mubr.f32.mxu0 0.0
        %3171 = vmatmul.mubr.f32.gmra.mrb[0].mxu0 %v2955
        %v3172 = vpop.f32.mrb[0].mxu0
        %v3173 = vadd.f32 0.0, %v3172
        %v3174 = vpop.f32.mrb[0].mxu0
        %3175 = vmatprep.mubr.f32.mxu0 0.0
        %3176 = vmatmul.mubr.f32.gmra.mrb[0].mxu0 %v2958
        %v3177 = vpop.f32.mrb[0].mxu0
        %v3178 = vadd.f32 0.0, %v3177
        %v3179 = vpop.f32.mrb[0].mxu0
        %3180 = vmatprep.mubr.f32.mxu0 0.0
        %3181 = vmatmul.mubr.f32.gmra.mrb[0].mxu0 %v2961
        %v3182 = vpop.f32.mrb[0].mxu0
        %v3183 = vadd.f32 0.0, %v3182
        %v3184 = vpop.f32.mrb[0].mxu0
        %3185 = vmatprep.mubr.f32.mxu0 0.0
        %3186 = vmatmul.mubr.f32.gmra.mrb[0].mxu0 %v2964
        %v3187 = vpop.f32.mrb[0].mxu0
        %v3188 = vadd.f32 0.0, %v3187
        %v3189 = vpop.f32.mrb[0].mxu0
        %3190 = vmatprep.mubr.f32.mxu0 0.0
        %3191 = vmatmul.mubr.f32.gmra.mrb[0].mxu0 %v2967
        %v3192 = vpop.f32.mrb[0].mxu0
        %v3193 = vadd.f32 0.0, %v3192
        %v3194 = vpop.f32.mrb[0].mxu0
        %3195 = vmatprep.mubr.f32.mxu0 0.0
        %3196 = vmatmul.mubr.f32.gmra.mrb[0].mxu0 %v2970
        %v3197 = vpop.f32.mrb[0].mxu0
        %v3198 = vadd.f32 0.0, %v3197
        %v3199 = vpop.f32.mrb[0].mxu0
        %3200 = vmatprep.mubr.f32.mxu0 0.0
        %3201 = vmatmul.mubr.f32.gmra.mrb[0].mxu0 %v2973
        %v3202 = vpop.f32.mrb[0].mxu0
        %v3203 = vadd.f32 0.0, %v3202
        %v3204 = vpop.f32.mrb[0].mxu0
        %3205 = vmatprep.mubr.f32.mxu0 0.0
        %3206 = vmatmul.mubr.f32.gmra.mrb[0].mxu0 %v2976
        %v3207 = vpop.f32.mrb[0].mxu0
        %v3208 = vadd.f32 0.0, %v3207
        %v3209 = vpop.f32.mrb[0].mxu0
        %3210 = vmatprep.mubr.f32.mxu0 0.0
        %3211 = vmatmul.mubr.f32.gmra.mrb[0].mxu0 %v2979
        %v3212 = vpop.f32.mrb[0].mxu0
        %v3213 = vadd.f32 0.0, %v3212
        %v3214 = vpop.f32.mrb[0].mxu0
        %3215 = vdwg.mxu0
        %3217 = vset.pattern.permute.xlu0 0
        %3218 = vperm.xlu0 %3217, %v2812
        %v3219 = vpop.permute.xlu0 %3218
        %3222 = vset.pattern.permute.xlu0 0
        %3223 = vperm.xlu0 %3222, %v2813
        %v3224 = vpop.permute.xlu0 %3223
        %3227 = vset.pattern.permute.xlu0 0
        %3228 = vperm.xlu0 %3227, %v2814
        %v3229 = vpop.permute.xlu0 %3228
        %3232 = vset.pattern.permute.xlu0 0
        %3233 = vperm.xlu0 %3232, %v2815
        %v3234 = vpop.permute.xlu0 %3233
        %3237 = vset.pattern.permute.xlu0 0
        %3238 = vperm.xlu0 %3237, %v2816
        %v3239 = vpop.permute.xlu0 %3238
        %3242 = vset.pattern.permute.xlu0 0
        %3243 = vperm.xlu0 %3242, %v2817
        %v3244 = vpop.permute.xlu0 %3243
        %3247 = vset.pattern.permute.xlu0 0
        %3248 = vperm.xlu0 %3247, %v2818
        %v3249 = vpop.permute.xlu0 %3248
        %3252 = vset.pattern.permute.xlu0 0
        %3253 = vperm.xlu0 %3252, %v2819
        %v3254 = vpop.permute.xlu0 %3253
        %3257 = vset.pattern.permute.xlu0 0
        %3258 = vperm.xlu0 %3257, %v2820
        %v3259 = vpop.permute.xlu0 %3258
        %3262 = vset.pattern.permute.xlu0 0
        %3263 = vperm.xlu0 %3262, %v2821
        %v3264 = vpop.permute.xlu0 %3263
        %3267 = vset.pattern.permute.xlu0 0
        %3268 = vperm.xlu0 %3267, %v2822
        %v3269 = vpop.permute.xlu0 %3268
        %3272 = vset.pattern.permute.xlu0 0
        %3273 = vperm.xlu0 %3272, %v2823
        %v3274 = vpop.permute.xlu0 %3273
        %3277 = vset.pattern.permute.xlu0 0
        %3278 = vperm.xlu0 %3277, %v2824
        %v3279 = vpop.permute.xlu0 %3278
        %3282 = vset.pattern.permute.xlu0 0
        %3283 = vperm.xlu0 %3282, %v2825
        %v3284 = vpop.permute.xlu0 %3283
        %3287 = vset.pattern.permute.xlu0 0
        %3288 = vperm.xlu0 %3287, %v2826
        %v3289 = vpop.permute.xlu0 %3288
        %3292 = vset.pattern.permute.xlu0 0
        %3293 = vperm.xlu0 %3292, %v2827
        %v3294 = vpop.permute.xlu0 %3293
        %3297 = vset.pattern.permute.xlu0 0
        %3298 = vperm.xlu0 %3297, %v2828
        %v3299 = vpop.permute.xlu0 %3298
        %3302 = vset.pattern.permute.xlu0 0
        %3303 = vperm.xlu0 %3302, %v2829
        %v3304 = vpop.permute.xlu0 %3303
        %3307 = vset.pattern.permute.xlu0 0
        %3308 = vperm.xlu0 %3307, %v2830
        %v3309 = vpop.permute.xlu0 %3308
        %3312 = vset.pattern.permute.xlu0 0
        %3313 = vperm.xlu0 %3312, %v2831
        %v3314 = vpop.permute.xlu0 %3313
        %3317 = vset.pattern.permute.xlu0 0
        %3318 = vperm.xlu0 %3317, %v2832
        %v3319 = vpop.permute.xlu0 %3318
        %3322 = vset.pattern.permute.xlu0 0
        %3323 = vperm.xlu0 %3322, %v2833
        %v3324 = vpop.permute.xlu0 %3323
        %3327 = vset.pattern.permute.xlu0 0
        %3328 = vperm.xlu0 %3327, %v2834
        %v3329 = vpop.permute.xlu0 %3328
        %3332 = vset.pattern.permute.xlu0 0
        %3333 = vperm.xlu0 %3332, %v2835
        %v3334 = vpop.permute.xlu0 %3333
        %3337 = vset.pattern.permute.xlu0 0
        %3338 = vperm.xlu0 %3337, %v2836
        %v3339 = vpop.permute.xlu0 %3338
        %3342 = vset.pattern.permute.xlu0 0
        %3343 = vperm.xlu0 %3342, %v2837
        %v3344 = vpop.permute.xlu0 %3343
        %3347 = vset.pattern.permute.xlu0 0
        %3348 = vperm.xlu0 %3347, %v2838
        %v3349 = vpop.permute.xlu0 %3348
        %3352 = vset.pattern.permute.xlu0 0
        %3353 = vperm.xlu0 %3352, %v2839
        %v3354 = vpop.permute.xlu0 %3353
        %3357 = vset.pattern.permute.xlu0 0
        %3358 = vperm.xlu0 %3357, %v2840
        %v3359 = vpop.permute.xlu0 %3358
        %3362 = vset.pattern.permute.xlu0 0
        %3363 = vperm.xlu0 %3362, %v2841
        %v3364 = vpop.permute.xlu0 %3363
        %3367 = vset.pattern.permute.xlu0 0
        %3368 = vperm.xlu0 %3367, %v2842
        %v3369 = vpop.permute.xlu0 %3368
        %3372 = vset.pattern.permute.xlu0 0
        %3373 = vperm.xlu0 %3372, %v2843
        %v3374 = vpop.permute.xlu0 %3373
        %v3376 = vadd.f32 %v3048, %v3219
        %v3377 = vadd.f32 %v3053, %v3224
        %v3378 = vadd.f32 %v3058, %v3229
        %v3379 = vadd.f32 %v3063, %v3234
        %v3380 = vadd.f32 %v3068, %v3239
        %v3381 = vadd.f32 %v3073, %v3244
        %v3382 = vadd.f32 %v3078, %v3249
        %v3383 = vadd.f32 %v3083, %v3254
        %v3384 = vadd.f32 %v3088, %v3259
        %v3385 = vadd.f32 %v3093, %v3264
        %v3386 = vadd.f32 %v3098, %v3269
        %v3387 = vadd.f32 %v3103, %v3274
        %v3388 = vadd.f32 %v3108, %v3279
        %v3389 = vadd.f32 %v3113, %v3284
        %v3390 = vadd.f32 %v3118, %v3289
        %v3391 = vadd.f32 %v3123, %v3294
        %v3392 = vadd.f32 %v3128, %v3299
        %v3393 = vadd.f32 %v3133, %v3304
        %v3394 = vadd.f32 %v3138, %v3309
        %v3395 = vadd.f32 %v3143, %v3314
        %v3396 = vadd.f32 %v3148, %v3319
        %v3397 = vadd.f32 %v3153, %v3324
        %v3398 = vadd.f32 %v3158, %v3329
        %v3399 = vadd.f32 %v3163, %v3334
        %v3400 = vadd.f32 %v3168, %v3339
        %v3401 = vadd.f32 %v3173, %v3344
        %v3402 = vadd.f32 %v3178, %v3349
        %v3403 = vadd.f32 %v3183, %v3354
        %v3404 = vadd.f32 %v3188, %v3359
        %v3405 = vadd.f32 %v3193, %v3364
        %v3406 = vadd.f32 %v3198, %v3369
        %v3407 = vadd.f32 %v3203, %v3374
        %v3408 = vadd.f32 %v3376, %v3377
        %v3409 = vadd.f32 %v3408, %v3378
        %v3410 = vadd.f32 %v3409, %v3379
        %v3411 = vadd.f32 %v3410, %v3380
        %v3412 = vadd.f32 %v3411, %v3381
        %v3413 = vadd.f32 %v3412, %v3382
        %v3414 = vadd.f32 %v3413, %v3383
        %v3415 = vadd.f32 %v3414, %v3384
        %v3416 = vadd.f32 %v3415, %v3385
        %v3417 = vadd.f32 %v3416, %v3386
        %v3418 = vadd.f32 %v3417, %v3387
        %v3419 = vadd.f32 %v3418, %v3388
        %v3420 = vadd.f32 %v3419, %v3389
        %v3421 = vadd.f32 %v3420, %v3390
        %v3422 = vadd.f32 %v3421, %v3391
        %v3423 = vadd.f32 %v3422, %v3392
        %v3424 = vadd.f32 %v3423, %v3393
        %v3425 = vadd.f32 %v3424, %v3394
        %v3426 = vadd.f32 %v3425, %v3395
        %v3427 = vadd.f32 %v3426, %v3396
        %v3428 = vadd.f32 %v3427, %v3397
        %v3429 = vadd.f32 %v3428, %v3398
        %v3430 = vadd.f32 %v3429, %v3399
        %v3431 = vadd.f32 %v3430, %v3400
        %v3432 = vadd.f32 %v3431, %v3401
        %v3433 = vadd.f32 %v3432, %v3402
        %v3434 = vadd.f32 %v3433, %v3403
        %v3435 = vadd.f32 %v3434, %v3404
        %v3436 = vadd.f32 %v3435, %v3405
        %v3437 = vadd.f32 %v3436, %v3406
        %v3438 = vadd.f32 %v3437, %v3407
        %v3439 = vrot.slane %v3438, 4
        %v3440 = vadd.f32 %v3438, %v3439
        %v3441 = vrot.slane %v3440, 2
        %v3442 = vadd.f32 %v3440, %v3441
        %v3443 = vrot.slane %v3442, 1
        %v3444 = vadd.f32 %v3442, %v3443
        %v3445 = vmul.f32 %v3444, %v979
        %v3446 = vmul.f32 %v3376, %v3376
        %v3447 = vmul.f32 %v3377, %v3377
        %v3448 = vmul.f32 %v3378, %v3378
        %v3449 = vmul.f32 %v3379, %v3379
        %v3450 = vmul.f32 %v3380, %v3380
        %v3451 = vmul.f32 %v3381, %v3381
        %v3452 = vmul.f32 %v3382, %v3382
        %v3453 = vmul.f32 %v3383, %v3383
        %v3454 = vmul.f32 %v3384, %v3384
        %v3455 = vmul.f32 %v3385, %v3385
        %v3456 = vmul.f32 %v3386, %v3386
        %v3457 = vmul.f32 %v3387, %v3387
        %v3458 = vmul.f32 %v3388, %v3388
        %v3459 = vmul.f32 %v3389, %v3389
        %v3460 = vmul.f32 %v3390, %v3390
        %v3461 = vmul.f32 %v3391, %v3391
        %v3462 = vmul.f32 %v3392, %v3392
        %v3463 = vmul.f32 %v3393, %v3393
        %v3464 = vmul.f32 %v3394, %v3394
        %v3465 = vmul.f32 %v3395, %v3395
        %v3466 = vmul.f32 %v3396, %v3396
        %v3467 = vmul.f32 %v3397, %v3397
        %v3468 = vmul.f32 %v3398, %v3398
        %v3469 = vmul.f32 %v3399, %v3399
        %v3470 = vmul.f32 %v3400, %v3400
        %v3471 = vmul.f32 %v3401, %v3401
        %v3472 = vmul.f32 %v3402, %v3402
        %v3473 = vmul.f32 %v3403, %v3403
        %v3474 = vmul.f32 %v3404, %v3404
        %v3475 = vmul.f32 %v3405, %v3405
        %v3476 = vmul.f32 %v3406, %v3406
        %v3477 = vmul.f32 %v3407, %v3407
        %v3478 = vadd.f32 %v3446, %v3447
        %v3479 = vadd.f32 %v3478, %v3448
        %v3480 = vadd.f32 %v3479, %v3449
        %v3481 = vadd.f32 %v3480, %v3450
        %v3482 = vadd.f32 %v3481, %v3451
        %v3483 = vadd.f32 %v3482, %v3452
        %v3484 = vadd.f32 %v3483, %v3453
        %v3485 = vadd.f32 %v3484, %v3454
        %v3486 = vadd.f32 %v3485, %v3455
        %v3487 = vadd.f32 %v3486, %v3456
        %v3488 = vadd.f32 %v3487, %v3457
        %v3489 = vadd.f32 %v3488, %v3458
        %v3490 = vadd.f32 %v3489, %v3459
        %v3491 = vadd.f32 %v3490, %v3460
        %v3492 = vadd.f32 %v3491, %v3461
        %v3493 = vadd.f32 %v3492, %v3462
        %v3494 = vadd.f32 %v3493, %v3463
        %v3495 = vadd.f32 %v3494, %v3464
        %v3496 = vadd.f32 %v3495, %v3465
        %v3497 = vadd.f32 %v3496, %v3466
        %v3498 = vadd.f32 %v3497, %v3467
        %v3499 = vadd.f32 %v3498, %v3468
        %v3500 = vadd.f32 %v3499, %v3469
        %v3501 = vadd.f32 %v3500, %v3470
        %v3502 = vadd.f32 %v3501, %v3471
        %v3503 = vadd.f32 %v3502, %v3472
        %v3504 = vadd.f32 %v3503, %v3473
        %v3505 = vadd.f32 %v3504, %v3474
        %v3506 = vadd.f32 %v3505, %v3475
        %v3507 = vadd.f32 %v3506, %v3476
        %v3508 = vadd.f32 %v3507, %v3477
        %v3509 = vrot.slane %v3508, 4
        %v3510 = vadd.f32 %v3508, %v3509
        %v3511 = vrot.slane %v3510, 2
        %v3512 = vadd.f32 %v3510, %v3511
        %v3513 = vrot.slane %v3512, 1
        %v3514 = vadd.f32 %v3512, %v3513
        %v3515 = vmul.f32 %v3514, %v979
        %v3516 = vmul.f32 %v3445, %v3445
        %v3517 = vsub.f32 %v3515, %v3516
        %v3518 = vsub.f32 %v3376, %v3445
        %v3519 = vsub.f32 %v3377, %v3445
        %v3520 = vsub.f32 %v3378, %v3445
        %v3521 = vsub.f32 %v3379, %v3445
        %v3522 = vsub.f32 %v3380, %v3445
        %v3523 = vsub.f32 %v3381, %v3445
        %v3524 = vsub.f32 %v3382, %v3445
        %v3525 = vsub.f32 %v3383, %v3445
        %v3526 = vsub.f32 %v3384, %v3445
        %v3527 = vsub.f32 %v3385, %v3445
        %v3528 = vsub.f32 %v3386, %v3445
        %v3529 = vsub.f32 %v3387, %v3445
        %v3530 = vsub.f32 %v3388, %v3445
        %v3531 = vsub.f32 %v3389, %v3445
        %v3532 = vsub.f32 %v3390, %v3445
        %v3533 = vsub.f32 %v3391, %v3445
        %v3534 = vsub.f32 %v3392, %v3445
        %v3535 = vsub.f32 %v3393, %v3445
        %v3536 = vsub.f32 %v3394, %v3445
        %v3537 = vsub.f32 %v3395, %v3445
        %v3538 = vsub.f32 %v3396, %v3445
        %v3539 = vsub.f32 %v3397, %v3445
        %v3540 = vsub.f32 %v3398, %v3445
        %v3541 = vsub.f32 %v3399, %v3445
        %v3542 = vsub.f32 %v3400, %v3445
        %v3543 = vsub.f32 %v3401, %v3445
        %v3544 = vsub.f32 %v3402, %v3445
        %v3545 = vsub.f32 %v3403, %v3445
        %v3546 = vsub.f32 %v3404, %v3445
        %v3547 = vsub.f32 %v3405, %v3445
        %v3548 = vsub.f32 %v3406, %v3445
        %v3549 = vsub.f32 %v3407, %v3445
        %v3550 = vadd.f32 %v3517, 1e-05
        %v3551 = vrsqrt.pop %v3550
        %v3552 = vmul.f32 %v3518, %v3551
        %v3553 = vmul.f32 %v3519, %v3551
        %v3554 = vmul.f32 %v3520, %v3551
        %v3555 = vmul.f32 %v3521, %v3551
        %v3556 = vmul.f32 %v3522, %v3551
        %v3557 = vmul.f32 %v3523, %v3551
        %v3558 = vmul.f32 %v3524, %v3551
        %v3559 = vmul.f32 %v3525, %v3551
        %v3560 = vmul.f32 %v3526, %v3551
        %v3561 = vmul.f32 %v3527, %v3551
        %v3562 = vmul.f32 %v3528, %v3551
        %v3563 = vmul.f32 %v3529, %v3551
        %v3564 = vmul.f32 %v3530, %v3551
        %v3565 = vmul.f32 %v3531, %v3551
        %v3566 = vmul.f32 %v3532, %v3551
        %v3567 = vmul.f32 %v3533, %v3551
        %v3568 = vmul.f32 %v3534, %v3551
        %v3569 = vmul.f32 %v3535, %v3551
        %v3570 = vmul.f32 %v3536, %v3551
        %v3571 = vmul.f32 %v3537, %v3551
        %v3572 = vmul.f32 %v3538, %v3551
        %v3573 = vmul.f32 %v3539, %v3551
        %v3574 = vmul.f32 %v3540, %v3551
        %v3575 = vmul.f32 %v3541, %v3551
        %v3576 = vmul.f32 %v3542, %v3551
        %v3577 = vmul.f32 %v3543, %v3551
        %v3578 = vmul.f32 %v3544, %v3551
        %v3579 = vmul.f32 %v3545, %v3551
        %v3580 = vmul.f32 %v3546, %v3551
        %v3581 = vmul.f32 %v3547, %v3551
        %v3582 = vmul.f32 %v3548, %v3551
        %v3583 = vmul.f32 %v3549, %v3551
        %3584 = vset.pattern.permute.xlu0 1
        %3585 = vperm.xlu0 %3584, %v2812
        %v3586 = vpop.permute.xlu0 %3585
        %3588 = vset.pattern.permute.xlu0 1
        %3589 = vperm.xlu0 %3588, %v2813
        %v3590 = vpop.permute.xlu0 %3589
        %3592 = vset.pattern.permute.xlu0 1
        %3593 = vperm.xlu0 %3592, %v2814
        %v3594 = vpop.permute.xlu0 %3593
        %3596 = vset.pattern.permute.xlu0 1
        %3597 = vperm.xlu0 %3596, %v2815
        %v3598 = vpop.permute.xlu0 %3597
        %3600 = vset.pattern.permute.xlu0 1
        %3601 = vperm.xlu0 %3600, %v2816
        %v3602 = vpop.permute.xlu0 %3601
        %3604 = vset.pattern.permute.xlu0 1
        %3605 = vperm.xlu0 %3604, %v2817
        %v3606 = vpop.permute.xlu0 %3605
        %3608 = vset.pattern.permute.xlu0 1
        %3609 = vperm.xlu0 %3608, %v2818
        %v3610 = vpop.permute.xlu0 %3609
        %3612 = vset.pattern.permute.xlu0 1
        %3613 = vperm.xlu0 %3612, %v2819
        %v3614 = vpop.permute.xlu0 %3613
        %3616 = vset.pattern.permute.xlu0 1
        %3617 = vperm.xlu0 %3616, %v2820
        %v3618 = vpop.permute.xlu0 %3617
        %3620 = vset.pattern.permute.xlu0 1
        %3621 = vperm.xlu0 %3620, %v2821
        %v3622 = vpop.permute.xlu0 %3621
        %3624 = vset.pattern.permute.xlu0 1
        %3625 = vperm.xlu0 %3624, %v2822
        %v3626 = vpop.permute.xlu0 %3625
        %3628 = vset.pattern.permute.xlu0 1
        %3629 = vperm.xlu0 %3628, %v2823
        %v3630 = vpop.permute.xlu0 %3629
        %3632 = vset.pattern.permute.xlu0 1
        %3633 = vperm.xlu0 %3632, %v2824
        %v3634 = vpop.permute.xlu0 %3633
        %3636 = vset.pattern.permute.xlu0 1
        %3637 = vperm.xlu0 %3636, %v2825
        %v3638 = vpop.permute.xlu0 %3637
        %3640 = vset.pattern.permute.xlu0 1
        %3641 = vperm.xlu0 %3640, %v2826
        %v3642 = vpop.permute.xlu0 %3641
        %3644 = vset.pattern.permute.xlu0 1
        %3645 = vperm.xlu0 %3644, %v2827
        %v3646 = vpop.permute.xlu0 %3645
        %3648 = vset.pattern.permute.xlu0 1
        %3649 = vperm.xlu0 %3648, %v2828
        %v3650 = vpop.permute.xlu0 %3649
        %3652 = vset.pattern.permute.xlu0 1
        %3653 = vperm.xlu0 %3652, %v2829
        %v3654 = vpop.permute.xlu0 %3653
        %3656 = vset.pattern.permute.xlu0 1
        %3657 = vperm.xlu0 %3656, %v2830
        %v3658 = vpop.permute.xlu0 %3657
        %3660 = vset.pattern.permute.xlu0 1
        %3661 = vperm.xlu0 %3660, %v2831
        %v3662 = vpop.permute.xlu0 %3661
        %3664 = vset.pattern.permute.xlu0 1
        %3665 = vperm.xlu0 %3664, %v2832
        %v3666 = vpop.permute.xlu0 %3665
        %3668 = vset.pattern.permute.xlu0 1
        %3669 = vperm.xlu0 %3668, %v2833
        %v3670 = vpop.permute.xlu0 %3669
        %3672 = vset.pattern.permute.xlu0 1
        %3673 = vperm.xlu0 %3672, %v2834
        %v3674 = vpop.permute.xlu0 %3673
        %3676 = vset.pattern.permute.xlu0 1
        %3677 = vperm.xlu0 %3676, %v2835
        %v3678 = vpop.permute.xlu0 %3677
        %3680 = vset.pattern.permute.xlu0 1
        %3681 = vperm.xlu0 %3680, %v2836
        %v3682 = vpop.permute.xlu0 %3681
        %3684 = vset.pattern.permute.xlu0 1
        %3685 = vperm.xlu0 %3684, %v2837
        %v3686 = vpop.permute.xlu0 %3685
        %3688 = vset.pattern.permute.xlu0 1
        %3689 = vperm.xlu0 %3688, %v2838
        %v3690 = vpop.permute.xlu0 %3689
        %3692 = vset.pattern.permute.xlu0 1
        %3693 = vperm.xlu0 %3692, %v2839
        %v3694 = vpop.permute.xlu0 %3693
        %3696 = vset.pattern.permute.xlu0 1
        %3697 = vperm.xlu0 %3696, %v2840
        %v3698 = vpop.permute.xlu0 %3697
        %3700 = vset.pattern.permute.xlu0 1
        %3701 = vperm.xlu0 %3700, %v2841
        %v3702 = vpop.permute.xlu0 %3701
        %3704 = vset.pattern.permute.xlu0 1
        %3705 = vperm.xlu0 %3704, %v2842
        %v3706 = vpop.permute.xlu0 %3705
        %3708 = vset.pattern.permute.xlu0 1
        %3709 = vperm.xlu0 %3708, %v2843
        %v3710 = vpop.permute.xlu0 %3709
        %v3712 = vmul.f32 %v3552, %v3586
        %v3713 = vmul.f32 %v3553, %v3590
        %v3714 = vmul.f32 %v3554, %v3594
        %v3715 = vmul.f32 %v3555, %v3598
        %v3716 = vmul.f32 %v3556, %v3602
        %v3717 = vmul.f32 %v3557, %v3606
        %v3718 = vmul.f32 %v3558, %v3610
        %v3719 = vmul.f32 %v3559, %v3614
        %v3720 = vmul.f32 %v3560, %v3618
        %v3721 = vmul.f32 %v3561, %v3622
        %v3722 = vmul.f32 %v3562, %v3626
        %v3723 = vmul.f32 %v3563, %v3630
        %v3724 = vmul.f32 %v3564, %v3634
        %v3725 = vmul.f32 %v3565, %v3638
        %v3726 = vmul.f32 %v3566, %v3642
        %v3727 = vmul.f32 %v3567, %v3646
        %v3728 = vmul.f32 %v3568, %v3650
        %v3729 = vmul.f32 %v3569, %v3654
        %v3730 = vmul.f32 %v3570, %v3658
        %v3731 = vmul.f32 %v3571, %v3662
        %v3732 = vmul.f32 %v3572, %v3666
        %v3733 = vmul.f32 %v3573, %v3670
        %v3734 = vmul.f32 %v3574, %v3674
        %v3735 = vmul.f32 %v3575, %v3678
        %v3736 = vmul.f32 %v3576, %v3682
        %v3737 = vmul.f32 %v3577, %v3686
        %v3738 = vmul.f32 %v3578, %v3690
        %v3739 = vmul.f32 %v3579, %v3694
        %v3740 = vmul.f32 %v3580, %v3698
        %v3741 = vmul.f32 %v3581, %v3702
        %v3742 = vmul.f32 %v3582, %v3706
        %v3743 = vmul.f32 %v3583, %v3710
        %3744 = vset.pattern.permute.xlu0 2
        %3745 = vperm.xlu0 %3744, %v2812
        %v3746 = vpop.permute.xlu0 %3745
        %3748 = vset.pattern.permute.xlu0 2
        %3749 = vperm.xlu0 %3748, %v2813
        %v3750 = vpop.permute.xlu0 %3749
        %3752 = vset.pattern.permute.xlu0 2
        %3753 = vperm.xlu0 %3752, %v2814
        %v3754 = vpop.permute.xlu0 %3753
        %3756 = vset.pattern.permute.xlu0 2
        %3757 = vperm.xlu0 %3756, %v2815
        %v3758 = vpop.permute.xlu0 %3757
        %3760 = vset.pattern.permute.xlu0 2
        %3761 = vperm.xlu0 %3760, %v2816
        %v3762 = vpop.permute.xlu0 %3761
        %3764 = vset.pattern.permute.xlu0 2
        %3765 = vperm.xlu0 %3764, %v2817
        %v3766 = vpop.permute.xlu0 %3765
        %3768 = vset.pattern.permute.xlu0 2
        %3769 = vperm.xlu0 %3768, %v2818
        %v3770 = vpop.permute.xlu0 %3769
        %3772 = vset.pattern.permute.xlu0 2
        %3773 = vperm.xlu0 %3772, %v2819
        %v3774 = vpop.permute.xlu0 %3773
        %3776 = vset.pattern.permute.xlu0 2
        %3777 = vperm.xlu0 %3776, %v2820
        %v3778 = vpop.permute.xlu0 %3777
        %3780 = vset.pattern.permute.xlu0 2
        %3781 = vperm.xlu0 %3780, %v2821
        %v3782 = vpop.permute.xlu0 %3781
        %3784 = vset.pattern.permute.xlu0 2
        %3785 = vperm.xlu0 %3784, %v2822
        %v3786 = vpop.permute.xlu0 %3785
        %3788 = vset.pattern.permute.xlu0 2
        %3789 = vperm.xlu0 %3788, %v2823
        %v3790 = vpop.permute.xlu0 %3789
        %3792 = vset.pattern.permute.xlu0 2
        %3793 = vperm.xlu0 %3792, %v2824
        %v3794 = vpop.permute.xlu0 %3793
        %3796 = vset.pattern.permute.xlu0 2
        %3797 = vperm.xlu0 %3796, %v2825
        %v3798 = vpop.permute.xlu0 %3797
        %3800 = vset.pattern.permute.xlu0 2
        %3801 = vperm.xlu0 %3800, %v2826
        %v3802 = vpop.permute.xlu0 %3801
        %3804 = vset.pattern.permute.xlu0 2
        %3805 = vperm.xlu0 %3804, %v2827
        %v3806 = vpop.permute.xlu0 %3805
        %3808 = vset.pattern.permute.xlu0 2
        %3809 = vperm.xlu0 %3808, %v2828
        %v3810 = vpop.permute.xlu0 %3809
        %3812 = vset.pattern.permute.xlu0 2
        %3813 = vperm.xlu0 %3812, %v2829
        %v3814 = vpop.permute.xlu0 %3813
        %3816 = vset.pattern.permute.xlu0 2
        %3817 = vperm.xlu0 %3816, %v2830
        %v3818 = vpop.permute.xlu0 %3817
        %3820 = vset.pattern.permute.xlu0 2
        %3821 = vperm.xlu0 %3820, %v2831
        %v3822 = vpop.permute.xlu0 %3821
        %3824 = vset.pattern.permute.xlu0 2
        %3825 = vperm.xlu0 %3824, %v2832
        %v3826 = vpop.permute.xlu0 %3825
        %3828 = vset.pattern.permute.xlu0 2
        %3829 = vperm.xlu0 %3828, %v2833
        %v3830 = vpop.permute.xlu0 %3829
        %3832 = vset.pattern.permute.xlu0 2
        %3833 = vperm.xlu0 %3832, %v2834
        %v3834 = vpop.permute.xlu0 %3833
        %3836 = vset.pattern.permute.xlu0 2
        %3837 = vperm.xlu0 %3836, %v2835
        %v3838 = vpop.permute.xlu0 %3837
        %3840 = vset.pattern.permute.xlu0 2
        %3841 = vperm.xlu0 %3840, %v2836
        %v3842 = vpop.permute.xlu0 %3841
        %3844 = vset.pattern.permute.xlu0 2
        %3845 = vperm.xlu0 %3844, %v2837
        %v3846 = vpop.permute.xlu0 %3845
        %3848 = vset.pattern.permute.xlu0 2
        %3849 = vperm.xlu0 %3848, %v2838
        %v3850 = vpop.permute.xlu0 %3849
        %3852 = vset.pattern.permute.xlu0 2
        %3853 = vperm.xlu0 %3852, %v2839
        %v3854 = vpop.permute.xlu0 %3853
        %3856 = vset.pattern.permute.xlu0 2
        %3857 = vperm.xlu0 %3856, %v2840
        %v3858 = vpop.permute.xlu0 %3857
        %3860 = vset.pattern.permute.xlu0 2
        %3861 = vperm.xlu0 %3860, %v2841
        %v3862 = vpop.permute.xlu0 %3861
        %3864 = vset.pattern.permute.xlu0 2
        %3865 = vperm.xlu0 %3864, %v2842
        %v3866 = vpop.permute.xlu0 %3865
        %3868 = vset.pattern.permute.xlu0 2
        %3869 = vperm.xlu0 %3868, %v2843
        %v3870 = vpop.permute.xlu0 %3869
        %v3872 = vadd.f32 %v3712, %v3746
        %v3873 = vadd.f32 %v3713, %v3750
        %v3874 = vadd.f32 %v3714, %v3754
        %v3875 = vadd.f32 %v3715, %v3758
        %v3876 = vadd.f32 %v3716, %v3762
        %v3877 = vadd.f32 %v3717, %v3766
        %v3878 = vadd.f32 %v3718, %v3770
        %v3879 = vadd.f32 %v3719, %v3774
        %v3880 = vadd.f32 %v3720, %v3778
        %v3881 = vadd.f32 %v3721, %v3782
        %v3882 = vadd.f32 %v3722, %v3786
        %v3883 = vadd.f32 %v3723, %v3790
        %v3884 = vadd.f32 %v3724, %v3794
        %v3885 = vadd.f32 %v3725, %v3798
        %v3886 = vadd.f32 %v3726, %v3802
        %v3887 = vadd.f32 %v3727, %v3806
        %v3888 = vadd.f32 %v3728, %v3810
        %v3889 = vadd.f32 %v3729, %v3814
        %v3890 = vadd.f32 %v3730, %v3818
        %v3891 = vadd.f32 %v3731, %v3822
        %v3892 = vadd.f32 %v3732, %v3826
        %v3893 = vadd.f32 %v3733, %v3830
        %v3894 = vadd.f32 %v3734, %v3834
        %v3895 = vadd.f32 %v3735, %v3838
        %v3896 = vadd.f32 %v3736, %v3842
        %v3897 = vadd.f32 %v3737, %v3846
        %v3898 = vadd.f32 %v3738, %v3850
        %v3899 = vadd.f32 %v3739, %v3854
        %v3900 = vadd.f32 %v3740, %v3858
        %v3901 = vadd.f32 %v3741, %v3862
        %v3902 = vadd.f32 %v3742, %v3866
        %v3903 = vadd.f32 %v3743, %v3870
        %vm3904 = vcmp.gt.f32.partialorder %v3872, 0.0
        %vm3905 = vcmp.gt.f32.partialorder %v3873, 0.0
        %vm3906 = vcmp.gt.f32.partialorder %v3874, 0.0
        %vm3907 = vcmp.gt.f32.partialorder %v3875, 0.0
        %vm3908 = vcmp.gt.f32.partialorder %v3876, 0.0
        %vm3909 = vcmp.gt.f32.partialorder %v3877, 0.0
        %vm3910 = vcmp.gt.f32.partialorder %v3878, 0.0
        %vm3911 = vcmp.gt.f32.partialorder %v3879, 0.0
        %vm3912 = vcmp.gt.f32.partialorder %v3880, 0.0
        %vm3913 = vcmp.gt.f32.partialorder %v3881, 0.0
        %vm3914 = vcmp.gt.f32.partialorder %v3882, 0.0
        %vm3915 = vcmp.gt.f32.partialorder %v3883, 0.0
        %vm3916 = vcmp.gt.f32.partialorder %v3884, 0.0
        %vm3917 = vcmp.gt.f32.partialorder %v3885, 0.0
        %vm3918 = vcmp.gt.f32.partialorder %v3886, 0.0
        %vm3919 = vcmp.gt.f32.partialorder %v3887, 0.0
        %vm3920 = vcmp.gt.f32.partialorder %v3888, 0.0
        %vm3921 = vcmp.gt.f32.partialorder %v3889, 0.0
        %vm3922 = vcmp.gt.f32.partialorder %v3890, 0.0
        %vm3923 = vcmp.gt.f32.partialorder %v3891, 0.0
        %vm3924 = vcmp.gt.f32.partialorder %v3892, 0.0
        %vm3925 = vcmp.gt.f32.partialorder %v3893, 0.0
        %vm3926 = vcmp.gt.f32.partialorder %v3894, 0.0
        %vm3927 = vcmp.gt.f32.partialorder %v3895, 0.0
        %vm3928 = vcmp.gt.f32.partialorder %v3896, 0.0
        %vm3929 = vcmp.gt.f32.partialorder %v3897, 0.0
        %vm3930 = vcmp.gt.f32.partialorder %v3898, 0.0
        %vm3931 = vcmp.gt.f32.partialorder %v3899, 0.0
        %vm3932 = vcmp.gt.f32.partialorder %v3900, 0.0
        %vm3933 = vcmp.gt.f32.partialorder %v3901, 0.0
        %vm3934 = vcmp.gt.f32.partialorder %v3902, 0.0
        %vm3935 = vcmp.gt.f32.partialorder %v3903, 0.0
        %v3936 = vmul.f32 %v3872, 0.2
        %v3937 = vmul.f32 %v3873, 0.2
        %v3938 = vmul.f32 %v3874, 0.2
        %v3939 = vmul.f32 %v3875, 0.2
        %v3940 = vmul.f32 %v3876, 0.2
        %v3941 = vmul.f32 %v3877, 0.2
        %v3942 = vmul.f32 %v3878, 0.2
        %v3943 = vmul.f32 %v3879, 0.2
        %v3944 = vmul.f32 %v3880, 0.2
        %v3945 = vmul.f32 %v3881, 0.2
        %v3946 = vmul.f32 %v3882, 0.2
        %v3947 = vmul.f32 %v3883, 0.2
        %v3948 = vmul.f32 %v3884, 0.2
        %v3949 = vmul.f32 %v3885, 0.2
        %v3950 = vmul.f32 %v3886, 0.2
        %v3951 = vmul.f32 %v3887, 0.2
        %v3952 = vmul.f32 %v3888, 0.2
        %v3953 = vmul.f32 %v3889, 0.2
        %v3954 = vmul.f32 %v3890, 0.2
        %v3955 = vmul.f32 %v3891, 0.2
        %v3956 = vmul.f32 %v3892, 0.2
        %v3957 = vmul.f32 %v3893, 0.2
        %v3958 = vmul.f32 %v3894, 0.2
        %v3959 = vmul.f32 %v3895, 0.2
        %v3960 = vmul.f32 %v3896, 0.2
        %v3961 = vmul.f32 %v3897, 0.2
        %v3962 = vmul.f32 %v3898, 0.2
        %v3963 = vmul.f32 %v3899, 0.2
        %v3964 = vmul.f32 %v3900, 0.2
        %v3965 = vmul.f32 %v3901, 0.2
        %v3966 = vmul.f32 %v3902, 0.2
        %v3967 = vmul.f32 %v3903, 0.2
        %v3968 = vsel %vm3904, %v3872, %v3936
        %v3969 = vsel %vm3905, %v3873, %v3937
        %v3970 = vsel %vm3906, %v3874, %v3938
        %v3971 = vsel %vm3907, %v3875, %v3939
        %v3972 = vsel %vm3908, %v3876, %v3940
        %v3973 = vsel %vm3909, %v3877, %v3941
        %v3974 = vsel %vm3910, %v3878, %v3942
        %v3975 = vsel %vm3911, %v3879, %v3943
        %v3976 = vsel %vm3912, %v3880, %v3944
        %v3977 = vsel %vm3913, %v3881, %v3945
        %v3978 = vsel %vm3914, %v3882, %v3946
        %v3979 = vsel %vm3915, %v3883, %v3947
        %v3980 = vsel %vm3916, %v3884, %v3948
        %v3981 = vsel %vm3917, %v3885, %v3949
        %v3982 = vsel %vm3918, %v3886, %v3950
        %v3983 = vsel %vm3919, %v3887, %v3951
        %v3984 = vsel %vm3920, %v3888, %v3952
        %v3985 = vsel %vm3921, %v3889, %v3953
        %v3986 = vsel %vm3922, %v3890, %v3954
        %v3987 = vsel %vm3923, %v3891, %v3955
        %v3988 = vsel %vm3924, %v3892, %v3956
        %v3989 = vsel %vm3925, %v3893, %v3957
        %v3990 = vsel %vm3926, %v3894, %v3958
        %v3991 = vsel %vm3927, %v3895, %v3959
        %v3992 = vsel %vm3928, %v3896, %v3960
        %v3993 = vsel %vm3929, %v3897, %v3961
        %v3994 = vsel %vm3930, %v3898, %v3962
        %v3995 = vsel %vm3931, %v3899, %v3963
        %v3996 = vsel %vm3932, %v3900, %v3964
        %v3997 = vsel %vm3933, %v3901, %v3965
        %v3998 = vsel %vm3934, %v3902, %v3966
        %v3999 = vsel %vm3935, %v3903, %v3967
        %s4000 = scalar_lea.vmem %s2, 256
        %v4001 = vld [vmem:[%s4000] sm:$0xff]
        %v4002 = vld [vmem:[%s4000 + $0x8] sm:$0xff]
        %v4003 = vld [vmem:[%s4000 + $0x10] sm:$0xff]
        %v4004 = vld [vmem:[%s4000 + $0x18] sm:$0xff]
        %v4005 = vld [vmem:[%s4000 + $0x20] sm:$0xff]
        %v4006 = vld [vmem:[%s4000 + $0x28] sm:$0xff]
        %v4007 = vld [vmem:[%s4000 + $0x30] sm:$0xff]
        %v4008 = vld [vmem:[%s4000 + $0x38] sm:$0xff]
        %v4009 = vld [vmem:[%s4000 + $0x40] sm:$0xff]
        %v4010 = vld [vmem:[%s4000 + $0x48] sm:$0xff]
        %v4011 = vld [vmem:[%s4000 + $0x50] sm:$0xff]
        %v4012 = vld [vmem:[%s4000 + $0x58] sm:$0xff]
        %v4013 = vld [vmem:[%s4000 + $0x60] sm:$0xff]
        %v4014 = vld [vmem:[%s4000 + $0x68] sm:$0xff]
        %v4015 = vld [vmem:[%s4000 + $0x70] sm:$0xff]
        %v4016 = vld [vmem:[%s4000 + $0x78] sm:$0xff]
        %v4017 = vld [vmem:[%s4000 + $0x80] sm:$0xff]
        %v4018 = vld [vmem:[%s4000 + $0x88] sm:$0xff]
        %v4019 = vld [vmem:[%s4000 + $0x90] sm:$0xff]
        %v4020 = vld [vmem:[%s4000 + $0x98] sm:$0xff]
        %v4021 = vld [vmem:[%s4000 + $0xa0] sm:$0xff]
        %v4022 = vld [vmem:[%s4000 + $0xa8] sm:$0xff]
        %v4023 = vld [vmem:[%s4000 + $0xb0] sm:$0xff]
        %v4024 = vld [vmem:[%s4000 + $0xb8] sm:$0xff]
        %v4025 = vld [vmem:[%s4000 + $0xc0] sm:$0xff]
        %v4026 = vld [vmem:[%s4000 + $0xc8] sm:$0xff]
        %v4027 = vld [vmem:[%s4000 + $0xd0] sm:$0xff]
        %v4028 = vld [vmem:[%s4000 + $0xd8] sm:$0xff]
        %v4029 = vld [vmem:[%s4000 + $0xe0] sm:$0xff]
        %v4030 = vld [vmem:[%s4000 + $0xe8] sm:$0xff]
        %v4031 = vld [vmem:[%s4000 + $0xf0] sm:$0xff]
        %v4032 = vld [vmem:[%s4000 + $0xf8] sm:$0xff]
        %v4033 = vpack.c.bf16 %v3969, %v3968
        %v4034 = vpack.c.bf16 %v3971, %v3970
        %v4035 = vpack.c.bf16 %v3973, %v3972
        %v4036 = vpack.c.bf16 %v3975, %v3974
        %v4037 = vpack.c.bf16 %v3977, %v3976
        %v4038 = vpack.c.bf16 %v3979, %v3978
        %v4039 = vpack.c.bf16 %v3981, %v3980
        %v4040 = vpack.c.bf16 %v3983, %v3982
        %v4041 = vpack.c.bf16 %v3985, %v3984
        %v4042 = vpack.c.bf16 %v3987, %v3986
        %v4043 = vpack.c.bf16 %v3989, %v3988
        %v4044 = vpack.c.bf16 %v3991, %v3990
        %v4045 = vpack.c.bf16 %v3993, %v3992
        %v4046 = vpack.c.bf16 %v3995, %v3994
        %v4047 = vpack.c.bf16 %v3997, %v3996
        %v4048 = vpack.c.bf16 %v3999, %v3998
        %4049 = vset.pattern.permute.xlu0 3
        %4050 = vperm.xlu0 %4049, %v2812
        %v4051 = vpop.permute.xlu0 %4050
        %4053 = vset.pattern.permute.xlu0 3
        %4054 = vperm.xlu0 %4053, %v2813
        %v4055 = vpop.permute.xlu0 %4054
        %4057 = vset.pattern.permute.xlu0 3
        %4058 = vperm.xlu0 %4057, %v2814
        %v4059 = vpop.permute.xlu0 %4058
        %4061 = vset.pattern.permute.xlu0 3
        %4062 = vperm.xlu0 %4061, %v2815
        %v4063 = vpop.permute.xlu0 %4062
        %4065 = vset.pattern.permute.xlu0 3
        %4066 = vperm.xlu0 %4065, %v2816
        %v4067 = vpop.permute.xlu0 %4066
        %4069 = vset.pattern.permute.xlu0 3
        %4070 = vperm.xlu0 %4069, %v2817
        %v4071 = vpop.permute.xlu0 %4070
        %4073 = vset.pattern.permute.xlu0 3
        %4074 = vperm.xlu0 %4073, %v2818
        %v4075 = vpop.permute.xlu0 %4074
        %4077 = vset.pattern.permute.xlu0 3
        %4078 = vperm.xlu0 %4077, %v2819
        %v4079 = vpop.permute.xlu0 %4078
        %4081 = vset.pattern.permute.xlu0 3
        %4082 = vperm.xlu0 %4081, %v2820
        %v4083 = vpop.permute.xlu0 %4082
        %4085 = vset.pattern.permute.xlu0 3
        %4086 = vperm.xlu0 %4085, %v2821
        %v4087 = vpop.permute.xlu0 %4086
        %4089 = vset.pattern.permute.xlu0 3
        %4090 = vperm.xlu0 %4089, %v2822
        %v4091 = vpop.permute.xlu0 %4090
        %4093 = vset.pattern.permute.xlu0 3
        %4094 = vperm.xlu0 %4093, %v2823
        %v4095 = vpop.permute.xlu0 %4094
        %4097 = vset.pattern.permute.xlu0 3
        %4098 = vperm.xlu0 %4097, %v2824
        %v4099 = vpop.permute.xlu0 %4098
        %4101 = vset.pattern.permute.xlu0 3
        %4102 = vperm.xlu0 %4101, %v2825
        %v4103 = vpop.permute.xlu0 %4102
        %4105 = vset.pattern.permute.xlu0 3
        %4106 = vperm.xlu0 %4105, %v2826
        %v4107 = vpop.permute.xlu0 %4106
        %4109 = vset.pattern.permute.xlu0 3
        %4110 = vperm.xlu0 %4109, %v2827
        %v4111 = vpop.permute.xlu0 %4110
        %4113 = vset.pattern.permute.xlu0 3
        %4114 = vperm.xlu0 %4113, %v2828
        %v4115 = vpop.permute.xlu0 %4114
        %4117 = vset.pattern.permute.xlu0 3
        %4118 = vperm.xlu0 %4117, %v2829
        %v4119 = vpop.permute.xlu0 %4118
        %4121 = vset.pattern.permute.xlu0 3
        %4122 = vperm.xlu0 %4121, %v2830
        %v4123 = vpop.permute.xlu0 %4122
        %4125 = vset.pattern.permute.xlu0 3
        %4126 = vperm.xlu0 %4125, %v2831
        %v4127 = vpop.permute.xlu0 %4126
        %4129 = vset.pattern.permute.xlu0 3
        %4130 = vperm.xlu0 %4129, %v2832
        %v4131 = vpop.permute.xlu0 %4130
        %4133 = vset.pattern.permute.xlu0 3
        %4134 = vperm.xlu0 %4133, %v2833
        %v4135 = vpop.permute.xlu0 %4134
        %4137 = vset.pattern.permute.xlu0 3
        %4138 = vperm.xlu0 %4137, %v2834
        %v4139 = vpop.permute.xlu0 %4138
        %4141 = vset.pattern.permute.xlu0 3
        %4142 = vperm.xlu0 %4141, %v2835
        %v4143 = vpop.permute.xlu0 %4142
        %4145 = vset.pattern.permute.xlu0 3
        %4146 = vperm.xlu0 %4145, %v2836
        %v4147 = vpop.permute.xlu0 %4146
        %4149 = vset.pattern.permute.xlu0 3
        %4150 = vperm.xlu0 %4149, %v2837
        %v4151 = vpop.permute.xlu0 %4150
        %4153 = vset.pattern.permute.xlu0 3
        %4154 = vperm.xlu0 %4153, %v2838
        %v4155 = vpop.permute.xlu0 %4154
        %4157 = vset.pattern.permute.xlu0 3
        %4158 = vperm.xlu0 %4157, %v2839
        %v4159 = vpop.permute.xlu0 %4158
        %4161 = vset.pattern.permute.xlu0 3
        %4162 = vperm.xlu0 %4161, %v2840
        %v4163 = vpop.permute.xlu0 %4162
        %4165 = vset.pattern.permute.xlu0 3
        %4166 = vperm.xlu0 %4165, %v2841
        %v4167 = vpop.permute.xlu0 %4166
        %4169 = vset.pattern.permute.xlu0 3
        %4170 = vperm.xlu0 %4169, %v2842
        %v4171 = vpop.permute.xlu0 %4170
        %4173 = vset.pattern.permute.xlu0 3
        %4174 = vperm.xlu0 %4173, %v2843
        %v4175 = vpop.permute.xlu0 %4174
        %v4209 = vunpack.c.l.b16 %v4001
        %v4210 = vunpack.c.h.b16 %v4001
        %v4211 = vunpack.c.l.b16 %v4002
        %v4212 = vunpack.c.h.b16 %v4002
        %v4213 = vunpack.c.l.b16 %v4003
        %v4214 = vunpack.c.h.b16 %v4003
        %v4215 = vunpack.c.l.b16 %v4004
        %v4216 = vunpack.c.h.b16 %v4004
        %v4217 = vunpack.c.l.b16 %v4005
        %v4218 = vunpack.c.h.b16 %v4005
        %v4219 = vunpack.c.l.b16 %v4006
        %v4220 = vunpack.c.h.b16 %v4006
        %v4221 = vunpack.c.l.b16 %v4007
        %v4222 = vunpack.c.h.b16 %v4007
        %v4223 = vunpack.c.l.b16 %v4008
        %v4224 = vunpack.c.h.b16 %v4008
        %v4225 = vunpack.c.l.b16 %v4009
        %v4226 = vunpack.c.h.b16 %v4009
        %v4227 = vunpack.c.l.b16 %v4010
        %v4228 = vunpack.c.h.b16 %v4010
        %v4229 = vunpack.c.l.b16 %v4011
        %v4230 = vunpack.c.h.b16 %v4011
        %v4231 = vunpack.c.l.b16 %v4012
        %v4232 = vunpack.c.h.b16 %v4012
        %v4233 = vunpack.c.l.b16 %v4013
        %v4234 = vunpack.c.h.b16 %v4013
        %v4235 = vunpack.c.l.b16 %v4014
        %v4236 = vunpack.c.h.b16 %v4014
        %v4237 = vunpack.c.l.b16 %v4015
        %v4238 = vunpack.c.h.b16 %v4015
        %v4239 = vunpack.c.l.b16 %v4016
        %v4240 = vunpack.c.h.b16 %v4016
        %v4241 = vunpack.c.l.b16 %v4017
        %v4242 = vunpack.c.h.b16 %v4017
        %v4243 = vunpack.c.l.b16 %v4018
        %v4244 = vunpack.c.h.b16 %v4018
        %v4245 = vunpack.c.l.b16 %v4019
        %v4246 = vunpack.c.h.b16 %v4019
        %v4247 = vunpack.c.l.b16 %v4020
        %v4248 = vunpack.c.h.b16 %v4020
        %v4249 = vunpack.c.l.b16 %v4021
        %v4250 = vunpack.c.h.b16 %v4021
        %v4251 = vunpack.c.l.b16 %v4022
        %v4252 = vunpack.c.h.b16 %v4022
        %v4253 = vunpack.c.l.b16 %v4023
        %v4254 = vunpack.c.h.b16 %v4023
        %v4255 = vunpack.c.l.b16 %v4024
        %v4256 = vunpack.c.h.b16 %v4024
        %v4257 = vunpack.c.l.b16 %v4025
        %v4258 = vunpack.c.h.b16 %v4025
        %v4259 = vunpack.c.l.b16 %v4026
        %v4260 = vunpack.c.h.b16 %v4026
        %v4261 = vunpack.c.l.b16 %v4027
        %v4262 = vunpack.c.h.b16 %v4027
        %v4263 = vunpack.c.l.b16 %v4028
        %v4264 = vunpack.c.h.b16 %v4028
        %v4265 = vunpack.c.l.b16 %v4029
        %v4266 = vunpack.c.h.b16 %v4029
        %v4267 = vunpack.c.l.b16 %v4030
        %v4268 = vunpack.c.h.b16 %v4030
        %v4269 = vunpack.c.l.b16 %v4031
        %v4270 = vunpack.c.h.b16 %v4031
        %v4271 = vunpack.c.l.b16 %v4032
        %v4272 = vunpack.c.h.b16 %v4032
        %v4273 = vpack.c.b16 %v4211, %v4209
        %v4274 = vpack.c.b16 %v4212, %v4210
        %v4275 = vpack.c.b16 %v4215, %v4213
        %v4276 = vpack.c.b16 %v4216, %v4214
        %v4277 = vpack.c.b16 %v4219, %v4217
        %v4278 = vpack.c.b16 %v4220, %v4218
        %v4279 = vpack.c.b16 %v4223, %v4221
        %v4280 = vpack.c.b16 %v4224, %v4222
        %v4281 = vpack.c.b16 %v4227, %v4225
        %v4282 = vpack.c.b16 %v4228, %v4226
        %v4283 = vpack.c.b16 %v4231, %v4229
        %v4284 = vpack.c.b16 %v4232, %v4230
        %v4285 = vpack.c.b16 %v4235, %v4233
        %v4286 = vpack.c.b16 %v4236, %v4234
        %v4287 = vpack.c.b16 %v4239, %v4237
        %v4288 = vpack.c.b16 %v4240, %v4238
        %v4289 = vpack.c.b16 %v4243, %v4241
        %v4290 = vpack.c.b16 %v4244, %v4242
        %v4291 = vpack.c.b16 %v4247, %v4245
        %v4292 = vpack.c.b16 %v4248, %v4246
        %v4293 = vpack.c.b16 %v4251, %v4249
        %v4294 = vpack.c.b16 %v4252, %v4250
        %v4295 = vpack.c.b16 %v4255, %v4253
        %v4296 = vpack.c.b16 %v4256, %v4254
        %v4297 = vpack.c.b16 %v4259, %v4257
        %v4298 = vpack.c.b16 %v4260, %v4258
        %v4299 = vpack.c.b16 %v4263, %v4261
        %v4300 = vpack.c.b16 %v4264, %v4262
        %v4301 = vpack.c.b16 %v4267, %v4265
        %v4302 = vpack.c.b16 %v4268, %v4266
        %v4303 = vpack.c.b16 %v4271, %v4269
        %v4304 = vpack.c.b16 %v4272, %v4270
        %4337 = vmatprep.subr.bf16.mxu0 0
        %4338 = vmatpush1.bf16.msra.mxu0 %v4033
        %4339 = vmatprep.subr.bf16.mxu0 0
        %4340 = vmatpush1.bf16.msra.mxu0 %v4034
        %4341 = vmatprep.subr.bf16.mxu0 0
        %4342 = vmatpush1.bf16.msra.mxu0 %v4035
        %4343 = vmatprep.subr.bf16.mxu0 0
        %4344 = vmatpush1.bf16.msra.mxu0 %v4036
        %4345 = vmatprep.subr.bf16.mxu0 0
        %4346 = vmatpush1.bf16.msra.mxu0 %v4037
        %4347 = vmatprep.subr.bf16.mxu0 0
        %4348 = vmatpush1.bf16.msra.mxu0 %v4038
        %4349 = vmatprep.subr.bf16.mxu0 0
        %4350 = vmatpush1.bf16.msra.mxu0 %v4039
        %4351 = vmatprep.subr.bf16.mxu0 0
        %4352 = vmatpush1.bf16.msra.mxu0 %v4040
        %4353 = vmatprep.subr.bf16.mxu0 0
        %4354 = vmatpush1.bf16.msra.mxu0 %v4041
        %4355 = vmatprep.subr.bf16.mxu0 0
        %4356 = vmatpush1.bf16.msra.mxu0 %v4042
        %4357 = vmatprep.subr.bf16.mxu0 0
        %4358 = vmatpush1.bf16.msra.mxu0 %v4043
        %4359 = vmatprep.subr.bf16.mxu0 0
        %4360 = vmatpush1.bf16.msra.mxu0 %v4044
        %4361 = vmatprep.subr.bf16.mxu0 0
        %4362 = vmatpush1.bf16.msra.mxu0 %v4045
        %4363 = vmatprep.subr.bf16.mxu0 0
        %4364 = vmatpush1.bf16.msra.mxu0 %v4046
        %4365 = vmatprep.subr.bf16.mxu0 0
        %4366 = vmatpush1.bf16.msra.mxu0 %v4047
        %4367 = vmatprep.subr.bf16.mxu0 0
        %4368 = vmatpush1.bf16.msra.mxu0 %v4048
        %4369 = vmatprep.mubr.bf16.mxu0 %v4274
        %4370 = vmatmul.mubr.bf16.gmra.mrb[0].mxu0 %v4273
        %v4371 = vpop.f32.mrb[0].mxu0
        %v4372 = vadd.f32 %v4051, %v4371
        %v4373 = vpop.f32.mrb[0].mxu0
        %v4374 = vpop.f32.mrb[0].mxu0
        %v4375 = vadd.f32 %v4055, %v4374
        %v4376 = vpop.f32.mrb[0].mxu0
        %4377 = vmatprep.mubr.bf16.mxu0 %v4276
        %4378 = vmatmul.mubr.bf16.gmra.mrb[0].mxu0 %v4275
        %v4379 = vpop.f32.mrb[0].mxu0
        %v4380 = vadd.f32 %v4059, %v4379
        %v4381 = vpop.f32.mrb[0].mxu0
        %v4382 = vpop.f32.mrb[0].mxu0
        %v4383 = vadd.f32 %v4063, %v4382
        %v4384 = vpop.f32.mrb[0].mxu0
        %4385 = vmatprep.mubr.bf16.mxu0 %v4278
        %4386 = vmatmul.mubr.bf16.gmra.mrb[0].mxu0 %v4277
        %v4387 = vpop.f32.mrb[0].mxu0
        %v4388 = vadd.f32 %v4067, %v4387
        %v4389 = vpop.f32.mrb[0].mxu0
        %v4390 = vpop.f32.mrb[0].mxu0
        %v4391 = vadd.f32 %v4071, %v4390
        %v4392 = vpop.f32.mrb[0].mxu0
        %4393 = vmatprep.mubr.bf16.mxu0 %v4280
        %4394 = vmatmul.mubr.bf16.gmra.mrb[0].mxu0 %v4279
        %v4395 = vpop.f32.mrb[0].mxu0
        %v4396 = vadd.f32 %v4075, %v4395
        %v4397 = vpop.f32.mrb[0].mxu0
        %v4398 = vpop.f32.mrb[0].mxu0
        %v4399 = vadd.f32 %v4079, %v4398
        %v4400 = vpop.f32.mrb[0].mxu0
        %4401 = vmatprep.mubr.bf16.mxu0 %v4282
        %4402 = vmatmul.mubr.bf16.gmra.mrb[0].mxu0 %v4281
        %v4403 = vpop.f32.mrb[0].mxu0
        %v4404 = vadd.f32 %v4083, %v4403
        %v4405 = vpop.f32.mrb[0].mxu0
        %v4406 = vpop.f32.mrb[0].mxu0
        %v4407 = vadd.f32 %v4087, %v4406
        %v4408 = vpop.f32.mrb[0].mxu0
        %4409 = vmatprep.mubr.bf16.mxu0 %v4284
        %4410 = vmatmul.mubr.bf16.gmra.mrb[0].mxu0 %v4283
        %v4411 = vpop.f32.mrb[0].mxu0
        %v4412 = vadd.f32 %v4091, %v4411
        %v4413 = vpop.f32.mrb[0].mxu0
        %v4414 = vpop.f32.mrb[0].mxu0
        %v4415 = vadd.f32 %v4095, %v4414
        %v4416 = vpop.f32.mrb[0].mxu0
        %4417 = vmatprep.mubr.bf16.mxu0 %v4286
        %4418 = vmatmul.mubr.bf16.gmra.mrb[0].mxu0 %v4285
        %v4419 = vpop.f32.mrb[0].mxu0
        %v4420 = vadd.f32 %v4099, %v4419
        %v4421 = vpop.f32.mrb[0].mxu0
        %v4422 = vpop.f32.mrb[0].mxu0
        %v4423 = vadd.f32 %v4103, %v4422
        %v4424 = vpop.f32.mrb[0].mxu0
        %4425 = vmatprep.mubr.bf16.mxu0 %v4288
        %4426 = vmatmul.mubr.bf16.gmra.mrb[0].mxu0 %v4287
        %v4427 = vpop.f32.mrb[0].mxu0
        %v4428 = vadd.f32 %v4107, %v4427
        %v4429 = vpop.f32.mrb[0].mxu0
        %v4430 = vpop.f32.mrb[0].mxu0
        %v4431 = vadd.f32 %v4111, %v4430
        %v4432 = vpop.f32.mrb[0].mxu0
        %4433 = vmatprep.mubr.bf16.mxu0 %v4290
        %4434 = vmatmul.mubr.bf16.gmra.mrb[0].mxu0 %v4289
        %v4435 = vpop.f32.mrb[0].mxu0
        %v4436 = vadd.f32 %v4115, %v4435
        %v4437 = vpop.f32.mrb[0].mxu0
        %v4438 = vpop.f32.mrb[0].mxu0
        %v4439 = vadd.f32 %v4119, %v4438
        %v4440 = vpop.f32.mrb[0].mxu0
        %4441 = vmatprep.mubr.bf16.mxu0 %v4292
        %4442 = vmatmul.mubr.bf16.gmra.mrb[0].mxu0 %v4291
        %v4443 = vpop.f32.mrb[0].mxu0
        %v4444 = vadd.f32 %v4123, %v4443
        %v4445 = vpop.f32.mrb[0].mxu0
        %v4446 = vpop.f32.mrb[0].mxu0
        %v4447 = vadd.f32 %v4127, %v4446
        %v4448 = vpop.f32.mrb[0].mxu0
        %4449 = vmatprep.mubr.bf16.mxu0 %v4294
        %4450 = vmatmul.mubr.bf16.gmra.mrb[0].mxu0 %v4293
        %v4451 = vpop.f32.mrb[0].mxu0
        %v4452 = vadd.f32 %v4131, %v4451
        %v4453 = vpop.f32.mrb[0].mxu0
        %v4454 = vpop.f32.mrb[0].mxu0
        %v4455 = vadd.f32 %v4135, %v4454
        %v4456 = vpop.f32.mrb[0].mxu0
        %4457 = vmatprep.mubr.bf16.mxu0 %v4296
        %4458 = vmatmul.mubr.bf16.gmra.mrb[0].mxu0 %v4295
        %v4459 = vpop.f32.mrb[0].mxu0
        %v4460 = vadd.f32 %v4139, %v4459
        %v4461 = vpop.f32.mrb[0].mxu0
        %v4462 = vpop.f32.mrb[0].mxu0
        %v4463 = vadd.f32 %v4143, %v4462
        %v4464 = vpop.f32.mrb[0].mxu0
        %4465 = vmatprep.mubr.bf16.mxu0 %v4298
        %4466 = vmatmul.mubr.bf16.gmra.mrb[0].mxu0 %v4297
        %v4467 = vpop.f32.mrb[0].mxu0
        %v4468 = vadd.f32 %v4147, %v4467
        %v4469 = vpop.f32.mrb[0].mxu0
        %v4470 = vpop.f32.mrb[0].mxu0
        %v4471 = vadd.f32 %v4151, %v4470
        %v4472 = vpop.f32.mrb[0].mxu0
        %4473 = vmatprep.mubr.bf16.mxu0 %v4300
        %4474 = vmatmul.mubr.bf16.gmra.mrb[0].mxu0 %v4299
        %v4475 = vpop.f32.mrb[0].mxu0
        %v4476 = vadd.f32 %v4155, %v4475
        %v4477 = vpop.f32.mrb[0].mxu0
        %v4478 = vpop.f32.mrb[0].mxu0
        %v4479 = vadd.f32 %v4159, %v4478
        %v4480 = vpop.f32.mrb[0].mxu0
        %4481 = vmatprep.mubr.bf16.mxu0 %v4302
        %4482 = vmatmul.mubr.bf16.gmra.mrb[0].mxu0 %v4301
        %v4483 = vpop.f32.mrb[0].mxu0
        %v4484 = vadd.f32 %v4163, %v4483
        %v4485 = vpop.f32.mrb[0].mxu0
        %v4486 = vpop.f32.mrb[0].mxu0
        %v4487 = vadd.f32 %v4167, %v4486
        %v4488 = vpop.f32.mrb[0].mxu0
        %4489 = vmatprep.mubr.bf16.mxu0 %v4304
        %4490 = vmatmul.mubr.bf16.gmra.mrb[0].mxu0 %v4303
        %v4491 = vpop.f32.mrb[0].mxu0
        %v4492 = vadd.f32 %v4171, %v4491
        %v4493 = vpop.f32.mrb[0].mxu0
        %v4494 = vpop.f32.mrb[0].mxu0
        %v4495 = vadd.f32 %v4175, %v4494
        %v4496 = vpop.f32.mrb[0].mxu0
        %4497 = vdwg.mxu0
        %v4498 = vadd.f32 %v4372, %v4375
        %v4499 = vadd.f32 %v4498, %v4380
        %v4500 = vadd.f32 %v4499, %v4383
        %v4501 = vadd.f32 %v4500, %v4388
        %v4502 = vadd.f32 %v4501, %v4391
        %v4503 = vadd.f32 %v4502, %v4396
        %v4504 = vadd.f32 %v4503, %v4399
        %v4505 = vadd.f32 %v4504, %v4404
        %v4506 = vadd.f32 %v4505, %v4407
        %v4507 = vadd.f32 %v4506, %v4412
        %v4508 = vadd.f32 %v4507, %v4415
        %v4509 = vadd.f32 %v4508, %v4420
        %v4510 = vadd.f32 %v4509, %v4423
        %v4511 = vadd.f32 %v4510, %v4428
        %v4512 = vadd.f32 %v4511, %v4431
        %v4513 = vadd.f32 %v4512, %v4436
        %v4514 = vadd.f32 %v4513, %v4439
        %v4515 = vadd.f32 %v4514, %v4444
        %v4516 = vadd.f32 %v4515, %v4447
        %v4517 = vadd.f32 %v4516, %v4452
        %v4518 = vadd.f32 %v4517, %v4455
        %v4519 = vadd.f32 %v4518, %v4460
        %v4520 = vadd.f32 %v4519, %v4463
        %v4521 = vadd.f32 %v4520, %v4468
        %v4522 = vadd.f32 %v4521, %v4471
        %v4523 = vadd.f32 %v4522, %v4476
        %v4524 = vadd.f32 %v4523, %v4479
        %v4525 = vadd.f32 %v4524, %v4484
        %v4526 = vadd.f32 %v4525, %v4487
        %v4527 = vadd.f32 %v4526, %v4492
        %v4528 = vadd.f32 %v4527, %v4495
        %v4529 = vrot.slane %v4528, 4
        %v4530 = vadd.f32 %v4528, %v4529
        %v4531 = vrot.slane %v4530, 2
        %v4532 = vadd.f32 %v4530, %v4531
        %v4533 = vrot.slane %v4532, 1
        %v4534 = vadd.f32 %v4532, %v4533
        %v4535 = vmul.f32 %v4534, %v979
        %v4536 = vmul.f32 %v4372, %v4372
        %v4537 = vmul.f32 %v4375, %v4375
        %v4538 = vmul.f32 %v4380, %v4380
        %v4539 = vmul.f32 %v4383, %v4383
        %v4540 = vmul.f32 %v4388, %v4388
        %v4541 = vmul.f32 %v4391, %v4391
        %v4542 = vmul.f32 %v4396, %v4396
        %v4543 = vmul.f32 %v4399, %v4399
        %v4544 = vmul.f32 %v4404, %v4404
        %v4545 = vmul.f32 %v4407, %v4407
        %v4546 = vmul.f32 %v4412, %v4412
        %v4547 = vmul.f32 %v4415, %v4415
        %v4548 = vmul.f32 %v4420, %v4420
        %v4549 = vmul.f32 %v4423, %v4423
        %v4550 = vmul.f32 %v4428, %v4428
        %v4551 = vmul.f32 %v4431, %v4431
        %v4552 = vmul.f32 %v4436, %v4436
        %v4553 = vmul.f32 %v4439, %v4439
        %v4554 = vmul.f32 %v4444, %v4444
        %v4555 = vmul.f32 %v4447, %v4447
        %v4556 = vmul.f32 %v4452, %v4452
        %v4557 = vmul.f32 %v4455, %v4455
        %v4558 = vmul.f32 %v4460, %v4460
        %v4559 = vmul.f32 %v4463, %v4463
        %v4560 = vmul.f32 %v4468, %v4468
        %v4561 = vmul.f32 %v4471, %v4471
        %v4562 = vmul.f32 %v4476, %v4476
        %v4563 = vmul.f32 %v4479, %v4479
        %v4564 = vmul.f32 %v4484, %v4484
        %v4565 = vmul.f32 %v4487, %v4487
        %v4566 = vmul.f32 %v4492, %v4492
        %v4567 = vmul.f32 %v4495, %v4495
        %v4568 = vadd.f32 %v4536, %v4537
        %v4569 = vadd.f32 %v4568, %v4538
        %v4570 = vadd.f32 %v4569, %v4539
        %v4571 = vadd.f32 %v4570, %v4540
        %v4572 = vadd.f32 %v4571, %v4541
        %v4573 = vadd.f32 %v4572, %v4542
        %v4574 = vadd.f32 %v4573, %v4543
        %v4575 = vadd.f32 %v4574, %v4544
        %v4576 = vadd.f32 %v4575, %v4545
        %v4577 = vadd.f32 %v4576, %v4546
        %v4578 = vadd.f32 %v4577, %v4547
        %v4579 = vadd.f32 %v4578, %v4548
        %v4580 = vadd.f32 %v4579, %v4549
        %v4581 = vadd.f32 %v4580, %v4550
        %v4582 = vadd.f32 %v4581, %v4551
        %v4583 = vadd.f32 %v4582, %v4552
        %v4584 = vadd.f32 %v4583, %v4553
        %v4585 = vadd.f32 %v4584, %v4554
        %v4586 = vadd.f32 %v4585, %v4555
        %v4587 = vadd.f32 %v4586, %v4556
        %v4588 = vadd.f32 %v4587, %v4557
        %v4589 = vadd.f32 %v4588, %v4558
        %v4590 = vadd.f32 %v4589, %v4559
        %v4591 = vadd.f32 %v4590, %v4560
        %v4592 = vadd.f32 %v4591, %v4561
        %v4593 = vadd.f32 %v4592, %v4562
        %v4594 = vadd.f32 %v4593, %v4563
        %v4595 = vadd.f32 %v4594, %v4564
        %v4596 = vadd.f32 %v4595, %v4565
        %v4597 = vadd.f32 %v4596, %v4566
        %v4598 = vadd.f32 %v4597, %v4567
        %v4599 = vrot.slane %v4598, 4
        %v4600 = vadd.f32 %v4598, %v4599
        %v4601 = vrot.slane %v4600, 2
        %v4602 = vadd.f32 %v4600, %v4601
        %v4603 = vrot.slane %v4602, 1
        %v4604 = vadd.f32 %v4602, %v4603
        %v4605 = vmul.f32 %v4604, %v979
        %v4606 = vmul.f32 %v4535, %v4535
        %v4607 = vsub.f32 %v4605, %v4606
        %v4608 = vsub.f32 %v4372, %v4535
        %v4609 = vsub.f32 %v4375, %v4535
        %v4610 = vsub.f32 %v4380, %v4535
        %v4611 = vsub.f32 %v4383, %v4535
        %v4612 = vsub.f32 %v4388, %v4535
        %v4613 = vsub.f32 %v4391, %v4535
        %v4614 = vsub.f32 %v4396, %v4535
        %v4615 = vsub.f32 %v4399, %v4535
        %v4616 = vsub.f32 %v4404, %v4535
        %v4617 = vsub.f32 %v4407, %v4535
        %v4618 = vsub.f32 %v4412, %v4535
        %v4619 = vsub.f32 %v4415, %v4535
        %v4620 = vsub.f32 %v4420, %v4535
        %v4621 = vsub.f32 %v4423, %v4535
        %v4622 = vsub.f32 %v4428, %v4535
        %v4623 = vsub.f32 %v4431, %v4535
        %v4624 = vsub.f32 %v4436, %v4535
        %v4625 = vsub.f32 %v4439, %v4535
        %v4626 = vsub.f32 %v4444, %v4535
        %v4627 = vsub.f32 %v4447, %v4535
        %v4628 = vsub.f32 %v4452, %v4535
        %v4629 = vsub.f32 %v4455, %v4535
        %v4630 = vsub.f32 %v4460, %v4535
        %v4631 = vsub.f32 %v4463, %v4535
        %v4632 = vsub.f32 %v4468, %v4535
        %v4633 = vsub.f32 %v4471, %v4535
        %v4634 = vsub.f32 %v4476, %v4535
        %v4635 = vsub.f32 %v4479, %v4535
        %v4636 = vsub.f32 %v4484, %v4535
        %v4637 = vsub.f32 %v4487, %v4535
        %v4638 = vsub.f32 %v4492, %v4535
        %v4639 = vsub.f32 %v4495, %v4535
        %v4640 = vadd.f32 %v4607, 1e-05
        %v4641 = vrsqrt.pop %v4640
        %v4642 = vmul.f32 %v4608, %v4641
        %v4643 = vmul.f32 %v4609, %v4641
        %v4644 = vmul.f32 %v4610, %v4641
        %v4645 = vmul.f32 %v4611, %v4641
        %v4646 = vmul.f32 %v4612, %v4641
        %v4647 = vmul.f32 %v4613, %v4641
        %v4648 = vmul.f32 %v4614, %v4641
        %v4649 = vmul.f32 %v4615, %v4641
        %v4650 = vmul.f32 %v4616, %v4641
        %v4651 = vmul.f32 %v4617, %v4641
        %v4652 = vmul.f32 %v4618, %v4641
        %v4653 = vmul.f32 %v4619, %v4641
        %v4654 = vmul.f32 %v4620, %v4641
        %v4655 = vmul.f32 %v4621, %v4641
        %v4656 = vmul.f32 %v4622, %v4641
        %v4657 = vmul.f32 %v4623, %v4641
        %v4658 = vmul.f32 %v4624, %v4641
        %v4659 = vmul.f32 %v4625, %v4641
        %v4660 = vmul.f32 %v4626, %v4641
        %v4661 = vmul.f32 %v4627, %v4641
        %v4662 = vmul.f32 %v4628, %v4641
        %v4663 = vmul.f32 %v4629, %v4641
        %v4664 = vmul.f32 %v4630, %v4641
        %v4665 = vmul.f32 %v4631, %v4641
        %v4666 = vmul.f32 %v4632, %v4641
        %v4667 = vmul.f32 %v4633, %v4641
        %v4668 = vmul.f32 %v4634, %v4641
        %v4669 = vmul.f32 %v4635, %v4641
        %v4670 = vmul.f32 %v4636, %v4641
        %v4671 = vmul.f32 %v4637, %v4641
        %v4672 = vmul.f32 %v4638, %v4641
        %v4673 = vmul.f32 %v4639, %v4641
        %4674 = vset.pattern.permute.xlu0 4
        %4675 = vperm.xlu0 %4674, %v2812
        %v4676 = vpop.permute.xlu0 %4675
        %4678 = vset.pattern.permute.xlu0 4
        %4679 = vperm.xlu0 %4678, %v2813
        %v4680 = vpop.permute.xlu0 %4679
        %4682 = vset.pattern.permute.xlu0 4
        %4683 = vperm.xlu0 %4682, %v2814
        %v4684 = vpop.permute.xlu0 %4683
        %4686 = vset.pattern.permute.xlu0 4
        %4687 = vperm.xlu0 %4686, %v2815
        %v4688 = vpop.permute.xlu0 %4687
        %4690 = vset.pattern.permute.xlu0 4
        %4691 = vperm.xlu0 %4690, %v2816
        %v4692 = vpop.permute.xlu0 %4691
        %4694 = vset.pattern.permute.xlu0 4
        %4695 = vperm.xlu0 %4694, %v2817
        %v4696 = vpop.permute.xlu0 %4695
        %4698 = vset.pattern.permute.xlu0 4
        %4699 = vperm.xlu0 %4698, %v2818
        %v4700 = vpop.permute.xlu0 %4699
        %4702 = vset.pattern.permute.xlu0 4
        %4703 = vperm.xlu0 %4702, %v2819
        %v4704 = vpop.permute.xlu0 %4703
        %4706 = vset.pattern.permute.xlu0 4
        %4707 = vperm.xlu0 %4706, %v2820
        %v4708 = vpop.permute.xlu0 %4707
        %4710 = vset.pattern.permute.xlu0 4
        %4711 = vperm.xlu0 %4710, %v2821
        %v4712 = vpop.permute.xlu0 %4711
        %4714 = vset.pattern.permute.xlu0 4
        %4715 = vperm.xlu0 %4714, %v2822
        %v4716 = vpop.permute.xlu0 %4715
        %4718 = vset.pattern.permute.xlu0 4
        %4719 = vperm.xlu0 %4718, %v2823
        %v4720 = vpop.permute.xlu0 %4719
        %4722 = vset.pattern.permute.xlu0 4
        %4723 = vperm.xlu0 %4722, %v2824
        %v4724 = vpop.permute.xlu0 %4723
        %4726 = vset.pattern.permute.xlu0 4
        %4727 = vperm.xlu0 %4726, %v2825
        %v4728 = vpop.permute.xlu0 %4727
        %4730 = vset.pattern.permute.xlu0 4
        %4731 = vperm.xlu0 %4730, %v2826
        %v4732 = vpop.permute.xlu0 %4731
        %4734 = vset.pattern.permute.xlu0 4
        %4735 = vperm.xlu0 %4734, %v2827
        %v4736 = vpop.permute.xlu0 %4735
        %4738 = vset.pattern.permute.xlu0 4
        %4739 = vperm.xlu0 %4738, %v2828
        %v4740 = vpop.permute.xlu0 %4739
        %4742 = vset.pattern.permute.xlu0 4
        %4743 = vperm.xlu0 %4742, %v2829
        %v4744 = vpop.permute.xlu0 %4743
        %4746 = vset.pattern.permute.xlu0 4
        %4747 = vperm.xlu0 %4746, %v2830
        %v4748 = vpop.permute.xlu0 %4747
        %4750 = vset.pattern.permute.xlu0 4
        %4751 = vperm.xlu0 %4750, %v2831
        %v4752 = vpop.permute.xlu0 %4751
        %4754 = vset.pattern.permute.xlu0 4
        %4755 = vperm.xlu0 %4754, %v2832
        %v4756 = vpop.permute.xlu0 %4755
        %4758 = vset.pattern.permute.xlu0 4
        %4759 = vperm.xlu0 %4758, %v2833
        %v4760 = vpop.permute.xlu0 %4759
        %4762 = vset.pattern.permute.xlu0 4
        %4763 = vperm.xlu0 %4762, %v2834
        %v4764 = vpop.permute.xlu0 %4763
        %4766 = vset.pattern.permute.xlu0 4
        %4767 = vperm.xlu0 %4766, %v2835
        %v4768 = vpop.permute.xlu0 %4767
        %4770 = vset.pattern.permute.xlu0 4
        %4771 = vperm.xlu0 %4770, %v2836
        %v4772 = vpop.permute.xlu0 %4771
        %4774 = vset.pattern.permute.xlu0 4
        %4775 = vperm.xlu0 %4774, %v2837
        %v4776 = vpop.permute.xlu0 %4775
        %4778 = vset.pattern.permute.xlu0 4
        %4779 = vperm.xlu0 %4778, %v2838
        %v4780 = vpop.permute.xlu0 %4779
        %4782 = vset.pattern.permute.xlu0 4
        %4783 = vperm.xlu0 %4782, %v2839
        %v4784 = vpop.permute.xlu0 %4783
        %4786 = vset.pattern.permute.xlu0 4
        %4787 = vperm.xlu0 %4786, %v2840
        %v4788 = vpop.permute.xlu0 %4787
        %4790 = vset.pattern.permute.xlu0 4
        %4791 = vperm.xlu0 %4790, %v2841
        %v4792 = vpop.permute.xlu0 %4791
        %4794 = vset.pattern.permute.xlu0 4
        %4795 = vperm.xlu0 %4794, %v2842
        %v4796 = vpop.permute.xlu0 %4795
        %4798 = vset.pattern.permute.xlu0 4
        %4799 = vperm.xlu0 %4798, %v2843
        %v4800 = vpop.permute.xlu0 %4799
        %v4802 = vmul.f32 %v4642, %v4676
        %v4803 = vmul.f32 %v4643, %v4680
        %v4804 = vmul.f32 %v4644, %v4684
        %v4805 = vmul.f32 %v4645, %v4688
        %v4806 = vmul.f32 %v4646, %v4692
        %v4807 = vmul.f32 %v4647, %v4696
        %v4808 = vmul.f32 %v4648, %v4700
        %v4809 = vmul.f32 %v4649, %v4704
        %v4810 = vmul.f32 %v4650, %v4708
        %v4811 = vmul.f32 %v4651, %v4712
        %v4812 = vmul.f32 %v4652, %v4716
        %v4813 = vmul.f32 %v4653, %v4720
        %v4814 = vmul.f32 %v4654, %v4724
        %v4815 = vmul.f32 %v4655, %v4728
        %v4816 = vmul.f32 %v4656, %v4732
        %v4817 = vmul.f32 %v4657, %v4736
        %v4818 = vmul.f32 %v4658, %v4740
        %v4819 = vmul.f32 %v4659, %v4744
        %v4820 = vmul.f32 %v4660, %v4748
        %v4821 = vmul.f32 %v4661, %v4752
        %v4822 = vmul.f32 %v4662, %v4756
        %v4823 = vmul.f32 %v4663, %v4760
        %v4824 = vmul.f32 %v4664, %v4764
        %v4825 = vmul.f32 %v4665, %v4768
        %v4826 = vmul.f32 %v4666, %v4772
        %v4827 = vmul.f32 %v4667, %v4776
        %v4828 = vmul.f32 %v4668, %v4780
        %v4829 = vmul.f32 %v4669, %v4784
        %v4830 = vmul.f32 %v4670, %v4788
        %v4831 = vmul.f32 %v4671, %v4792
        %v4832 = vmul.f32 %v4672, %v4796
        %v4833 = vmul.f32 %v4673, %v4800
        %4834 = vset.pattern.permute.xlu0 5
        %4835 = vperm.xlu0 %4834, %v2812
        %v4836 = vpop.permute.xlu0 %4835
        %4838 = vset.pattern.permute.xlu0 5
        %4839 = vperm.xlu0 %4838, %v2813
        %v4840 = vpop.permute.xlu0 %4839
        %4842 = vset.pattern.permute.xlu0 5
        %4843 = vperm.xlu0 %4842, %v2814
        %v4844 = vpop.permute.xlu0 %4843
        %4846 = vset.pattern.permute.xlu0 5
        %4847 = vperm.xlu0 %4846, %v2815
        %v4848 = vpop.permute.xlu0 %4847
        %4850 = vset.pattern.permute.xlu0 5
        %4851 = vperm.xlu0 %4850, %v2816
        %v4852 = vpop.permute.xlu0 %4851
        %4854 = vset.pattern.permute.xlu0 5
        %4855 = vperm.xlu0 %4854, %v2817
        %v4856 = vpop.permute.xlu0 %4855
        %4858 = vset.pattern.permute.xlu0 5
        %4859 = vperm.xlu0 %4858, %v2818
        %v4860 = vpop.permute.xlu0 %4859
        %4862 = vset.pattern.permute.xlu0 5
        %4863 = vperm.xlu0 %4862, %v2819
        %v4864 = vpop.permute.xlu0 %4863
        %4866 = vset.pattern.permute.xlu0 5
        %4867 = vperm.xlu0 %4866, %v2820
        %v4868 = vpop.permute.xlu0 %4867
        %4870 = vset.pattern.permute.xlu0 5
        %4871 = vperm.xlu0 %4870, %v2821
        %v4872 = vpop.permute.xlu0 %4871
        %4874 = vset.pattern.permute.xlu0 5
        %4875 = vperm.xlu0 %4874, %v2822
        %v4876 = vpop.permute.xlu0 %4875
        %4878 = vset.pattern.permute.xlu0 5
        %4879 = vperm.xlu0 %4878, %v2823
        %v4880 = vpop.permute.xlu0 %4879
        %4882 = vset.pattern.permute.xlu0 5
        %4883 = vperm.xlu0 %4882, %v2824
        %v4884 = vpop.permute.xlu0 %4883
        %4886 = vset.pattern.permute.xlu0 5
        %4887 = vperm.xlu0 %4886, %v2825
        %v4888 = vpop.permute.xlu0 %4887
        %4890 = vset.pattern.permute.xlu0 5
        %4891 = vperm.xlu0 %4890, %v2826
        %v4892 = vpop.permute.xlu0 %4891
        %4894 = vset.pattern.permute.xlu0 5
        %4895 = vperm.xlu0 %4894, %v2827
        %v4896 = vpop.permute.xlu0 %4895
        %4898 = vset.pattern.permute.xlu0 5
        %4899 = vperm.xlu0 %4898, %v2828
        %v4900 = vpop.permute.xlu0 %4899
        %4902 = vset.pattern.permute.xlu0 5
        %4903 = vperm.xlu0 %4902, %v2829
        %v4904 = vpop.permute.xlu0 %4903
        %4906 = vset.pattern.permute.xlu0 5
        %4907 = vperm.xlu0 %4906, %v2830
        %v4908 = vpop.permute.xlu0 %4907
        %4910 = vset.pattern.permute.xlu0 5
        %4911 = vperm.xlu0 %4910, %v2831
        %v4912 = vpop.permute.xlu0 %4911
        %4914 = vset.pattern.permute.xlu0 5
        %4915 = vperm.xlu0 %4914, %v2832
        %v4916 = vpop.permute.xlu0 %4915
        %4918 = vset.pattern.permute.xlu0 5
        %4919 = vperm.xlu0 %4918, %v2833
        %v4920 = vpop.permute.xlu0 %4919
        %4922 = vset.pattern.permute.xlu0 5
        %4923 = vperm.xlu0 %4922, %v2834
        %v4924 = vpop.permute.xlu0 %4923
        %4926 = vset.pattern.permute.xlu0 5
        %4927 = vperm.xlu0 %4926, %v2835
        %v4928 = vpop.permute.xlu0 %4927
        %4930 = vset.pattern.permute.xlu0 5
        %4931 = vperm.xlu0 %4930, %v2836
        %v4932 = vpop.permute.xlu0 %4931
        %4934 = vset.pattern.permute.xlu0 5
        %4935 = vperm.xlu0 %4934, %v2837
        %v4936 = vpop.permute.xlu0 %4935
        %4938 = vset.pattern.permute.xlu0 5
        %4939 = vperm.xlu0 %4938, %v2838
        %v4940 = vpop.permute.xlu0 %4939
        %4942 = vset.pattern.permute.xlu0 5
        %4943 = vperm.xlu0 %4942, %v2839
        %v4944 = vpop.permute.xlu0 %4943
        %4946 = vset.pattern.permute.xlu0 5
        %4947 = vperm.xlu0 %4946, %v2840
        %v4948 = vpop.permute.xlu0 %4947
        %4950 = vset.pattern.permute.xlu0 5
        %4951 = vperm.xlu0 %4950, %v2841
        %v4952 = vpop.permute.xlu0 %4951
        %4954 = vset.pattern.permute.xlu0 5
        %4955 = vperm.xlu0 %4954, %v2842
        %v4956 = vpop.permute.xlu0 %4955
        %4958 = vset.pattern.permute.xlu0 5
        %4959 = vperm.xlu0 %4958, %v2843
        %v4960 = vpop.permute.xlu0 %4959
        %v4962 = vadd.f32 %v4802, %v4836
        %v4963 = vadd.f32 %v4803, %v4840
        %v4964 = vadd.f32 %v4804, %v4844
        %v4965 = vadd.f32 %v4805, %v4848
        %v4966 = vadd.f32 %v4806, %v4852
        %v4967 = vadd.f32 %v4807, %v4856
        %v4968 = vadd.f32 %v4808, %v4860
        %v4969 = vadd.f32 %v4809, %v4864
        %v4970 = vadd.f32 %v4810, %v4868
        %v4971 = vadd.f32 %v4811, %v4872
        %v4972 = vadd.f32 %v4812, %v4876
        %v4973 = vadd.f32 %v4813, %v4880
        %v4974 = vadd.f32 %v4814, %v4884
        %v4975 = vadd.f32 %v4815, %v4888
        %v4976 = vadd.f32 %v4816, %v4892
        %v4977 = vadd.f32 %v4817, %v4896
        %v4978 = vadd.f32 %v4818, %v4900
        %v4979 = vadd.f32 %v4819, %v4904
        %v4980 = vadd.f32 %v4820, %v4908
        %v4981 = vadd.f32 %v4821, %v4912
        %v4982 = vadd.f32 %v4822, %v4916
        %v4983 = vadd.f32 %v4823, %v4920
        %v4984 = vadd.f32 %v4824, %v4924
        %v4985 = vadd.f32 %v4825, %v4928
        %v4986 = vadd.f32 %v4826, %v4932
        %v4987 = vadd.f32 %v4827, %v4936
        %v4988 = vadd.f32 %v4828, %v4940
        %v4989 = vadd.f32 %v4829, %v4944
        %v4990 = vadd.f32 %v4830, %v4948
        %v4991 = vadd.f32 %v4831, %v4952
        %v4992 = vadd.f32 %v4832, %v4956
        %v4993 = vadd.f32 %v4833, %v4960
        %vm4994 = vcmp.gt.f32.partialorder %v4962, 0.0
        %vm4995 = vcmp.gt.f32.partialorder %v4963, 0.0
        %vm4996 = vcmp.gt.f32.partialorder %v4964, 0.0
        %vm4997 = vcmp.gt.f32.partialorder %v4965, 0.0
        %vm4998 = vcmp.gt.f32.partialorder %v4966, 0.0
        %vm4999 = vcmp.gt.f32.partialorder %v4967, 0.0
        %vm5000 = vcmp.gt.f32.partialorder %v4968, 0.0
        %vm5001 = vcmp.gt.f32.partialorder %v4969, 0.0
        %vm5002 = vcmp.gt.f32.partialorder %v4970, 0.0
        %vm5003 = vcmp.gt.f32.partialorder %v4971, 0.0
        %vm5004 = vcmp.gt.f32.partialorder %v4972, 0.0
        %vm5005 = vcmp.gt.f32.partialorder %v4973, 0.0
        %vm5006 = vcmp.gt.f32.partialorder %v4974, 0.0
        %vm5007 = vcmp.gt.f32.partialorder %v4975, 0.0
        %vm5008 = vcmp.gt.f32.partialorder %v4976, 0.0
        %vm5009 = vcmp.gt.f32.partialorder %v4977, 0.0
        %vm5010 = vcmp.gt.f32.partialorder %v4978, 0.0
        %vm5011 = vcmp.gt.f32.partialorder %v4979, 0.0
        %vm5012 = vcmp.gt.f32.partialorder %v4980, 0.0
        %vm5013 = vcmp.gt.f32.partialorder %v4981, 0.0
        %vm5014 = vcmp.gt.f32.partialorder %v4982, 0.0
        %vm5015 = vcmp.gt.f32.partialorder %v4983, 0.0
        %vm5016 = vcmp.gt.f32.partialorder %v4984, 0.0
        %vm5017 = vcmp.gt.f32.partialorder %v4985, 0.0
        %vm5018 = vcmp.gt.f32.partialorder %v4986, 0.0
        %vm5019 = vcmp.gt.f32.partialorder %v4987, 0.0
        %vm5020 = vcmp.gt.f32.partialorder %v4988, 0.0
        %vm5021 = vcmp.gt.f32.partialorder %v4989, 0.0
        %vm5022 = vcmp.gt.f32.partialorder %v4990, 0.0
        %vm5023 = vcmp.gt.f32.partialorder %v4991, 0.0
        %vm5024 = vcmp.gt.f32.partialorder %v4992, 0.0
        %vm5025 = vcmp.gt.f32.partialorder %v4993, 0.0
        %v5026 = vmul.f32 %v4962, 0.2
        %v5027 = vmul.f32 %v4963, 0.2
        %v5028 = vmul.f32 %v4964, 0.2
        %v5029 = vmul.f32 %v4965, 0.2
        %v5030 = vmul.f32 %v4966, 0.2
        %v5031 = vmul.f32 %v4967, 0.2
        %v5032 = vmul.f32 %v4968, 0.2
        %v5033 = vmul.f32 %v4969, 0.2
        %v5034 = vmul.f32 %v4970, 0.2
        %v5035 = vmul.f32 %v4971, 0.2
        %v5036 = vmul.f32 %v4972, 0.2
        %v5037 = vmul.f32 %v4973, 0.2
        %v5038 = vmul.f32 %v4974, 0.2
        %v5039 = vmul.f32 %v4975, 0.2
        %v5040 = vmul.f32 %v4976, 0.2
        %v5041 = vmul.f32 %v4977, 0.2
        %v5042 = vmul.f32 %v4978, 0.2
        %v5043 = vmul.f32 %v4979, 0.2
        %v5044 = vmul.f32 %v4980, 0.2
        %v5045 = vmul.f32 %v4981, 0.2
        %v5046 = vmul.f32 %v4982, 0.2
        %v5047 = vmul.f32 %v4983, 0.2
        %v5048 = vmul.f32 %v4984, 0.2
        %v5049 = vmul.f32 %v4985, 0.2
        %v5050 = vmul.f32 %v4986, 0.2
        %v5051 = vmul.f32 %v4987, 0.2
        %v5052 = vmul.f32 %v4988, 0.2
        %v5053 = vmul.f32 %v4989, 0.2
        %v5054 = vmul.f32 %v4990, 0.2
        %v5055 = vmul.f32 %v4991, 0.2
        %v5056 = vmul.f32 %v4992, 0.2
        %v5057 = vmul.f32 %v4993, 0.2
        %v5058 = vsel %vm4994, %v4962, %v5026
        %v5059 = vsel %vm4995, %v4963, %v5027
        %v5060 = vsel %vm4996, %v4964, %v5028
        %v5061 = vsel %vm4997, %v4965, %v5029
        %v5062 = vsel %vm4998, %v4966, %v5030
        %v5063 = vsel %vm4999, %v4967, %v5031
        %v5064 = vsel %vm5000, %v4968, %v5032
        %v5065 = vsel %vm5001, %v4969, %v5033
        %v5066 = vsel %vm5002, %v4970, %v5034
        %v5067 = vsel %vm5003, %v4971, %v5035
        %v5068 = vsel %vm5004, %v4972, %v5036
        %v5069 = vsel %vm5005, %v4973, %v5037
        %v5070 = vsel %vm5006, %v4974, %v5038
        %v5071 = vsel %vm5007, %v4975, %v5039
        %v5072 = vsel %vm5008, %v4976, %v5040
        %v5073 = vsel %vm5009, %v4977, %v5041
        %v5074 = vsel %vm5010, %v4978, %v5042
        %v5075 = vsel %vm5011, %v4979, %v5043
        %v5076 = vsel %vm5012, %v4980, %v5044
        %v5077 = vsel %vm5013, %v4981, %v5045
        %v5078 = vsel %vm5014, %v4982, %v5046
        %v5079 = vsel %vm5015, %v4983, %v5047
        %v5080 = vsel %vm5016, %v4984, %v5048
        %v5081 = vsel %vm5017, %v4985, %v5049
        %v5082 = vsel %vm5018, %v4986, %v5050
        %v5083 = vsel %vm5019, %v4987, %v5051
        %v5084 = vsel %vm5020, %v4988, %v5052
        %v5085 = vsel %vm5021, %v4989, %v5053
        %v5086 = vsel %vm5022, %v4990, %v5054
        %v5087 = vsel %vm5023, %v4991, %v5055
        %v5088 = vsel %vm5024, %v4992, %v5056
        %v5089 = vsel %vm5025, %v4993, %v5057
        %s5090 = scalar_lea.vmem %s3, 16
        %v5091 = vld [vmem:[%s5090] sm:$0xff]
        %v5092 = vld [vmem:[%s5090 + $0x8] sm:$0xff]
        %v5093 = vpack.c.bf16 %v5059, %v5058
        %v5094 = vpack.c.bf16 %v5061, %v5060
        %v5095 = vpack.c.bf16 %v5063, %v5062
        %v5096 = vpack.c.bf16 %v5065, %v5064
        %v5097 = vpack.c.bf16 %v5067, %v5066
        %v5098 = vpack.c.bf16 %v5069, %v5068
        %v5099 = vpack.c.bf16 %v5071, %v5070
        %v5100 = vpack.c.bf16 %v5073, %v5072
        %v5101 = vpack.c.bf16 %v5075, %v5074
        %v5102 = vpack.c.bf16 %v5077, %v5076
        %v5103 = vpack.c.bf16 %v5079, %v5078
        %v5104 = vpack.c.bf16 %v5081, %v5080
        %v5105 = vpack.c.bf16 %v5083, %v5082
        %v5106 = vpack.c.bf16 %v5085, %v5084
        %v5107 = vpack.c.bf16 %v5087, %v5086
        %v5108 = vpack.c.bf16 %v5089, %v5088
        %v5111 = vunpack.c.l.b16 %v5091
        %v5112 = vunpack.c.h.b16 %v5091
        %v5113 = vunpack.c.l.b16 %v5092
        %v5114 = vunpack.c.h.b16 %v5092
        %v5115 = vpack.c.b16 %v5113, %v5111
        %v5116 = vpack.c.b16 %v5114, %v5112
        %5119 = vmatprep.subr.bf16.mxu0 0
        %5120 = vmatpush1.bf16.msra.mxu0 %v5093
        %5121 = vmatprep.subr.bf16.mxu0 0
        %5122 = vmatpush1.bf16.msra.mxu0 %v5094
        %5123 = vmatprep.subr.bf16.mxu0 0
        %5124 = vmatpush1.bf16.msra.mxu0 %v5095
        %5125 = vmatprep.subr.bf16.mxu0 0
        %5126 = vmatpush1.bf16.msra.mxu0 %v5096
        %5127 = vmatprep.subr.bf16.mxu0 0
        %5128 = vmatpush1.bf16.msra.mxu0 %v5097
        %5129 = vmatprep.subr.bf16.mxu0 0
        %5130 = vmatpush1.bf16.msra.mxu0 %v5098
        %5131 = vmatprep.subr.bf16.mxu0 0
        %5132 = vmatpush1.bf16.msra.mxu0 %v5099
        %5133 = vmatprep.subr.bf16.mxu0 0
        %5134 = vmatpush1.bf16.msra.mxu0 %v5100
        %5135 = vmatprep.subr.bf16.mxu0 0
        %5136 = vmatpush1.bf16.msra.mxu0 %v5101
        %5137 = vmatprep.subr.bf16.mxu0 0
        %5138 = vmatpush1.bf16.msra.mxu0 %v5102
        %5139 = vmatprep.subr.bf16.mxu0 0
        %5140 = vmatpush1.bf16.msra.mxu0 %v5103
        %5141 = vmatprep.subr.bf16.mxu0 0
        %5142 = vmatpush1.bf16.msra.mxu0 %v5104
        %5143 = vmatprep.subr.bf16.mxu0 0
        %5144 = vmatpush1.bf16.msra.mxu0 %v5105
        %5145 = vmatprep.subr.bf16.mxu0 0
        %5146 = vmatpush1.bf16.msra.mxu0 %v5106
        %5147 = vmatprep.subr.bf16.mxu0 0
        %5148 = vmatpush1.bf16.msra.mxu0 %v5107
        %5149 = vmatprep.subr.bf16.mxu0 0
        %5150 = vmatpush1.bf16.msra.mxu0 %v5108
        %5151 = vmatprep.mubr.bf16.mxu0 %v5116
        %5152 = vmatmul.mubr.bf16.gmra.mrb[0].mxu0 %v5115
        %v5153 = vpop.f32.mrb[0].mxu0
        %v5154 = vadd.f32 0.0, %v5153
        %v5155 = vpop.f32.mrb[0].mxu0
        %v5156 = vpop.f32.mrb[0].mxu0
        %v5157 = vadd.f32 0.0, %v5156
        %v5158 = vpop.f32.mrb[0].mxu0
        %5159 = vdwg.mxu0
        %5160 = vset.pattern.permute.xlu0 6
        %5161 = vperm.xlu0 %5160, %v2812
        %v5162 = vpop.permute.xlu0 %5161
        %v5164 = vadd.f32 %v5154, %v5162
        %v5165 = vtanh.pop %v5164
        %v5166 = vmul.f32 %v5165, 2.0
        %5167 = vset.pattern.permute.xlu0 7
        %5168 = vperm.xlu0 %5167, %v2812
        %v5169 = vpop.permute.xlu0 %5168
        %v5171 = vadd.f32 %v5157, %v5169
        %v5172 = vmul.f32 %v5166, 1.442695
        %v5173 = vpow.pop %v5172
        %v5174 = vmul.f32 %v2810, %v5173
        %v5175 = vadd.f32 %v5174, %v5171
        %v5176 = vrot.slane %v5166, 4
        %v5177 = vadd.f32 %v5166, %v5176
        %v5178 = vrot.slane %v5177, 2
        %v5179 = vadd.f32 %v5177, %v5178
        %v5180 = vrot.slane %v5179, 1
        %v5181 = vadd.f32 %v5179, %v5180
        %v5182 = vadd.f32 %v2715, %v5181
        %s5183 = scalar_lea.vmem %s4, 16
        %v5184 = vld [vmem:[%s5183] sm:$0xff]
        %v5185 = vld [vmem:[%s5183 + $0x8] sm:$0xff]
        %v5187 = vsel %vm412, %v5184, 0
        %v5190 = vsel %vm412, %v5185, 0
        %5192 = vmatprep.subr.mxu0 0.0
        %5193 = vmatpush1.msra.mxu0 %v5175
        %5194 = vmatprep.subr.mxu0 0.0
        %5195 = vmatpush1.msra.mxu0 0.0
        %5196 = vmatprep.subr.mxu0 0.0
        %5197 = vmatpush1.msra.mxu0 0.0
        %5198 = vmatprep.subr.mxu0 0.0
        %5199 = vmatpush1.msra.mxu0 0.0
        %5200 = vmatprep.subr.mxu0 0.0
        %5201 = vmatpush1.msra.mxu0 0.0
        %5202 = vmatprep.subr.mxu0 0.0
        %5203 = vmatpush1.msra.mxu0 0.0
        %5204 = vmatprep.subr.mxu0 0.0
        %5205 = vmatpush1.msra.mxu0 0.0
        %5206 = vmatprep.subr.mxu0 0.0
        %5207 = vmatpush1.msra.mxu0 0.0
        %5208 = vmatprep.subr.mxu0 0.0
        %5209 = vmatpush1.msra.mxu0 0.0
        %5210 = vmatprep.subr.mxu0 0.0
        %5211 = vmatpush1.msra.mxu0 0.0
        %5212 = vmatprep.subr.mxu0 0.0
        %5213 = vmatpush1.msra.mxu0 0.0
        %5214 = vmatprep.subr.mxu0 0.0
        %5215 = vmatpush1.msra.mxu0 0.0
        %5216 = vmatprep.subr.mxu0 0.0
        %5217 = vmatpush1.msra.mxu0 0.0
        %5218 = vmatprep.subr.mxu0 0.0
        %5219 = vmatpush1.msra.mxu0 0.0
        %5220 = vmatprep.subr.mxu0 0.0
        %5221 = vmatpush1.msra.mxu0 0.0
        %5222 = vmatprep.subr.mxu0 0.0
        %5223 = vmatpush1.msra.mxu0 0.0
        %5224 = vmatprep.subr.mxu0 0.0
        %5225 = vmatpush1.msra.mxu0 0.0
        %5226 = vmatprep.subr.mxu0 0.0
        %5227 = vmatpush1.msra.mxu0 0.0
        %5228 = vmatprep.subr.mxu0 0.0
        %5229 = vmatpush1.msra.mxu0 0.0
        %5230 = vmatprep.subr.mxu0 0.0
        %5231 = vmatpush1.msra.mxu0 0.0
        %5232 = vmatprep.subr.mxu0 0.0
        %5233 = vmatpush1.msra.mxu0 0.0
        %5234 = vmatprep.subr.mxu0 0.0
        %5235 = vmatpush1.msra.mxu0 0.0
        %5236 = vmatprep.subr.mxu0 0.0
        %5237 = vmatpush1.msra.mxu0 0.0
        %5238 = vmatprep.subr.mxu0 0.0
        %5239 = vmatpush1.msra.mxu0 0.0
        %5240 = vmatprep.subr.mxu0 0.0
        %5241 = vmatpush1.msra.mxu0 0.0
        %5242 = vmatprep.subr.mxu0 0.0
        %5243 = vmatpush1.msra.mxu0 0.0
        %5244 = vmatprep.subr.mxu0 0.0
        %5245 = vmatpush1.msra.mxu0 0.0
        %5246 = vmatprep.subr.mxu0 0.0
        %5247 = vmatpush1.msra.mxu0 0.0
        %5248 = vmatprep.subr.mxu0 0.0
        %5249 = vmatpush1.msra.mxu0 0.0
        %5250 = vmatprep.subr.mxu0 0.0
        %5251 = vmatpush1.msra.mxu0 0.0
        %5252 = vmatprep.subr.mxu0 0.0
        %5253 = vmatpush1.msra.mxu0 0.0
        %5254 = vmatprep.subr.mxu0 0.0
        %5255 = vmatpush1.msra.mxu0 0.0
        %5256 = vmatprep.mubr.f32.mxu0 0.0
        %5257 = vmatmul.mubr.f32.gmra.mrb[0].mxu0 %v5187
        %v5258 = vpop.f32.mrb[0].mxu0
        %v5259 = vadd.f32 0.0, %v5258
        %v5260 = vpop.f32.mrb[0].mxu0
        %5261 = vmatprep.mubr.f32.mxu0 0.0
        %5262 = vmatmul.mubr.f32.gmra.mrb[0].mxu0 %v5190
        %v5263 = vpop.f32.mrb[0].mxu0
        %v5264 = vadd.f32 0.0, %v5263
        %v5265 = vpop.f32.mrb[0].mxu0
        %5266 = vdwg.mxu0
        %v5267 = vadd.f32 %v3208, %v5259
        %v5268 = vadd.f32 %v3213, %v5264
        %5269 = vset.pattern.permute.xlu0 8
        %5270 = vperm.xlu0 %5269, %v2812
        %v5271 = vpop.permute.xlu0 %5270
        %5273 = vset.pattern.permute.xlu0 8
        %5274 = vperm.xlu0 %5273, %v2813
        %v5275 = vpop.permute.xlu0 %5274
        %v5277 = vadd.f32 %v5267, %v5271
        %v5278 = vadd.f32 %v5268, %v5275
        %s5279 = scalar_lea.vmem %s5, 512
        %v5280 = vld [vmem:[%s5279] sm:$0xff]
        %v5281 = vld [vmem:[%s5279 + $0x8] sm:$0xff]
        %v5282 = vld [vmem:[%s5279 + $0x10] sm:$0xff]
        %v5283 = vld [vmem:[%s5279 + $0x18] sm:$0xff]
        %v5284 = vld [vmem:[%s5279 + $0x20] sm:$0xff]
        %v5285 = vld [vmem:[%s5279 + $0x28] sm:$0xff]
        %v5286 = vld [vmem:[%s5279 + $0x30] sm:$0xff]
        %v5287 = vld [vmem:[%s5279 + $0x38] sm:$0xff]
        %v5288 = vld [vmem:[%s5279 + $0x40] sm:$0xff]
        %v5289 = vld [vmem:[%s5279 + $0x48] sm:$0xff]
        %v5290 = vld [vmem:[%s5279 + $0x50] sm:$0xff]
        %v5291 = vld [vmem:[%s5279 + $0x58] sm:$0xff]
        %v5292 = vld [vmem:[%s5279 + $0x60] sm:$0xff]
        %v5293 = vld [vmem:[%s5279 + $0x68] sm:$0xff]
        %v5294 = vld [vmem:[%s5279 + $0x70] sm:$0xff]
        %v5295 = vld [vmem:[%s5279 + $0x78] sm:$0xff]
        %v5296 = vld [vmem:[%s5279 + $0x80] sm:$0xff]
        %v5297 = vld [vmem:[%s5279 + $0x88] sm:$0xff]
        %v5298 = vld [vmem:[%s5279 + $0x90] sm:$0xff]
        %v5299 = vld [vmem:[%s5279 + $0x98] sm:$0xff]
        %v5300 = vld [vmem:[%s5279 + $0xa0] sm:$0xff]
        %v5301 = vld [vmem:[%s5279 + $0xa8] sm:$0xff]
        %v5302 = vld [vmem:[%s5279 + $0xb0] sm:$0xff]
        %v5303 = vld [vmem:[%s5279 + $0xb8] sm:$0xff]
        %v5304 = vld [vmem:[%s5279 + $0xc0] sm:$0xff]
        %v5305 = vld [vmem:[%s5279 + $0xc8] sm:$0xff]
        %v5306 = vld [vmem:[%s5279 + $0xd0] sm:$0xff]
        %v5307 = vld [vmem:[%s5279 + $0xd8] sm:$0xff]
        %v5308 = vld [vmem:[%s5279 + $0xe0] sm:$0xff]
        %v5309 = vld [vmem:[%s5279 + $0xe8] sm:$0xff]
        %v5310 = vld [vmem:[%s5279 + $0xf0] sm:$0xff]
        %v5311 = vld [vmem:[%s5279 + $0xf8] sm:$0xff]
        %s5312 = scalar_lea.vmem %s1, 544
        %v5313 = vld [vmem:[%s5312] sm:$0xff]
        %v5314 = vld [vmem:[%s5312 + $0x8] sm:$0xff]
        %v5315 = vld [vmem:[%s5312 + $0x10] sm:$0xff]
        %v5316 = vld [vmem:[%s5312 + $0x18] sm:$0xff]
        %v5317 = vld [vmem:[%s5312 + $0x20] sm:$0xff]
        %v5318 = vld [vmem:[%s5312 + $0x28] sm:$0xff]
        %v5319 = vld [vmem:[%s5312 + $0x30] sm:$0xff]
        %v5320 = vld [vmem:[%s5312 + $0x38] sm:$0xff]
        %v5321 = vld [vmem:[%s5312 + $0x40] sm:$0xff]
        %v5322 = vld [vmem:[%s5312 + $0x48] sm:$0xff]
        %v5323 = vld [vmem:[%s5312 + $0x50] sm:$0xff]
        %v5324 = vld [vmem:[%s5312 + $0x58] sm:$0xff]
        %v5325 = vld [vmem:[%s5312 + $0x60] sm:$0xff]
        %v5326 = vld [vmem:[%s5312 + $0x68] sm:$0xff]
        %v5327 = vld [vmem:[%s5312 + $0x70] sm:$0xff]
        %v5328 = vld [vmem:[%s5312 + $0x78] sm:$0xff]
        %v5329 = vld [vmem:[%s5312 + $0x80] sm:$0xff]
        %v5330 = vld [vmem:[%s5312 + $0x88] sm:$0xff]
        %v5331 = vld [vmem:[%s5312 + $0x90] sm:$0xff]
        %v5332 = vld [vmem:[%s5312 + $0x98] sm:$0xff]
        %v5333 = vld [vmem:[%s5312 + $0xa0] sm:$0xff]
        %v5334 = vld [vmem:[%s5312 + $0xa8] sm:$0xff]
        %v5335 = vld [vmem:[%s5312 + $0xb0] sm:$0xff]
        %v5336 = vld [vmem:[%s5312 + $0xb8] sm:$0xff]
        %v5337 = vld [vmem:[%s5312 + $0xc0] sm:$0xff]
        %v5338 = vld [vmem:[%s5312 + $0xc8] sm:$0xff]
        %v5339 = vld [vmem:[%s5312 + $0xd0] sm:$0xff]
        %v5340 = vld [vmem:[%s5312 + $0xd8] sm:$0xff]
        %v5341 = vld [vmem:[%s5312 + $0xe0] sm:$0xff]
        %v5342 = vld [vmem:[%s5312 + $0xe8] sm:$0xff]
        %v5343 = vld [vmem:[%s5312 + $0xf0] sm:$0xff]
        %v5344 = vld [vmem:[%s5312 + $0xf8] sm:$0xff]
        %v5345 = vld [vmem:[%s5312 + $0x100] sm:$0xff]
        %v5346 = vld [vmem:[%s5312 + $0x108] sm:$0xff]
        %v5348 = vsel %vm412, %v5313, 0
        %v5351 = vsel %vm412, %v5314, 0
        %v5354 = vsel %vm412, %v5315, 0
        %v5357 = vsel %vm412, %v5316, 0
        %v5360 = vsel %vm412, %v5317, 0
        %v5363 = vsel %vm412, %v5318, 0
        %v5366 = vsel %vm412, %v5319, 0
        %v5369 = vsel %vm412, %v5320, 0
        %v5372 = vsel %vm412, %v5321, 0
        %v5375 = vsel %vm412, %v5322, 0
        %v5378 = vsel %vm412, %v5323, 0
        %v5381 = vsel %vm412, %v5324, 0
        %v5384 = vsel %vm412, %v5325, 0
        %v5387 = vsel %vm412, %v5326, 0
        %v5390 = vsel %vm412, %v5327, 0
        %v5393 = vsel %vm412, %v5328, 0
        %v5396 = vsel %vm412, %v5329, 0
        %v5399 = vsel %vm412, %v5330, 0
        %v5402 = vsel %vm412, %v5331, 0
        %v5405 = vsel %vm412, %v5332, 0
        %v5408 = vsel %vm412, %v5333, 0
        %v5411 = vsel %vm412, %v5334, 0
        %v5414 = vsel %vm412, %v5335, 0
        %v5417 = vsel %vm412, %v5336, 0
        %v5420 = vsel %vm412, %v5337, 0
        %v5423 = vsel %vm412, %v5338, 0
        %v5426 = vsel %vm412, %v5339, 0
        %v5429 = vsel %vm412, %v5340, 0
        %v5432 = vsel %vm412, %v5341, 0
        %v5435 = vsel %vm412, %v5342, 0
        %v5438 = vsel %vm412, %v5343, 0
        %v5441 = vsel %vm412, %v5344, 0
        %v5444 = vsel %vm412, %v5345, 0
        %v5447 = vsel %vm412, %v5346, 0
        %5449 = vmatprep.subr.mxu0 0.0
        %5450 = vmatpush1.msra.mxu0 %v5277
        %5451 = vmatprep.subr.mxu0 0.0
        %5452 = vmatpush1.msra.mxu0 0.0
        %5453 = vmatprep.subr.mxu0 0.0
        %5454 = vmatpush1.msra.mxu0 0.0
        %5455 = vmatprep.subr.mxu0 0.0
        %5456 = vmatpush1.msra.mxu0 0.0
        %5457 = vmatprep.subr.mxu0 0.0
        %5458 = vmatpush1.msra.mxu0 0.0
        %5459 = vmatprep.subr.mxu0 0.0
        %5460 = vmatpush1.msra.mxu0 0.0
        %5461 = vmatprep.subr.mxu0 0.0
        %5462 = vmatpush1.msra.mxu0 0.0
        %5463 = vmatprep.subr.mxu0 0.0
        %5464 = vmatpush1.msra.mxu0 0.0
        %5465 = vmatprep.subr.mxu0 0.0
        %5466 = vmatpush1.msra.mxu0 0.0
        %5467 = vmatprep.subr.mxu0 0.0
        %5468 = vmatpush1.msra.mxu0 0.0
        %5469 = vmatprep.subr.mxu0 0.0
        %5470 = vmatpush1.msra.mxu0 0.0
        %5471 = vmatprep.subr.mxu0 0.0
        %5472 = vmatpush1.msra.mxu0 0.0
        %5473 = vmatprep.subr.mxu0 0.0
        %5474 = vmatpush1.msra.mxu0 0.0
        %5475 = vmatprep.subr.mxu0 0.0
        %5476 = vmatpush1.msra.mxu0 0.0
        %5477 = vmatprep.subr.mxu0 0.0
        %5478 = vmatpush1.msra.mxu0 0.0
        %5479 = vmatprep.subr.mxu0 0.0
        %5480 = vmatpush1.msra.mxu0 0.0
        %5481 = vmatprep.subr.mxu0 0.0
        %5482 = vmatpush1.msra.mxu0 0.0
        %5483 = vmatprep.subr.mxu0 0.0
        %5484 = vmatpush1.msra.mxu0 0.0
        %5485 = vmatprep.subr.mxu0 0.0
        %5486 = vmatpush1.msra.mxu0 0.0
        %5487 = vmatprep.subr.mxu0 0.0
        %5488 = vmatpush1.msra.mxu0 0.0
        %5489 = vmatprep.subr.mxu0 0.0
        %5490 = vmatpush1.msra.mxu0 0.0
        %5491 = vmatprep.subr.mxu0 0.0
        %5492 = vmatpush1.msra.mxu0 0.0
        %5493 = vmatprep.subr.mxu0 0.0
        %5494 = vmatpush1.msra.mxu0 0.0
        %5495 = vmatprep.subr.mxu0 0.0
        %5496 = vmatpush1.msra.mxu0 0.0
        %5497 = vmatprep.subr.mxu0 0.0
        %5498 = vmatpush1.msra.mxu0 0.0
        %5499 = vmatprep.subr.mxu0 0.0
        %5500 = vmatpush1.msra.mxu0 0.0
        %5501 = vmatprep.subr.mxu0 0.0
        %5502 = vmatpush1.msra.mxu0 0.0
        %5503 = vmatprep.subr.mxu0 0.0
        %5504 = vmatpush1.msra.mxu0 0.0
        %5505 = vmatprep.subr.mxu0 0.0
        %5506 = vmatpush1.msra.mxu0 0.0
        %5507 = vmatprep.subr.mxu0 0.0
        %5508 = vmatpush1.msra.mxu0 0.0
        %5509 = vmatprep.subr.mxu0 0.0
        %5510 = vmatpush1.msra.mxu0 0.0
        %5511 = vmatprep.subr.mxu0 0.0
        %5512 = vmatpush1.msra.mxu0 0.0
        %5513 = vmatprep.mubr.f32.mxu0 0.0
        %5514 = vmatmul.mubr.f32.gmra.mrb[0].mxu0 %v5348
        %v5515 = vpop.f32.mrb[0].mxu0
        %v5516 = vadd.f32 0.0, %v5515
        %v5517 = vpop.f32.mrb[0].mxu0
        %5518 = vmatprep.mubr.f32.mxu0 0.0
        %5519 = vmatmul.mubr.f32.gmra.mrb[0].mxu0 %v5351
        %v5520 = vpop.f32.mrb[0].mxu0
        %v5521 = vadd.f32 0.0, %v5520
        %v5522 = vpop.f32.mrb[0].mxu0
        %5523 = vmatprep.mubr.f32.mxu0 0.0
        %5524 = vmatmul.mubr.f32.gmra.mrb[0].mxu0 %v5354
        %v5525 = vpop.f32.mrb[0].mxu0
        %v5526 = vadd.f32 0.0, %v5525
        %v5527 = vpop.f32.mrb[0].mxu0
        %5528 = vmatprep.mubr.f32.mxu0 0.0
        %5529 = vmatmul.mubr.f32.gmra.mrb[0].mxu0 %v5357
        %v5530 = vpop.f32.mrb[0].mxu0
        %v5531 = vadd.f32 0.0, %v5530
        %v5532 = vpop.f32.mrb[0].mxu0
        %5533 = vmatprep.mubr.f32.mxu0 0.0
        %5534 = vmatmul.mubr.f32.gmra.mrb[0].mxu0 %v5360
        %v5535 = vpop.f32.mrb[0].mxu0
        %v5536 = vadd.f32 0.0, %v5535
        %v5537 = vpop.f32.mrb[0].mxu0
        %5538 = vmatprep.mubr.f32.mxu0 0.0
        %5539 = vmatmul.mubr.f32.gmra.mrb[0].mxu0 %v5363
        %v5540 = vpop.f32.mrb[0].mxu0
        %v5541 = vadd.f32 0.0, %v5540
        %v5542 = vpop.f32.mrb[0].mxu0
        %5543 = vmatprep.mubr.f32.mxu0 0.0
        %5544 = vmatmul.mubr.f32.gmra.mrb[0].mxu0 %v5366
        %v5545 = vpop.f32.mrb[0].mxu0
        %v5546 = vadd.f32 0.0, %v5545
        %v5547 = vpop.f32.mrb[0].mxu0
        %5548 = vmatprep.mubr.f32.mxu0 0.0
        %5549 = vmatmul.mubr.f32.gmra.mrb[0].mxu0 %v5369
        %v5550 = vpop.f32.mrb[0].mxu0
        %v5551 = vadd.f32 0.0, %v5550
        %v5552 = vpop.f32.mrb[0].mxu0
        %5553 = vmatprep.mubr.f32.mxu0 0.0
        %5554 = vmatmul.mubr.f32.gmra.mrb[0].mxu0 %v5372
        %v5555 = vpop.f32.mrb[0].mxu0
        %v5556 = vadd.f32 0.0, %v5555
        %v5557 = vpop.f32.mrb[0].mxu0
        %5558 = vmatprep.mubr.f32.mxu0 0.0
        %5559 = vmatmul.mubr.f32.gmra.mrb[0].mxu0 %v5375
        %v5560 = vpop.f32.mrb[0].mxu0
        %v5561 = vadd.f32 0.0, %v5560
        %v5562 = vpop.f32.mrb[0].mxu0
        %5563 = vmatprep.mubr.f32.mxu0 0.0
        %5564 = vmatmul.mubr.f32.gmra.mrb[0].mxu0 %v5378
        %v5565 = vpop.f32.mrb[0].mxu0
        %v5566 = vadd.f32 0.0, %v5565
        %v5567 = vpop.f32.mrb[0].mxu0
        %5568 = vmatprep.mubr.f32.mxu0 0.0
        %5569 = vmatmul.mubr.f32.gmra.mrb[0].mxu0 %v5381
        %v5570 = vpop.f32.mrb[0].mxu0
        %v5571 = vadd.f32 0.0, %v5570
        %v5572 = vpop.f32.mrb[0].mxu0
        %5573 = vmatprep.mubr.f32.mxu0 0.0
        %5574 = vmatmul.mubr.f32.gmra.mrb[0].mxu0 %v5384
        %v5575 = vpop.f32.mrb[0].mxu0
        %v5576 = vadd.f32 0.0, %v5575
        %v5577 = vpop.f32.mrb[0].mxu0
        %5578 = vmatprep.mubr.f32.mxu0 0.0
        %5579 = vmatmul.mubr.f32.gmra.mrb[0].mxu0 %v5387
        %v5580 = vpop.f32.mrb[0].mxu0
        %v5581 = vadd.f32 0.0, %v5580
        %v5582 = vpop.f32.mrb[0].mxu0
        %5583 = vmatprep.mubr.f32.mxu0 0.0
        %5584 = vmatmul.mubr.f32.gmra.mrb[0].mxu0 %v5390
        %v5585 = vpop.f32.mrb[0].mxu0
        %v5586 = vadd.f32 0.0, %v5585
        %v5587 = vpop.f32.mrb[0].mxu0
        %5588 = vmatprep.mubr.f32.mxu0 0.0
        %5589 = vmatmul.mubr.f32.gmra.mrb[0].mxu0 %v5393
        %v5590 = vpop.f32.mrb[0].mxu0
        %v5591 = vadd.f32 0.0, %v5590
        %v5592 = vpop.f32.mrb[0].mxu0
        %5593 = vmatprep.mubr.f32.mxu0 0.0
        %5594 = vmatmul.mubr.f32.gmra.mrb[0].mxu0 %v5396
        %v5595 = vpop.f32.mrb[0].mxu0
        %v5596 = vadd.f32 0.0, %v5595
        %v5597 = vpop.f32.mrb[0].mxu0
        %5598 = vmatprep.mubr.f32.mxu0 0.0
        %5599 = vmatmul.mubr.f32.gmra.mrb[0].mxu0 %v5399
        %v5600 = vpop.f32.mrb[0].mxu0
        %v5601 = vadd.f32 0.0, %v5600
        %v5602 = vpop.f32.mrb[0].mxu0
        %5603 = vmatprep.mubr.f32.mxu0 0.0
        %5604 = vmatmul.mubr.f32.gmra.mrb[0].mxu0 %v5402
        %v5605 = vpop.f32.mrb[0].mxu0
        %v5606 = vadd.f32 0.0, %v5605
        %v5607 = vpop.f32.mrb[0].mxu0
        %5608 = vmatprep.mubr.f32.mxu0 0.0
        %5609 = vmatmul.mubr.f32.gmra.mrb[0].mxu0 %v5405
        %v5610 = vpop.f32.mrb[0].mxu0
        %v5611 = vadd.f32 0.0, %v5610
        %v5612 = vpop.f32.mrb[0].mxu0
        %5613 = vmatprep.mubr.f32.mxu0 0.0
        %5614 = vmatmul.mubr.f32.gmra.mrb[0].mxu0 %v5408
        %v5615 = vpop.f32.mrb[0].mxu0
        %v5616 = vadd.f32 0.0, %v5615
        %v5617 = vpop.f32.mrb[0].mxu0
        %5618 = vmatprep.mubr.f32.mxu0 0.0
        %5619 = vmatmul.mubr.f32.gmra.mrb[0].mxu0 %v5411
        %v5620 = vpop.f32.mrb[0].mxu0
        %v5621 = vadd.f32 0.0, %v5620
        %v5622 = vpop.f32.mrb[0].mxu0
        %5623 = vmatprep.mubr.f32.mxu0 0.0
        %5624 = vmatmul.mubr.f32.gmra.mrb[0].mxu0 %v5414
        %v5625 = vpop.f32.mrb[0].mxu0
        %v5626 = vadd.f32 0.0, %v5625
        %v5627 = vpop.f32.mrb[0].mxu0
        %5628 = vmatprep.mubr.f32.mxu0 0.0
        %5629 = vmatmul.mubr.f32.gmra.mrb[0].mxu0 %v5417
        %v5630 = vpop.f32.mrb[0].mxu0
        %v5631 = vadd.f32 0.0, %v5630
        %v5632 = vpop.f32.mrb[0].mxu0
        %5633 = vmatprep.mubr.f32.mxu0 0.0
        %5634 = vmatmul.mubr.f32.gmra.mrb[0].mxu0 %v5420
        %v5635 = vpop.f32.mrb[0].mxu0
        %v5636 = vadd.f32 0.0, %v5635
        %v5637 = vpop.f32.mrb[0].mxu0
        %5638 = vmatprep.mubr.f32.mxu0 0.0
        %5639 = vmatmul.mubr.f32.gmra.mrb[0].mxu0 %v5423
        %v5640 = vpop.f32.mrb[0].mxu0
        %v5641 = vadd.f32 0.0, %v5640
        %v5642 = vpop.f32.mrb[0].mxu0
        %5643 = vmatprep.mubr.f32.mxu0 0.0
        %5644 = vmatmul.mubr.f32.gmra.mrb[0].mxu0 %v5426
        %v5645 = vpop.f32.mrb[0].mxu0
        %v5646 = vadd.f32 0.0, %v5645
        %v5647 = vpop.f32.mrb[0].mxu0
        %5648 = vmatprep.mubr.f32.mxu0 0.0
        %5649 = vmatmul.mubr.f32.gmra.mrb[0].mxu0 %v5429
        %v5650 = vpop.f32.mrb[0].mxu0
        %v5651 = vadd.f32 0.0, %v5650
        %v5652 = vpop.f32.mrb[0].mxu0
        %5653 = vmatprep.mubr.f32.mxu0 0.0
        %5654 = vmatmul.mubr.f32.gmra.mrb[0].mxu0 %v5432
        %v5655 = vpop.f32.mrb[0].mxu0
        %v5656 = vadd.f32 0.0, %v5655
        %v5657 = vpop.f32.mrb[0].mxu0
        %5658 = vmatprep.mubr.f32.mxu0 0.0
        %5659 = vmatmul.mubr.f32.gmra.mrb[0].mxu0 %v5435
        %v5660 = vpop.f32.mrb[0].mxu0
        %v5661 = vadd.f32 0.0, %v5660
        %v5662 = vpop.f32.mrb[0].mxu0
        %5663 = vmatprep.mubr.f32.mxu0 0.0
        %5664 = vmatmul.mubr.f32.gmra.mrb[0].mxu0 %v5438
        %v5665 = vpop.f32.mrb[0].mxu0
        %v5666 = vadd.f32 0.0, %v5665
        %v5667 = vpop.f32.mrb[0].mxu0
        %5668 = vmatprep.mubr.f32.mxu0 0.0
        %5669 = vmatmul.mubr.f32.gmra.mrb[0].mxu0 %v5441
        %v5670 = vpop.f32.mrb[0].mxu0
        %v5671 = vadd.f32 0.0, %v5670
        %v5672 = vpop.f32.mrb[0].mxu0
        %5673 = vmatprep.mubr.f32.mxu0 0.0
        %5674 = vmatmul.mubr.f32.gmra.mrb[0].mxu0 %v5444
        %v5675 = vpop.f32.mrb[0].mxu0
        %v5676 = vadd.f32 0.0, %v5675
        %v5677 = vpop.f32.mrb[0].mxu0
        %5678 = vmatprep.mubr.f32.mxu0 0.0
        %5679 = vmatmul.mubr.f32.gmra.mrb[0].mxu0 %v5447
        %v5680 = vpop.f32.mrb[0].mxu0
        %v5681 = vadd.f32 0.0, %v5680
        %v5682 = vpop.f32.mrb[0].mxu0
        %5683 = vdwg.mxu0
        %5685 = vset.pattern.permute.xlu0 0
        %5686 = vperm.xlu0 %5685, %v5280
        %v5687 = vpop.permute.xlu0 %5686
        %5690 = vset.pattern.permute.xlu0 0
        %5691 = vperm.xlu0 %5690, %v5281
        %v5692 = vpop.permute.xlu0 %5691
        %5695 = vset.pattern.permute.xlu0 0
        %5696 = vperm.xlu0 %5695, %v5282
        %v5697 = vpop.permute.xlu0 %5696
        %5700 = vset.pattern.permute.xlu0 0
        %5701 = vperm.xlu0 %5700, %v5283
        %v5702 = vpop.permute.xlu0 %5701
        %5705 = vset.pattern.permute.xlu0 0
        %5706 = vperm.xlu0 %5705, %v5284
        %v5707 = vpop.permute.xlu0 %5706
        %5710 = vset.pattern.permute.xlu0 0
        %5711 = vperm.xlu0 %5710, %v5285
        %v5712 = vpop.permute.xlu0 %5711
        %5715 = vset.pattern.permute.xlu0 0
        %5716 = vperm.xlu0 %5715, %v5286
        %v5717 = vpop.permute.xlu0 %5716
        %5720 = vset.pattern.permute.xlu0 0
        %5721 = vperm.xlu0 %5720, %v5287
        %v5722 = vpop.permute.xlu0 %5721
        %5725 = vset.pattern.permute.xlu0 0
        %5726 = vperm.xlu0 %5725, %v5288
        %v5727 = vpop.permute.xlu0 %5726
        %5730 = vset.pattern.permute.xlu0 0
        %5731 = vperm.xlu0 %5730, %v5289
        %v5732 = vpop.permute.xlu0 %5731
        %5735 = vset.pattern.permute.xlu0 0
        %5736 = vperm.xlu0 %5735, %v5290
        %v5737 = vpop.permute.xlu0 %5736
        %5740 = vset.pattern.permute.xlu0 0
        %5741 = vperm.xlu0 %5740, %v5291
        %v5742 = vpop.permute.xlu0 %5741
        %5745 = vset.pattern.permute.xlu0 0
        %5746 = vperm.xlu0 %5745, %v5292
        %v5747 = vpop.permute.xlu0 %5746
        %5750 = vset.pattern.permute.xlu0 0
        %5751 = vperm.xlu0 %5750, %v5293
        %v5752 = vpop.permute.xlu0 %5751
        %5755 = vset.pattern.permute.xlu0 0
        %5756 = vperm.xlu0 %5755, %v5294
        %v5757 = vpop.permute.xlu0 %5756
        %5760 = vset.pattern.permute.xlu0 0
        %5761 = vperm.xlu0 %5760, %v5295
        %v5762 = vpop.permute.xlu0 %5761
        %5765 = vset.pattern.permute.xlu0 0
        %5766 = vperm.xlu0 %5765, %v5296
        %v5767 = vpop.permute.xlu0 %5766
        %5770 = vset.pattern.permute.xlu0 0
        %5771 = vperm.xlu0 %5770, %v5297
        %v5772 = vpop.permute.xlu0 %5771
        %5775 = vset.pattern.permute.xlu0 0
        %5776 = vperm.xlu0 %5775, %v5298
        %v5777 = vpop.permute.xlu0 %5776
        %5780 = vset.pattern.permute.xlu0 0
        %5781 = vperm.xlu0 %5780, %v5299
        %v5782 = vpop.permute.xlu0 %5781
        %5785 = vset.pattern.permute.xlu0 0
        %5786 = vperm.xlu0 %5785, %v5300
        %v5787 = vpop.permute.xlu0 %5786
        %5790 = vset.pattern.permute.xlu0 0
        %5791 = vperm.xlu0 %5790, %v5301
        %v5792 = vpop.permute.xlu0 %5791
        %5795 = vset.pattern.permute.xlu0 0
        %5796 = vperm.xlu0 %5795, %v5302
        %v5797 = vpop.permute.xlu0 %5796
        %5800 = vset.pattern.permute.xlu0 0
        %5801 = vperm.xlu0 %5800, %v5303
        %v5802 = vpop.permute.xlu0 %5801
        %5805 = vset.pattern.permute.xlu0 0
        %5806 = vperm.xlu0 %5805, %v5304
        %v5807 = vpop.permute.xlu0 %5806
        %5810 = vset.pattern.permute.xlu0 0
        %5811 = vperm.xlu0 %5810, %v5305
        %v5812 = vpop.permute.xlu0 %5811
        %5815 = vset.pattern.permute.xlu0 0
        %5816 = vperm.xlu0 %5815, %v5306
        %v5817 = vpop.permute.xlu0 %5816
        %5820 = vset.pattern.permute.xlu0 0
        %5821 = vperm.xlu0 %5820, %v5307
        %v5822 = vpop.permute.xlu0 %5821
        %5825 = vset.pattern.permute.xlu0 0
        %5826 = vperm.xlu0 %5825, %v5308
        %v5827 = vpop.permute.xlu0 %5826
        %5830 = vset.pattern.permute.xlu0 0
        %5831 = vperm.xlu0 %5830, %v5309
        %v5832 = vpop.permute.xlu0 %5831
        %5835 = vset.pattern.permute.xlu0 0
        %5836 = vperm.xlu0 %5835, %v5310
        %v5837 = vpop.permute.xlu0 %5836
        %5840 = vset.pattern.permute.xlu0 0
        %5841 = vperm.xlu0 %5840, %v5311
        %v5842 = vpop.permute.xlu0 %5841
        %v5844 = vadd.f32 %v5516, %v5687
        %v5845 = vadd.f32 %v5521, %v5692
        %v5846 = vadd.f32 %v5526, %v5697
        %v5847 = vadd.f32 %v5531, %v5702
        %v5848 = vadd.f32 %v5536, %v5707
        %v5849 = vadd.f32 %v5541, %v5712
        %v5850 = vadd.f32 %v5546, %v5717
        %v5851 = vadd.f32 %v5551, %v5722
        %v5852 = vadd.f32 %v5556, %v5727
        %v5853 = vadd.f32 %v5561, %v5732
        %v5854 = vadd.f32 %v5566, %v5737
        %v5855 = vadd.f32 %v5571, %v5742
        %v5856 = vadd.f32 %v5576, %v5747
        %v5857 = vadd.f32 %v5581, %v5752
        %v5858 = vadd.f32 %v5586, %v5757
        %v5859 = vadd.f32 %v5591, %v5762
        %v5860 = vadd.f32 %v5596, %v5767
        %v5861 = vadd.f32 %v5601, %v5772
        %v5862 = vadd.f32 %v5606, %v5777
        %v5863 = vadd.f32 %v5611, %v5782
        %v5864 = vadd.f32 %v5616, %v5787
        %v5865 = vadd.f32 %v5621, %v5792
        %v5866 = vadd.f32 %v5626, %v5797
        %v5867 = vadd.f32 %v5631, %v5802
        %v5868 = vadd.f32 %v5636, %v5807
        %v5869 = vadd.f32 %v5641, %v5812
        %v5870 = vadd.f32 %v5646, %v5817
        %v5871 = vadd.f32 %v5651, %v5822
        %v5872 = vadd.f32 %v5656, %v5827
        %v5873 = vadd.f32 %v5661, %v5832
        %v5874 = vadd.f32 %v5666, %v5837
        %v5875 = vadd.f32 %v5671, %v5842
        %v5876 = vadd.f32 %v5844, %v5845
        %v5877 = vadd.f32 %v5876, %v5846
        %v5878 = vadd.f32 %v5877, %v5847
        %v5879 = vadd.f32 %v5878, %v5848
        %v5880 = vadd.f32 %v5879, %v5849
        %v5881 = vadd.f32 %v5880, %v5850
        %v5882 = vadd.f32 %v5881, %v5851
        %v5883 = vadd.f32 %v5882, %v5852
        %v5884 = vadd.f32 %v5883, %v5853
        %v5885 = vadd.f32 %v5884, %v5854
        %v5886 = vadd.f32 %v5885, %v5855
        %v5887 = vadd.f32 %v5886, %v5856
        %v5888 = vadd.f32 %v5887, %v5857
        %v5889 = vadd.f32 %v5888, %v5858
        %v5890 = vadd.f32 %v5889, %v5859
        %v5891 = vadd.f32 %v5890, %v5860
        %v5892 = vadd.f32 %v5891, %v5861
        %v5893 = vadd.f32 %v5892, %v5862
        %v5894 = vadd.f32 %v5893, %v5863
        %v5895 = vadd.f32 %v5894, %v5864
        %v5896 = vadd.f32 %v5895, %v5865
        %v5897 = vadd.f32 %v5896, %v5866
        %v5898 = vadd.f32 %v5897, %v5867
        %v5899 = vadd.f32 %v5898, %v5868
        %v5900 = vadd.f32 %v5899, %v5869
        %v5901 = vadd.f32 %v5900, %v5870
        %v5902 = vadd.f32 %v5901, %v5871
        %v5903 = vadd.f32 %v5902, %v5872
        %v5904 = vadd.f32 %v5903, %v5873
        %v5905 = vadd.f32 %v5904, %v5874
        %v5906 = vadd.f32 %v5905, %v5875
        %v5907 = vrot.slane %v5906, 4
        %v5908 = vadd.f32 %v5906, %v5907
        %v5909 = vrot.slane %v5908, 2
        %v5910 = vadd.f32 %v5908, %v5909
        %v5911 = vrot.slane %v5910, 1
        %v5912 = vadd.f32 %v5910, %v5911
        %v5913 = vmul.f32 %v5912, %v979
        %v5914 = vmul.f32 %v5844, %v5844
        %v5915 = vmul.f32 %v5845, %v5845
        %v5916 = vmul.f32 %v5846, %v5846
        %v5917 = vmul.f32 %v5847, %v5847
        %v5918 = vmul.f32 %v5848, %v5848
        %v5919 = vmul.f32 %v5849, %v5849
        %v5920 = vmul.f32 %v5850, %v5850
        %v5921 = vmul.f32 %v5851, %v5851
        %v5922 = vmul.f32 %v5852, %v5852
        %v5923 = vmul.f32 %v5853, %v5853
        %v5924 = vmul.f32 %v5854, %v5854
        %v5925 = vmul.f32 %v5855, %v5855
        %v5926 = vmul.f32 %v5856, %v5856
        %v5927 = vmul.f32 %v5857, %v5857
        %v5928 = vmul.f32 %v5858, %v5858
        %v5929 = vmul.f32 %v5859, %v5859
        %v5930 = vmul.f32 %v5860, %v5860
        %v5931 = vmul.f32 %v5861, %v5861
        %v5932 = vmul.f32 %v5862, %v5862
        %v5933 = vmul.f32 %v5863, %v5863
        %v5934 = vmul.f32 %v5864, %v5864
        %v5935 = vmul.f32 %v5865, %v5865
        %v5936 = vmul.f32 %v5866, %v5866
        %v5937 = vmul.f32 %v5867, %v5867
        %v5938 = vmul.f32 %v5868, %v5868
        %v5939 = vmul.f32 %v5869, %v5869
        %v5940 = vmul.f32 %v5870, %v5870
        %v5941 = vmul.f32 %v5871, %v5871
        %v5942 = vmul.f32 %v5872, %v5872
        %v5943 = vmul.f32 %v5873, %v5873
        %v5944 = vmul.f32 %v5874, %v5874
        %v5945 = vmul.f32 %v5875, %v5875
        %v5946 = vadd.f32 %v5914, %v5915
        %v5947 = vadd.f32 %v5946, %v5916
        %v5948 = vadd.f32 %v5947, %v5917
        %v5949 = vadd.f32 %v5948, %v5918
        %v5950 = vadd.f32 %v5949, %v5919
        %v5951 = vadd.f32 %v5950, %v5920
        %v5952 = vadd.f32 %v5951, %v5921
        %v5953 = vadd.f32 %v5952, %v5922
        %v5954 = vadd.f32 %v5953, %v5923
        %v5955 = vadd.f32 %v5954, %v5924
        %v5956 = vadd.f32 %v5955, %v5925
        %v5957 = vadd.f32 %v5956, %v5926
        %v5958 = vadd.f32 %v5957, %v5927
        %v5959 = vadd.f32 %v5958, %v5928
        %v5960 = vadd.f32 %v5959, %v5929
        %v5961 = vadd.f32 %v5960, %v5930
        %v5962 = vadd.f32 %v5961, %v5931
        %v5963 = vadd.f32 %v5962, %v5932
        %v5964 = vadd.f32 %v5963, %v5933
        %v5965 = vadd.f32 %v5964, %v5934
        %v5966 = vadd.f32 %v5965, %v5935
        %v5967 = vadd.f32 %v5966, %v5936
        %v5968 = vadd.f32 %v5967, %v5937
        %v5969 = vadd.f32 %v5968, %v5938
        %v5970 = vadd.f32 %v5969, %v5939
        %v5971 = vadd.f32 %v5970, %v5940
        %v5972 = vadd.f32 %v5971, %v5941
        %v5973 = vadd.f32 %v5972, %v5942
        %v5974 = vadd.f32 %v5973, %v5943
        %v5975 = vadd.f32 %v5974, %v5944
        %v5976 = vadd.f32 %v5975, %v5945
        %v5977 = vrot.slane %v5976, 4
        %v5978 = vadd.f32 %v5976, %v5977
        %v5979 = vrot.slane %v5978, 2
        %v5980 = vadd.f32 %v5978, %v5979
        %v5981 = vrot.slane %v5980, 1
        %v5982 = vadd.f32 %v5980, %v5981
        %v5983 = vmul.f32 %v5982, %v979
        %v5984 = vmul.f32 %v5913, %v5913
        %v5985 = vsub.f32 %v5983, %v5984
        %v5986 = vsub.f32 %v5844, %v5913
        %v5987 = vsub.f32 %v5845, %v5913
        %v5988 = vsub.f32 %v5846, %v5913
        %v5989 = vsub.f32 %v5847, %v5913
        %v5990 = vsub.f32 %v5848, %v5913
        %v5991 = vsub.f32 %v5849, %v5913
        %v5992 = vsub.f32 %v5850, %v5913
        %v5993 = vsub.f32 %v5851, %v5913
        %v5994 = vsub.f32 %v5852, %v5913
        %v5995 = vsub.f32 %v5853, %v5913
        %v5996 = vsub.f32 %v5854, %v5913
        %v5997 = vsub.f32 %v5855, %v5913
        %v5998 = vsub.f32 %v5856, %v5913
        %v5999 = vsub.f32 %v5857, %v5913
        %v6000 = vsub.f32 %v5858, %v5913
        %v6001 = vsub.f32 %v5859, %v5913
        %v6002 = vsub.f32 %v5860, %v5913
        %v6003 = vsub.f32 %v5861, %v5913
        %v6004 = vsub.f32 %v5862, %v5913
        %v6005 = vsub.f32 %v5863, %v5913
        %v6006 = vsub.f32 %v5864, %v5913
        %v6007 = vsub.f32 %v5865, %v5913
        %v6008 = vsub.f32 %v5866, %v5913
        %v6009 = vsub.f32 %v5867, %v5913
        %v6010 = vsub.f32 %v5868, %v5913
        %v6011 = vsub.f32 %v5869, %v5913
        %v6012 = vsub.f32 %v5870, %v5913
        %v6013 = vsub.f32 %v5871, %v5913
        %v6014 = vsub.f32 %v5872, %v5913
        %v6015 = vsub.f32 %v5873, %v5913
        %v6016 = vsub.f32 %v5874, %v5913
        %v6017 = vsub.f32 %v5875, %v5913
        %v6018 = vadd.f32 %v5985, 1e-05
        %v6019 = vrsqrt.pop %v6018
        %v6020 = vmul.f32 %v5986, %v6019
        %v6021 = vmul.f32 %v5987, %v6019
        %v6022 = vmul.f32 %v5988, %v6019
        %v6023 = vmul.f32 %v5989, %v6019
        %v6024 = vmul.f32 %v5990, %v6019
        %v6025 = vmul.f32 %v5991, %v6019
        %v6026 = vmul.f32 %v5992, %v6019
        %v6027 = vmul.f32 %v5993, %v6019
        %v6028 = vmul.f32 %v5994, %v6019
        %v6029 = vmul.f32 %v5995, %v6019
        %v6030 = vmul.f32 %v5996, %v6019
        %v6031 = vmul.f32 %v5997, %v6019
        %v6032 = vmul.f32 %v5998, %v6019
        %v6033 = vmul.f32 %v5999, %v6019
        %v6034 = vmul.f32 %v6000, %v6019
        %v6035 = vmul.f32 %v6001, %v6019
        %v6036 = vmul.f32 %v6002, %v6019
        %v6037 = vmul.f32 %v6003, %v6019
        %v6038 = vmul.f32 %v6004, %v6019
        %v6039 = vmul.f32 %v6005, %v6019
        %v6040 = vmul.f32 %v6006, %v6019
        %v6041 = vmul.f32 %v6007, %v6019
        %v6042 = vmul.f32 %v6008, %v6019
        %v6043 = vmul.f32 %v6009, %v6019
        %v6044 = vmul.f32 %v6010, %v6019
        %v6045 = vmul.f32 %v6011, %v6019
        %v6046 = vmul.f32 %v6012, %v6019
        %v6047 = vmul.f32 %v6013, %v6019
        %v6048 = vmul.f32 %v6014, %v6019
        %v6049 = vmul.f32 %v6015, %v6019
        %v6050 = vmul.f32 %v6016, %v6019
        %v6051 = vmul.f32 %v6017, %v6019
        %6052 = vset.pattern.permute.xlu0 1
        %6053 = vperm.xlu0 %6052, %v5280
        %v6054 = vpop.permute.xlu0 %6053
        %6056 = vset.pattern.permute.xlu0 1
        %6057 = vperm.xlu0 %6056, %v5281
        %v6058 = vpop.permute.xlu0 %6057
        %6060 = vset.pattern.permute.xlu0 1
        %6061 = vperm.xlu0 %6060, %v5282
        %v6062 = vpop.permute.xlu0 %6061
        %6064 = vset.pattern.permute.xlu0 1
        %6065 = vperm.xlu0 %6064, %v5283
        %v6066 = vpop.permute.xlu0 %6065
        %6068 = vset.pattern.permute.xlu0 1
        %6069 = vperm.xlu0 %6068, %v5284
        %v6070 = vpop.permute.xlu0 %6069
        %6072 = vset.pattern.permute.xlu0 1
        %6073 = vperm.xlu0 %6072, %v5285
        %v6074 = vpop.permute.xlu0 %6073
        %6076 = vset.pattern.permute.xlu0 1
        %6077 = vperm.xlu0 %6076, %v5286
        %v6078 = vpop.permute.xlu0 %6077
        %6080 = vset.pattern.permute.xlu0 1
        %6081 = vperm.xlu0 %6080, %v5287
        %v6082 = vpop.permute.xlu0 %6081
        %6084 = vset.pattern.permute.xlu0 1
        %6085 = vperm.xlu0 %6084, %v5288
        %v6086 = vpop.permute.xlu0 %6085
        %6088 = vset.pattern.permute.xlu0 1
        %6089 = vperm.xlu0 %6088, %v5289
        %v6090 = vpop.permute.xlu0 %6089
        %6092 = vset.pattern.permute.xlu0 1
        %6093 = vperm.xlu0 %6092, %v5290
        %v6094 = vpop.permute.xlu0 %6093
        %6096 = vset.pattern.permute.xlu0 1
        %6097 = vperm.xlu0 %6096, %v5291
        %v6098 = vpop.permute.xlu0 %6097
        %6100 = vset.pattern.permute.xlu0 1
        %6101 = vperm.xlu0 %6100, %v5292
        %v6102 = vpop.permute.xlu0 %6101
        %6104 = vset.pattern.permute.xlu0 1
        %6105 = vperm.xlu0 %6104, %v5293
        %v6106 = vpop.permute.xlu0 %6105
        %6108 = vset.pattern.permute.xlu0 1
        %6109 = vperm.xlu0 %6108, %v5294
        %v6110 = vpop.permute.xlu0 %6109
        %6112 = vset.pattern.permute.xlu0 1
        %6113 = vperm.xlu0 %6112, %v5295
        %v6114 = vpop.permute.xlu0 %6113
        %6116 = vset.pattern.permute.xlu0 1
        %6117 = vperm.xlu0 %6116, %v5296
        %v6118 = vpop.permute.xlu0 %6117
        %6120 = vset.pattern.permute.xlu0 1
        %6121 = vperm.xlu0 %6120, %v5297
        %v6122 = vpop.permute.xlu0 %6121
        %6124 = vset.pattern.permute.xlu0 1
        %6125 = vperm.xlu0 %6124, %v5298
        %v6126 = vpop.permute.xlu0 %6125
        %6128 = vset.pattern.permute.xlu0 1
        %6129 = vperm.xlu0 %6128, %v5299
        %v6130 = vpop.permute.xlu0 %6129
        %6132 = vset.pattern.permute.xlu0 1
        %6133 = vperm.xlu0 %6132, %v5300
        %v6134 = vpop.permute.xlu0 %6133
        %6136 = vset.pattern.permute.xlu0 1
        %6137 = vperm.xlu0 %6136, %v5301
        %v6138 = vpop.permute.xlu0 %6137
        %6140 = vset.pattern.permute.xlu0 1
        %6141 = vperm.xlu0 %6140, %v5302
        %v6142 = vpop.permute.xlu0 %6141
        %6144 = vset.pattern.permute.xlu0 1
        %6145 = vperm.xlu0 %6144, %v5303
        %v6146 = vpop.permute.xlu0 %6145
        %6148 = vset.pattern.permute.xlu0 1
        %6149 = vperm.xlu0 %6148, %v5304
        %v6150 = vpop.permute.xlu0 %6149
        %6152 = vset.pattern.permute.xlu0 1
        %6153 = vperm.xlu0 %6152, %v5305
        %v6154 = vpop.permute.xlu0 %6153
        %6156 = vset.pattern.permute.xlu0 1
        %6157 = vperm.xlu0 %6156, %v5306
        %v6158 = vpop.permute.xlu0 %6157
        %6160 = vset.pattern.permute.xlu0 1
        %6161 = vperm.xlu0 %6160, %v5307
        %v6162 = vpop.permute.xlu0 %6161
        %6164 = vset.pattern.permute.xlu0 1
        %6165 = vperm.xlu0 %6164, %v5308
        %v6166 = vpop.permute.xlu0 %6165
        %6168 = vset.pattern.permute.xlu0 1
        %6169 = vperm.xlu0 %6168, %v5309
        %v6170 = vpop.permute.xlu0 %6169
        %6172 = vset.pattern.permute.xlu0 1
        %6173 = vperm.xlu0 %6172, %v5310
        %v6174 = vpop.permute.xlu0 %6173
        %6176 = vset.pattern.permute.xlu0 1
        %6177 = vperm.xlu0 %6176, %v5311
        %v6178 = vpop.permute.xlu0 %6177
        %v6180 = vmul.f32 %v6020, %v6054
        %v6181 = vmul.f32 %v6021, %v6058
        %v6182 = vmul.f32 %v6022, %v6062
        %v6183 = vmul.f32 %v6023, %v6066
        %v6184 = vmul.f32 %v6024, %v6070
        %v6185 = vmul.f32 %v6025, %v6074
        %v6186 = vmul.f32 %v6026, %v6078
        %v6187 = vmul.f32 %v6027, %v6082
        %v6188 = vmul.f32 %v6028, %v6086
        %v6189 = vmul.f32 %v6029, %v6090
        %v6190 = vmul.f32 %v6030, %v6094
        %v6191 = vmul.f32 %v6031, %v6098
        %v6192 = vmul.f32 %v6032, %v6102
        %v6193 = vmul.f32 %v6033, %v6106
        %v6194 = vmul.f32 %v6034, %v6110
        %v6195 = vmul.f32 %v6035, %v6114
        %v6196 = vmul.f32 %v6036, %v6118
        %v6197 = vmul.f32 %v6037, %v6122
        %v6198 = vmul.f32 %v6038, %v6126
        %v6199 = vmul.f32 %v6039, %v6130
        %v6200 = vmul.f32 %v6040, %v6134
        %v6201 = vmul.f32 %v6041, %v6138
        %v6202 = vmul.f32 %v6042, %v6142
        %v6203 = vmul.f32 %v6043, %v6146
        %v6204 = vmul.f32 %v6044, %v6150
        %v6205 = vmul.f32 %v6045, %v6154
        %v6206 = vmul.f32 %v6046, %v6158
        %v6207 = vmul.f32 %v6047, %v6162
        %v6208 = vmul.f32 %v6048, %v6166
        %v6209 = vmul.f32 %v6049, %v6170
        %v6210 = vmul.f32 %v6050, %v6174
        %v6211 = vmul.f32 %v6051, %v6178
        %6212 = vset.pattern.permute.xlu0 2
        %6213 = vperm.xlu0 %6212, %v5280
        %v6214 = vpop.permute.xlu0 %6213
        %6216 = vset.pattern.permute.xlu0 2
        %6217 = vperm.xlu0 %6216, %v5281
        %v6218 = vpop.permute.xlu0 %6217
        %6220 = vset.pattern.permute.xlu0 2
        %6221 = vperm.xlu0 %6220, %v5282
        %v6222 = vpop.permute.xlu0 %6221
        %6224 = vset.pattern.permute.xlu0 2
        %6225 = vperm.xlu0 %6224, %v5283
        %v6226 = vpop.permute.xlu0 %6225
        %6228 = vset.pattern.permute.xlu0 2
        %6229 = vperm.xlu0 %6228, %v5284
        %v6230 = vpop.permute.xlu0 %6229
        %6232 = vset.pattern.permute.xlu0 2
        %6233 = vperm.xlu0 %6232, %v5285
        %v6234 = vpop.permute.xlu0 %6233
        %6236 = vset.pattern.permute.xlu0 2
        %6237 = vperm.xlu0 %6236, %v5286
        %v6238 = vpop.permute.xlu0 %6237
        %6240 = vset.pattern.permute.xlu0 2
        %6241 = vperm.xlu0 %6240, %v5287
        %v6242 = vpop.permute.xlu0 %6241
        %6244 = vset.pattern.permute.xlu0 2
        %6245 = vperm.xlu0 %6244, %v5288
        %v6246 = vpop.permute.xlu0 %6245
        %6248 = vset.pattern.permute.xlu0 2
        %6249 = vperm.xlu0 %6248, %v5289
        %v6250 = vpop.permute.xlu0 %6249
        %6252 = vset.pattern.permute.xlu0 2
        %6253 = vperm.xlu0 %6252, %v5290
        %v6254 = vpop.permute.xlu0 %6253
        %6256 = vset.pattern.permute.xlu0 2
        %6257 = vperm.xlu0 %6256, %v5291
        %v6258 = vpop.permute.xlu0 %6257
        %6260 = vset.pattern.permute.xlu0 2
        %6261 = vperm.xlu0 %6260, %v5292
        %v6262 = vpop.permute.xlu0 %6261
        %6264 = vset.pattern.permute.xlu0 2
        %6265 = vperm.xlu0 %6264, %v5293
        %v6266 = vpop.permute.xlu0 %6265
        %6268 = vset.pattern.permute.xlu0 2
        %6269 = vperm.xlu0 %6268, %v5294
        %v6270 = vpop.permute.xlu0 %6269
        %6272 = vset.pattern.permute.xlu0 2
        %6273 = vperm.xlu0 %6272, %v5295
        %v6274 = vpop.permute.xlu0 %6273
        %6276 = vset.pattern.permute.xlu0 2
        %6277 = vperm.xlu0 %6276, %v5296
        %v6278 = vpop.permute.xlu0 %6277
        %6280 = vset.pattern.permute.xlu0 2
        %6281 = vperm.xlu0 %6280, %v5297
        %v6282 = vpop.permute.xlu0 %6281
        %6284 = vset.pattern.permute.xlu0 2
        %6285 = vperm.xlu0 %6284, %v5298
        %v6286 = vpop.permute.xlu0 %6285
        %6288 = vset.pattern.permute.xlu0 2
        %6289 = vperm.xlu0 %6288, %v5299
        %v6290 = vpop.permute.xlu0 %6289
        %6292 = vset.pattern.permute.xlu0 2
        %6293 = vperm.xlu0 %6292, %v5300
        %v6294 = vpop.permute.xlu0 %6293
        %6296 = vset.pattern.permute.xlu0 2
        %6297 = vperm.xlu0 %6296, %v5301
        %v6298 = vpop.permute.xlu0 %6297
        %6300 = vset.pattern.permute.xlu0 2
        %6301 = vperm.xlu0 %6300, %v5302
        %v6302 = vpop.permute.xlu0 %6301
        %6304 = vset.pattern.permute.xlu0 2
        %6305 = vperm.xlu0 %6304, %v5303
        %v6306 = vpop.permute.xlu0 %6305
        %6308 = vset.pattern.permute.xlu0 2
        %6309 = vperm.xlu0 %6308, %v5304
        %v6310 = vpop.permute.xlu0 %6309
        %6312 = vset.pattern.permute.xlu0 2
        %6313 = vperm.xlu0 %6312, %v5305
        %v6314 = vpop.permute.xlu0 %6313
        %6316 = vset.pattern.permute.xlu0 2
        %6317 = vperm.xlu0 %6316, %v5306
        %v6318 = vpop.permute.xlu0 %6317
        %6320 = vset.pattern.permute.xlu0 2
        %6321 = vperm.xlu0 %6320, %v5307
        %v6322 = vpop.permute.xlu0 %6321
        %6324 = vset.pattern.permute.xlu0 2
        %6325 = vperm.xlu0 %6324, %v5308
        %v6326 = vpop.permute.xlu0 %6325
        %6328 = vset.pattern.permute.xlu0 2
        %6329 = vperm.xlu0 %6328, %v5309
        %v6330 = vpop.permute.xlu0 %6329
        %6332 = vset.pattern.permute.xlu0 2
        %6333 = vperm.xlu0 %6332, %v5310
        %v6334 = vpop.permute.xlu0 %6333
        %6336 = vset.pattern.permute.xlu0 2
        %6337 = vperm.xlu0 %6336, %v5311
        %v6338 = vpop.permute.xlu0 %6337
        %v6340 = vadd.f32 %v6180, %v6214
        %v6341 = vadd.f32 %v6181, %v6218
        %v6342 = vadd.f32 %v6182, %v6222
        %v6343 = vadd.f32 %v6183, %v6226
        %v6344 = vadd.f32 %v6184, %v6230
        %v6345 = vadd.f32 %v6185, %v6234
        %v6346 = vadd.f32 %v6186, %v6238
        %v6347 = vadd.f32 %v6187, %v6242
        %v6348 = vadd.f32 %v6188, %v6246
        %v6349 = vadd.f32 %v6189, %v6250
        %v6350 = vadd.f32 %v6190, %v6254
        %v6351 = vadd.f32 %v6191, %v6258
        %v6352 = vadd.f32 %v6192, %v6262
        %v6353 = vadd.f32 %v6193, %v6266
        %v6354 = vadd.f32 %v6194, %v6270
        %v6355 = vadd.f32 %v6195, %v6274
        %v6356 = vadd.f32 %v6196, %v6278
        %v6357 = vadd.f32 %v6197, %v6282
        %v6358 = vadd.f32 %v6198, %v6286
        %v6359 = vadd.f32 %v6199, %v6290
        %v6360 = vadd.f32 %v6200, %v6294
        %v6361 = vadd.f32 %v6201, %v6298
        %v6362 = vadd.f32 %v6202, %v6302
        %v6363 = vadd.f32 %v6203, %v6306
        %v6364 = vadd.f32 %v6204, %v6310
        %v6365 = vadd.f32 %v6205, %v6314
        %v6366 = vadd.f32 %v6206, %v6318
        %v6367 = vadd.f32 %v6207, %v6322
        %v6368 = vadd.f32 %v6208, %v6326
        %v6369 = vadd.f32 %v6209, %v6330
        %v6370 = vadd.f32 %v6210, %v6334
        %v6371 = vadd.f32 %v6211, %v6338
        %vm6372 = vcmp.gt.f32.partialorder %v6340, 0.0
        %vm6373 = vcmp.gt.f32.partialorder %v6341, 0.0
        %vm6374 = vcmp.gt.f32.partialorder %v6342, 0.0
        %vm6375 = vcmp.gt.f32.partialorder %v6343, 0.0
        %vm6376 = vcmp.gt.f32.partialorder %v6344, 0.0
        %vm6377 = vcmp.gt.f32.partialorder %v6345, 0.0
        %vm6378 = vcmp.gt.f32.partialorder %v6346, 0.0
        %vm6379 = vcmp.gt.f32.partialorder %v6347, 0.0
        %vm6380 = vcmp.gt.f32.partialorder %v6348, 0.0
        %vm6381 = vcmp.gt.f32.partialorder %v6349, 0.0
        %vm6382 = vcmp.gt.f32.partialorder %v6350, 0.0
        %vm6383 = vcmp.gt.f32.partialorder %v6351, 0.0
        %vm6384 = vcmp.gt.f32.partialorder %v6352, 0.0
        %vm6385 = vcmp.gt.f32.partialorder %v6353, 0.0
        %vm6386 = vcmp.gt.f32.partialorder %v6354, 0.0
        %vm6387 = vcmp.gt.f32.partialorder %v6355, 0.0
        %vm6388 = vcmp.gt.f32.partialorder %v6356, 0.0
        %vm6389 = vcmp.gt.f32.partialorder %v6357, 0.0
        %vm6390 = vcmp.gt.f32.partialorder %v6358, 0.0
        %vm6391 = vcmp.gt.f32.partialorder %v6359, 0.0
        %vm6392 = vcmp.gt.f32.partialorder %v6360, 0.0
        %vm6393 = vcmp.gt.f32.partialorder %v6361, 0.0
        %vm6394 = vcmp.gt.f32.partialorder %v6362, 0.0
        %vm6395 = vcmp.gt.f32.partialorder %v6363, 0.0
        %vm6396 = vcmp.gt.f32.partialorder %v6364, 0.0
        %vm6397 = vcmp.gt.f32.partialorder %v6365, 0.0
        %vm6398 = vcmp.gt.f32.partialorder %v6366, 0.0
        %vm6399 = vcmp.gt.f32.partialorder %v6367, 0.0
        %vm6400 = vcmp.gt.f32.partialorder %v6368, 0.0
        %vm6401 = vcmp.gt.f32.partialorder %v6369, 0.0
        %vm6402 = vcmp.gt.f32.partialorder %v6370, 0.0
        %vm6403 = vcmp.gt.f32.partialorder %v6371, 0.0
        %v6404 = vmul.f32 %v6340, 0.2
        %v6405 = vmul.f32 %v6341, 0.2
        %v6406 = vmul.f32 %v6342, 0.2
        %v6407 = vmul.f32 %v6343, 0.2
        %v6408 = vmul.f32 %v6344, 0.2
        %v6409 = vmul.f32 %v6345, 0.2
        %v6410 = vmul.f32 %v6346, 0.2
        %v6411 = vmul.f32 %v6347, 0.2
        %v6412 = vmul.f32 %v6348, 0.2
        %v6413 = vmul.f32 %v6349, 0.2
        %v6414 = vmul.f32 %v6350, 0.2
        %v6415 = vmul.f32 %v6351, 0.2
        %v6416 = vmul.f32 %v6352, 0.2
        %v6417 = vmul.f32 %v6353, 0.2
        %v6418 = vmul.f32 %v6354, 0.2
        %v6419 = vmul.f32 %v6355, 0.2
        %v6420 = vmul.f32 %v6356, 0.2
        %v6421 = vmul.f32 %v6357, 0.2
        %v6422 = vmul.f32 %v6358, 0.2
        %v6423 = vmul.f32 %v6359, 0.2
        %v6424 = vmul.f32 %v6360, 0.2
        %v6425 = vmul.f32 %v6361, 0.2
        %v6426 = vmul.f32 %v6362, 0.2
        %v6427 = vmul.f32 %v6363, 0.2
        %v6428 = vmul.f32 %v6364, 0.2
        %v6429 = vmul.f32 %v6365, 0.2
        %v6430 = vmul.f32 %v6366, 0.2
        %v6431 = vmul.f32 %v6367, 0.2
        %v6432 = vmul.f32 %v6368, 0.2
        %v6433 = vmul.f32 %v6369, 0.2
        %v6434 = vmul.f32 %v6370, 0.2
        %v6435 = vmul.f32 %v6371, 0.2
        %v6436 = vsel %vm6372, %v6340, %v6404
        %v6437 = vsel %vm6373, %v6341, %v6405
        %v6438 = vsel %vm6374, %v6342, %v6406
        %v6439 = vsel %vm6375, %v6343, %v6407
        %v6440 = vsel %vm6376, %v6344, %v6408
        %v6441 = vsel %vm6377, %v6345, %v6409
        %v6442 = vsel %vm6378, %v6346, %v6410
        %v6443 = vsel %vm6379, %v6347, %v6411
        %v6444 = vsel %vm6380, %v6348, %v6412
        %v6445 = vsel %vm6381, %v6349, %v6413
        %v6446 = vsel %vm6382, %v6350, %v6414
        %v6447 = vsel %vm6383, %v6351, %v6415
        %v6448 = vsel %vm6384, %v6352, %v6416
        %v6449 = vsel %vm6385, %v6353, %v6417
        %v6450 = vsel %vm6386, %v6354, %v6418
        %v6451 = vsel %vm6387, %v6355, %v6419
        %v6452 = vsel %vm6388, %v6356, %v6420
        %v6453 = vsel %vm6389, %v6357, %v6421
        %v6454 = vsel %vm6390, %v6358, %v6422
        %v6455 = vsel %vm6391, %v6359, %v6423
        %v6456 = vsel %vm6392, %v6360, %v6424
        %v6457 = vsel %vm6393, %v6361, %v6425
        %v6458 = vsel %vm6394, %v6362, %v6426
        %v6459 = vsel %vm6395, %v6363, %v6427
        %v6460 = vsel %vm6396, %v6364, %v6428
        %v6461 = vsel %vm6397, %v6365, %v6429
        %v6462 = vsel %vm6398, %v6366, %v6430
        %v6463 = vsel %vm6399, %v6367, %v6431
        %v6464 = vsel %vm6400, %v6368, %v6432
        %v6465 = vsel %vm6401, %v6369, %v6433
        %v6466 = vsel %vm6402, %v6370, %v6434
        %v6467 = vsel %vm6403, %v6371, %v6435
        %s6468 = scalar_lea.vmem %s2, 512
        %v6469 = vld [vmem:[%s6468] sm:$0xff]
        %v6470 = vld [vmem:[%s6468 + $0x8] sm:$0xff]
        %v6471 = vld [vmem:[%s6468 + $0x10] sm:$0xff]
        %v6472 = vld [vmem:[%s6468 + $0x18] sm:$0xff]
        %v6473 = vld [vmem:[%s6468 + $0x20] sm:$0xff]
        %v6474 = vld [vmem:[%s6468 + $0x28] sm:$0xff]
        %v6475 = vld [vmem:[%s6468 + $0x30] sm:$0xff]
        %v6476 = vld [vmem:[%s6468 + $0x38] sm:$0xff]
        %v6477 = vld [vmem:[%s6468 + $0x40] sm:$0xff]
        %v6478 = vld [vmem:[%s6468 + $0x48] sm:$0xff]
        %v6479 = vld [vmem:[%s6468 + $0x50] sm:$0xff]
        %v6480 = vld [vmem:[%s6468 + $0x58] sm:$0xff]
        %v6481 = vld [vmem:[%s6468 + $0x60] sm:$0xff]
        %v6482 = vld [vmem:[%s6468 + $0x68] sm:$0xff]
        %v6483 = vld [vmem:[%s6468 + $0x70] sm:$0xff]
        %v6484 = vld [vmem:[%s6468 + $0x78] sm:$0xff]
        %v6485 = vld [vmem:[%s6468 + $0x80] sm:$0xff]
        %v6486 = vld [vmem:[%s6468 + $0x88] sm:$0xff]
        %v6487 = vld [vmem:[%s6468 + $0x90] sm:$0xff]
        %v6488 = vld [vmem:[%s6468 + $0x98] sm:$0xff]
        %v6489 = vld [vmem:[%s6468 + $0xa0] sm:$0xff]
        %v6490 = vld [vmem:[%s6468 + $0xa8] sm:$0xff]
        %v6491 = vld [vmem:[%s6468 + $0xb0] sm:$0xff]
        %v6492 = vld [vmem:[%s6468 + $0xb8] sm:$0xff]
        %v6493 = vld [vmem:[%s6468 + $0xc0] sm:$0xff]
        %v6494 = vld [vmem:[%s6468 + $0xc8] sm:$0xff]
        %v6495 = vld [vmem:[%s6468 + $0xd0] sm:$0xff]
        %v6496 = vld [vmem:[%s6468 + $0xd8] sm:$0xff]
        %v6497 = vld [vmem:[%s6468 + $0xe0] sm:$0xff]
        %v6498 = vld [vmem:[%s6468 + $0xe8] sm:$0xff]
        %v6499 = vld [vmem:[%s6468 + $0xf0] sm:$0xff]
        %v6500 = vld [vmem:[%s6468 + $0xf8] sm:$0xff]
        %v6501 = vpack.c.bf16 %v6437, %v6436
        %v6502 = vpack.c.bf16 %v6439, %v6438
        %v6503 = vpack.c.bf16 %v6441, %v6440
        %v6504 = vpack.c.bf16 %v6443, %v6442
        %v6505 = vpack.c.bf16 %v6445, %v6444
        %v6506 = vpack.c.bf16 %v6447, %v6446
        %v6507 = vpack.c.bf16 %v6449, %v6448
        %v6508 = vpack.c.bf16 %v6451, %v6450
        %v6509 = vpack.c.bf16 %v6453, %v6452
        %v6510 = vpack.c.bf16 %v6455, %v6454
        %v6511 = vpack.c.bf16 %v6457, %v6456
        %v6512 = vpack.c.bf16 %v6459, %v6458
        %v6513 = vpack.c.bf16 %v6461, %v6460
        %v6514 = vpack.c.bf16 %v6463, %v6462
        %v6515 = vpack.c.bf16 %v6465, %v6464
        %v6516 = vpack.c.bf16 %v6467, %v6466
        %6517 = vset.pattern.permute.xlu0 3
        %6518 = vperm.xlu0 %6517, %v5280
        %v6519 = vpop.permute.xlu0 %6518
        %6521 = vset.pattern.permute.xlu0 3
        %6522 = vperm.xlu0 %6521, %v5281
        %v6523 = vpop.permute.xlu0 %6522
        %6525 = vset.pattern.permute.xlu0 3
        %6526 = vperm.xlu0 %6525, %v5282
        %v6527 = vpop.permute.xlu0 %6526
        %6529 = vset.pattern.permute.xlu0 3
        %6530 = vperm.xlu0 %6529, %v5283
        %v6531 = vpop.permute.xlu0 %6530
        %6533 = vset.pattern.permute.xlu0 3
        %6534 = vperm.xlu0 %6533, %v5284
        %v6535 = vpop.permute.xlu0 %6534
        %6537 = vset.pattern.permute.xlu0 3
        %6538 = vperm.xlu0 %6537, %v5285
        %v6539 = vpop.permute.xlu0 %6538
        %6541 = vset.pattern.permute.xlu0 3
        %6542 = vperm.xlu0 %6541, %v5286
        %v6543 = vpop.permute.xlu0 %6542
        %6545 = vset.pattern.permute.xlu0 3
        %6546 = vperm.xlu0 %6545, %v5287
        %v6547 = vpop.permute.xlu0 %6546
        %6549 = vset.pattern.permute.xlu0 3
        %6550 = vperm.xlu0 %6549, %v5288
        %v6551 = vpop.permute.xlu0 %6550
        %6553 = vset.pattern.permute.xlu0 3
        %6554 = vperm.xlu0 %6553, %v5289
        %v6555 = vpop.permute.xlu0 %6554
        %6557 = vset.pattern.permute.xlu0 3
        %6558 = vperm.xlu0 %6557, %v5290
        %v6559 = vpop.permute.xlu0 %6558
        %6561 = vset.pattern.permute.xlu0 3
        %6562 = vperm.xlu0 %6561, %v5291
        %v6563 = vpop.permute.xlu0 %6562
        %6565 = vset.pattern.permute.xlu0 3
        %6566 = vperm.xlu0 %6565, %v5292
        %v6567 = vpop.permute.xlu0 %6566
        %6569 = vset.pattern.permute.xlu0 3
        %6570 = vperm.xlu0 %6569, %v5293
        %v6571 = vpop.permute.xlu0 %6570
        %6573 = vset.pattern.permute.xlu0 3
        %6574 = vperm.xlu0 %6573, %v5294
        %v6575 = vpop.permute.xlu0 %6574
        %6577 = vset.pattern.permute.xlu0 3
        %6578 = vperm.xlu0 %6577, %v5295
        %v6579 = vpop.permute.xlu0 %6578
        %6581 = vset.pattern.permute.xlu0 3
        %6582 = vperm.xlu0 %6581, %v5296
        %v6583 = vpop.permute.xlu0 %6582
        %6585 = vset.pattern.permute.xlu0 3
        %6586 = vperm.xlu0 %6585, %v5297
        %v6587 = vpop.permute.xlu0 %6586
        %6589 = vset.pattern.permute.xlu0 3
        %6590 = vperm.xlu0 %6589, %v5298
        %v6591 = vpop.permute.xlu0 %6590
        %6593 = vset.pattern.permute.xlu0 3
        %6594 = vperm.xlu0 %6593, %v5299
        %v6595 = vpop.permute.xlu0 %6594
        %6597 = vset.pattern.permute.xlu0 3
        %6598 = vperm.xlu0 %6597, %v5300
        %v6599 = vpop.permute.xlu0 %6598
        %6601 = vset.pattern.permute.xlu0 3
        %6602 = vperm.xlu0 %6601, %v5301
        %v6603 = vpop.permute.xlu0 %6602
        %6605 = vset.pattern.permute.xlu0 3
        %6606 = vperm.xlu0 %6605, %v5302
        %v6607 = vpop.permute.xlu0 %6606
        %6609 = vset.pattern.permute.xlu0 3
        %6610 = vperm.xlu0 %6609, %v5303
        %v6611 = vpop.permute.xlu0 %6610
        %6613 = vset.pattern.permute.xlu0 3
        %6614 = vperm.xlu0 %6613, %v5304
        %v6615 = vpop.permute.xlu0 %6614
        %6617 = vset.pattern.permute.xlu0 3
        %6618 = vperm.xlu0 %6617, %v5305
        %v6619 = vpop.permute.xlu0 %6618
        %6621 = vset.pattern.permute.xlu0 3
        %6622 = vperm.xlu0 %6621, %v5306
        %v6623 = vpop.permute.xlu0 %6622
        %6625 = vset.pattern.permute.xlu0 3
        %6626 = vperm.xlu0 %6625, %v5307
        %v6627 = vpop.permute.xlu0 %6626
        %6629 = vset.pattern.permute.xlu0 3
        %6630 = vperm.xlu0 %6629, %v5308
        %v6631 = vpop.permute.xlu0 %6630
        %6633 = vset.pattern.permute.xlu0 3
        %6634 = vperm.xlu0 %6633, %v5309
        %v6635 = vpop.permute.xlu0 %6634
        %6637 = vset.pattern.permute.xlu0 3
        %6638 = vperm.xlu0 %6637, %v5310
        %v6639 = vpop.permute.xlu0 %6638
        %6641 = vset.pattern.permute.xlu0 3
        %6642 = vperm.xlu0 %6641, %v5311
        %v6643 = vpop.permute.xlu0 %6642
        %v6677 = vunpack.c.l.b16 %v6469
        %v6678 = vunpack.c.h.b16 %v6469
        %v6679 = vunpack.c.l.b16 %v6470
        %v6680 = vunpack.c.h.b16 %v6470
        %v6681 = vunpack.c.l.b16 %v6471
        %v6682 = vunpack.c.h.b16 %v6471
        %v6683 = vunpack.c.l.b16 %v6472
        %v6684 = vunpack.c.h.b16 %v6472
        %v6685 = vunpack.c.l.b16 %v6473
        %v6686 = vunpack.c.h.b16 %v6473
        %v6687 = vunpack.c.l.b16 %v6474
        %v6688 = vunpack.c.h.b16 %v6474
        %v6689 = vunpack.c.l.b16 %v6475
        %v6690 = vunpack.c.h.b16 %v6475
        %v6691 = vunpack.c.l.b16 %v6476
        %v6692 = vunpack.c.h.b16 %v6476
        %v6693 = vunpack.c.l.b16 %v6477
        %v6694 = vunpack.c.h.b16 %v6477
        %v6695 = vunpack.c.l.b16 %v6478
        %v6696 = vunpack.c.h.b16 %v6478
        %v6697 = vunpack.c.l.b16 %v6479
        %v6698 = vunpack.c.h.b16 %v6479
        %v6699 = vunpack.c.l.b16 %v6480
        %v6700 = vunpack.c.h.b16 %v6480
        %v6701 = vunpack.c.l.b16 %v6481
        %v6702 = vunpack.c.h.b16 %v6481
        %v6703 = vunpack.c.l.b16 %v6482
        %v6704 = vunpack.c.h.b16 %v6482
        %v6705 = vunpack.c.l.b16 %v6483
        %v6706 = vunpack.c.h.b16 %v6483
        %v6707 = vunpack.c.l.b16 %v6484
        %v6708 = vunpack.c.h.b16 %v6484
        %v6709 = vunpack.c.l.b16 %v6485
        %v6710 = vunpack.c.h.b16 %v6485
        %v6711 = vunpack.c.l.b16 %v6486
        %v6712 = vunpack.c.h.b16 %v6486
        %v6713 = vunpack.c.l.b16 %v6487
        %v6714 = vunpack.c.h.b16 %v6487
        %v6715 = vunpack.c.l.b16 %v6488
        %v6716 = vunpack.c.h.b16 %v6488
        %v6717 = vunpack.c.l.b16 %v6489
        %v6718 = vunpack.c.h.b16 %v6489
        %v6719 = vunpack.c.l.b16 %v6490
        %v6720 = vunpack.c.h.b16 %v6490
        %v6721 = vunpack.c.l.b16 %v6491
        %v6722 = vunpack.c.h.b16 %v6491
        %v6723 = vunpack.c.l.b16 %v6492
        %v6724 = vunpack.c.h.b16 %v6492
        %v6725 = vunpack.c.l.b16 %v6493
        %v6726 = vunpack.c.h.b16 %v6493
        %v6727 = vunpack.c.l.b16 %v6494
        %v6728 = vunpack.c.h.b16 %v6494
        %v6729 = vunpack.c.l.b16 %v6495
        %v6730 = vunpack.c.h.b16 %v6495
        %v6731 = vunpack.c.l.b16 %v6496
        %v6732 = vunpack.c.h.b16 %v6496
        %v6733 = vunpack.c.l.b16 %v6497
        %v6734 = vunpack.c.h.b16 %v6497
        %v6735 = vunpack.c.l.b16 %v6498
        %v6736 = vunpack.c.h.b16 %v6498
        %v6737 = vunpack.c.l.b16 %v6499
        %v6738 = vunpack.c.h.b16 %v6499
        %v6739 = vunpack.c.l.b16 %v6500
        %v6740 = vunpack.c.h.b16 %v6500
        %v6741 = vpack.c.b16 %v6679, %v6677
        %v6742 = vpack.c.b16 %v6680, %v6678
        %v6743 = vpack.c.b16 %v6683, %v6681
        %v6744 = vpack.c.b16 %v6684, %v6682
        %v6745 = vpack.c.b16 %v6687, %v6685
        %v6746 = vpack.c.b16 %v6688, %v6686
        %v6747 = vpack.c.b16 %v6691, %v6689
        %v6748 = vpack.c.b16 %v6692, %v6690
        %v6749 = vpack.c.b16 %v6695, %v6693
        %v6750 = vpack.c.b16 %v6696, %v6694
        %v6751 = vpack.c.b16 %v6699, %v6697
        %v6752 = vpack.c.b16 %v6700, %v6698
        %v6753 = vpack.c.b16 %v6703, %v6701
        %v6754 = vpack.c.b16 %v6704, %v6702
        %v6755 = vpack.c.b16 %v6707, %v6705
        %v6756 = vpack.c.b16 %v6708, %v6706
        %v6757 = vpack.c.b16 %v6711, %v6709
        %v6758 = vpack.c.b16 %v6712, %v6710
        %v6759 = vpack.c.b16 %v6715, %v6713
        %v6760 = vpack.c.b16 %v6716, %v6714
        %v6761 = vpack.c.b16 %v6719, %v6717
        %v6762 = vpack.c.b16 %v6720, %v6718
        %v6763 = vpack.c.b16 %v6723, %v6721
        %v6764 = vpack.c.b16 %v6724, %v6722
        %v6765 = vpack.c.b16 %v6727, %v6725
        %v6766 = vpack.c.b16 %v6728, %v6726
        %v6767 = vpack.c.b16 %v6731, %v6729
        %v6768 = vpack.c.b16 %v6732, %v6730
        %v6769 = vpack.c.b16 %v6735, %v6733
        %v6770 = vpack.c.b16 %v6736, %v6734
        %v6771 = vpack.c.b16 %v6739, %v6737
        %v6772 = vpack.c.b16 %v6740, %v6738
        %6805 = vmatprep.subr.bf16.mxu0 0
        %6806 = vmatpush1.bf16.msra.mxu0 %v6501
        %6807 = vmatprep.subr.bf16.mxu0 0
        %6808 = vmatpush1.bf16.msra.mxu0 %v6502
        %6809 = vmatprep.subr.bf16.mxu0 0
        %6810 = vmatpush1.bf16.msra.mxu0 %v6503
        %6811 = vmatprep.subr.bf16.mxu0 0
        %6812 = vmatpush1.bf16.msra.mxu0 %v6504
        %6813 = vmatprep.subr.bf16.mxu0 0
        %6814 = vmatpush1.bf16.msra.mxu0 %v6505
        %6815 = vmatprep.subr.bf16.mxu0 0
        %6816 = vmatpush1.bf16.msra.mxu0 %v6506
        %6817 = vmatprep.subr.bf16.mxu0 0
        %6818 = vmatpush1.bf16.msra.mxu0 %v6507
        %6819 = vmatprep.subr.bf16.mxu0 0
        %6820 = vmatpush1.bf16.msra.mxu0 %v6508
        %6821 = vmatprep.subr.bf16.mxu0 0
        %6822 = vmatpush1.bf16.msra.mxu0 %v6509
        %6823 = vmatprep.subr.bf16.mxu0 0
        %6824 = vmatpush1.bf16.msra.mxu0 %v6510
        %6825 = vmatprep.subr.bf16.mxu0 0
        %6826 = vmatpush1.bf16.msra.mxu0 %v6511
        %6827 = vmatprep.subr.bf16.mxu0 0
        %6828 = vmatpush1.bf16.msra.mxu0 %v6512
        %6829 = vmatprep.subr.bf16.mxu0 0
        %6830 = vmatpush1.bf16.msra.mxu0 %v6513
        %6831 = vmatprep.subr.bf16.mxu0 0
        %6832 = vmatpush1.bf16.msra.mxu0 %v6514
        %6833 = vmatprep.subr.bf16.mxu0 0
        %6834 = vmatpush1.bf16.msra.mxu0 %v6515
        %6835 = vmatprep.subr.bf16.mxu0 0
        %6836 = vmatpush1.bf16.msra.mxu0 %v6516
        %6837 = vmatprep.mubr.bf16.mxu0 %v6742
        %6838 = vmatmul.mubr.bf16.gmra.mrb[0].mxu0 %v6741
        %v6839 = vpop.f32.mrb[0].mxu0
        %v6840 = vadd.f32 %v6519, %v6839
        %v6841 = vpop.f32.mrb[0].mxu0
        %v6842 = vpop.f32.mrb[0].mxu0
        %v6843 = vadd.f32 %v6523, %v6842
        %v6844 = vpop.f32.mrb[0].mxu0
        %6845 = vmatprep.mubr.bf16.mxu0 %v6744
        %6846 = vmatmul.mubr.bf16.gmra.mrb[0].mxu0 %v6743
        %v6847 = vpop.f32.mrb[0].mxu0
        %v6848 = vadd.f32 %v6527, %v6847
        %v6849 = vpop.f32.mrb[0].mxu0
        %v6850 = vpop.f32.mrb[0].mxu0
        %v6851 = vadd.f32 %v6531, %v6850
        %v6852 = vpop.f32.mrb[0].mxu0
        %6853 = vmatprep.mubr.bf16.mxu0 %v6746
        %6854 = vmatmul.mubr.bf16.gmra.mrb[0].mxu0 %v6745
        %v6855 = vpop.f32.mrb[0].mxu0
        %v6856 = vadd.f32 %v6535, %v6855
        %v6857 = vpop.f32.mrb[0].mxu0
        %v6858 = vpop.f32.mrb[0].mxu0
        %v6859 = vadd.f32 %v6539, %v6858
        %v6860 = vpop.f32.mrb[0].mxu0
        %6861 = vmatprep.mubr.bf16.mxu0 %v6748
        %6862 = vmatmul.mubr.bf16.gmra.mrb[0].mxu0 %v6747
        %v6863 = vpop.f32.mrb[0].mxu0
        %v6864 = vadd.f32 %v6543, %v6863
        %v6865 = vpop.f32.mrb[0].mxu0
        %v6866 = vpop.f32.mrb[0].mxu0
        %v6867 = vadd.f32 %v6547, %v6866
        %v6868 = vpop.f32.mrb[0].mxu0
        %6869 = vmatprep.mubr.bf16.mxu0 %v6750
        %6870 = vmatmul.mubr.bf16.gmra.mrb[0].mxu0 %v6749
        %v6871 = vpop.f32.mrb[0].mxu0
        %v6872 = vadd.f32 %v6551, %v6871
        %v6873 = vpop.f32.mrb[0].mxu0
        %v6874 = vpop.f32.mrb[0].mxu0
        %v6875 = vadd.f32 %v6555, %v6874
        %v6876 = vpop.f32.mrb[0].mxu0
        %6877 = vmatprep.mubr.bf16.mxu0 %v6752
        %6878 = vmatmul.mubr.bf16.gmra.mrb[0].mxu0 %v6751
        %v6879 = vpop.f32.mrb[0].mxu0
        %v6880 = vadd.f32 %v6559, %v6879
        %v6881 = vpop.f32.mrb[0].mxu0
        %v6882 = vpop.f32.mrb[0].mxu0
        %v6883 = vadd.f32 %v6563, %v6882
        %v6884 = vpop.f32.mrb[0].mxu0
        %6885 = vmatprep.mubr.bf16.mxu0 %v6754
        %6886 = vmatmul.mubr.bf16.gmra.mrb[0].mxu0 %v6753
        %v6887 = vpop.f32.mrb[0].mxu0
        %v6888 = vadd.f32 %v6567, %v6887
        %v6889 = vpop.f32.mrb[0].mxu0
        %v6890 = vpop.f32.mrb[0].mxu0
        %v6891 = vadd.f32 %v6571, %v6890
        %v6892 = vpop.f32.mrb[0].mxu0
        %6893 = vmatprep.mubr.bf16.mxu0 %v6756
        %6894 = vmatmul.mubr.bf16.gmra.mrb[0].mxu0 %v6755
        %v6895 = vpop.f32.mrb[0].mxu0
        %v6896 = vadd.f32 %v6575, %v6895
        %v6897 = vpop.f32.mrb[0].mxu0
        %v6898 = vpop.f32.mrb[0].mxu0
        %v6899 = vadd.f32 %v6579, %v6898
        %v6900 = vpop.f32.mrb[0].mxu0
        %6901 = vmatprep.mubr.bf16.mxu0 %v6758
        %6902 = vmatmul.mubr.bf16.gmra.mrb[0].mxu0 %v6757
        %v6903 = vpop.f32.mrb[0].mxu0
        %v6904 = vadd.f32 %v6583, %v6903
        %v6905 = vpop.f32.mrb[0].mxu0
        %v6906 = vpop.f32.mrb[0].mxu0
        %v6907 = vadd.f32 %v6587, %v6906
        %v6908 = vpop.f32.mrb[0].mxu0
        %6909 = vmatprep.mubr.bf16.mxu0 %v6760
        %6910 = vmatmul.mubr.bf16.gmra.mrb[0].mxu0 %v6759
        %v6911 = vpop.f32.mrb[0].mxu0
        %v6912 = vadd.f32 %v6591, %v6911
        %v6913 = vpop.f32.mrb[0].mxu0
        %v6914 = vpop.f32.mrb[0].mxu0
        %v6915 = vadd.f32 %v6595, %v6914
        %v6916 = vpop.f32.mrb[0].mxu0
        %6917 = vmatprep.mubr.bf16.mxu0 %v6762
        %6918 = vmatmul.mubr.bf16.gmra.mrb[0].mxu0 %v6761
        %v6919 = vpop.f32.mrb[0].mxu0
        %v6920 = vadd.f32 %v6599, %v6919
        %v6921 = vpop.f32.mrb[0].mxu0
        %v6922 = vpop.f32.mrb[0].mxu0
        %v6923 = vadd.f32 %v6603, %v6922
        %v6924 = vpop.f32.mrb[0].mxu0
        %6925 = vmatprep.mubr.bf16.mxu0 %v6764
        %6926 = vmatmul.mubr.bf16.gmra.mrb[0].mxu0 %v6763
        %v6927 = vpop.f32.mrb[0].mxu0
        %v6928 = vadd.f32 %v6607, %v6927
        %v6929 = vpop.f32.mrb[0].mxu0
        %v6930 = vpop.f32.mrb[0].mxu0
        %v6931 = vadd.f32 %v6611, %v6930
        %v6932 = vpop.f32.mrb[0].mxu0
        %6933 = vmatprep.mubr.bf16.mxu0 %v6766
        %6934 = vmatmul.mubr.bf16.gmra.mrb[0].mxu0 %v6765
        %v6935 = vpop.f32.mrb[0].mxu0
        %v6936 = vadd.f32 %v6615, %v6935
        %v6937 = vpop.f32.mrb[0].mxu0
        %v6938 = vpop.f32.mrb[0].mxu0
        %v6939 = vadd.f32 %v6619, %v6938
        %v6940 = vpop.f32.mrb[0].mxu0
        %6941 = vmatprep.mubr.bf16.mxu0 %v6768
        %6942 = vmatmul.mubr.bf16.gmra.mrb[0].mxu0 %v6767
        %v6943 = vpop.f32.mrb[0].mxu0
        %v6944 = vadd.f32 %v6623, %v6943
        %v6945 = vpop.f32.mrb[0].mxu0
        %v6946 = vpop.f32.mrb[0].mxu0
        %v6947 = vadd.f32 %v6627, %v6946
        %v6948 = vpop.f32.mrb[0].mxu0
        %6949 = vmatprep.mubr.bf16.mxu0 %v6770
        %6950 = vmatmul.mubr.bf16.gmra.mrb[0].mxu0 %v6769
        %v6951 = vpop.f32.mrb[0].mxu0
        %v6952 = vadd.f32 %v6631, %v6951
        %v6953 = vpop.f32.mrb[0].mxu0
        %v6954 = vpop.f32.mrb[0].mxu0
        %v6955 = vadd.f32 %v6635, %v6954
        %v6956 = vpop.f32.mrb[0].mxu0
        %6957 = vmatprep.mubr.bf16.mxu0 %v6772
        %6958 = vmatmul.mubr.bf16.gmra.mrb[0].mxu0 %v6771
        %v6959 = vpop.f32.mrb[0].mxu0
        %v6960 = vadd.f32 %v6639, %v6959
        %v6961 = vpop.f32.mrb[0].mxu0
        %v6962 = vpop.f32.mrb[0].mxu0
        %v6963 = vadd.f32 %v6643, %v6962
        %v6964 = vpop.f32.mrb[0].mxu0
        %6965 = vdwg.mxu0
        %v6966 = vadd.f32 %v6840, %v6843
        %v6967 = vadd.f32 %v6966, %v6848
        %v6968 = vadd.f32 %v6967, %v6851
        %v6969 = vadd.f32 %v6968, %v6856
        %v6970 = vadd.f32 %v6969, %v6859
        %v6971 = vadd.f32 %v6970, %v6864
        %v6972 = vadd.f32 %v6971, %v6867
        %v6973 = vadd.f32 %v6972, %v6872
        %v6974 = vadd.f32 %v6973, %v6875
        %v6975 = vadd.f32 %v6974, %v6880
        %v6976 = vadd.f32 %v6975, %v6883
        %v6977 = vadd.f32 %v6976, %v6888
        %v6978 = vadd.f32 %v6977, %v6891
        %v6979 = vadd.f32 %v6978, %v6896
        %v6980 = vadd.f32 %v6979, %v6899
        %v6981 = vadd.f32 %v6980, %v6904
        %v6982 = vadd.f32 %v6981, %v6907
        %v6983 = vadd.f32 %v6982, %v6912
        %v6984 = vadd.f32 %v6983, %v6915
        %v6985 = vadd.f32 %v6984, %v6920
        %v6986 = vadd.f32 %v6985, %v6923
        %v6987 = vadd.f32 %v6986, %v6928
        %v6988 = vadd.f32 %v6987, %v6931
        %v6989 = vadd.f32 %v6988, %v6936
        %v6990 = vadd.f32 %v6989, %v6939
        %v6991 = vadd.f32 %v6990, %v6944
        %v6992 = vadd.f32 %v6991, %v6947
        %v6993 = vadd.f32 %v6992, %v6952
        %v6994 = vadd.f32 %v6993, %v6955
        %v6995 = vadd.f32 %v6994, %v6960
        %v6996 = vadd.f32 %v6995, %v6963
        %v6997 = vrot.slane %v6996, 4
        %v6998 = vadd.f32 %v6996, %v6997
        %v6999 = vrot.slane %v6998, 2
        %v7000 = vadd.f32 %v6998, %v6999
        %v7001 = vrot.slane %v7000, 1
        %v7002 = vadd.f32 %v7000, %v7001
        %v7003 = vmul.f32 %v7002, %v979
        %v7004 = vmul.f32 %v6840, %v6840
        %v7005 = vmul.f32 %v6843, %v6843
        %v7006 = vmul.f32 %v6848, %v6848
        %v7007 = vmul.f32 %v6851, %v6851
        %v7008 = vmul.f32 %v6856, %v6856
        %v7009 = vmul.f32 %v6859, %v6859
        %v7010 = vmul.f32 %v6864, %v6864
        %v7011 = vmul.f32 %v6867, %v6867
        %v7012 = vmul.f32 %v6872, %v6872
        %v7013 = vmul.f32 %v6875, %v6875
        %v7014 = vmul.f32 %v6880, %v6880
        %v7015 = vmul.f32 %v6883, %v6883
        %v7016 = vmul.f32 %v6888, %v6888
        %v7017 = vmul.f32 %v6891, %v6891
        %v7018 = vmul.f32 %v6896, %v6896
        %v7019 = vmul.f32 %v6899, %v6899
        %v7020 = vmul.f32 %v6904, %v6904
        %v7021 = vmul.f32 %v6907, %v6907
        %v7022 = vmul.f32 %v6912, %v6912
        %v7023 = vmul.f32 %v6915, %v6915
        %v7024 = vmul.f32 %v6920, %v6920
        %v7025 = vmul.f32 %v6923, %v6923
        %v7026 = vmul.f32 %v6928, %v6928
        %v7027 = vmul.f32 %v6931, %v6931
        %v7028 = vmul.f32 %v6936, %v6936
        %v7029 = vmul.f32 %v6939, %v6939
        %v7030 = vmul.f32 %v6944, %v6944
        %v7031 = vmul.f32 %v6947, %v6947
        %v7032 = vmul.f32 %v6952, %v6952
        %v7033 = vmul.f32 %v6955, %v6955
        %v7034 = vmul.f32 %v6960, %v6960
        %v7035 = vmul.f32 %v6963, %v6963
        %v7036 = vadd.f32 %v7004, %v7005
        %v7037 = vadd.f32 %v7036, %v7006
        %v7038 = vadd.f32 %v7037, %v7007
        %v7039 = vadd.f32 %v7038, %v7008
        %v7040 = vadd.f32 %v7039, %v7009
        %v7041 = vadd.f32 %v7040, %v7010
        %v7042 = vadd.f32 %v7041, %v7011
        %v7043 = vadd.f32 %v7042, %v7012
        %v7044 = vadd.f32 %v7043, %v7013
        %v7045 = vadd.f32 %v7044, %v7014
        %v7046 = vadd.f32 %v7045, %v7015
        %v7047 = vadd.f32 %v7046, %v7016
        %v7048 = vadd.f32 %v7047, %v7017
        %v7049 = vadd.f32 %v7048, %v7018
        %v7050 = vadd.f32 %v7049, %v7019
        %v7051 = vadd.f32 %v7050, %v7020
        %v7052 = vadd.f32 %v7051, %v7021
        %v7053 = vadd.f32 %v7052, %v7022
        %v7054 = vadd.f32 %v7053, %v7023
        %v7055 = vadd.f32 %v7054, %v7024
        %v7056 = vadd.f32 %v7055, %v7025
        %v7057 = vadd.f32 %v7056, %v7026
        %v7058 = vadd.f32 %v7057, %v7027
        %v7059 = vadd.f32 %v7058, %v7028
        %v7060 = vadd.f32 %v7059, %v7029
        %v7061 = vadd.f32 %v7060, %v7030
        %v7062 = vadd.f32 %v7061, %v7031
        %v7063 = vadd.f32 %v7062, %v7032
        %v7064 = vadd.f32 %v7063, %v7033
        %v7065 = vadd.f32 %v7064, %v7034
        %v7066 = vadd.f32 %v7065, %v7035
        %v7067 = vrot.slane %v7066, 4
        %v7068 = vadd.f32 %v7066, %v7067
        %v7069 = vrot.slane %v7068, 2
        %v7070 = vadd.f32 %v7068, %v7069
        %v7071 = vrot.slane %v7070, 1
        %v7072 = vadd.f32 %v7070, %v7071
        %v7073 = vmul.f32 %v7072, %v979
        %v7074 = vmul.f32 %v7003, %v7003
        %v7075 = vsub.f32 %v7073, %v7074
        %v7076 = vsub.f32 %v6840, %v7003
        %v7077 = vsub.f32 %v6843, %v7003
        %v7078 = vsub.f32 %v6848, %v7003
        %v7079 = vsub.f32 %v6851, %v7003
        %v7080 = vsub.f32 %v6856, %v7003
        %v7081 = vsub.f32 %v6859, %v7003
        %v7082 = vsub.f32 %v6864, %v7003
        %v7083 = vsub.f32 %v6867, %v7003
        %v7084 = vsub.f32 %v6872, %v7003
        %v7085 = vsub.f32 %v6875, %v7003
        %v7086 = vsub.f32 %v6880, %v7003
        %v7087 = vsub.f32 %v6883, %v7003
        %v7088 = vsub.f32 %v6888, %v7003
        %v7089 = vsub.f32 %v6891, %v7003
        %v7090 = vsub.f32 %v6896, %v7003
        %v7091 = vsub.f32 %v6899, %v7003
        %v7092 = vsub.f32 %v6904, %v7003
        %v7093 = vsub.f32 %v6907, %v7003
        %v7094 = vsub.f32 %v6912, %v7003
        %v7095 = vsub.f32 %v6915, %v7003
        %v7096 = vsub.f32 %v6920, %v7003
        %v7097 = vsub.f32 %v6923, %v7003
        %v7098 = vsub.f32 %v6928, %v7003
        %v7099 = vsub.f32 %v6931, %v7003
        %v7100 = vsub.f32 %v6936, %v7003
        %v7101 = vsub.f32 %v6939, %v7003
        %v7102 = vsub.f32 %v6944, %v7003
        %v7103 = vsub.f32 %v6947, %v7003
        %v7104 = vsub.f32 %v6952, %v7003
        %v7105 = vsub.f32 %v6955, %v7003
        %v7106 = vsub.f32 %v6960, %v7003
        %v7107 = vsub.f32 %v6963, %v7003
        %v7108 = vadd.f32 %v7075, 1e-05
        %v7109 = vrsqrt.pop %v7108
        %v7110 = vmul.f32 %v7076, %v7109
        %v7111 = vmul.f32 %v7077, %v7109
        %v7112 = vmul.f32 %v7078, %v7109
        %v7113 = vmul.f32 %v7079, %v7109
        %v7114 = vmul.f32 %v7080, %v7109
        %v7115 = vmul.f32 %v7081, %v7109
        %v7116 = vmul.f32 %v7082, %v7109
        %v7117 = vmul.f32 %v7083, %v7109
        %v7118 = vmul.f32 %v7084, %v7109
        %v7119 = vmul.f32 %v7085, %v7109
        %v7120 = vmul.f32 %v7086, %v7109
        %v7121 = vmul.f32 %v7087, %v7109
        %v7122 = vmul.f32 %v7088, %v7109
        %v7123 = vmul.f32 %v7089, %v7109
        %v7124 = vmul.f32 %v7090, %v7109
        %v7125 = vmul.f32 %v7091, %v7109
        %v7126 = vmul.f32 %v7092, %v7109
        %v7127 = vmul.f32 %v7093, %v7109
        %v7128 = vmul.f32 %v7094, %v7109
        %v7129 = vmul.f32 %v7095, %v7109
        %v7130 = vmul.f32 %v7096, %v7109
        %v7131 = vmul.f32 %v7097, %v7109
        %v7132 = vmul.f32 %v7098, %v7109
        %v7133 = vmul.f32 %v7099, %v7109
        %v7134 = vmul.f32 %v7100, %v7109
        %v7135 = vmul.f32 %v7101, %v7109
        %v7136 = vmul.f32 %v7102, %v7109
        %v7137 = vmul.f32 %v7103, %v7109
        %v7138 = vmul.f32 %v7104, %v7109
        %v7139 = vmul.f32 %v7105, %v7109
        %v7140 = vmul.f32 %v7106, %v7109
        %v7141 = vmul.f32 %v7107, %v7109
        %7142 = vset.pattern.permute.xlu0 4
        %7143 = vperm.xlu0 %7142, %v5280
        %v7144 = vpop.permute.xlu0 %7143
        %7146 = vset.pattern.permute.xlu0 4
        %7147 = vperm.xlu0 %7146, %v5281
        %v7148 = vpop.permute.xlu0 %7147
        %7150 = vset.pattern.permute.xlu0 4
        %7151 = vperm.xlu0 %7150, %v5282
        %v7152 = vpop.permute.xlu0 %7151
        %7154 = vset.pattern.permute.xlu0 4
        %7155 = vperm.xlu0 %7154, %v5283
        %v7156 = vpop.permute.xlu0 %7155
        %7158 = vset.pattern.permute.xlu0 4
        %7159 = vperm.xlu0 %7158, %v5284
        %v7160 = vpop.permute.xlu0 %7159
        %7162 = vset.pattern.permute.xlu0 4
        %7163 = vperm.xlu0 %7162, %v5285
        %v7164 = vpop.permute.xlu0 %7163
        %7166 = vset.pattern.permute.xlu0 4
        %7167 = vperm.xlu0 %7166, %v5286
        %v7168 = vpop.permute.xlu0 %7167
        %7170 = vset.pattern.permute.xlu0 4
        %7171 = vperm.xlu0 %7170, %v5287
        %v7172 = vpop.permute.xlu0 %7171
        %7174 = vset.pattern.permute.xlu0 4
        %7175 = vperm.xlu0 %7174, %v5288
        %v7176 = vpop.permute.xlu0 %7175
        %7178 = vset.pattern.permute.xlu0 4
        %7179 = vperm.xlu0 %7178, %v5289
        %v7180 = vpop.permute.xlu0 %7179
        %7182 = vset.pattern.permute.xlu0 4
        %7183 = vperm.xlu0 %7182, %v5290
        %v7184 = vpop.permute.xlu0 %7183
        %7186 = vset.pattern.permute.xlu0 4
        %7187 = vperm.xlu0 %7186, %v5291
        %v7188 = vpop.permute.xlu0 %7187
        %7190 = vset.pattern.permute.xlu0 4
        %7191 = vperm.xlu0 %7190, %v5292
        %v7192 = vpop.permute.xlu0 %7191
        %7194 = vset.pattern.permute.xlu0 4
        %7195 = vperm.xlu0 %7194, %v5293
        %v7196 = vpop.permute.xlu0 %7195
        %7198 = vset.pattern.permute.xlu0 4
        %7199 = vperm.xlu0 %7198, %v5294
        %v7200 = vpop.permute.xlu0 %7199
        %7202 = vset.pattern.permute.xlu0 4
        %7203 = vperm.xlu0 %7202, %v5295
        %v7204 = vpop.permute.xlu0 %7203
        %7206 = vset.pattern.permute.xlu0 4
        %7207 = vperm.xlu0 %7206, %v5296
        %v7208 = vpop.permute.xlu0 %7207
        %7210 = vset.pattern.permute.xlu0 4
        %7211 = vperm.xlu0 %7210, %v5297
        %v7212 = vpop.permute.xlu0 %7211
        %7214 = vset.pattern.permute.xlu0 4
        %7215 = vperm.xlu0 %7214, %v5298
        %v7216 = vpop.permute.xlu0 %7215
        %7218 = vset.pattern.permute.xlu0 4
        %7219 = vperm.xlu0 %7218, %v5299
        %v7220 = vpop.permute.xlu0 %7219
        %7222 = vset.pattern.permute.xlu0 4
        %7223 = vperm.xlu0 %7222, %v5300
        %v7224 = vpop.permute.xlu0 %7223
        %7226 = vset.pattern.permute.xlu0 4
        %7227 = vperm.xlu0 %7226, %v5301
        %v7228 = vpop.permute.xlu0 %7227
        %7230 = vset.pattern.permute.xlu0 4
        %7231 = vperm.xlu0 %7230, %v5302
        %v7232 = vpop.permute.xlu0 %7231
        %7234 = vset.pattern.permute.xlu0 4
        %7235 = vperm.xlu0 %7234, %v5303
        %v7236 = vpop.permute.xlu0 %7235
        %7238 = vset.pattern.permute.xlu0 4
        %7239 = vperm.xlu0 %7238, %v5304
        %v7240 = vpop.permute.xlu0 %7239
        %7242 = vset.pattern.permute.xlu0 4
        %7243 = vperm.xlu0 %7242, %v5305
        %v7244 = vpop.permute.xlu0 %7243
        %7246 = vset.pattern.permute.xlu0 4
        %7247 = vperm.xlu0 %7246, %v5306
        %v7248 = vpop.permute.xlu0 %7247
        %7250 = vset.pattern.permute.xlu0 4
        %7251 = vperm.xlu0 %7250, %v5307
        %v7252 = vpop.permute.xlu0 %7251
        %7254 = vset.pattern.permute.xlu0 4
        %7255 = vperm.xlu0 %7254, %v5308
        %v7256 = vpop.permute.xlu0 %7255
        %7258 = vset.pattern.permute.xlu0 4
        %7259 = vperm.xlu0 %7258, %v5309
        %v7260 = vpop.permute.xlu0 %7259
        %7262 = vset.pattern.permute.xlu0 4
        %7263 = vperm.xlu0 %7262, %v5310
        %v7264 = vpop.permute.xlu0 %7263
        %7266 = vset.pattern.permute.xlu0 4
        %7267 = vperm.xlu0 %7266, %v5311
        %v7268 = vpop.permute.xlu0 %7267
        %v7270 = vmul.f32 %v7110, %v7144
        %v7271 = vmul.f32 %v7111, %v7148
        %v7272 = vmul.f32 %v7112, %v7152
        %v7273 = vmul.f32 %v7113, %v7156
        %v7274 = vmul.f32 %v7114, %v7160
        %v7275 = vmul.f32 %v7115, %v7164
        %v7276 = vmul.f32 %v7116, %v7168
        %v7277 = vmul.f32 %v7117, %v7172
        %v7278 = vmul.f32 %v7118, %v7176
        %v7279 = vmul.f32 %v7119, %v7180
        %v7280 = vmul.f32 %v7120, %v7184
        %v7281 = vmul.f32 %v7121, %v7188
        %v7282 = vmul.f32 %v7122, %v7192
        %v7283 = vmul.f32 %v7123, %v7196
        %v7284 = vmul.f32 %v7124, %v7200
        %v7285 = vmul.f32 %v7125, %v7204
        %v7286 = vmul.f32 %v7126, %v7208
        %v7287 = vmul.f32 %v7127, %v7212
        %v7288 = vmul.f32 %v7128, %v7216
        %v7289 = vmul.f32 %v7129, %v7220
        %v7290 = vmul.f32 %v7130, %v7224
        %v7291 = vmul.f32 %v7131, %v7228
        %v7292 = vmul.f32 %v7132, %v7232
        %v7293 = vmul.f32 %v7133, %v7236
        %v7294 = vmul.f32 %v7134, %v7240
        %v7295 = vmul.f32 %v7135, %v7244
        %v7296 = vmul.f32 %v7136, %v7248
        %v7297 = vmul.f32 %v7137, %v7252
        %v7298 = vmul.f32 %v7138, %v7256
        %v7299 = vmul.f32 %v7139, %v7260
        %v7300 = vmul.f32 %v7140, %v7264
        %v7301 = vmul.f32 %v7141, %v7268
        %7302 = vset.pattern.permute.xlu0 5
        %7303 = vperm.xlu0 %7302, %v5280
        %v7304 = vpop.permute.xlu0 %7303
        %7306 = vset.pattern.permute.xlu0 5
        %7307 = vperm.xlu0 %7306, %v5281
        %v7308 = vpop.permute.xlu0 %7307
        %7310 = vset.pattern.permute.xlu0 5
        %7311 = vperm.xlu0 %7310, %v5282
        %v7312 = vpop.permute.xlu0 %7311
        %7314 = vset.pattern.permute.xlu0 5
        %7315 = vperm.xlu0 %7314, %v5283
        %v7316 = vpop.permute.xlu0 %7315
        %7318 = vset.pattern.permute.xlu0 5
        %7319 = vperm.xlu0 %7318, %v5284
        %v7320 = vpop.permute.xlu0 %7319
        %7322 = vset.pattern.permute.xlu0 5
        %7323 = vperm.xlu0 %7322, %v5285
        %v7324 = vpop.permute.xlu0 %7323
        %7326 = vset.pattern.permute.xlu0 5
        %7327 = vperm.xlu0 %7326, %v5286
        %v7328 = vpop.permute.xlu0 %7327
        %7330 = vset.pattern.permute.xlu0 5
        %7331 = vperm.xlu0 %7330, %v5287
        %v7332 = vpop.permute.xlu0 %7331
        %7334 = vset.pattern.permute.xlu0 5
        %7335 = vperm.xlu0 %7334, %v5288
        %v7336 = vpop.permute.xlu0 %7335
        %7338 = vset.pattern.permute.xlu0 5
        %7339 = vperm.xlu0 %7338, %v5289
        %v7340 = vpop.permute.xlu0 %7339
        %7342 = vset.pattern.permute.xlu0 5
        %7343 = vperm.xlu0 %7342, %v5290
        %v7344 = vpop.permute.xlu0 %7343
        %7346 = vset.pattern.permute.xlu0 5
        %7347 = vperm.xlu0 %7346, %v5291
        %v7348 = vpop.permute.xlu0 %7347
        %7350 = vset.pattern.permute.xlu0 5
        %7351 = vperm.xlu0 %7350, %v5292
        %v7352 = vpop.permute.xlu0 %7351
        %7354 = vset.pattern.permute.xlu0 5
        %7355 = vperm.xlu0 %7354, %v5293
        %v7356 = vpop.permute.xlu0 %7355
        %7358 = vset.pattern.permute.xlu0 5
        %7359 = vperm.xlu0 %7358, %v5294
        %v7360 = vpop.permute.xlu0 %7359
        %7362 = vset.pattern.permute.xlu0 5
        %7363 = vperm.xlu0 %7362, %v5295
        %v7364 = vpop.permute.xlu0 %7363
        %7366 = vset.pattern.permute.xlu0 5
        %7367 = vperm.xlu0 %7366, %v5296
        %v7368 = vpop.permute.xlu0 %7367
        %7370 = vset.pattern.permute.xlu0 5
        %7371 = vperm.xlu0 %7370, %v5297
        %v7372 = vpop.permute.xlu0 %7371
        %7374 = vset.pattern.permute.xlu0 5
        %7375 = vperm.xlu0 %7374, %v5298
        %v7376 = vpop.permute.xlu0 %7375
        %7378 = vset.pattern.permute.xlu0 5
        %7379 = vperm.xlu0 %7378, %v5299
        %v7380 = vpop.permute.xlu0 %7379
        %7382 = vset.pattern.permute.xlu0 5
        %7383 = vperm.xlu0 %7382, %v5300
        %v7384 = vpop.permute.xlu0 %7383
        %7386 = vset.pattern.permute.xlu0 5
        %7387 = vperm.xlu0 %7386, %v5301
        %v7388 = vpop.permute.xlu0 %7387
        %7390 = vset.pattern.permute.xlu0 5
        %7391 = vperm.xlu0 %7390, %v5302
        %v7392 = vpop.permute.xlu0 %7391
        %7394 = vset.pattern.permute.xlu0 5
        %7395 = vperm.xlu0 %7394, %v5303
        %v7396 = vpop.permute.xlu0 %7395
        %7398 = vset.pattern.permute.xlu0 5
        %7399 = vperm.xlu0 %7398, %v5304
        %v7400 = vpop.permute.xlu0 %7399
        %7402 = vset.pattern.permute.xlu0 5
        %7403 = vperm.xlu0 %7402, %v5305
        %v7404 = vpop.permute.xlu0 %7403
        %7406 = vset.pattern.permute.xlu0 5
        %7407 = vperm.xlu0 %7406, %v5306
        %v7408 = vpop.permute.xlu0 %7407
        %7410 = vset.pattern.permute.xlu0 5
        %7411 = vperm.xlu0 %7410, %v5307
        %v7412 = vpop.permute.xlu0 %7411
        %7414 = vset.pattern.permute.xlu0 5
        %7415 = vperm.xlu0 %7414, %v5308
        %v7416 = vpop.permute.xlu0 %7415
        %7418 = vset.pattern.permute.xlu0 5
        %7419 = vperm.xlu0 %7418, %v5309
        %v7420 = vpop.permute.xlu0 %7419
        %7422 = vset.pattern.permute.xlu0 5
        %7423 = vperm.xlu0 %7422, %v5310
        %v7424 = vpop.permute.xlu0 %7423
        %7426 = vset.pattern.permute.xlu0 5
        %7427 = vperm.xlu0 %7426, %v5311
        %v7428 = vpop.permute.xlu0 %7427
        %v7430 = vadd.f32 %v7270, %v7304
        %v7431 = vadd.f32 %v7271, %v7308
        %v7432 = vadd.f32 %v7272, %v7312
        %v7433 = vadd.f32 %v7273, %v7316
        %v7434 = vadd.f32 %v7274, %v7320
        %v7435 = vadd.f32 %v7275, %v7324
        %v7436 = vadd.f32 %v7276, %v7328
        %v7437 = vadd.f32 %v7277, %v7332
        %v7438 = vadd.f32 %v7278, %v7336
        %v7439 = vadd.f32 %v7279, %v7340
        %v7440 = vadd.f32 %v7280, %v7344
        %v7441 = vadd.f32 %v7281, %v7348
        %v7442 = vadd.f32 %v7282, %v7352
        %v7443 = vadd.f32 %v7283, %v7356
        %v7444 = vadd.f32 %v7284, %v7360
        %v7445 = vadd.f32 %v7285, %v7364
        %v7446 = vadd.f32 %v7286, %v7368
        %v7447 = vadd.f32 %v7287, %v7372
        %v7448 = vadd.f32 %v7288, %v7376
        %v7449 = vadd.f32 %v7289, %v7380
        %v7450 = vadd.f32 %v7290, %v7384
        %v7451 = vadd.f32 %v7291, %v7388
        %v7452 = vadd.f32 %v7292, %v7392
        %v7453 = vadd.f32 %v7293, %v7396
        %v7454 = vadd.f32 %v7294, %v7400
        %v7455 = vadd.f32 %v7295, %v7404
        %v7456 = vadd.f32 %v7296, %v7408
        %v7457 = vadd.f32 %v7297, %v7412
        %v7458 = vadd.f32 %v7298, %v7416
        %v7459 = vadd.f32 %v7299, %v7420
        %v7460 = vadd.f32 %v7300, %v7424
        %v7461 = vadd.f32 %v7301, %v7428
        %vm7462 = vcmp.gt.f32.partialorder %v7430, 0.0
        %vm7463 = vcmp.gt.f32.partialorder %v7431, 0.0
        %vm7464 = vcmp.gt.f32.partialorder %v7432, 0.0
        %vm7465 = vcmp.gt.f32.partialorder %v7433, 0.0
        %vm7466 = vcmp.gt.f32.partialorder %v7434, 0.0
        %vm7467 = vcmp.gt.f32.partialorder %v7435, 0.0
        %vm7468 = vcmp.gt.f32.partialorder %v7436, 0.0
        %vm7469 = vcmp.gt.f32.partialorder %v7437, 0.0
        %vm7470 = vcmp.gt.f32.partialorder %v7438, 0.0
        %vm7471 = vcmp.gt.f32.partialorder %v7439, 0.0
        %vm7472 = vcmp.gt.f32.partialorder %v7440, 0.0
        %vm7473 = vcmp.gt.f32.partialorder %v7441, 0.0
        %vm7474 = vcmp.gt.f32.partialorder %v7442, 0.0
        %vm7475 = vcmp.gt.f32.partialorder %v7443, 0.0
        %vm7476 = vcmp.gt.f32.partialorder %v7444, 0.0
        %vm7477 = vcmp.gt.f32.partialorder %v7445, 0.0
        %vm7478 = vcmp.gt.f32.partialorder %v7446, 0.0
        %vm7479 = vcmp.gt.f32.partialorder %v7447, 0.0
        %vm7480 = vcmp.gt.f32.partialorder %v7448, 0.0
        %vm7481 = vcmp.gt.f32.partialorder %v7449, 0.0
        %vm7482 = vcmp.gt.f32.partialorder %v7450, 0.0
        %vm7483 = vcmp.gt.f32.partialorder %v7451, 0.0
        %vm7484 = vcmp.gt.f32.partialorder %v7452, 0.0
        %vm7485 = vcmp.gt.f32.partialorder %v7453, 0.0
        %vm7486 = vcmp.gt.f32.partialorder %v7454, 0.0
        %vm7487 = vcmp.gt.f32.partialorder %v7455, 0.0
        %vm7488 = vcmp.gt.f32.partialorder %v7456, 0.0
        %vm7489 = vcmp.gt.f32.partialorder %v7457, 0.0
        %vm7490 = vcmp.gt.f32.partialorder %v7458, 0.0
        %vm7491 = vcmp.gt.f32.partialorder %v7459, 0.0
        %vm7492 = vcmp.gt.f32.partialorder %v7460, 0.0
        %vm7493 = vcmp.gt.f32.partialorder %v7461, 0.0
        %v7494 = vmul.f32 %v7430, 0.2
        %v7495 = vmul.f32 %v7431, 0.2
        %v7496 = vmul.f32 %v7432, 0.2
        %v7497 = vmul.f32 %v7433, 0.2
        %v7498 = vmul.f32 %v7434, 0.2
        %v7499 = vmul.f32 %v7435, 0.2
        %v7500 = vmul.f32 %v7436, 0.2
        %v7501 = vmul.f32 %v7437, 0.2
        %v7502 = vmul.f32 %v7438, 0.2
        %v7503 = vmul.f32 %v7439, 0.2
        %v7504 = vmul.f32 %v7440, 0.2
        %v7505 = vmul.f32 %v7441, 0.2
        %v7506 = vmul.f32 %v7442, 0.2
        %v7507 = vmul.f32 %v7443, 0.2
        %v7508 = vmul.f32 %v7444, 0.2
        %v7509 = vmul.f32 %v7445, 0.2
        %v7510 = vmul.f32 %v7446, 0.2
        %v7511 = vmul.f32 %v7447, 0.2
        %v7512 = vmul.f32 %v7448, 0.2
        %v7513 = vmul.f32 %v7449, 0.2
        %v7514 = vmul.f32 %v7450, 0.2
        %v7515 = vmul.f32 %v7451, 0.2
        %v7516 = vmul.f32 %v7452, 0.2
        %v7517 = vmul.f32 %v7453, 0.2
        %v7518 = vmul.f32 %v7454, 0.2
        %v7519 = vmul.f32 %v7455, 0.2
        %v7520 = vmul.f32 %v7456, 0.2
        %v7521 = vmul.f32 %v7457, 0.2
        %v7522 = vmul.f32 %v7458, 0.2
        %v7523 = vmul.f32 %v7459, 0.2
        %v7524 = vmul.f32 %v7460, 0.2
        %v7525 = vmul.f32 %v7461, 0.2
        %v7526 = vsel %vm7462, %v7430, %v7494
        %v7527 = vsel %vm7463, %v7431, %v7495
        %v7528 = vsel %vm7464, %v7432, %v7496
        %v7529 = vsel %vm7465, %v7433, %v7497
        %v7530 = vsel %vm7466, %v7434, %v7498
        %v7531 = vsel %vm7467, %v7435, %v7499
        %v7532 = vsel %vm7468, %v7436, %v7500
        %v7533 = vsel %vm7469, %v7437, %v7501
        %v7534 = vsel %vm7470, %v7438, %v7502
        %v7535 = vsel %vm7471, %v7439, %v7503
        %v7536 = vsel %vm7472, %v7440, %v7504
        %v7537 = vsel %vm7473, %v7441, %v7505
        %v7538 = vsel %vm7474, %v7442, %v7506
        %v7539 = vsel %vm7475, %v7443, %v7507
        %v7540 = vsel %vm7476, %v7444, %v7508
        %v7541 = vsel %vm7477, %v7445, %v7509
        %v7542 = vsel %vm7478, %v7446, %v7510
        %v7543 = vsel %vm7479, %v7447, %v7511
        %v7544 = vsel %vm7480, %v7448, %v7512
        %v7545 = vsel %vm7481, %v7449, %v7513
        %v7546 = vsel %vm7482, %v7450, %v7514
        %v7547 = vsel %vm7483, %v7451, %v7515
        %v7548 = vsel %vm7484, %v7452, %v7516
        %v7549 = vsel %vm7485, %v7453, %v7517
        %v7550 = vsel %vm7486, %v7454, %v7518
        %v7551 = vsel %vm7487, %v7455, %v7519
        %v7552 = vsel %vm7488, %v7456, %v7520
        %v7553 = vsel %vm7489, %v7457, %v7521
        %v7554 = vsel %vm7490, %v7458, %v7522
        %v7555 = vsel %vm7491, %v7459, %v7523
        %v7556 = vsel %vm7492, %v7460, %v7524
        %v7557 = vsel %vm7493, %v7461, %v7525
        %s7558 = scalar_lea.vmem %s3, 32
        %v7559 = vld [vmem:[%s7558] sm:$0xff]
        %v7560 = vld [vmem:[%s7558 + $0x8] sm:$0xff]
        %v7561 = vpack.c.bf16 %v7527, %v7526
        %v7562 = vpack.c.bf16 %v7529, %v7528
        %v7563 = vpack.c.bf16 %v7531, %v7530
        %v7564 = vpack.c.bf16 %v7533, %v7532
        %v7565 = vpack.c.bf16 %v7535, %v7534
        %v7566 = vpack.c.bf16 %v7537, %v7536
        %v7567 = vpack.c.bf16 %v7539, %v7538
        %v7568 = vpack.c.bf16 %v7541, %v7540
        %v7569 = vpack.c.bf16 %v7543, %v7542
        %v7570 = vpack.c.bf16 %v7545, %v7544
        %v7571 = vpack.c.bf16 %v7547, %v7546
        %v7572 = vpack.c.bf16 %v7549, %v7548
        %v7573 = vpack.c.bf16 %v7551, %v7550
        %v7574 = vpack.c.bf16 %v7553, %v7552
        %v7575 = vpack.c.bf16 %v7555, %v7554
        %v7576 = vpack.c.bf16 %v7557, %v7556
        %v7579 = vunpack.c.l.b16 %v7559
        %v7580 = vunpack.c.h.b16 %v7559
        %v7581 = vunpack.c.l.b16 %v7560
        %v7582 = vunpack.c.h.b16 %v7560
        %v7583 = vpack.c.b16 %v7581, %v7579
        %v7584 = vpack.c.b16 %v7582, %v7580
        %7587 = vmatprep.subr.bf16.mxu0 0
        %7588 = vmatpush1.bf16.msra.mxu0 %v7561
        %7589 = vmatprep.subr.bf16.mxu0 0
        %7590 = vmatpush1.bf16.msra.mxu0 %v7562
        %7591 = vmatprep.subr.bf16.mxu0 0
        %7592 = vmatpush1.bf16.msra.mxu0 %v7563
        %7593 = vmatprep.subr.bf16.mxu0 0
        %7594 = vmatpush1.bf16.msra.mxu0 %v7564
        %7595 = vmatprep.subr.bf16.mxu0 0
        %7596 = vmatpush1.bf16.msra.mxu0 %v7565
        %7597 = vmatprep.subr.bf16.mxu0 0
        %7598 = vmatpush1.bf16.msra.mxu0 %v7566
        %7599 = vmatprep.subr.bf16.mxu0 0
        %7600 = vmatpush1.bf16.msra.mxu0 %v7567
        %7601 = vmatprep.subr.bf16.mxu0 0
        %7602 = vmatpush1.bf16.msra.mxu0 %v7568
        %7603 = vmatprep.subr.bf16.mxu0 0
        %7604 = vmatpush1.bf16.msra.mxu0 %v7569
        %7605 = vmatprep.subr.bf16.mxu0 0
        %7606 = vmatpush1.bf16.msra.mxu0 %v7570
        %7607 = vmatprep.subr.bf16.mxu0 0
        %7608 = vmatpush1.bf16.msra.mxu0 %v7571
        %7609 = vmatprep.subr.bf16.mxu0 0
        %7610 = vmatpush1.bf16.msra.mxu0 %v7572
        %7611 = vmatprep.subr.bf16.mxu0 0
        %7612 = vmatpush1.bf16.msra.mxu0 %v7573
        %7613 = vmatprep.subr.bf16.mxu0 0
        %7614 = vmatpush1.bf16.msra.mxu0 %v7574
        %7615 = vmatprep.subr.bf16.mxu0 0
        %7616 = vmatpush1.bf16.msra.mxu0 %v7575
        %7617 = vmatprep.subr.bf16.mxu0 0
        %7618 = vmatpush1.bf16.msra.mxu0 %v7576
        %7619 = vmatprep.mubr.bf16.mxu0 %v7584
        %7620 = vmatmul.mubr.bf16.gmra.mrb[0].mxu0 %v7583
        %v7621 = vpop.f32.mrb[0].mxu0
        %v7622 = vadd.f32 0.0, %v7621
        %v7623 = vpop.f32.mrb[0].mxu0
        %v7624 = vpop.f32.mrb[0].mxu0
        %v7625 = vadd.f32 0.0, %v7624
        %v7626 = vpop.f32.mrb[0].mxu0
        %7627 = vdwg.mxu0
        %7628 = vset.pattern.permute.xlu0 6
        %7629 = vperm.xlu0 %7628, %v5280
        %v7630 = vpop.permute.xlu0 %7629
        %v7632 = vadd.f32 %v7622, %v7630
        %v7633 = vtanh.pop %v7632
        %v7634 = vmul.f32 %v7633, 2.0
        %7635 = vset.pattern.permute.xlu0 7
        %7636 = vperm.xlu0 %7635, %v5280
        %v7637 = vpop.permute.xlu0 %7636
        %v7639 = vadd.f32 %v7625, %v7637
        %v7640 = vmul.f32 %v7634, 1.442695
        %v7641 = vpow.pop %v7640
        %v7642 = vmul.f32 %v5278, %v7641
        %v7643 = vadd.f32 %v7642, %v7639
        %v7644 = vrot.slane %v7634, 4
        %v7645 = vadd.f32 %v7634, %v7644
        %v7646 = vrot.slane %v7645, 2
        %v7647 = vadd.f32 %v7645, %v7646
        %v7648 = vrot.slane %v7647, 1
        %v7649 = vadd.f32 %v7647, %v7648
        %v7650 = vadd.f32 %v5182, %v7649
        %s7651 = scalar_lea.vmem %s4, 32
        %v7652 = vld [vmem:[%s7651] sm:$0xff]
        %v7653 = vld [vmem:[%s7651 + $0x8] sm:$0xff]
        %v7655 = vsel %vm412, %v7652, 0
        %v7658 = vsel %vm412, %v7653, 0
        %7660 = vmatprep.subr.mxu0 0.0
        %7661 = vmatpush1.msra.mxu0 %v7643
        %7662 = vmatprep.subr.mxu0 0.0
        %7663 = vmatpush1.msra.mxu0 0.0
        %7664 = vmatprep.subr.mxu0 0.0
        %7665 = vmatpush1.msra.mxu0 0.0
        %7666 = vmatprep.subr.mxu0 0.0
        %7667 = vmatpush1.msra.mxu0 0.0
        %7668 = vmatprep.subr.mxu0 0.0
        %7669 = vmatpush1.msra.mxu0 0.0
        %7670 = vmatprep.subr.mxu0 0.0
        %7671 = vmatpush1.msra.mxu0 0.0
        %7672 = vmatprep.subr.mxu0 0.0
        %7673 = vmatpush1.msra.mxu0 0.0
        %7674 = vmatprep.subr.mxu0 0.0
        %7675 = vmatpush1.msra.mxu0 0.0
        %7676 = vmatprep.subr.mxu0 0.0
        %7677 = vmatpush1.msra.mxu0 0.0
        %7678 = vmatprep.subr.mxu0 0.0
        %7679 = vmatpush1.msra.mxu0 0.0
        %7680 = vmatprep.subr.mxu0 0.0
        %7681 = vmatpush1.msra.mxu0 0.0
        %7682 = vmatprep.subr.mxu0 0.0
        %7683 = vmatpush1.msra.mxu0 0.0
        %7684 = vmatprep.subr.mxu0 0.0
        %7685 = vmatpush1.msra.mxu0 0.0
        %7686 = vmatprep.subr.mxu0 0.0
        %7687 = vmatpush1.msra.mxu0 0.0
        %7688 = vmatprep.subr.mxu0 0.0
        %7689 = vmatpush1.msra.mxu0 0.0
        %7690 = vmatprep.subr.mxu0 0.0
        %7691 = vmatpush1.msra.mxu0 0.0
        %7692 = vmatprep.subr.mxu0 0.0
        %7693 = vmatpush1.msra.mxu0 0.0
        %7694 = vmatprep.subr.mxu0 0.0
        %7695 = vmatpush1.msra.mxu0 0.0
        %7696 = vmatprep.subr.mxu0 0.0
        %7697 = vmatpush1.msra.mxu0 0.0
        %7698 = vmatprep.subr.mxu0 0.0
        %7699 = vmatpush1.msra.mxu0 0.0
        %7700 = vmatprep.subr.mxu0 0.0
        %7701 = vmatpush1.msra.mxu0 0.0
        %7702 = vmatprep.subr.mxu0 0.0
        %7703 = vmatpush1.msra.mxu0 0.0
        %7704 = vmatprep.subr.mxu0 0.0
        %7705 = vmatpush1.msra.mxu0 0.0
        %7706 = vmatprep.subr.mxu0 0.0
        %7707 = vmatpush1.msra.mxu0 0.0
        %7708 = vmatprep.subr.mxu0 0.0
        %7709 = vmatpush1.msra.mxu0 0.0
        %7710 = vmatprep.subr.mxu0 0.0
        %7711 = vmatpush1.msra.mxu0 0.0
        %7712 = vmatprep.subr.mxu0 0.0
        %7713 = vmatpush1.msra.mxu0 0.0
        %7714 = vmatprep.subr.mxu0 0.0
        %7715 = vmatpush1.msra.mxu0 0.0
        %7716 = vmatprep.subr.mxu0 0.0
        %7717 = vmatpush1.msra.mxu0 0.0
        %7718 = vmatprep.subr.mxu0 0.0
        %7719 = vmatpush1.msra.mxu0 0.0
        %7720 = vmatprep.subr.mxu0 0.0
        %7721 = vmatpush1.msra.mxu0 0.0
        %7722 = vmatprep.subr.mxu0 0.0
        %7723 = vmatpush1.msra.mxu0 0.0
        %7724 = vmatprep.mubr.f32.mxu0 0.0
        %7725 = vmatmul.mubr.f32.gmra.mrb[0].mxu0 %v7655
        %v7726 = vpop.f32.mrb[0].mxu0
        %v7727 = vadd.f32 0.0, %v7726
        %v7728 = vpop.f32.mrb[0].mxu0
        %7729 = vmatprep.mubr.f32.mxu0 0.0
        %7730 = vmatmul.mubr.f32.gmra.mrb[0].mxu0 %v7658
        %v7731 = vpop.f32.mrb[0].mxu0
        %v7732 = vadd.f32 0.0, %v7731
        %v7733 = vpop.f32.mrb[0].mxu0
        %7734 = vdwg.mxu0
        %v7735 = vadd.f32 %v5676, %v7727
        %v7736 = vadd.f32 %v5681, %v7732
        %7737 = vset.pattern.permute.xlu0 8
        %7738 = vperm.xlu0 %7737, %v5280
        %v7739 = vpop.permute.xlu0 %7738
        %7741 = vset.pattern.permute.xlu0 8
        %7742 = vperm.xlu0 %7741, %v5281
        %v7743 = vpop.permute.xlu0 %7742
        %v7745 = vadd.f32 %v7735, %v7739
        %v7746 = vadd.f32 %v7736, %v7743
        %s7747 = scalar_lea.vmem %s5, 768
        %v7748 = vld [vmem:[%s7747] sm:$0xff]
        %v7749 = vld [vmem:[%s7747 + $0x8] sm:$0xff]
        %v7750 = vld [vmem:[%s7747 + $0x10] sm:$0xff]
        %v7751 = vld [vmem:[%s7747 + $0x18] sm:$0xff]
        %v7752 = vld [vmem:[%s7747 + $0x20] sm:$0xff]
        %v7753 = vld [vmem:[%s7747 + $0x28] sm:$0xff]
        %v7754 = vld [vmem:[%s7747 + $0x30] sm:$0xff]
        %v7755 = vld [vmem:[%s7747 + $0x38] sm:$0xff]
        %v7756 = vld [vmem:[%s7747 + $0x40] sm:$0xff]
        %v7757 = vld [vmem:[%s7747 + $0x48] sm:$0xff]
        %v7758 = vld [vmem:[%s7747 + $0x50] sm:$0xff]
        %v7759 = vld [vmem:[%s7747 + $0x58] sm:$0xff]
        %v7760 = vld [vmem:[%s7747 + $0x60] sm:$0xff]
        %v7761 = vld [vmem:[%s7747 + $0x68] sm:$0xff]
        %v7762 = vld [vmem:[%s7747 + $0x70] sm:$0xff]
        %v7763 = vld [vmem:[%s7747 + $0x78] sm:$0xff]
        %v7764 = vld [vmem:[%s7747 + $0x80] sm:$0xff]
        %v7765 = vld [vmem:[%s7747 + $0x88] sm:$0xff]
        %v7766 = vld [vmem:[%s7747 + $0x90] sm:$0xff]
        %v7767 = vld [vmem:[%s7747 + $0x98] sm:$0xff]
        %v7768 = vld [vmem:[%s7747 + $0xa0] sm:$0xff]
        %v7769 = vld [vmem:[%s7747 + $0xa8] sm:$0xff]
        %v7770 = vld [vmem:[%s7747 + $0xb0] sm:$0xff]
        %v7771 = vld [vmem:[%s7747 + $0xb8] sm:$0xff]
        %v7772 = vld [vmem:[%s7747 + $0xc0] sm:$0xff]
        %v7773 = vld [vmem:[%s7747 + $0xc8] sm:$0xff]
        %v7774 = vld [vmem:[%s7747 + $0xd0] sm:$0xff]
        %v7775 = vld [vmem:[%s7747 + $0xd8] sm:$0xff]
        %v7776 = vld [vmem:[%s7747 + $0xe0] sm:$0xff]
        %v7777 = vld [vmem:[%s7747 + $0xe8] sm:$0xff]
        %v7778 = vld [vmem:[%s7747 + $0xf0] sm:$0xff]
        %v7779 = vld [vmem:[%s7747 + $0xf8] sm:$0xff]
        %s7780 = scalar_lea.vmem %s1, 816
        %v7781 = vld [vmem:[%s7780] sm:$0xff]
        %v7782 = vld [vmem:[%s7780 + $0x8] sm:$0xff]
        %v7783 = vld [vmem:[%s7780 + $0x10] sm:$0xff]
        %v7784 = vld [vmem:[%s7780 + $0x18] sm:$0xff]
        %v7785 = vld [vmem:[%s7780 + $0x20] sm:$0xff]
        %v7786 = vld [vmem:[%s7780 + $0x28] sm:$0xff]
        %v7787 = vld [vmem:[%s7780 + $0x30] sm:$0xff]
        %v7788 = vld [vmem:[%s7780 + $0x38] sm:$0xff]
        %v7789 = vld [vmem:[%s7780 + $0x40] sm:$0xff]
        %v7790 = vld [vmem:[%s7780 + $0x48] sm:$0xff]
        %v7791 = vld [vmem:[%s7780 + $0x50] sm:$0xff]
        %v7792 = vld [vmem:[%s7780 + $0x58] sm:$0xff]
        %v7793 = vld [vmem:[%s7780 + $0x60] sm:$0xff]
        %v7794 = vld [vmem:[%s7780 + $0x68] sm:$0xff]
        %v7795 = vld [vmem:[%s7780 + $0x70] sm:$0xff]
        %v7796 = vld [vmem:[%s7780 + $0x78] sm:$0xff]
        %v7797 = vld [vmem:[%s7780 + $0x80] sm:$0xff]
        %v7798 = vld [vmem:[%s7780 + $0x88] sm:$0xff]
        %v7799 = vld [vmem:[%s7780 + $0x90] sm:$0xff]
        %v7800 = vld [vmem:[%s7780 + $0x98] sm:$0xff]
        %v7801 = vld [vmem:[%s7780 + $0xa0] sm:$0xff]
        %v7802 = vld [vmem:[%s7780 + $0xa8] sm:$0xff]
        %v7803 = vld [vmem:[%s7780 + $0xb0] sm:$0xff]
        %v7804 = vld [vmem:[%s7780 + $0xb8] sm:$0xff]
        %v7805 = vld [vmem:[%s7780 + $0xc0] sm:$0xff]
        %v7806 = vld [vmem:[%s7780 + $0xc8] sm:$0xff]
        %v7807 = vld [vmem:[%s7780 + $0xd0] sm:$0xff]
        %v7808 = vld [vmem:[%s7780 + $0xd8] sm:$0xff]
        %v7809 = vld [vmem:[%s7780 + $0xe0] sm:$0xff]
        %v7810 = vld [vmem:[%s7780 + $0xe8] sm:$0xff]
        %v7811 = vld [vmem:[%s7780 + $0xf0] sm:$0xff]
        %v7812 = vld [vmem:[%s7780 + $0xf8] sm:$0xff]
        %v7813 = vld [vmem:[%s7780 + $0x100] sm:$0xff]
        %v7814 = vld [vmem:[%s7780 + $0x108] sm:$0xff]
        %v7816 = vsel %vm412, %v7781, 0
        %v7819 = vsel %vm412, %v7782, 0
        %v7822 = vsel %vm412, %v7783, 0
        %v7825 = vsel %vm412, %v7784, 0
        %v7828 = vsel %vm412, %v7785, 0
        %v7831 = vsel %vm412, %v7786, 0
        %v7834 = vsel %vm412, %v7787, 0
        %v7837 = vsel %vm412, %v7788, 0
        %v7840 = vsel %vm412, %v7789, 0
        %v7843 = vsel %vm412, %v7790, 0
        %v7846 = vsel %vm412, %v7791, 0
        %v7849 = vsel %vm412, %v7792, 0
        %v7852 = vsel %vm412, %v7793, 0
        %v7855 = vsel %vm412, %v7794, 0
        %v7858 = vsel %vm412, %v7795, 0
        %v7861 = vsel %vm412, %v7796, 0
        %v7864 = vsel %vm412, %v7797, 0
        %v7867 = vsel %vm412, %v7798, 0
        %v7870 = vsel %vm412, %v7799, 0
        %v7873 = vsel %vm412, %v7800, 0
        %v7876 = vsel %vm412, %v7801, 0
        %v7879 = vsel %vm412, %v7802, 0
        %v7882 = vsel %vm412, %v7803, 0
        %v7885 = vsel %vm412, %v7804, 0
        %v7888 = vsel %vm412, %v7805, 0
        %v7891 = vsel %vm412, %v7806, 0
        %v7894 = vsel %vm412, %v7807, 0
        %v7897 = vsel %vm412, %v7808, 0
        %v7900 = vsel %vm412, %v7809, 0
        %v7903 = vsel %vm412, %v7810, 0
        %v7906 = vsel %vm412, %v7811, 0
        %v7909 = vsel %vm412, %v7812, 0
        %v7912 = vsel %vm412, %v7813, 0
        %v7915 = vsel %vm412, %v7814, 0
        %7917 = vmatprep.subr.mxu0 0.0
        %7918 = vmatpush1.msra.mxu0 %v7745
        %7919 = vmatprep.subr.mxu0 0.0
        %7920 = vmatpush1.msra.mxu0 0.0
        %7921 = vmatprep.subr.mxu0 0.0
        %7922 = vmatpush1.msra.mxu0 0.0
        %7923 = vmatprep.subr.mxu0 0.0
        %7924 = vmatpush1.msra.mxu0 0.0
        %7925 = vmatprep.subr.mxu0 0.0
        %7926 = vmatpush1.msra.mxu0 0.0
        %7927 = vmatprep.subr.mxu0 0.0
        %7928 = vmatpush1.msra.mxu0 0.0
        %7929 = vmatprep.subr.mxu0 0.0
        %7930 = vmatpush1.msra.mxu0 0.0
        %7931 = vmatprep.subr.mxu0 0.0
        %7932 = vmatpush1.msra.mxu0 0.0
        %7933 = vmatprep.subr.mxu0 0.0
        %7934 = vmatpush1.msra.mxu0 0.0
        %7935 = vmatprep.subr.mxu0 0.0
        %7936 = vmatpush1.msra.mxu0 0.0
        %7937 = vmatprep.subr.mxu0 0.0
        %7938 = vmatpush1.msra.mxu0 0.0
        %7939 = vmatprep.subr.mxu0 0.0
        %7940 = vmatpush1.msra.mxu0 0.0
        %7941 = vmatprep.subr.mxu0 0.0
        %7942 = vmatpush1.msra.mxu0 0.0
        %7943 = vmatprep.subr.mxu0 0.0
        %7944 = vmatpush1.msra.mxu0 0.0
        %7945 = vmatprep.subr.mxu0 0.0
        %7946 = vmatpush1.msra.mxu0 0.0
        %7947 = vmatprep.subr.mxu0 0.0
        %7948 = vmatpush1.msra.mxu0 0.0
        %7949 = vmatprep.subr.mxu0 0.0
        %7950 = vmatpush1.msra.mxu0 0.0
        %7951 = vmatprep.subr.mxu0 0.0
        %7952 = vmatpush1.msra.mxu0 0.0
        %7953 = vmatprep.subr.mxu0 0.0
        %7954 = vmatpush1.msra.mxu0 0.0
        %7955 = vmatprep.subr.mxu0 0.0
        %7956 = vmatpush1.msra.mxu0 0.0
        %7957 = vmatprep.subr.mxu0 0.0
        %7958 = vmatpush1.msra.mxu0 0.0
        %7959 = vmatprep.subr.mxu0 0.0
        %7960 = vmatpush1.msra.mxu0 0.0
        %7961 = vmatprep.subr.mxu0 0.0
        %7962 = vmatpush1.msra.mxu0 0.0
        %7963 = vmatprep.subr.mxu0 0.0
        %7964 = vmatpush1.msra.mxu0 0.0
        %7965 = vmatprep.subr.mxu0 0.0
        %7966 = vmatpush1.msra.mxu0 0.0
        %7967 = vmatprep.subr.mxu0 0.0
        %7968 = vmatpush1.msra.mxu0 0.0
        %7969 = vmatprep.subr.mxu0 0.0
        %7970 = vmatpush1.msra.mxu0 0.0
        %7971 = vmatprep.subr.mxu0 0.0
        %7972 = vmatpush1.msra.mxu0 0.0
        %7973 = vmatprep.subr.mxu0 0.0
        %7974 = vmatpush1.msra.mxu0 0.0
        %7975 = vmatprep.subr.mxu0 0.0
        %7976 = vmatpush1.msra.mxu0 0.0
        %7977 = vmatprep.subr.mxu0 0.0
        %7978 = vmatpush1.msra.mxu0 0.0
        %7979 = vmatprep.subr.mxu0 0.0
        %7980 = vmatpush1.msra.mxu0 0.0
        %7981 = vmatprep.mubr.f32.mxu0 0.0
        %7982 = vmatmul.mubr.f32.gmra.mrb[0].mxu0 %v7816
        %v7983 = vpop.f32.mrb[0].mxu0
        %v7984 = vadd.f32 0.0, %v7983
        %v7985 = vpop.f32.mrb[0].mxu0
        %7986 = vmatprep.mubr.f32.mxu0 0.0
        %7987 = vmatmul.mubr.f32.gmra.mrb[0].mxu0 %v7819
        %v7988 = vpop.f32.mrb[0].mxu0
        %v7989 = vadd.f32 0.0, %v7988
        %v7990 = vpop.f32.mrb[0].mxu0
        %7991 = vmatprep.mubr.f32.mxu0 0.0
        %7992 = vmatmul.mubr.f32.gmra.mrb[0].mxu0 %v7822
        %v7993 = vpop.f32.mrb[0].mxu0
        %v7994 = vadd.f32 0.0, %v7993
        %v7995 = vpop.f32.mrb[0].mxu0
        %7996 = vmatprep.mubr.f32.mxu0 0.0
        %7997 = vmatmul.mubr.f32.gmra.mrb[0].mxu0 %v7825
        %v7998 = vpop.f32.mrb[0].mxu0
        %v7999 = vadd.f32 0.0, %v7998
        %v8000 = vpop.f32.mrb[0].mxu0
        %8001 = vmatprep.mubr.f32.mxu0 0.0
        %8002 = vmatmul.mubr.f32.gmra.mrb[0].mxu0 %v7828
        %v8003 = vpop.f32.mrb[0].mxu0
        %v8004 = vadd.f32 0.0, %v8003
        %v8005 = vpop.f32.mrb[0].mxu0
        %8006 = vmatprep.mubr.f32.mxu0 0.0
        %8007 = vmatmul.mubr.f32.gmra.mrb[0].mxu0 %v7831
        %v8008 = vpop.f32.mrb[0].mxu0
        %v8009 = vadd.f32 0.0, %v8008
        %v8010 = vpop.f32.mrb[0].mxu0
        %8011 = vmatprep.mubr.f32.mxu0 0.0
        %8012 = vmatmul.mubr.f32.gmra.mrb[0].mxu0 %v7834
        %v8013 = vpop.f32.mrb[0].mxu0
        %v8014 = vadd.f32 0.0, %v8013
        %v8015 = vpop.f32.mrb[0].mxu0
        %8016 = vmatprep.mubr.f32.mxu0 0.0
        %8017 = vmatmul.mubr.f32.gmra.mrb[0].mxu0 %v7837
        %v8018 = vpop.f32.mrb[0].mxu0
        %v8019 = vadd.f32 0.0, %v8018
        %v8020 = vpop.f32.mrb[0].mxu0
        %8021 = vmatprep.mubr.f32.mxu0 0.0
        %8022 = vmatmul.mubr.f32.gmra.mrb[0].mxu0 %v7840
        %v8023 = vpop.f32.mrb[0].mxu0
        %v8024 = vadd.f32 0.0, %v8023
        %v8025 = vpop.f32.mrb[0].mxu0
        %8026 = vmatprep.mubr.f32.mxu0 0.0
        %8027 = vmatmul.mubr.f32.gmra.mrb[0].mxu0 %v7843
        %v8028 = vpop.f32.mrb[0].mxu0
        %v8029 = vadd.f32 0.0, %v8028
        %v8030 = vpop.f32.mrb[0].mxu0
        %8031 = vmatprep.mubr.f32.mxu0 0.0
        %8032 = vmatmul.mubr.f32.gmra.mrb[0].mxu0 %v7846
        %v8033 = vpop.f32.mrb[0].mxu0
        %v8034 = vadd.f32 0.0, %v8033
        %v8035 = vpop.f32.mrb[0].mxu0
        %8036 = vmatprep.mubr.f32.mxu0 0.0
        %8037 = vmatmul.mubr.f32.gmra.mrb[0].mxu0 %v7849
        %v8038 = vpop.f32.mrb[0].mxu0
        %v8039 = vadd.f32 0.0, %v8038
        %v8040 = vpop.f32.mrb[0].mxu0
        %8041 = vmatprep.mubr.f32.mxu0 0.0
        %8042 = vmatmul.mubr.f32.gmra.mrb[0].mxu0 %v7852
        %v8043 = vpop.f32.mrb[0].mxu0
        %v8044 = vadd.f32 0.0, %v8043
        %v8045 = vpop.f32.mrb[0].mxu0
        %8046 = vmatprep.mubr.f32.mxu0 0.0
        %8047 = vmatmul.mubr.f32.gmra.mrb[0].mxu0 %v7855
        %v8048 = vpop.f32.mrb[0].mxu0
        %v8049 = vadd.f32 0.0, %v8048
        %v8050 = vpop.f32.mrb[0].mxu0
        %8051 = vmatprep.mubr.f32.mxu0 0.0
        %8052 = vmatmul.mubr.f32.gmra.mrb[0].mxu0 %v7858
        %v8053 = vpop.f32.mrb[0].mxu0
        %v8054 = vadd.f32 0.0, %v8053
        %v8055 = vpop.f32.mrb[0].mxu0
        %8056 = vmatprep.mubr.f32.mxu0 0.0
        %8057 = vmatmul.mubr.f32.gmra.mrb[0].mxu0 %v7861
        %v8058 = vpop.f32.mrb[0].mxu0
        %v8059 = vadd.f32 0.0, %v8058
        %v8060 = vpop.f32.mrb[0].mxu0
        %8061 = vmatprep.mubr.f32.mxu0 0.0
        %8062 = vmatmul.mubr.f32.gmra.mrb[0].mxu0 %v7864
        %v8063 = vpop.f32.mrb[0].mxu0
        %v8064 = vadd.f32 0.0, %v8063
        %v8065 = vpop.f32.mrb[0].mxu0
        %8066 = vmatprep.mubr.f32.mxu0 0.0
        %8067 = vmatmul.mubr.f32.gmra.mrb[0].mxu0 %v7867
        %v8068 = vpop.f32.mrb[0].mxu0
        %v8069 = vadd.f32 0.0, %v8068
        %v8070 = vpop.f32.mrb[0].mxu0
        %8071 = vmatprep.mubr.f32.mxu0 0.0
        %8072 = vmatmul.mubr.f32.gmra.mrb[0].mxu0 %v7870
        %v8073 = vpop.f32.mrb[0].mxu0
        %v8074 = vadd.f32 0.0, %v8073
        %v8075 = vpop.f32.mrb[0].mxu0
        %8076 = vmatprep.mubr.f32.mxu0 0.0
        %8077 = vmatmul.mubr.f32.gmra.mrb[0].mxu0 %v7873
        %v8078 = vpop.f32.mrb[0].mxu0
        %v8079 = vadd.f32 0.0, %v8078
        %v8080 = vpop.f32.mrb[0].mxu0
        %8081 = vmatprep.mubr.f32.mxu0 0.0
        %8082 = vmatmul.mubr.f32.gmra.mrb[0].mxu0 %v7876
        %v8083 = vpop.f32.mrb[0].mxu0
        %v8084 = vadd.f32 0.0, %v8083
        %v8085 = vpop.f32.mrb[0].mxu0
        %8086 = vmatprep.mubr.f32.mxu0 0.0
        %8087 = vmatmul.mubr.f32.gmra.mrb[0].mxu0 %v7879
        %v8088 = vpop.f32.mrb[0].mxu0
        %v8089 = vadd.f32 0.0, %v8088
        %v8090 = vpop.f32.mrb[0].mxu0
        %8091 = vmatprep.mubr.f32.mxu0 0.0
        %8092 = vmatmul.mubr.f32.gmra.mrb[0].mxu0 %v7882
        %v8093 = vpop.f32.mrb[0].mxu0
        %v8094 = vadd.f32 0.0, %v8093
        %v8095 = vpop.f32.mrb[0].mxu0
        %8096 = vmatprep.mubr.f32.mxu0 0.0
        %8097 = vmatmul.mubr.f32.gmra.mrb[0].mxu0 %v7885
        %v8098 = vpop.f32.mrb[0].mxu0
        %v8099 = vadd.f32 0.0, %v8098
        %v8100 = vpop.f32.mrb[0].mxu0
        %8101 = vmatprep.mubr.f32.mxu0 0.0
        %8102 = vmatmul.mubr.f32.gmra.mrb[0].mxu0 %v7888
        %v8103 = vpop.f32.mrb[0].mxu0
        %v8104 = vadd.f32 0.0, %v8103
        %v8105 = vpop.f32.mrb[0].mxu0
        %8106 = vmatprep.mubr.f32.mxu0 0.0
        %8107 = vmatmul.mubr.f32.gmra.mrb[0].mxu0 %v7891
        %v8108 = vpop.f32.mrb[0].mxu0
        %v8109 = vadd.f32 0.0, %v8108
        %v8110 = vpop.f32.mrb[0].mxu0
        %8111 = vmatprep.mubr.f32.mxu0 0.0
        %8112 = vmatmul.mubr.f32.gmra.mrb[0].mxu0 %v7894
        %v8113 = vpop.f32.mrb[0].mxu0
        %v8114 = vadd.f32 0.0, %v8113
        %v8115 = vpop.f32.mrb[0].mxu0
        %8116 = vmatprep.mubr.f32.mxu0 0.0
        %8117 = vmatmul.mubr.f32.gmra.mrb[0].mxu0 %v7897
        %v8118 = vpop.f32.mrb[0].mxu0
        %v8119 = vadd.f32 0.0, %v8118
        %v8120 = vpop.f32.mrb[0].mxu0
        %8121 = vmatprep.mubr.f32.mxu0 0.0
        %8122 = vmatmul.mubr.f32.gmra.mrb[0].mxu0 %v7900
        %v8123 = vpop.f32.mrb[0].mxu0
        %v8124 = vadd.f32 0.0, %v8123
        %v8125 = vpop.f32.mrb[0].mxu0
        %8126 = vmatprep.mubr.f32.mxu0 0.0
        %8127 = vmatmul.mubr.f32.gmra.mrb[0].mxu0 %v7903
        %v8128 = vpop.f32.mrb[0].mxu0
        %v8129 = vadd.f32 0.0, %v8128
        %v8130 = vpop.f32.mrb[0].mxu0
        %8131 = vmatprep.mubr.f32.mxu0 0.0
        %8132 = vmatmul.mubr.f32.gmra.mrb[0].mxu0 %v7906
        %v8133 = vpop.f32.mrb[0].mxu0
        %v8134 = vadd.f32 0.0, %v8133
        %v8135 = vpop.f32.mrb[0].mxu0
        %8136 = vmatprep.mubr.f32.mxu0 0.0
        %8137 = vmatmul.mubr.f32.gmra.mrb[0].mxu0 %v7909
        %v8138 = vpop.f32.mrb[0].mxu0
        %v8139 = vadd.f32 0.0, %v8138
        %v8140 = vpop.f32.mrb[0].mxu0
        %8141 = vmatprep.mubr.f32.mxu0 0.0
        %8142 = vmatmul.mubr.f32.gmra.mrb[0].mxu0 %v7912
        %v8143 = vpop.f32.mrb[0].mxu0
        %v8144 = vadd.f32 0.0, %v8143
        %v8145 = vpop.f32.mrb[0].mxu0
        %8146 = vmatprep.mubr.f32.mxu0 0.0
        %8147 = vmatmul.mubr.f32.gmra.mrb[0].mxu0 %v7915
        %v8148 = vpop.f32.mrb[0].mxu0
        %v8149 = vadd.f32 0.0, %v8148
        %v8150 = vpop.f32.mrb[0].mxu0
        %8151 = vdwg.mxu0
        %8153 = vset.pattern.permute.xlu0 0
        %8154 = vperm.xlu0 %8153, %v7748
        %v8155 = vpop.permute.xlu0 %8154
        %8158 = vset.pattern.permute.xlu0 0
        %8159 = vperm.xlu0 %8158, %v7749
        %v8160 = vpop.permute.xlu0 %8159
        %8163 = vset.pattern.permute.xlu0 0
        %8164 = vperm.xlu0 %8163, %v7750
        %v8165 = vpop.permute.xlu0 %8164
        %8168 = vset.pattern.permute.xlu0 0
        %8169 = vperm.xlu0 %8168, %v7751
        %v8170 = vpop.permute.xlu0 %8169
        %8173 = vset.pattern.permute.xlu0 0
        %8174 = vperm.xlu0 %8173, %v7752
        %v8175 = vpop.permute.xlu0 %8174
        %8178 = vset.pattern.permute.xlu0 0
        %8179 = vperm.xlu0 %8178, %v7753
        %v8180 = vpop.permute.xlu0 %8179
        %8183 = vset.pattern.permute.xlu0 0
        %8184 = vperm.xlu0 %8183, %v7754
        %v8185 = vpop.permute.xlu0 %8184
        %8188 = vset.pattern.permute.xlu0 0
        %8189 = vperm.xlu0 %8188, %v7755
        %v8190 = vpop.permute.xlu0 %8189
        %8193 = vset.pattern.permute.xlu0 0
        %8194 = vperm.xlu0 %8193, %v7756
        %v8195 = vpop.permute.xlu0 %8194
        %8198 = vset.pattern.permute.xlu0 0
        %8199 = vperm.xlu0 %8198, %v7757
        %v8200 = vpop.permute.xlu0 %8199
        %8203 = vset.pattern.permute.xlu0 0
        %8204 = vperm.xlu0 %8203, %v7758
        %v8205 = vpop.permute.xlu0 %8204
        %8208 = vset.pattern.permute.xlu0 0
        %8209 = vperm.xlu0 %8208, %v7759
        %v8210 = vpop.permute.xlu0 %8209
        %8213 = vset.pattern.permute.xlu0 0
        %8214 = vperm.xlu0 %8213, %v7760
        %v8215 = vpop.permute.xlu0 %8214
        %8218 = vset.pattern.permute.xlu0 0
        %8219 = vperm.xlu0 %8218, %v7761
        %v8220 = vpop.permute.xlu0 %8219
        %8223 = vset.pattern.permute.xlu0 0
        %8224 = vperm.xlu0 %8223, %v7762
        %v8225 = vpop.permute.xlu0 %8224
        %8228 = vset.pattern.permute.xlu0 0
        %8229 = vperm.xlu0 %8228, %v7763
        %v8230 = vpop.permute.xlu0 %8229
        %8233 = vset.pattern.permute.xlu0 0
        %8234 = vperm.xlu0 %8233, %v7764
        %v8235 = vpop.permute.xlu0 %8234
        %8238 = vset.pattern.permute.xlu0 0
        %8239 = vperm.xlu0 %8238, %v7765
        %v8240 = vpop.permute.xlu0 %8239
        %8243 = vset.pattern.permute.xlu0 0
        %8244 = vperm.xlu0 %8243, %v7766
        %v8245 = vpop.permute.xlu0 %8244
        %8248 = vset.pattern.permute.xlu0 0
        %8249 = vperm.xlu0 %8248, %v7767
        %v8250 = vpop.permute.xlu0 %8249
        %8253 = vset.pattern.permute.xlu0 0
        %8254 = vperm.xlu0 %8253, %v7768
        %v8255 = vpop.permute.xlu0 %8254
        %8258 = vset.pattern.permute.xlu0 0
        %8259 = vperm.xlu0 %8258, %v7769
        %v8260 = vpop.permute.xlu0 %8259
        %8263 = vset.pattern.permute.xlu0 0
        %8264 = vperm.xlu0 %8263, %v7770
        %v8265 = vpop.permute.xlu0 %8264
        %8268 = vset.pattern.permute.xlu0 0
        %8269 = vperm.xlu0 %8268, %v7771
        %v8270 = vpop.permute.xlu0 %8269
        %8273 = vset.pattern.permute.xlu0 0
        %8274 = vperm.xlu0 %8273, %v7772
        %v8275 = vpop.permute.xlu0 %8274
        %8278 = vset.pattern.permute.xlu0 0
        %8279 = vperm.xlu0 %8278, %v7773
        %v8280 = vpop.permute.xlu0 %8279
        %8283 = vset.pattern.permute.xlu0 0
        %8284 = vperm.xlu0 %8283, %v7774
        %v8285 = vpop.permute.xlu0 %8284
        %8288 = vset.pattern.permute.xlu0 0
        %8289 = vperm.xlu0 %8288, %v7775
        %v8290 = vpop.permute.xlu0 %8289
        %8293 = vset.pattern.permute.xlu0 0
        %8294 = vperm.xlu0 %8293, %v7776
        %v8295 = vpop.permute.xlu0 %8294
        %8298 = vset.pattern.permute.xlu0 0
        %8299 = vperm.xlu0 %8298, %v7777
        %v8300 = vpop.permute.xlu0 %8299
        %8303 = vset.pattern.permute.xlu0 0
        %8304 = vperm.xlu0 %8303, %v7778
        %v8305 = vpop.permute.xlu0 %8304
        %8308 = vset.pattern.permute.xlu0 0
        %8309 = vperm.xlu0 %8308, %v7779
        %v8310 = vpop.permute.xlu0 %8309
        %v8312 = vadd.f32 %v7984, %v8155
        %v8313 = vadd.f32 %v7989, %v8160
        %v8314 = vadd.f32 %v7994, %v8165
        %v8315 = vadd.f32 %v7999, %v8170
        %v8316 = vadd.f32 %v8004, %v8175
        %v8317 = vadd.f32 %v8009, %v8180
        %v8318 = vadd.f32 %v8014, %v8185
        %v8319 = vadd.f32 %v8019, %v8190
        %v8320 = vadd.f32 %v8024, %v8195
        %v8321 = vadd.f32 %v8029, %v8200
        %v8322 = vadd.f32 %v8034, %v8205
        %v8323 = vadd.f32 %v8039, %v8210
        %v8324 = vadd.f32 %v8044, %v8215
        %v8325 = vadd.f32 %v8049, %v8220
        %v8326 = vadd.f32 %v8054, %v8225
        %v8327 = vadd.f32 %v8059, %v8230
        %v8328 = vadd.f32 %v8064, %v8235
        %v8329 = vadd.f32 %v8069, %v8240
        %v8330 = vadd.f32 %v8074, %v8245
        %v8331 = vadd.f32 %v8079, %v8250
        %v8332 = vadd.f32 %v8084, %v8255
        %v8333 = vadd.f32 %v8089, %v8260
        %v8334 = vadd.f32 %v8094, %v8265
        %v8335 = vadd.f32 %v8099, %v8270
        %v8336 = vadd.f32 %v8104, %v8275
        %v8337 = vadd.f32 %v8109, %v8280
        %v8338 = vadd.f32 %v8114, %v8285
        %v8339 = vadd.f32 %v8119, %v8290
        %v8340 = vadd.f32 %v8124, %v8295
        %v8341 = vadd.f32 %v8129, %v8300
        %v8342 = vadd.f32 %v8134, %v8305
        %v8343 = vadd.f32 %v8139, %v8310
        %v8344 = vadd.f32 %v8312, %v8313
        %v8345 = vadd.f32 %v8344, %v8314
        %v8346 = vadd.f32 %v8345, %v8315
        %v8347 = vadd.f32 %v8346, %v8316
        %v8348 = vadd.f32 %v8347, %v8317
        %v8349 = vadd.f32 %v8348, %v8318
        %v8350 = vadd.f32 %v8349, %v8319
        %v8351 = vadd.f32 %v8350, %v8320
        %v8352 = vadd.f32 %v8351, %v8321
        %v8353 = vadd.f32 %v8352, %v8322
        %v8354 = vadd.f32 %v8353, %v8323
        %v8355 = vadd.f32 %v8354, %v8324
        %v8356 = vadd.f32 %v8355, %v8325
        %v8357 = vadd.f32 %v8356, %v8326
        %v8358 = vadd.f32 %v8357, %v8327
        %v8359 = vadd.f32 %v8358, %v8328
        %v8360 = vadd.f32 %v8359, %v8329
        %v8361 = vadd.f32 %v8360, %v8330
        %v8362 = vadd.f32 %v8361, %v8331
        %v8363 = vadd.f32 %v8362, %v8332
        %v8364 = vadd.f32 %v8363, %v8333
        %v8365 = vadd.f32 %v8364, %v8334
        %v8366 = vadd.f32 %v8365, %v8335
        %v8367 = vadd.f32 %v8366, %v8336
        %v8368 = vadd.f32 %v8367, %v8337
        %v8369 = vadd.f32 %v8368, %v8338
        %v8370 = vadd.f32 %v8369, %v8339
        %v8371 = vadd.f32 %v8370, %v8340
        %v8372 = vadd.f32 %v8371, %v8341
        %v8373 = vadd.f32 %v8372, %v8342
        %v8374 = vadd.f32 %v8373, %v8343
        %v8375 = vrot.slane %v8374, 4
        %v8376 = vadd.f32 %v8374, %v8375
        %v8377 = vrot.slane %v8376, 2
        %v8378 = vadd.f32 %v8376, %v8377
        %v8379 = vrot.slane %v8378, 1
        %v8380 = vadd.f32 %v8378, %v8379
        %v8381 = vmul.f32 %v8380, %v979
        %v8382 = vmul.f32 %v8312, %v8312
        %v8383 = vmul.f32 %v8313, %v8313
        %v8384 = vmul.f32 %v8314, %v8314
        %v8385 = vmul.f32 %v8315, %v8315
        %v8386 = vmul.f32 %v8316, %v8316
        %v8387 = vmul.f32 %v8317, %v8317
        %v8388 = vmul.f32 %v8318, %v8318
        %v8389 = vmul.f32 %v8319, %v8319
        %v8390 = vmul.f32 %v8320, %v8320
        %v8391 = vmul.f32 %v8321, %v8321
        %v8392 = vmul.f32 %v8322, %v8322
        %v8393 = vmul.f32 %v8323, %v8323
        %v8394 = vmul.f32 %v8324, %v8324
        %v8395 = vmul.f32 %v8325, %v8325
        %v8396 = vmul.f32 %v8326, %v8326
        %v8397 = vmul.f32 %v8327, %v8327
        %v8398 = vmul.f32 %v8328, %v8328
        %v8399 = vmul.f32 %v8329, %v8329
        %v8400 = vmul.f32 %v8330, %v8330
        %v8401 = vmul.f32 %v8331, %v8331
        %v8402 = vmul.f32 %v8332, %v8332
        %v8403 = vmul.f32 %v8333, %v8333
        %v8404 = vmul.f32 %v8334, %v8334
        %v8405 = vmul.f32 %v8335, %v8335
        %v8406 = vmul.f32 %v8336, %v8336
        %v8407 = vmul.f32 %v8337, %v8337
        %v8408 = vmul.f32 %v8338, %v8338
        %v8409 = vmul.f32 %v8339, %v8339
        %v8410 = vmul.f32 %v8340, %v8340
        %v8411 = vmul.f32 %v8341, %v8341
        %v8412 = vmul.f32 %v8342, %v8342
        %v8413 = vmul.f32 %v8343, %v8343
        %v8414 = vadd.f32 %v8382, %v8383
        %v8415 = vadd.f32 %v8414, %v8384
        %v8416 = vadd.f32 %v8415, %v8385
        %v8417 = vadd.f32 %v8416, %v8386
        %v8418 = vadd.f32 %v8417, %v8387
        %v8419 = vadd.f32 %v8418, %v8388
        %v8420 = vadd.f32 %v8419, %v8389
        %v8421 = vadd.f32 %v8420, %v8390
        %v8422 = vadd.f32 %v8421, %v8391
        %v8423 = vadd.f32 %v8422, %v8392
        %v8424 = vadd.f32 %v8423, %v8393
        %v8425 = vadd.f32 %v8424, %v8394
        %v8426 = vadd.f32 %v8425, %v8395
        %v8427 = vadd.f32 %v8426, %v8396
        %v8428 = vadd.f32 %v8427, %v8397
        %v8429 = vadd.f32 %v8428, %v8398
        %v8430 = vadd.f32 %v8429, %v8399
        %v8431 = vadd.f32 %v8430, %v8400
        %v8432 = vadd.f32 %v8431, %v8401
        %v8433 = vadd.f32 %v8432, %v8402
        %v8434 = vadd.f32 %v8433, %v8403
        %v8435 = vadd.f32 %v8434, %v8404
        %v8436 = vadd.f32 %v8435, %v8405
        %v8437 = vadd.f32 %v8436, %v8406
        %v8438 = vadd.f32 %v8437, %v8407
        %v8439 = vadd.f32 %v8438, %v8408
        %v8440 = vadd.f32 %v8439, %v8409
        %v8441 = vadd.f32 %v8440, %v8410
        %v8442 = vadd.f32 %v8441, %v8411
        %v8443 = vadd.f32 %v8442, %v8412
        %v8444 = vadd.f32 %v8443, %v8413
        %v8445 = vrot.slane %v8444, 4
        %v8446 = vadd.f32 %v8444, %v8445
        %v8447 = vrot.slane %v8446, 2
        %v8448 = vadd.f32 %v8446, %v8447
        %v8449 = vrot.slane %v8448, 1
        %v8450 = vadd.f32 %v8448, %v8449
        %v8451 = vmul.f32 %v8450, %v979
        %v8452 = vmul.f32 %v8381, %v8381
        %v8453 = vsub.f32 %v8451, %v8452
        %v8454 = vsub.f32 %v8312, %v8381
        %v8455 = vsub.f32 %v8313, %v8381
        %v8456 = vsub.f32 %v8314, %v8381
        %v8457 = vsub.f32 %v8315, %v8381
        %v8458 = vsub.f32 %v8316, %v8381
        %v8459 = vsub.f32 %v8317, %v8381
        %v8460 = vsub.f32 %v8318, %v8381
        %v8461 = vsub.f32 %v8319, %v8381
        %v8462 = vsub.f32 %v8320, %v8381
        %v8463 = vsub.f32 %v8321, %v8381
        %v8464 = vsub.f32 %v8322, %v8381
        %v8465 = vsub.f32 %v8323, %v8381
        %v8466 = vsub.f32 %v8324, %v8381
        %v8467 = vsub.f32 %v8325, %v8381
        %v8468 = vsub.f32 %v8326, %v8381
        %v8469 = vsub.f32 %v8327, %v8381
        %v8470 = vsub.f32 %v8328, %v8381
        %v8471 = vsub.f32 %v8329, %v8381
        %v8472 = vsub.f32 %v8330, %v8381
        %v8473 = vsub.f32 %v8331, %v8381
        %v8474 = vsub.f32 %v8332, %v8381
        %v8475 = vsub.f32 %v8333, %v8381
        %v8476 = vsub.f32 %v8334, %v8381
        %v8477 = vsub.f32 %v8335, %v8381
        %v8478 = vsub.f32 %v8336, %v8381
        %v8479 = vsub.f32 %v8337, %v8381
        %v8480 = vsub.f32 %v8338, %v8381
        %v8481 = vsub.f32 %v8339, %v8381
        %v8482 = vsub.f32 %v8340, %v8381
        %v8483 = vsub.f32 %v8341, %v8381
        %v8484 = vsub.f32 %v8342, %v8381
        %v8485 = vsub.f32 %v8343, %v8381
        %v8486 = vadd.f32 %v8453, 1e-05
        %v8487 = vrsqrt.pop %v8486
        %v8488 = vmul.f32 %v8454, %v8487
        %v8489 = vmul.f32 %v8455, %v8487
        %v8490 = vmul.f32 %v8456, %v8487
        %v8491 = vmul.f32 %v8457, %v8487
        %v8492 = vmul.f32 %v8458, %v8487
        %v8493 = vmul.f32 %v8459, %v8487
        %v8494 = vmul.f32 %v8460, %v8487
        %v8495 = vmul.f32 %v8461, %v8487
        %v8496 = vmul.f32 %v8462, %v8487
        %v8497 = vmul.f32 %v8463, %v8487
        %v8498 = vmul.f32 %v8464, %v8487
        %v8499 = vmul.f32 %v8465, %v8487
        %v8500 = vmul.f32 %v8466, %v8487
        %v8501 = vmul.f32 %v8467, %v8487
        %v8502 = vmul.f32 %v8468, %v8487
        %v8503 = vmul.f32 %v8469, %v8487
        %v8504 = vmul.f32 %v8470, %v8487
        %v8505 = vmul.f32 %v8471, %v8487
        %v8506 = vmul.f32 %v8472, %v8487
        %v8507 = vmul.f32 %v8473, %v8487
        %v8508 = vmul.f32 %v8474, %v8487
        %v8509 = vmul.f32 %v8475, %v8487
        %v8510 = vmul.f32 %v8476, %v8487
        %v8511 = vmul.f32 %v8477, %v8487
        %v8512 = vmul.f32 %v8478, %v8487
        %v8513 = vmul.f32 %v8479, %v8487
        %v8514 = vmul.f32 %v8480, %v8487
        %v8515 = vmul.f32 %v8481, %v8487
        %v8516 = vmul.f32 %v8482, %v8487
        %v8517 = vmul.f32 %v8483, %v8487
        %v8518 = vmul.f32 %v8484, %v8487
        %v8519 = vmul.f32 %v8485, %v8487
        %8520 = vset.pattern.permute.xlu0 1
        %8521 = vperm.xlu0 %8520, %v7748
        %v8522 = vpop.permute.xlu0 %8521
        %8524 = vset.pattern.permute.xlu0 1
        %8525 = vperm.xlu0 %8524, %v7749
        %v8526 = vpop.permute.xlu0 %8525
        %8528 = vset.pattern.permute.xlu0 1
        %8529 = vperm.xlu0 %8528, %v7750
        %v8530 = vpop.permute.xlu0 %8529
        %8532 = vset.pattern.permute.xlu0 1
        %8533 = vperm.xlu0 %8532, %v7751
        %v8534 = vpop.permute.xlu0 %8533
        %8536 = vset.pattern.permute.xlu0 1
        %8537 = vperm.xlu0 %8536, %v7752
        %v8538 = vpop.permute.xlu0 %8537
        %8540 = vset.pattern.permute.xlu0 1
        %8541 = vperm.xlu0 %8540, %v7753
        %v8542 = vpop.permute.xlu0 %8541
        %8544 = vset.pattern.permute.xlu0 1
        %8545 = vperm.xlu0 %8544, %v7754
        %v8546 = vpop.permute.xlu0 %8545
        %8548 = vset.pattern.permute.xlu0 1
        %8549 = vperm.xlu0 %8548, %v7755
        %v8550 = vpop.permute.xlu0 %8549
        %8552 = vset.pattern.permute.xlu0 1
        %8553 = vperm.xlu0 %8552, %v7756
        %v8554 = vpop.permute.xlu0 %8553
        %8556 = vset.pattern.permute.xlu0 1
        %8557 = vperm.xlu0 %8556, %v7757
        %v8558 = vpop.permute.xlu0 %8557
        %8560 = vset.pattern.permute.xlu0 1
        %8561 = vperm.xlu0 %8560, %v7758
        %v8562 = vpop.permute.xlu0 %8561
        %8564 = vset.pattern.permute.xlu0 1
        %8565 = vperm.xlu0 %8564, %v7759
        %v8566 = vpop.permute.xlu0 %8565
        %8568 = vset.pattern.permute.xlu0 1
        %8569 = vperm.xlu0 %8568, %v7760
        %v8570 = vpop.permute.xlu0 %8569
        %8572 = vset.pattern.permute.xlu0 1
        %8573 = vperm.xlu0 %8572, %v7761
        %v8574 = vpop.permute.xlu0 %8573
        %8576 = vset.pattern.permute.xlu0 1
        %8577 = vperm.xlu0 %8576, %v7762
        %v8578 = vpop.permute.xlu0 %8577
        %8580 = vset.pattern.permute.xlu0 1
        %8581 = vperm.xlu0 %8580, %v7763
        %v8582 = vpop.permute.xlu0 %8581
        %8584 = vset.pattern.permute.xlu0 1
        %8585 = vperm.xlu0 %8584, %v7764
        %v8586 = vpop.permute.xlu0 %8585
        %8588 = vset.pattern.permute.xlu0 1
        %8589 = vperm.xlu0 %8588, %v7765
        %v8590 = vpop.permute.xlu0 %8589
        %8592 = vset.pattern.permute.xlu0 1
        %8593 = vperm.xlu0 %8592, %v7766
        %v8594 = vpop.permute.xlu0 %8593
        %8596 = vset.pattern.permute.xlu0 1
        %8597 = vperm.xlu0 %8596, %v7767
        %v8598 = vpop.permute.xlu0 %8597
        %8600 = vset.pattern.permute.xlu0 1
        %8601 = vperm.xlu0 %8600, %v7768
        %v8602 = vpop.permute.xlu0 %8601
        %8604 = vset.pattern.permute.xlu0 1
        %8605 = vperm.xlu0 %8604, %v7769
        %v8606 = vpop.permute.xlu0 %8605
        %8608 = vset.pattern.permute.xlu0 1
        %8609 = vperm.xlu0 %8608, %v7770
        %v8610 = vpop.permute.xlu0 %8609
        %8612 = vset.pattern.permute.xlu0 1
        %8613 = vperm.xlu0 %8612, %v7771
        %v8614 = vpop.permute.xlu0 %8613
        %8616 = vset.pattern.permute.xlu0 1
        %8617 = vperm.xlu0 %8616, %v7772
        %v8618 = vpop.permute.xlu0 %8617
        %8620 = vset.pattern.permute.xlu0 1
        %8621 = vperm.xlu0 %8620, %v7773
        %v8622 = vpop.permute.xlu0 %8621
        %8624 = vset.pattern.permute.xlu0 1
        %8625 = vperm.xlu0 %8624, %v7774
        %v8626 = vpop.permute.xlu0 %8625
        %8628 = vset.pattern.permute.xlu0 1
        %8629 = vperm.xlu0 %8628, %v7775
        %v8630 = vpop.permute.xlu0 %8629
        %8632 = vset.pattern.permute.xlu0 1
        %8633 = vperm.xlu0 %8632, %v7776
        %v8634 = vpop.permute.xlu0 %8633
        %8636 = vset.pattern.permute.xlu0 1
        %8637 = vperm.xlu0 %8636, %v7777
        %v8638 = vpop.permute.xlu0 %8637
        %8640 = vset.pattern.permute.xlu0 1
        %8641 = vperm.xlu0 %8640, %v7778
        %v8642 = vpop.permute.xlu0 %8641
        %8644 = vset.pattern.permute.xlu0 1
        %8645 = vperm.xlu0 %8644, %v7779
        %v8646 = vpop.permute.xlu0 %8645
        %v8648 = vmul.f32 %v8488, %v8522
        %v8649 = vmul.f32 %v8489, %v8526
        %v8650 = vmul.f32 %v8490, %v8530
        %v8651 = vmul.f32 %v8491, %v8534
        %v8652 = vmul.f32 %v8492, %v8538
        %v8653 = vmul.f32 %v8493, %v8542
        %v8654 = vmul.f32 %v8494, %v8546
        %v8655 = vmul.f32 %v8495, %v8550
        %v8656 = vmul.f32 %v8496, %v8554
        %v8657 = vmul.f32 %v8497, %v8558
        %v8658 = vmul.f32 %v8498, %v8562
        %v8659 = vmul.f32 %v8499, %v8566
        %v8660 = vmul.f32 %v8500, %v8570
        %v8661 = vmul.f32 %v8501, %v8574
        %v8662 = vmul.f32 %v8502, %v8578
        %v8663 = vmul.f32 %v8503, %v8582
        %v8664 = vmul.f32 %v8504, %v8586
        %v8665 = vmul.f32 %v8505, %v8590
        %v8666 = vmul.f32 %v8506, %v8594
        %v8667 = vmul.f32 %v8507, %v8598
        %v8668 = vmul.f32 %v8508, %v8602
        %v8669 = vmul.f32 %v8509, %v8606
        %v8670 = vmul.f32 %v8510, %v8610
        %v8671 = vmul.f32 %v8511, %v8614
        %v8672 = vmul.f32 %v8512, %v8618
        %v8673 = vmul.f32 %v8513, %v8622
        %v8674 = vmul.f32 %v8514, %v8626
        %v8675 = vmul.f32 %v8515, %v8630
        %v8676 = vmul.f32 %v8516, %v8634
        %v8677 = vmul.f32 %v8517, %v8638
        %v8678 = vmul.f32 %v8518, %v8642
        %v8679 = vmul.f32 %v8519, %v8646
        %8680 = vset.pattern.permute.xlu0 2
        %8681 = vperm.xlu0 %8680, %v7748
        %v8682 = vpop.permute.xlu0 %8681
        %8684 = vset.pattern.permute.xlu0 2
        %8685 = vperm.xlu0 %8684, %v7749
        %v8686 = vpop.permute.xlu0 %8685
        %8688 = vset.pattern.permute.xlu0 2
        %8689 = vperm.xlu0 %8688, %v7750
        %v8690 = vpop.permute.xlu0 %8689
        %8692 = vset.pattern.permute.xlu0 2
        %8693 = vperm.xlu0 %8692, %v7751
        %v8694 = vpop.permute.xlu0 %8693
        %8696 = vset.pattern.permute.xlu0 2
        %8697 = vperm.xlu0 %8696, %v7752
        %v8698 = vpop.permute.xlu0 %8697
        %8700 = vset.pattern.permute.xlu0 2
        %8701 = vperm.xlu0 %8700, %v7753
        %v8702 = vpop.permute.xlu0 %8701
        %8704 = vset.pattern.permute.xlu0 2
        %8705 = vperm.xlu0 %8704, %v7754
        %v8706 = vpop.permute.xlu0 %8705
        %8708 = vset.pattern.permute.xlu0 2
        %8709 = vperm.xlu0 %8708, %v7755
        %v8710 = vpop.permute.xlu0 %8709
        %8712 = vset.pattern.permute.xlu0 2
        %8713 = vperm.xlu0 %8712, %v7756
        %v8714 = vpop.permute.xlu0 %8713
        %8716 = vset.pattern.permute.xlu0 2
        %8717 = vperm.xlu0 %8716, %v7757
        %v8718 = vpop.permute.xlu0 %8717
        %8720 = vset.pattern.permute.xlu0 2
        %8721 = vperm.xlu0 %8720, %v7758
        %v8722 = vpop.permute.xlu0 %8721
        %8724 = vset.pattern.permute.xlu0 2
        %8725 = vperm.xlu0 %8724, %v7759
        %v8726 = vpop.permute.xlu0 %8725
        %8728 = vset.pattern.permute.xlu0 2
        %8729 = vperm.xlu0 %8728, %v7760
        %v8730 = vpop.permute.xlu0 %8729
        %8732 = vset.pattern.permute.xlu0 2
        %8733 = vperm.xlu0 %8732, %v7761
        %v8734 = vpop.permute.xlu0 %8733
        %8736 = vset.pattern.permute.xlu0 2
        %8737 = vperm.xlu0 %8736, %v7762
        %v8738 = vpop.permute.xlu0 %8737
        %8740 = vset.pattern.permute.xlu0 2
        %8741 = vperm.xlu0 %8740, %v7763
        %v8742 = vpop.permute.xlu0 %8741
        %8744 = vset.pattern.permute.xlu0 2
        %8745 = vperm.xlu0 %8744, %v7764
        %v8746 = vpop.permute.xlu0 %8745
        %8748 = vset.pattern.permute.xlu0 2
        %8749 = vperm.xlu0 %8748, %v7765
        %v8750 = vpop.permute.xlu0 %8749
        %8752 = vset.pattern.permute.xlu0 2
        %8753 = vperm.xlu0 %8752, %v7766
        %v8754 = vpop.permute.xlu0 %8753
        %8756 = vset.pattern.permute.xlu0 2
        %8757 = vperm.xlu0 %8756, %v7767
        %v8758 = vpop.permute.xlu0 %8757
        %8760 = vset.pattern.permute.xlu0 2
        %8761 = vperm.xlu0 %8760, %v7768
        %v8762 = vpop.permute.xlu0 %8761
        %8764 = vset.pattern.permute.xlu0 2
        %8765 = vperm.xlu0 %8764, %v7769
        %v8766 = vpop.permute.xlu0 %8765
        %8768 = vset.pattern.permute.xlu0 2
        %8769 = vperm.xlu0 %8768, %v7770
        %v8770 = vpop.permute.xlu0 %8769
        %8772 = vset.pattern.permute.xlu0 2
        %8773 = vperm.xlu0 %8772, %v7771
        %v8774 = vpop.permute.xlu0 %8773
        %8776 = vset.pattern.permute.xlu0 2
        %8777 = vperm.xlu0 %8776, %v7772
        %v8778 = vpop.permute.xlu0 %8777
        %8780 = vset.pattern.permute.xlu0 2
        %8781 = vperm.xlu0 %8780, %v7773
        %v8782 = vpop.permute.xlu0 %8781
        %8784 = vset.pattern.permute.xlu0 2
        %8785 = vperm.xlu0 %8784, %v7774
        %v8786 = vpop.permute.xlu0 %8785
        %8788 = vset.pattern.permute.xlu0 2
        %8789 = vperm.xlu0 %8788, %v7775
        %v8790 = vpop.permute.xlu0 %8789
        %8792 = vset.pattern.permute.xlu0 2
        %8793 = vperm.xlu0 %8792, %v7776
        %v8794 = vpop.permute.xlu0 %8793
        %8796 = vset.pattern.permute.xlu0 2
        %8797 = vperm.xlu0 %8796, %v7777
        %v8798 = vpop.permute.xlu0 %8797
        %8800 = vset.pattern.permute.xlu0 2
        %8801 = vperm.xlu0 %8800, %v7778
        %v8802 = vpop.permute.xlu0 %8801
        %8804 = vset.pattern.permute.xlu0 2
        %8805 = vperm.xlu0 %8804, %v7779
        %v8806 = vpop.permute.xlu0 %8805
        %v8808 = vadd.f32 %v8648, %v8682
        %v8809 = vadd.f32 %v8649, %v8686
        %v8810 = vadd.f32 %v8650, %v8690
        %v8811 = vadd.f32 %v8651, %v8694
        %v8812 = vadd.f32 %v8652, %v8698
        %v8813 = vadd.f32 %v8653, %v8702
        %v8814 = vadd.f32 %v8654, %v8706
        %v8815 = vadd.f32 %v8655, %v8710
        %v8816 = vadd.f32 %v8656, %v8714
        %v8817 = vadd.f32 %v8657, %v8718
        %v8818 = vadd.f32 %v8658, %v8722
        %v8819 = vadd.f32 %v8659, %v8726
        %v8820 = vadd.f32 %v8660, %v8730
        %v8821 = vadd.f32 %v8661, %v8734
        %v8822 = vadd.f32 %v8662, %v8738
        %v8823 = vadd.f32 %v8663, %v8742
        %v8824 = vadd.f32 %v8664, %v8746
        %v8825 = vadd.f32 %v8665, %v8750
        %v8826 = vadd.f32 %v8666, %v8754
        %v8827 = vadd.f32 %v8667, %v8758
        %v8828 = vadd.f32 %v8668, %v8762
        %v8829 = vadd.f32 %v8669, %v8766
        %v8830 = vadd.f32 %v8670, %v8770
        %v8831 = vadd.f32 %v8671, %v8774
        %v8832 = vadd.f32 %v8672, %v8778
        %v8833 = vadd.f32 %v8673, %v8782
        %v8834 = vadd.f32 %v8674, %v8786
        %v8835 = vadd.f32 %v8675, %v8790
        %v8836 = vadd.f32 %v8676, %v8794
        %v8837 = vadd.f32 %v8677, %v8798
        %v8838 = vadd.f32 %v8678, %v8802
        %v8839 = vadd.f32 %v8679, %v8806
        %vm8840 = vcmp.gt.f32.partialorder %v8808, 0.0
        %vm8841 = vcmp.gt.f32.partialorder %v8809, 0.0
        %vm8842 = vcmp.gt.f32.partialorder %v8810, 0.0
        %vm8843 = vcmp.gt.f32.partialorder %v8811, 0.0
        %vm8844 = vcmp.gt.f32.partialorder %v8812, 0.0
        %vm8845 = vcmp.gt.f32.partialorder %v8813, 0.0
        %vm8846 = vcmp.gt.f32.partialorder %v8814, 0.0
        %vm8847 = vcmp.gt.f32.partialorder %v8815, 0.0
        %vm8848 = vcmp.gt.f32.partialorder %v8816, 0.0
        %vm8849 = vcmp.gt.f32.partialorder %v8817, 0.0
        %vm8850 = vcmp.gt.f32.partialorder %v8818, 0.0
        %vm8851 = vcmp.gt.f32.partialorder %v8819, 0.0
        %vm8852 = vcmp.gt.f32.partialorder %v8820, 0.0
        %vm8853 = vcmp.gt.f32.partialorder %v8821, 0.0
        %vm8854 = vcmp.gt.f32.partialorder %v8822, 0.0
        %vm8855 = vcmp.gt.f32.partialorder %v8823, 0.0
        %vm8856 = vcmp.gt.f32.partialorder %v8824, 0.0
        %vm8857 = vcmp.gt.f32.partialorder %v8825, 0.0
        %vm8858 = vcmp.gt.f32.partialorder %v8826, 0.0
        %vm8859 = vcmp.gt.f32.partialorder %v8827, 0.0
        %vm8860 = vcmp.gt.f32.partialorder %v8828, 0.0
        %vm8861 = vcmp.gt.f32.partialorder %v8829, 0.0
        %vm8862 = vcmp.gt.f32.partialorder %v8830, 0.0
        %vm8863 = vcmp.gt.f32.partialorder %v8831, 0.0
        %vm8864 = vcmp.gt.f32.partialorder %v8832, 0.0
        %vm8865 = vcmp.gt.f32.partialorder %v8833, 0.0
        %vm8866 = vcmp.gt.f32.partialorder %v8834, 0.0
        %vm8867 = vcmp.gt.f32.partialorder %v8835, 0.0
        %vm8868 = vcmp.gt.f32.partialorder %v8836, 0.0
        %vm8869 = vcmp.gt.f32.partialorder %v8837, 0.0
        %vm8870 = vcmp.gt.f32.partialorder %v8838, 0.0
        %vm8871 = vcmp.gt.f32.partialorder %v8839, 0.0
        %v8872 = vmul.f32 %v8808, 0.2
        %v8873 = vmul.f32 %v8809, 0.2
        %v8874 = vmul.f32 %v8810, 0.2
        %v8875 = vmul.f32 %v8811, 0.2
        %v8876 = vmul.f32 %v8812, 0.2
        %v8877 = vmul.f32 %v8813, 0.2
        %v8878 = vmul.f32 %v8814, 0.2
        %v8879 = vmul.f32 %v8815, 0.2
        %v8880 = vmul.f32 %v8816, 0.2
        %v8881 = vmul.f32 %v8817, 0.2
        %v8882 = vmul.f32 %v8818, 0.2
        %v8883 = vmul.f32 %v8819, 0.2
        %v8884 = vmul.f32 %v8820, 0.2
        %v8885 = vmul.f32 %v8821, 0.2
        %v8886 = vmul.f32 %v8822, 0.2
        %v8887 = vmul.f32 %v8823, 0.2
        %v8888 = vmul.f32 %v8824, 0.2
        %v8889 = vmul.f32 %v8825, 0.2
        %v8890 = vmul.f32 %v8826, 0.2
        %v8891 = vmul.f32 %v8827, 0.2
        %v8892 = vmul.f32 %v8828, 0.2
        %v8893 = vmul.f32 %v8829, 0.2
        %v8894 = vmul.f32 %v8830, 0.2
        %v8895 = vmul.f32 %v8831, 0.2
        %v8896 = vmul.f32 %v8832, 0.2
        %v8897 = vmul.f32 %v8833, 0.2
        %v8898 = vmul.f32 %v8834, 0.2
        %v8899 = vmul.f32 %v8835, 0.2
        %v8900 = vmul.f32 %v8836, 0.2
        %v8901 = vmul.f32 %v8837, 0.2
        %v8902 = vmul.f32 %v8838, 0.2
        %v8903 = vmul.f32 %v8839, 0.2
        %v8904 = vsel %vm8840, %v8808, %v8872
        %v8905 = vsel %vm8841, %v8809, %v8873
        %v8906 = vsel %vm8842, %v8810, %v8874
        %v8907 = vsel %vm8843, %v8811, %v8875
        %v8908 = vsel %vm8844, %v8812, %v8876
        %v8909 = vsel %vm8845, %v8813, %v8877
        %v8910 = vsel %vm8846, %v8814, %v8878
        %v8911 = vsel %vm8847, %v8815, %v8879
        %v8912 = vsel %vm8848, %v8816, %v8880
        %v8913 = vsel %vm8849, %v8817, %v8881
        %v8914 = vsel %vm8850, %v8818, %v8882
        %v8915 = vsel %vm8851, %v8819, %v8883
        %v8916 = vsel %vm8852, %v8820, %v8884
        %v8917 = vsel %vm8853, %v8821, %v8885
        %v8918 = vsel %vm8854, %v8822, %v8886
        %v8919 = vsel %vm8855, %v8823, %v8887
        %v8920 = vsel %vm8856, %v8824, %v8888
        %v8921 = vsel %vm8857, %v8825, %v8889
        %v8922 = vsel %vm8858, %v8826, %v8890
        %v8923 = vsel %vm8859, %v8827, %v8891
        %v8924 = vsel %vm8860, %v8828, %v8892
        %v8925 = vsel %vm8861, %v8829, %v8893
        %v8926 = vsel %vm8862, %v8830, %v8894
        %v8927 = vsel %vm8863, %v8831, %v8895
        %v8928 = vsel %vm8864, %v8832, %v8896
        %v8929 = vsel %vm8865, %v8833, %v8897
        %v8930 = vsel %vm8866, %v8834, %v8898
        %v8931 = vsel %vm8867, %v8835, %v8899
        %v8932 = vsel %vm8868, %v8836, %v8900
        %v8933 = vsel %vm8869, %v8837, %v8901
        %v8934 = vsel %vm8870, %v8838, %v8902
        %v8935 = vsel %vm8871, %v8839, %v8903
        %s8936 = scalar_lea.vmem %s2, 768
        %v8937 = vld [vmem:[%s8936] sm:$0xff]
        %v8938 = vld [vmem:[%s8936 + $0x8] sm:$0xff]
        %v8939 = vld [vmem:[%s8936 + $0x10] sm:$0xff]
        %v8940 = vld [vmem:[%s8936 + $0x18] sm:$0xff]
        %v8941 = vld [vmem:[%s8936 + $0x20] sm:$0xff]
        %v8942 = vld [vmem:[%s8936 + $0x28] sm:$0xff]
        %v8943 = vld [vmem:[%s8936 + $0x30] sm:$0xff]
        %v8944 = vld [vmem:[%s8936 + $0x38] sm:$0xff]
        %v8945 = vld [vmem:[%s8936 + $0x40] sm:$0xff]
        %v8946 = vld [vmem:[%s8936 + $0x48] sm:$0xff]
        %v8947 = vld [vmem:[%s8936 + $0x50] sm:$0xff]
        %v8948 = vld [vmem:[%s8936 + $0x58] sm:$0xff]
        %v8949 = vld [vmem:[%s8936 + $0x60] sm:$0xff]
        %v8950 = vld [vmem:[%s8936 + $0x68] sm:$0xff]
        %v8951 = vld [vmem:[%s8936 + $0x70] sm:$0xff]
        %v8952 = vld [vmem:[%s8936 + $0x78] sm:$0xff]
        %v8953 = vld [vmem:[%s8936 + $0x80] sm:$0xff]
        %v8954 = vld [vmem:[%s8936 + $0x88] sm:$0xff]
        %v8955 = vld [vmem:[%s8936 + $0x90] sm:$0xff]
        %v8956 = vld [vmem:[%s8936 + $0x98] sm:$0xff]
        %v8957 = vld [vmem:[%s8936 + $0xa0] sm:$0xff]
        %v8958 = vld [vmem:[%s8936 + $0xa8] sm:$0xff]
        %v8959 = vld [vmem:[%s8936 + $0xb0] sm:$0xff]
        %v8960 = vld [vmem:[%s8936 + $0xb8] sm:$0xff]
        %v8961 = vld [vmem:[%s8936 + $0xc0] sm:$0xff]
        %v8962 = vld [vmem:[%s8936 + $0xc8] sm:$0xff]
        %v8963 = vld [vmem:[%s8936 + $0xd0] sm:$0xff]
        %v8964 = vld [vmem:[%s8936 + $0xd8] sm:$0xff]
        %v8965 = vld [vmem:[%s8936 + $0xe0] sm:$0xff]
        %v8966 = vld [vmem:[%s8936 + $0xe8] sm:$0xff]
        %v8967 = vld [vmem:[%s8936 + $0xf0] sm:$0xff]
        %v8968 = vld [vmem:[%s8936 + $0xf8] sm:$0xff]
        %v8969 = vpack.c.bf16 %v8905, %v8904
        %v8970 = vpack.c.bf16 %v8907, %v8906
        %v8971 = vpack.c.bf16 %v8909, %v8908
        %v8972 = vpack.c.bf16 %v8911, %v8910
        %v8973 = vpack.c.bf16 %v8913, %v8912
        %v8974 = vpack.c.bf16 %v8915, %v8914
        %v8975 = vpack.c.bf16 %v8917, %v8916
        %v8976 = vpack.c.bf16 %v8919, %v8918
        %v8977 = vpack.c.bf16 %v8921, %v8920
        %v8978 = vpack.c.bf16 %v8923, %v8922
        %v8979 = vpack.c.bf16 %v8925, %v8924
        %v8980 = vpack.c.bf16 %v8927, %v8926
        %v8981 = vpack.c.bf16 %v8929, %v8928
        %v8982 = vpack.c.bf16 %v8931, %v8930
        %v8983 = vpack.c.bf16 %v8933, %v8932
        %v8984 = vpack.c.bf16 %v8935, %v8934
        %8985 = vset.pattern.permute.xlu0 3
        %8986 = vperm.xlu0 %8985, %v7748
        %v8987 = vpop.permute.xlu0 %8986
        %8989 = vset.pattern.permute.xlu0 3
        %8990 = vperm.xlu0 %8989, %v7749
        %v8991 = vpop.permute.xlu0 %8990
        %8993 = vset.pattern.permute.xlu0 3
        %8994 = vperm.xlu0 %8993, %v7750
        %v8995 = vpop.permute.xlu0 %8994
        %8997 = vset.pattern.permute.xlu0 3
        %8998 = vperm.xlu0 %8997, %v7751
        %v8999 = vpop.permute.xlu0 %8998
        %9001 = vset.pattern.permute.xlu0 3
        %9002 = vperm.xlu0 %9001, %v7752
        %v9003 = vpop.permute.xlu0 %9002
        %9005 = vset.pattern.permute.xlu0 3
        %9006 = vperm.xlu0 %9005, %v7753
        %v9007 = vpop.permute.xlu0 %9006
        %9009 = vset.pattern.permute.xlu0 3
        %9010 = vperm.xlu0 %9009, %v7754
        %v9011 = vpop.permute.xlu0 %9010
        %9013 = vset.pattern.permute.xlu0 3
        %9014 = vperm.xlu0 %9013, %v7755
        %v9015 = vpop.permute.xlu0 %9014
        %9017 = vset.pattern.permute.xlu0 3
        %9018 = vperm.xlu0 %9017, %v7756
        %v9019 = vpop.permute.xlu0 %9018
        %9021 = vset.pattern.permute.xlu0 3
        %9022 = vperm.xlu0 %9021, %v7757
        %v9023 = vpop.permute.xlu0 %9022
        %9025 = vset.pattern.permute.xlu0 3
        %9026 = vperm.xlu0 %9025, %v7758
        %v9027 = vpop.permute.xlu0 %9026
        %9029 = vset.pattern.permute.xlu0 3
        %9030 = vperm.xlu0 %9029, %v7759
        %v9031 = vpop.permute.xlu0 %9030
        %9033 = vset.pattern.permute.xlu0 3
        %9034 = vperm.xlu0 %9033, %v7760
        %v9035 = vpop.permute.xlu0 %9034
        %9037 = vset.pattern.permute.xlu0 3
        %9038 = vperm.xlu0 %9037, %v7761
        %v9039 = vpop.permute.xlu0 %9038
        %9041 = vset.pattern.permute.xlu0 3
        %9042 = vperm.xlu0 %9041, %v7762
        %v9043 = vpop.permute.xlu0 %9042
        %9045 = vset.pattern.permute.xlu0 3
        %9046 = vperm.xlu0 %9045, %v7763
        %v9047 = vpop.permute.xlu0 %9046
        %9049 = vset.pattern.permute.xlu0 3
        %9050 = vperm.xlu0 %9049, %v7764
        %v9051 = vpop.permute.xlu0 %9050
        %9053 = vset.pattern.permute.xlu0 3
        %9054 = vperm.xlu0 %9053, %v7765
        %v9055 = vpop.permute.xlu0 %9054
        %9057 = vset.pattern.permute.xlu0 3
        %9058 = vperm.xlu0 %9057, %v7766
        %v9059 = vpop.permute.xlu0 %9058
        %9061 = vset.pattern.permute.xlu0 3
        %9062 = vperm.xlu0 %9061, %v7767
        %v9063 = vpop.permute.xlu0 %9062
        %9065 = vset.pattern.permute.xlu0 3
        %9066 = vperm.xlu0 %9065, %v7768
        %v9067 = vpop.permute.xlu0 %9066
        %9069 = vset.pattern.permute.xlu0 3
        %9070 = vperm.xlu0 %9069, %v7769
        %v9071 = vpop.permute.xlu0 %9070
        %9073 = vset.pattern.permute.xlu0 3
        %9074 = vperm.xlu0 %9073, %v7770
        %v9075 = vpop.permute.xlu0 %9074
        %9077 = vset.pattern.permute.xlu0 3
        %9078 = vperm.xlu0 %9077, %v7771
        %v9079 = vpop.permute.xlu0 %9078
        %9081 = vset.pattern.permute.xlu0 3
        %9082 = vperm.xlu0 %9081, %v7772
        %v9083 = vpop.permute.xlu0 %9082
        %9085 = vset.pattern.permute.xlu0 3
        %9086 = vperm.xlu0 %9085, %v7773
        %v9087 = vpop.permute.xlu0 %9086
        %9089 = vset.pattern.permute.xlu0 3
        %9090 = vperm.xlu0 %9089, %v7774
        %v9091 = vpop.permute.xlu0 %9090
        %9093 = vset.pattern.permute.xlu0 3
        %9094 = vperm.xlu0 %9093, %v7775
        %v9095 = vpop.permute.xlu0 %9094
        %9097 = vset.pattern.permute.xlu0 3
        %9098 = vperm.xlu0 %9097, %v7776
        %v9099 = vpop.permute.xlu0 %9098
        %9101 = vset.pattern.permute.xlu0 3
        %9102 = vperm.xlu0 %9101, %v7777
        %v9103 = vpop.permute.xlu0 %9102
        %9105 = vset.pattern.permute.xlu0 3
        %9106 = vperm.xlu0 %9105, %v7778
        %v9107 = vpop.permute.xlu0 %9106
        %9109 = vset.pattern.permute.xlu0 3
        %9110 = vperm.xlu0 %9109, %v7779
        %v9111 = vpop.permute.xlu0 %9110
        %v9145 = vunpack.c.l.b16 %v8937
        %v9146 = vunpack.c.h.b16 %v8937
        %v9147 = vunpack.c.l.b16 %v8938
        %v9148 = vunpack.c.h.b16 %v8938
        %v9149 = vunpack.c.l.b16 %v8939
        %v9150 = vunpack.c.h.b16 %v8939
        %v9151 = vunpack.c.l.b16 %v8940
        %v9152 = vunpack.c.h.b16 %v8940
        %v9153 = vunpack.c.l.b16 %v8941
        %v9154 = vunpack.c.h.b16 %v8941
        %v9155 = vunpack.c.l.b16 %v8942
        %v9156 = vunpack.c.h.b16 %v8942
        %v9157 = vunpack.c.l.b16 %v8943
        %v9158 = vunpack.c.h.b16 %v8943
        %v9159 = vunpack.c.l.b16 %v8944
        %v9160 = vunpack.c.h.b16 %v8944
        %v9161 = vunpack.c.l.b16 %v8945
        %v9162 = vunpack.c.h.b16 %v8945
        %v9163 = vunpack.c.l.b16 %v8946
        %v9164 = vunpack.c.h.b16 %v8946
        %v9165 = vunpack.c.l.b16 %v8947
        %v9166 = vunpack.c.h.b16 %v8947
        %v9167 = vunpack.c.l.b16 %v8948
        %v9168 = vunpack.c.h.b16 %v8948
        %v9169 = vunpack.c.l.b16 %v8949
        %v9170 = vunpack.c.h.b16 %v8949
        %v9171 = vunpack.c.l.b16 %v8950
        %v9172 = vunpack.c.h.b16 %v8950
        %v9173 = vunpack.c.l.b16 %v8951
        %v9174 = vunpack.c.h.b16 %v8951
        %v9175 = vunpack.c.l.b16 %v8952
        %v9176 = vunpack.c.h.b16 %v8952
        %v9177 = vunpack.c.l.b16 %v8953
        %v9178 = vunpack.c.h.b16 %v8953
        %v9179 = vunpack.c.l.b16 %v8954
        %v9180 = vunpack.c.h.b16 %v8954
        %v9181 = vunpack.c.l.b16 %v8955
        %v9182 = vunpack.c.h.b16 %v8955
        %v9183 = vunpack.c.l.b16 %v8956
        %v9184 = vunpack.c.h.b16 %v8956
        %v9185 = vunpack.c.l.b16 %v8957
        %v9186 = vunpack.c.h.b16 %v8957
        %v9187 = vunpack.c.l.b16 %v8958
        %v9188 = vunpack.c.h.b16 %v8958
        %v9189 = vunpack.c.l.b16 %v8959
        %v9190 = vunpack.c.h.b16 %v8959
        %v9191 = vunpack.c.l.b16 %v8960
        %v9192 = vunpack.c.h.b16 %v8960
        %v9193 = vunpack.c.l.b16 %v8961
        %v9194 = vunpack.c.h.b16 %v8961
        %v9195 = vunpack.c.l.b16 %v8962
        %v9196 = vunpack.c.h.b16 %v8962
        %v9197 = vunpack.c.l.b16 %v8963
        %v9198 = vunpack.c.h.b16 %v8963
        %v9199 = vunpack.c.l.b16 %v8964
        %v9200 = vunpack.c.h.b16 %v8964
        %v9201 = vunpack.c.l.b16 %v8965
        %v9202 = vunpack.c.h.b16 %v8965
        %v9203 = vunpack.c.l.b16 %v8966
        %v9204 = vunpack.c.h.b16 %v8966
        %v9205 = vunpack.c.l.b16 %v8967
        %v9206 = vunpack.c.h.b16 %v8967
        %v9207 = vunpack.c.l.b16 %v8968
        %v9208 = vunpack.c.h.b16 %v8968
        %v9209 = vpack.c.b16 %v9147, %v9145
        %v9210 = vpack.c.b16 %v9148, %v9146
        %v9211 = vpack.c.b16 %v9151, %v9149
        %v9212 = vpack.c.b16 %v9152, %v9150
        %v9213 = vpack.c.b16 %v9155, %v9153
        %v9214 = vpack.c.b16 %v9156, %v9154
        %v9215 = vpack.c.b16 %v9159, %v9157
        %v9216 = vpack.c.b16 %v9160, %v9158
        %v9217 = vpack.c.b16 %v9163, %v9161
        %v9218 = vpack.c.b16 %v9164, %v9162
        %v9219 = vpack.c.b16 %v9167, %v9165
        %v9220 = vpack.c.b16 %v9168, %v9166
        %v9221 = vpack.c.b16 %v9171, %v9169
        %v9222 = vpack.c.b16 %v9172, %v9170
        %v9223 = vpack.c.b16 %v9175, %v9173
        %v9224 = vpack.c.b16 %v9176, %v9174
        %v9225 = vpack.c.b16 %v9179, %v9177
        %v9226 = vpack.c.b16 %v9180, %v9178
        %v9227 = vpack.c.b16 %v9183, %v9181
        %v9228 = vpack.c.b16 %v9184, %v9182
        %v9229 = vpack.c.b16 %v9187, %v9185
        %v9230 = vpack.c.b16 %v9188, %v9186
        %v9231 = vpack.c.b16 %v9191, %v9189
        %v9232 = vpack.c.b16 %v9192, %v9190
        %v9233 = vpack.c.b16 %v9195, %v9193
        %v9234 = vpack.c.b16 %v9196, %v9194
        %v9235 = vpack.c.b16 %v9199, %v9197
        %v9236 = vpack.c.b16 %v9200, %v9198
        %v9237 = vpack.c.b16 %v9203, %v9201
        %v9238 = vpack.c.b16 %v9204, %v9202
        %v9239 = vpack.c.b16 %v9207, %v9205
        %v9240 = vpack.c.b16 %v9208, %v9206
        %9273 = vmatprep.subr.bf16.mxu0 0
        %9274 = vmatpush1.bf16.msra.mxu0 %v8969
        %9275 = vmatprep.subr.bf16.mxu0 0
        %9276 = vmatpush1.bf16.msra.mxu0 %v8970
        %9277 = vmatprep.subr.bf16.mxu0 0
        %9278 = vmatpush1.bf16.msra.mxu0 %v8971
        %9279 = vmatprep.subr.bf16.mxu0 0
        %9280 = vmatpush1.bf16.msra.mxu0 %v8972
        %9281 = vmatprep.subr.bf16.mxu0 0
        %9282 = vmatpush1.bf16.msra.mxu0 %v8973
        %9283 = vmatprep.subr.bf16.mxu0 0
        %9284 = vmatpush1.bf16.msra.mxu0 %v8974
        %9285 = vmatprep.subr.bf16.mxu0 0
        %9286 = vmatpush1.bf16.msra.mxu0 %v8975
        %9287 = vmatprep.subr.bf16.mxu0 0
        %9288 = vmatpush1.bf16.msra.mxu0 %v8976
        %9289 = vmatprep.subr.bf16.mxu0 0
        %9290 = vmatpush1.bf16.msra.mxu0 %v8977
        %9291 = vmatprep.subr.bf16.mxu0 0
        %9292 = vmatpush1.bf16.msra.mxu0 %v8978
        %9293 = vmatprep.subr.bf16.mxu0 0
        %9294 = vmatpush1.bf16.msra.mxu0 %v8979
        %9295 = vmatprep.subr.bf16.mxu0 0
        %9296 = vmatpush1.bf16.msra.mxu0 %v8980
        %9297 = vmatprep.subr.bf16.mxu0 0
        %9298 = vmatpush1.bf16.msra.mxu0 %v8981
        %9299 = vmatprep.subr.bf16.mxu0 0
        %9300 = vmatpush1.bf16.msra.mxu0 %v8982
        %9301 = vmatprep.subr.bf16.mxu0 0
        %9302 = vmatpush1.bf16.msra.mxu0 %v8983
        %9303 = vmatprep.subr.bf16.mxu0 0
        %9304 = vmatpush1.bf16.msra.mxu0 %v8984
        %9305 = vmatprep.mubr.bf16.mxu0 %v9210
        %9306 = vmatmul.mubr.bf16.gmra.mrb[0].mxu0 %v9209
        %v9307 = vpop.f32.mrb[0].mxu0
        %v9308 = vadd.f32 %v8987, %v9307
        %v9309 = vpop.f32.mrb[0].mxu0
        %v9310 = vpop.f32.mrb[0].mxu0
        %v9311 = vadd.f32 %v8991, %v9310
        %v9312 = vpop.f32.mrb[0].mxu0
        %9313 = vmatprep.mubr.bf16.mxu0 %v9212
        %9314 = vmatmul.mubr.bf16.gmra.mrb[0].mxu0 %v9211
        %v9315 = vpop.f32.mrb[0].mxu0
        %v9316 = vadd.f32 %v8995, %v9315
        %v9317 = vpop.f32.mrb[0].mxu0
        %v9318 = vpop.f32.mrb[0].mxu0
        %v9319 = vadd.f32 %v8999, %v9318
        %v9320 = vpop.f32.mrb[0].mxu0
        %9321 = vmatprep.mubr.bf16.mxu0 %v9214
        %9322 = vmatmul.mubr.bf16.gmra.mrb[0].mxu0 %v9213
        %v9323 = vpop.f32.mrb[0].mxu0
        %v9324 = vadd.f32 %v9003, %v9323
        %v9325 = vpop.f32.mrb[0].mxu0
        %v9326 = vpop.f32.mrb[0].mxu0
        %v9327 = vadd.f32 %v9007, %v9326
        %v9328 = vpop.f32.mrb[0].mxu0
        %9329 = vmatprep.mubr.bf16.mxu0 %v9216
        %9330 = vmatmul.mubr.bf16.gmra.mrb[0].mxu0 %v9215
        %v9331 = vpop.f32.mrb[0].mxu0
        %v9332 = vadd.f32 %v9011, %v9331
        %v9333 = vpop.f32.mrb[0].mxu0
        %v9334 = vpop.f32.mrb[0].mxu0
        %v9335 = vadd.f32 %v9015, %v9334
        %v9336 = vpop.f32.mrb[0].mxu0
        %9337 = vmatprep.mubr.bf16.mxu0 %v9218
        %9338 = vmatmul.mubr.bf16.gmra.mrb[0].mxu0 %v9217
        %v9339 = vpop.f32.mrb[0].mxu0
        %v9340 = vadd.f32 %v9019, %v9339
        %v9341 = vpop.f32.mrb[0].mxu0
        %v9342 = vpop.f32.mrb[0].mxu0
        %v9343 = vadd.f32 %v9023, %v9342
        %v9344 = vpop.f32.mrb[0].mxu0
        %9345 = vmatprep.mubr.bf16.mxu0 %v9220
        %9346 = vmatmul.mubr.bf16.gmra.mrb[0].mxu0 %v9219
        %v9347 = vpop.f32.mrb[0].mxu0
        %v9348 = vadd.f32 %v9027, %v9347
        %v9349 = vpop.f32.mrb[0].mxu0
        %v9350 = vpop.f32.mrb[0].mxu0
        %v9351 = vadd.f32 %v9031, %v9350
        %v9352 = vpop.f32.mrb[0].mxu0
        %9353 = vmatprep.mubr.bf16.mxu0 %v9222
        %9354 = vmatmul.mubr.bf16.gmra.mrb[0].mxu0 %v9221
        %v9355 = vpop.f32.mrb[0].mxu0
        %v9356 = vadd.f32 %v9035, %v9355
        %v9357 = vpop.f32.mrb[0].mxu0
        %v9358 = vpop.f32.mrb[0].mxu0
        %v9359 = vadd.f32 %v9039, %v9358
        %v9360 = vpop.f32.mrb[0].mxu0
        %9361 = vmatprep.mubr.bf16.mxu0 %v9224
        %9362 = vmatmul.mubr.bf16.gmra.mrb[0].mxu0 %v9223
        %v9363 = vpop.f32.mrb[0].mxu0
        %v9364 = vadd.f32 %v9043, %v9363
        %v9365 = vpop.f32.mrb[0].mxu0
        %v9366 = vpop.f32.mrb[0].mxu0
        %v9367 = vadd.f32 %v9047, %v9366
        %v9368 = vpop.f32.mrb[0].mxu0
        %9369 = vmatprep.mubr.bf16.mxu0 %v9226
        %9370 = vmatmul.mubr.bf16.gmra.mrb[0].mxu0 %v9225
        %v9371 = vpop.f32.mrb[0].mxu0
        %v9372 = vadd.f32 %v9051, %v9371
        %v9373 = vpop.f32.mrb[0].mxu0
        %v9374 = vpop.f32.mrb[0].mxu0
        %v9375 = vadd.f32 %v9055, %v9374
        %v9376 = vpop.f32.mrb[0].mxu0
        %9377 = vmatprep.mubr.bf16.mxu0 %v9228
        %9378 = vmatmul.mubr.bf16.gmra.mrb[0].mxu0 %v9227
        %v9379 = vpop.f32.mrb[0].mxu0
        %v9380 = vadd.f32 %v9059, %v9379
        %v9381 = vpop.f32.mrb[0].mxu0
        %v9382 = vpop.f32.mrb[0].mxu0
        %v9383 = vadd.f32 %v9063, %v9382
        %v9384 = vpop.f32.mrb[0].mxu0
        %9385 = vmatprep.mubr.bf16.mxu0 %v9230
        %9386 = vmatmul.mubr.bf16.gmra.mrb[0].mxu0 %v9229
        %v9387 = vpop.f32.mrb[0].mxu0
        %v9388 = vadd.f32 %v9067, %v9387
        %v9389 = vpop.f32.mrb[0].mxu0
        %v9390 = vpop.f32.mrb[0].mxu0
        %v9391 = vadd.f32 %v9071, %v9390
        %v9392 = vpop.f32.mrb[0].mxu0
        %9393 = vmatprep.mubr.bf16.mxu0 %v9232
        %9394 = vmatmul.mubr.bf16.gmra.mrb[0].mxu0 %v9231
        %v9395 = vpop.f32.mrb[0].mxu0
        %v9396 = vadd.f32 %v9075, %v9395
        %v9397 = vpop.f32.mrb[0].mxu0
        %v9398 = vpop.f32.mrb[0].mxu0
        %v9399 = vadd.f32 %v9079, %v9398
        %v9400 = vpop.f32.mrb[0].mxu0
        %9401 = vmatprep.mubr.bf16.mxu0 %v9234
        %9402 = vmatmul.mubr.bf16.gmra.mrb[0].mxu0 %v9233
        %v9403 = vpop.f32.mrb[0].mxu0
        %v9404 = vadd.f32 %v9083, %v9403
        %v9405 = vpop.f32.mrb[0].mxu0
        %v9406 = vpop.f32.mrb[0].mxu0
        %v9407 = vadd.f32 %v9087, %v9406
        %v9408 = vpop.f32.mrb[0].mxu0
        %9409 = vmatprep.mubr.bf16.mxu0 %v9236
        %9410 = vmatmul.mubr.bf16.gmra.mrb[0].mxu0 %v9235
        %v9411 = vpop.f32.mrb[0].mxu0
        %v9412 = vadd.f32 %v9091, %v9411
        %v9413 = vpop.f32.mrb[0].mxu0
        %v9414 = vpop.f32.mrb[0].mxu0
        %v9415 = vadd.f32 %v9095, %v9414
        %v9416 = vpop.f32.mrb[0].mxu0
        %9417 = vmatprep.mubr.bf16.mxu0 %v9238
        %9418 = vmatmul.mubr.bf16.gmra.mrb[0].mxu0 %v9237
        %v9419 = vpop.f32.mrb[0].mxu0
        %v9420 = vadd.f32 %v9099, %v9419
        %v9421 = vpop.f32.mrb[0].mxu0
        %v9422 = vpop.f32.mrb[0].mxu0
        %v9423 = vadd.f32 %v9103, %v9422
        %v9424 = vpop.f32.mrb[0].mxu0
        %9425 = vmatprep.mubr.bf16.mxu0 %v9240
        %9426 = vmatmul.mubr.bf16.gmra.mrb[0].mxu0 %v9239
        %v9427 = vpop.f32.mrb[0].mxu0
        %v9428 = vadd.f32 %v9107, %v9427
        %v9429 = vpop.f32.mrb[0].mxu0
        %v9430 = vpop.f32.mrb[0].mxu0
        %v9431 = vadd.f32 %v9111, %v9430
        %v9432 = vpop.f32.mrb[0].mxu0
        %9433 = vdwg.mxu0
        %v9434 = vadd.f32 %v9308, %v9311
        %v9435 = vadd.f32 %v9434, %v9316
        %v9436 = vadd.f32 %v9435, %v9319
        %v9437 = vadd.f32 %v9436, %v9324
        %v9438 = vadd.f32 %v9437, %v9327
        %v9439 = vadd.f32 %v9438, %v9332
        %v9440 = vadd.f32 %v9439, %v9335
        %v9441 = vadd.f32 %v9440, %v9340
        %v9442 = vadd.f32 %v9441, %v9343
        %v9443 = vadd.f32 %v9442, %v9348
        %v9444 = vadd.f32 %v9443, %v9351
        %v9445 = vadd.f32 %v9444, %v9356
        %v9446 = vadd.f32 %v9445, %v9359
        %v9447 = vadd.f32 %v9446, %v9364
        %v9448 = vadd.f32 %v9447, %v9367
        %v9449 = vadd.f32 %v9448, %v9372
        %v9450 = vadd.f32 %v9449, %v9375
        %v9451 = vadd.f32 %v9450, %v9380
        %v9452 = vadd.f32 %v9451, %v9383
        %v9453 = vadd.f32 %v9452, %v9388
        %v9454 = vadd.f32 %v9453, %v9391
        %v9455 = vadd.f32 %v9454, %v9396
        %v9456 = vadd.f32 %v9455, %v9399
        %v9457 = vadd.f32 %v9456, %v9404
        %v9458 = vadd.f32 %v9457, %v9407
        %v9459 = vadd.f32 %v9458, %v9412
        %v9460 = vadd.f32 %v9459, %v9415
        %v9461 = vadd.f32 %v9460, %v9420
        %v9462 = vadd.f32 %v9461, %v9423
        %v9463 = vadd.f32 %v9462, %v9428
        %v9464 = vadd.f32 %v9463, %v9431
        %v9465 = vrot.slane %v9464, 4
        %v9466 = vadd.f32 %v9464, %v9465
        %v9467 = vrot.slane %v9466, 2
        %v9468 = vadd.f32 %v9466, %v9467
        %v9469 = vrot.slane %v9468, 1
        %v9470 = vadd.f32 %v9468, %v9469
        %v9471 = vmul.f32 %v9470, %v979
        %v9472 = vmul.f32 %v9308, %v9308
        %v9473 = vmul.f32 %v9311, %v9311
        %v9474 = vmul.f32 %v9316, %v9316
        %v9475 = vmul.f32 %v9319, %v9319
        %v9476 = vmul.f32 %v9324, %v9324
        %v9477 = vmul.f32 %v9327, %v9327
        %v9478 = vmul.f32 %v9332, %v9332
        %v9479 = vmul.f32 %v9335, %v9335
        %v9480 = vmul.f32 %v9340, %v9340
        %v9481 = vmul.f32 %v9343, %v9343
        %v9482 = vmul.f32 %v9348, %v9348
        %v9483 = vmul.f32 %v9351, %v9351
        %v9484 = vmul.f32 %v9356, %v9356
        %v9485 = vmul.f32 %v9359, %v9359
        %v9486 = vmul.f32 %v9364, %v9364
        %v9487 = vmul.f32 %v9367, %v9367
        %v9488 = vmul.f32 %v9372, %v9372
        %v9489 = vmul.f32 %v9375, %v9375
        %v9490 = vmul.f32 %v9380, %v9380
        %v9491 = vmul.f32 %v9383, %v9383
        %v9492 = vmul.f32 %v9388, %v9388
        %v9493 = vmul.f32 %v9391, %v9391
        %v9494 = vmul.f32 %v9396, %v9396
        %v9495 = vmul.f32 %v9399, %v9399
        %v9496 = vmul.f32 %v9404, %v9404
        %v9497 = vmul.f32 %v9407, %v9407
        %v9498 = vmul.f32 %v9412, %v9412
        %v9499 = vmul.f32 %v9415, %v9415
        %v9500 = vmul.f32 %v9420, %v9420
        %v9501 = vmul.f32 %v9423, %v9423
        %v9502 = vmul.f32 %v9428, %v9428
        %v9503 = vmul.f32 %v9431, %v9431
        %v9504 = vadd.f32 %v9472, %v9473
        %v9505 = vadd.f32 %v9504, %v9474
        %v9506 = vadd.f32 %v9505, %v9475
        %v9507 = vadd.f32 %v9506, %v9476
        %v9508 = vadd.f32 %v9507, %v9477
        %v9509 = vadd.f32 %v9508, %v9478
        %v9510 = vadd.f32 %v9509, %v9479
        %v9511 = vadd.f32 %v9510, %v9480
        %v9512 = vadd.f32 %v9511, %v9481
        %v9513 = vadd.f32 %v9512, %v9482
        %v9514 = vadd.f32 %v9513, %v9483
        %v9515 = vadd.f32 %v9514, %v9484
        %v9516 = vadd.f32 %v9515, %v9485
        %v9517 = vadd.f32 %v9516, %v9486
        %v9518 = vadd.f32 %v9517, %v9487
        %v9519 = vadd.f32 %v9518, %v9488
        %v9520 = vadd.f32 %v9519, %v9489
        %v9521 = vadd.f32 %v9520, %v9490
        %v9522 = vadd.f32 %v9521, %v9491
        %v9523 = vadd.f32 %v9522, %v9492
        %v9524 = vadd.f32 %v9523, %v9493
        %v9525 = vadd.f32 %v9524, %v9494
        %v9526 = vadd.f32 %v9525, %v9495
        %v9527 = vadd.f32 %v9526, %v9496
        %v9528 = vadd.f32 %v9527, %v9497
        %v9529 = vadd.f32 %v9528, %v9498
        %v9530 = vadd.f32 %v9529, %v9499
        %v9531 = vadd.f32 %v9530, %v9500
        %v9532 = vadd.f32 %v9531, %v9501
        %v9533 = vadd.f32 %v9532, %v9502
        %v9534 = vadd.f32 %v9533, %v9503
        %v9535 = vrot.slane %v9534, 4
        %v9536 = vadd.f32 %v9534, %v9535
        %v9537 = vrot.slane %v9536, 2
        %v9538 = vadd.f32 %v9536, %v9537
        %v9539 = vrot.slane %v9538, 1
        %v9540 = vadd.f32 %v9538, %v9539
        %v9541 = vmul.f32 %v9540, %v979
        %v9542 = vmul.f32 %v9471, %v9471
        %v9543 = vsub.f32 %v9541, %v9542
        %v9544 = vsub.f32 %v9308, %v9471
        %v9545 = vsub.f32 %v9311, %v9471
        %v9546 = vsub.f32 %v9316, %v9471
        %v9547 = vsub.f32 %v9319, %v9471
        %v9548 = vsub.f32 %v9324, %v9471
        %v9549 = vsub.f32 %v9327, %v9471
        %v9550 = vsub.f32 %v9332, %v9471
        %v9551 = vsub.f32 %v9335, %v9471
        %v9552 = vsub.f32 %v9340, %v9471
        %v9553 = vsub.f32 %v9343, %v9471
        %v9554 = vsub.f32 %v9348, %v9471
        %v9555 = vsub.f32 %v9351, %v9471
        %v9556 = vsub.f32 %v9356, %v9471
        %v9557 = vsub.f32 %v9359, %v9471
        %v9558 = vsub.f32 %v9364, %v9471
        %v9559 = vsub.f32 %v9367, %v9471
        %v9560 = vsub.f32 %v9372, %v9471
        %v9561 = vsub.f32 %v9375, %v9471
        %v9562 = vsub.f32 %v9380, %v9471
        %v9563 = vsub.f32 %v9383, %v9471
        %v9564 = vsub.f32 %v9388, %v9471
        %v9565 = vsub.f32 %v9391, %v9471
        %v9566 = vsub.f32 %v9396, %v9471
        %v9567 = vsub.f32 %v9399, %v9471
        %v9568 = vsub.f32 %v9404, %v9471
        %v9569 = vsub.f32 %v9407, %v9471
        %v9570 = vsub.f32 %v9412, %v9471
        %v9571 = vsub.f32 %v9415, %v9471
        %v9572 = vsub.f32 %v9420, %v9471
        %v9573 = vsub.f32 %v9423, %v9471
        %v9574 = vsub.f32 %v9428, %v9471
        %v9575 = vsub.f32 %v9431, %v9471
        %v9576 = vadd.f32 %v9543, 1e-05
        %v9577 = vrsqrt.pop %v9576
        %v9578 = vmul.f32 %v9544, %v9577
        %v9579 = vmul.f32 %v9545, %v9577
        %v9580 = vmul.f32 %v9546, %v9577
        %v9581 = vmul.f32 %v9547, %v9577
        %v9582 = vmul.f32 %v9548, %v9577
        %v9583 = vmul.f32 %v9549, %v9577
        %v9584 = vmul.f32 %v9550, %v9577
        %v9585 = vmul.f32 %v9551, %v9577
        %v9586 = vmul.f32 %v9552, %v9577
        %v9587 = vmul.f32 %v9553, %v9577
        %v9588 = vmul.f32 %v9554, %v9577
        %v9589 = vmul.f32 %v9555, %v9577
        %v9590 = vmul.f32 %v9556, %v9577
        %v9591 = vmul.f32 %v9557, %v9577
        %v9592 = vmul.f32 %v9558, %v9577
        %v9593 = vmul.f32 %v9559, %v9577
        %v9594 = vmul.f32 %v9560, %v9577
        %v9595 = vmul.f32 %v9561, %v9577
        %v9596 = vmul.f32 %v9562, %v9577
        %v9597 = vmul.f32 %v9563, %v9577
        %v9598 = vmul.f32 %v9564, %v9577
        %v9599 = vmul.f32 %v9565, %v9577
        %v9600 = vmul.f32 %v9566, %v9577
        %v9601 = vmul.f32 %v9567, %v9577
        %v9602 = vmul.f32 %v9568, %v9577
        %v9603 = vmul.f32 %v9569, %v9577
        %v9604 = vmul.f32 %v9570, %v9577
        %v9605 = vmul.f32 %v9571, %v9577
        %v9606 = vmul.f32 %v9572, %v9577
        %v9607 = vmul.f32 %v9573, %v9577
        %v9608 = vmul.f32 %v9574, %v9577
        %v9609 = vmul.f32 %v9575, %v9577
        %9610 = vset.pattern.permute.xlu0 4
        %9611 = vperm.xlu0 %9610, %v7748
        %v9612 = vpop.permute.xlu0 %9611
        %9614 = vset.pattern.permute.xlu0 4
        %9615 = vperm.xlu0 %9614, %v7749
        %v9616 = vpop.permute.xlu0 %9615
        %9618 = vset.pattern.permute.xlu0 4
        %9619 = vperm.xlu0 %9618, %v7750
        %v9620 = vpop.permute.xlu0 %9619
        %9622 = vset.pattern.permute.xlu0 4
        %9623 = vperm.xlu0 %9622, %v7751
        %v9624 = vpop.permute.xlu0 %9623
        %9626 = vset.pattern.permute.xlu0 4
        %9627 = vperm.xlu0 %9626, %v7752
        %v9628 = vpop.permute.xlu0 %9627
        %9630 = vset.pattern.permute.xlu0 4
        %9631 = vperm.xlu0 %9630, %v7753
        %v9632 = vpop.permute.xlu0 %9631
        %9634 = vset.pattern.permute.xlu0 4
        %9635 = vperm.xlu0 %9634, %v7754
        %v9636 = vpop.permute.xlu0 %9635
        %9638 = vset.pattern.permute.xlu0 4
        %9639 = vperm.xlu0 %9638, %v7755
        %v9640 = vpop.permute.xlu0 %9639
        %9642 = vset.pattern.permute.xlu0 4
        %9643 = vperm.xlu0 %9642, %v7756
        %v9644 = vpop.permute.xlu0 %9643
        %9646 = vset.pattern.permute.xlu0 4
        %9647 = vperm.xlu0 %9646, %v7757
        %v9648 = vpop.permute.xlu0 %9647
        %9650 = vset.pattern.permute.xlu0 4
        %9651 = vperm.xlu0 %9650, %v7758
        %v9652 = vpop.permute.xlu0 %9651
        %9654 = vset.pattern.permute.xlu0 4
        %9655 = vperm.xlu0 %9654, %v7759
        %v9656 = vpop.permute.xlu0 %9655
        %9658 = vset.pattern.permute.xlu0 4
        %9659 = vperm.xlu0 %9658, %v7760
        %v9660 = vpop.permute.xlu0 %9659
        %9662 = vset.pattern.permute.xlu0 4
        %9663 = vperm.xlu0 %9662, %v7761
        %v9664 = vpop.permute.xlu0 %9663
        %9666 = vset.pattern.permute.xlu0 4
        %9667 = vperm.xlu0 %9666, %v7762
        %v9668 = vpop.permute.xlu0 %9667
        %9670 = vset.pattern.permute.xlu0 4
        %9671 = vperm.xlu0 %9670, %v7763
        %v9672 = vpop.permute.xlu0 %9671
        %9674 = vset.pattern.permute.xlu0 4
        %9675 = vperm.xlu0 %9674, %v7764
        %v9676 = vpop.permute.xlu0 %9675
        %9678 = vset.pattern.permute.xlu0 4
        %9679 = vperm.xlu0 %9678, %v7765
        %v9680 = vpop.permute.xlu0 %9679
        %9682 = vset.pattern.permute.xlu0 4
        %9683 = vperm.xlu0 %9682, %v7766
        %v9684 = vpop.permute.xlu0 %9683
        %9686 = vset.pattern.permute.xlu0 4
        %9687 = vperm.xlu0 %9686, %v7767
        %v9688 = vpop.permute.xlu0 %9687
        %9690 = vset.pattern.permute.xlu0 4
        %9691 = vperm.xlu0 %9690, %v7768
        %v9692 = vpop.permute.xlu0 %9691
        %9694 = vset.pattern.permute.xlu0 4
        %9695 = vperm.xlu0 %9694, %v7769
        %v9696 = vpop.permute.xlu0 %9695
        %9698 = vset.pattern.permute.xlu0 4
        %9699 = vperm.xlu0 %9698, %v7770
        %v9700 = vpop.permute.xlu0 %9699
        %9702 = vset.pattern.permute.xlu0 4
        %9703 = vperm.xlu0 %9702, %v7771
        %v9704 = vpop.permute.xlu0 %9703
        %9706 = vset.pattern.permute.xlu0 4
        %9707 = vperm.xlu0 %9706, %v7772
        %v9708 = vpop.permute.xlu0 %9707
        %9710 = vset.pattern.permute.xlu0 4
        %9711 = vperm.xlu0 %9710, %v7773
        %v9712 = vpop.permute.xlu0 %9711
        %9714 = vset.pattern.permute.xlu0 4
        %9715 = vperm.xlu0 %9714, %v7774
        %v9716 = vpop.permute.xlu0 %9715
        %9718 = vset.pattern.permute.xlu0 4
        %9719 = vperm.xlu0 %9718, %v7775
        %v9720 = vpop.permute.xlu0 %9719
        %9722 = vset.pattern.permute.xlu0 4
        %9723 = vperm.xlu0 %9722, %v7776
        %v9724 = vpop.permute.xlu0 %9723
        %9726 = vset.pattern.permute.xlu0 4
        %9727 = vperm.xlu0 %9726, %v7777
        %v9728 = vpop.permute.xlu0 %9727
        %9730 = vset.pattern.permute.xlu0 4
        %9731 = vperm.xlu0 %9730, %v7778
        %v9732 = vpop.permute.xlu0 %9731
        %9734 = vset.pattern.permute.xlu0 4
        %9735 = vperm.xlu0 %9734, %v7779
        %v9736 = vpop.permute.xlu0 %9735
        %v9738 = vmul.f32 %v9578, %v9612
        %v9739 = vmul.f32 %v9579, %v9616
        %v9740 = vmul.f32 %v9580, %v9620
        %v9741 = vmul.f32 %v9581, %v9624
        %v9742 = vmul.f32 %v9582, %v9628
        %v9743 = vmul.f32 %v9583, %v9632
        %v9744 = vmul.f32 %v9584, %v9636
        %v9745 = vmul.f32 %v9585, %v9640
        %v9746 = vmul.f32 %v9586, %v9644
        %v9747 = vmul.f32 %v9587, %v9648
        %v9748 = vmul.f32 %v9588, %v9652
        %v9749 = vmul.f32 %v9589, %v9656
        %v9750 = vmul.f32 %v9590, %v9660
        %v9751 = vmul.f32 %v9591, %v9664
        %v9752 = vmul.f32 %v9592, %v9668
        %v9753 = vmul.f32 %v9593, %v9672
        %v9754 = vmul.f32 %v9594, %v9676
        %v9755 = vmul.f32 %v9595, %v9680
        %v9756 = vmul.f32 %v9596, %v9684
        %v9757 = vmul.f32 %v9597, %v9688
        %v9758 = vmul.f32 %v9598, %v9692
        %v9759 = vmul.f32 %v9599, %v9696
        %v9760 = vmul.f32 %v9600, %v9700
        %v9761 = vmul.f32 %v9601, %v9704
        %v9762 = vmul.f32 %v9602, %v9708
        %v9763 = vmul.f32 %v9603, %v9712
        %v9764 = vmul.f32 %v9604, %v9716
        %v9765 = vmul.f32 %v9605, %v9720
        %v9766 = vmul.f32 %v9606, %v9724
        %v9767 = vmul.f32 %v9607, %v9728
        %v9768 = vmul.f32 %v9608, %v9732
        %v9769 = vmul.f32 %v9609, %v9736
        %9770 = vset.pattern.permute.xlu0 5
        %9771 = vperm.xlu0 %9770, %v7748
        %v9772 = vpop.permute.xlu0 %9771
        %9774 = vset.pattern.permute.xlu0 5
        %9775 = vperm.xlu0 %9774, %v7749
        %v9776 = vpop.permute.xlu0 %9775
        %9778 = vset.pattern.permute.xlu0 5
        %9779 = vperm.xlu0 %9778, %v7750
        %v9780 = vpop.permute.xlu0 %9779
        %9782 = vset.pattern.permute.xlu0 5
        %9783 = vperm.xlu0 %9782, %v7751
        %v9784 = vpop.permute.xlu0 %9783
        %9786 = vset.pattern.permute.xlu0 5
        %9787 = vperm.xlu0 %9786, %v7752
        %v9788 = vpop.permute.xlu0 %9787
        %9790 = vset.pattern.permute.xlu0 5
        %9791 = vperm.xlu0 %9790, %v7753
        %v9792 = vpop.permute.xlu0 %9791
        %9794 = vset.pattern.permute.xlu0 5
        %9795 = vperm.xlu0 %9794, %v7754
        %v9796 = vpop.permute.xlu0 %9795
        %9798 = vset.pattern.permute.xlu0 5
        %9799 = vperm.xlu0 %9798, %v7755
        %v9800 = vpop.permute.xlu0 %9799
        %9802 = vset.pattern.permute.xlu0 5
        %9803 = vperm.xlu0 %9802, %v7756
        %v9804 = vpop.permute.xlu0 %9803
        %9806 = vset.pattern.permute.xlu0 5
        %9807 = vperm.xlu0 %9806, %v7757
        %v9808 = vpop.permute.xlu0 %9807
        %9810 = vset.pattern.permute.xlu0 5
        %9811 = vperm.xlu0 %9810, %v7758
        %v9812 = vpop.permute.xlu0 %9811
        %9814 = vset.pattern.permute.xlu0 5
        %9815 = vperm.xlu0 %9814, %v7759
        %v9816 = vpop.permute.xlu0 %9815
        %9818 = vset.pattern.permute.xlu0 5
        %9819 = vperm.xlu0 %9818, %v7760
        %v9820 = vpop.permute.xlu0 %9819
        %9822 = vset.pattern.permute.xlu0 5
        %9823 = vperm.xlu0 %9822, %v7761
        %v9824 = vpop.permute.xlu0 %9823
        %9826 = vset.pattern.permute.xlu0 5
        %9827 = vperm.xlu0 %9826, %v7762
        %v9828 = vpop.permute.xlu0 %9827
        %9830 = vset.pattern.permute.xlu0 5
        %9831 = vperm.xlu0 %9830, %v7763
        %v9832 = vpop.permute.xlu0 %9831
        %9834 = vset.pattern.permute.xlu0 5
        %9835 = vperm.xlu0 %9834, %v7764
        %v9836 = vpop.permute.xlu0 %9835
        %9838 = vset.pattern.permute.xlu0 5
        %9839 = vperm.xlu0 %9838, %v7765
        %v9840 = vpop.permute.xlu0 %9839
        %9842 = vset.pattern.permute.xlu0 5
        %9843 = vperm.xlu0 %9842, %v7766
        %v9844 = vpop.permute.xlu0 %9843
        %9846 = vset.pattern.permute.xlu0 5
        %9847 = vperm.xlu0 %9846, %v7767
        %v9848 = vpop.permute.xlu0 %9847
        %9850 = vset.pattern.permute.xlu0 5
        %9851 = vperm.xlu0 %9850, %v7768
        %v9852 = vpop.permute.xlu0 %9851
        %9854 = vset.pattern.permute.xlu0 5
        %9855 = vperm.xlu0 %9854, %v7769
        %v9856 = vpop.permute.xlu0 %9855
        %9858 = vset.pattern.permute.xlu0 5
        %9859 = vperm.xlu0 %9858, %v7770
        %v9860 = vpop.permute.xlu0 %9859
        %9862 = vset.pattern.permute.xlu0 5
        %9863 = vperm.xlu0 %9862, %v7771
        %v9864 = vpop.permute.xlu0 %9863
        %9866 = vset.pattern.permute.xlu0 5
        %9867 = vperm.xlu0 %9866, %v7772
        %v9868 = vpop.permute.xlu0 %9867
        %9870 = vset.pattern.permute.xlu0 5
        %9871 = vperm.xlu0 %9870, %v7773
        %v9872 = vpop.permute.xlu0 %9871
        %9874 = vset.pattern.permute.xlu0 5
        %9875 = vperm.xlu0 %9874, %v7774
        %v9876 = vpop.permute.xlu0 %9875
        %9878 = vset.pattern.permute.xlu0 5
        %9879 = vperm.xlu0 %9878, %v7775
        %v9880 = vpop.permute.xlu0 %9879
        %9882 = vset.pattern.permute.xlu0 5
        %9883 = vperm.xlu0 %9882, %v7776
        %v9884 = vpop.permute.xlu0 %9883
        %9886 = vset.pattern.permute.xlu0 5
        %9887 = vperm.xlu0 %9886, %v7777
        %v9888 = vpop.permute.xlu0 %9887
        %9890 = vset.pattern.permute.xlu0 5
        %9891 = vperm.xlu0 %9890, %v7778
        %v9892 = vpop.permute.xlu0 %9891
        %9894 = vset.pattern.permute.xlu0 5
        %9895 = vperm.xlu0 %9894, %v7779
        %v9896 = vpop.permute.xlu0 %9895
        %v9898 = vadd.f32 %v9738, %v9772
        %v9899 = vadd.f32 %v9739, %v9776
        %v9900 = vadd.f32 %v9740, %v9780
        %v9901 = vadd.f32 %v9741, %v9784
        %v9902 = vadd.f32 %v9742, %v9788
        %v9903 = vadd.f32 %v9743, %v9792
        %v9904 = vadd.f32 %v9744, %v9796
        %v9905 = vadd.f32 %v9745, %v9800
        %v9906 = vadd.f32 %v9746, %v9804
        %v9907 = vadd.f32 %v9747, %v9808
        %v9908 = vadd.f32 %v9748, %v9812
        %v9909 = vadd.f32 %v9749, %v9816
        %v9910 = vadd.f32 %v9750, %v9820
        %v9911 = vadd.f32 %v9751, %v9824
        %v9912 = vadd.f32 %v9752, %v9828
        %v9913 = vadd.f32 %v9753, %v9832
        %v9914 = vadd.f32 %v9754, %v9836
        %v9915 = vadd.f32 %v9755, %v9840
        %v9916 = vadd.f32 %v9756, %v9844
        %v9917 = vadd.f32 %v9757, %v9848
        %v9918 = vadd.f32 %v9758, %v9852
        %v9919 = vadd.f32 %v9759, %v9856
        %v9920 = vadd.f32 %v9760, %v9860
        %v9921 = vadd.f32 %v9761, %v9864
        %v9922 = vadd.f32 %v9762, %v9868
        %v9923 = vadd.f32 %v9763, %v9872
        %v9924 = vadd.f32 %v9764, %v9876
        %v9925 = vadd.f32 %v9765, %v9880
        %v9926 = vadd.f32 %v9766, %v9884
        %v9927 = vadd.f32 %v9767, %v9888
        %v9928 = vadd.f32 %v9768, %v9892
        %v9929 = vadd.f32 %v9769, %v9896
        %vm9930 = vcmp.gt.f32.partialorder %v9898, 0.0
        %vm9931 = vcmp.gt.f32.partialorder %v9899, 0.0
        %vm9932 = vcmp.gt.f32.partialorder %v9900, 0.0
        %vm9933 = vcmp.gt.f32.partialorder %v9901, 0.0
        %vm9934 = vcmp.gt.f32.partialorder %v9902, 0.0
        %vm9935 = vcmp.gt.f32.partialorder %v9903, 0.0
        %vm9936 = vcmp.gt.f32.partialorder %v9904, 0.0
        %vm9937 = vcmp.gt.f32.partialorder %v9905, 0.0
        %vm9938 = vcmp.gt.f32.partialorder %v9906, 0.0
        %vm9939 = vcmp.gt.f32.partialorder %v9907, 0.0
        %vm9940 = vcmp.gt.f32.partialorder %v9908, 0.0
        %vm9941 = vcmp.gt.f32.partialorder %v9909, 0.0
        %vm9942 = vcmp.gt.f32.partialorder %v9910, 0.0
        %vm9943 = vcmp.gt.f32.partialorder %v9911, 0.0
        %vm9944 = vcmp.gt.f32.partialorder %v9912, 0.0
        %vm9945 = vcmp.gt.f32.partialorder %v9913, 0.0
        %vm9946 = vcmp.gt.f32.partialorder %v9914, 0.0
        %vm9947 = vcmp.gt.f32.partialorder %v9915, 0.0
        %vm9948 = vcmp.gt.f32.partialorder %v9916, 0.0
        %vm9949 = vcmp.gt.f32.partialorder %v9917, 0.0
        %vm9950 = vcmp.gt.f32.partialorder %v9918, 0.0
        %vm9951 = vcmp.gt.f32.partialorder %v9919, 0.0
        %vm9952 = vcmp.gt.f32.partialorder %v9920, 0.0
        %vm9953 = vcmp.gt.f32.partialorder %v9921, 0.0
        %vm9954 = vcmp.gt.f32.partialorder %v9922, 0.0
        %vm9955 = vcmp.gt.f32.partialorder %v9923, 0.0
        %vm9956 = vcmp.gt.f32.partialorder %v9924, 0.0
        %vm9957 = vcmp.gt.f32.partialorder %v9925, 0.0
        %vm9958 = vcmp.gt.f32.partialorder %v9926, 0.0
        %vm9959 = vcmp.gt.f32.partialorder %v9927, 0.0
        %vm9960 = vcmp.gt.f32.partialorder %v9928, 0.0
        %vm9961 = vcmp.gt.f32.partialorder %v9929, 0.0
        %v9962 = vmul.f32 %v9898, 0.2
        %v9963 = vmul.f32 %v9899, 0.2
        %v9964 = vmul.f32 %v9900, 0.2
        %v9965 = vmul.f32 %v9901, 0.2
        %v9966 = vmul.f32 %v9902, 0.2
        %v9967 = vmul.f32 %v9903, 0.2
        %v9968 = vmul.f32 %v9904, 0.2
        %v9969 = vmul.f32 %v9905, 0.2
        %v9970 = vmul.f32 %v9906, 0.2
        %v9971 = vmul.f32 %v9907, 0.2
        %v9972 = vmul.f32 %v9908, 0.2
        %v9973 = vmul.f32 %v9909, 0.2
        %v9974 = vmul.f32 %v9910, 0.2
        %v9975 = vmul.f32 %v9911, 0.2
        %v9976 = vmul.f32 %v9912, 0.2
        %v9977 = vmul.f32 %v9913, 0.2
        %v9978 = vmul.f32 %v9914, 0.2
        %v9979 = vmul.f32 %v9915, 0.2
        %v9980 = vmul.f32 %v9916, 0.2
        %v9981 = vmul.f32 %v9917, 0.2
        %v9982 = vmul.f32 %v9918, 0.2
        %v9983 = vmul.f32 %v9919, 0.2
        %v9984 = vmul.f32 %v9920, 0.2
        %v9985 = vmul.f32 %v9921, 0.2
        %v9986 = vmul.f32 %v9922, 0.2
        %v9987 = vmul.f32 %v9923, 0.2
        %v9988 = vmul.f32 %v9924, 0.2
        %v9989 = vmul.f32 %v9925, 0.2
        %v9990 = vmul.f32 %v9926, 0.2
        %v9991 = vmul.f32 %v9927, 0.2
        %v9992 = vmul.f32 %v9928, 0.2
        %v9993 = vmul.f32 %v9929, 0.2
        %v9994 = vsel %vm9930, %v9898, %v9962
        %v9995 = vsel %vm9931, %v9899, %v9963
        %v9996 = vsel %vm9932, %v9900, %v9964
        %v9997 = vsel %vm9933, %v9901, %v9965
        %v9998 = vsel %vm9934, %v9902, %v9966
        %v9999 = vsel %vm9935, %v9903, %v9967
        %v10000 = vsel %vm9936, %v9904, %v9968
        %v10001 = vsel %vm9937, %v9905, %v9969
        %v10002 = vsel %vm9938, %v9906, %v9970
        %v10003 = vsel %vm9939, %v9907, %v9971
        %v10004 = vsel %vm9940, %v9908, %v9972
        %v10005 = vsel %vm9941, %v9909, %v9973
        %v10006 = vsel %vm9942, %v9910, %v9974
        %v10007 = vsel %vm9943, %v9911, %v9975
        %v10008 = vsel %vm9944, %v9912, %v9976
        %v10009 = vsel %vm9945, %v9913, %v9977
        %v10010 = vsel %vm9946, %v9914, %v9978
        %v10011 = vsel %vm9947, %v9915, %v9979
        %v10012 = vsel %vm9948, %v9916, %v9980
        %v10013 = vsel %vm9949, %v9917, %v9981
        %v10014 = vsel %vm9950, %v9918, %v9982
        %v10015 = vsel %vm9951, %v9919, %v9983
        %v10016 = vsel %vm9952, %v9920, %v9984
        %v10017 = vsel %vm9953, %v9921, %v9985
        %v10018 = vsel %vm9954, %v9922, %v9986
        %v10019 = vsel %vm9955, %v9923, %v9987
        %v10020 = vsel %vm9956, %v9924, %v9988
        %v10021 = vsel %vm9957, %v9925, %v9989
        %v10022 = vsel %vm9958, %v9926, %v9990
        %v10023 = vsel %vm9959, %v9927, %v9991
        %v10024 = vsel %vm9960, %v9928, %v9992
        %v10025 = vsel %vm9961, %v9929, %v9993
        %s10026 = scalar_lea.vmem %s3, 48
        %v10027 = vld [vmem:[%s10026] sm:$0xff]
        %v10028 = vld [vmem:[%s10026 + $0x8] sm:$0xff]
        %v10029 = vpack.c.bf16 %v9995, %v9994
        %v10030 = vpack.c.bf16 %v9997, %v9996
        %v10031 = vpack.c.bf16 %v9999, %v9998
        %v10032 = vpack.c.bf16 %v10001, %v10000
        %v10033 = vpack.c.bf16 %v10003, %v10002
        %v10034 = vpack.c.bf16 %v10005, %v10004
        %v10035 = vpack.c.bf16 %v10007, %v10006
        %v10036 = vpack.c.bf16 %v10009, %v10008
        %v10037 = vpack.c.bf16 %v10011, %v10010
        %v10038 = vpack.c.bf16 %v10013, %v10012
        %v10039 = vpack.c.bf16 %v10015, %v10014
        %v10040 = vpack.c.bf16 %v10017, %v10016
        %v10041 = vpack.c.bf16 %v10019, %v10018
        %v10042 = vpack.c.bf16 %v10021, %v10020
        %v10043 = vpack.c.bf16 %v10023, %v10022
        %v10044 = vpack.c.bf16 %v10025, %v10024
        %v10047 = vunpack.c.l.b16 %v10027
        %v10048 = vunpack.c.h.b16 %v10027
        %v10049 = vunpack.c.l.b16 %v10028
        %v10050 = vunpack.c.h.b16 %v10028
        %v10051 = vpack.c.b16 %v10049, %v10047
        %v10052 = vpack.c.b16 %v10050, %v10048
        %10055 = vmatprep.subr.bf16.mxu0 0
        %10056 = vmatpush1.bf16.msra.mxu0 %v10029
        %10057 = vmatprep.subr.bf16.mxu0 0
        %10058 = vmatpush1.bf16.msra.mxu0 %v10030
        %10059 = vmatprep.subr.bf16.mxu0 0
        %10060 = vmatpush1.bf16.msra.mxu0 %v10031
        %10061 = vmatprep.subr.bf16.mxu0 0
        %10062 = vmatpush1.bf16.msra.mxu0 %v10032
        %10063 = vmatprep.subr.bf16.mxu0 0
        %10064 = vmatpush1.bf16.msra.mxu0 %v10033
        %10065 = vmatprep.subr.bf16.mxu0 0
        %10066 = vmatpush1.bf16.msra.mxu0 %v10034
        %10067 = vmatprep.subr.bf16.mxu0 0
        %10068 = vmatpush1.bf16.msra.mxu0 %v10035
        %10069 = vmatprep.subr.bf16.mxu0 0
        %10070 = vmatpush1.bf16.msra.mxu0 %v10036
        %10071 = vmatprep.subr.bf16.mxu0 0
        %10072 = vmatpush1.bf16.msra.mxu0 %v10037
        %10073 = vmatprep.subr.bf16.mxu0 0
        %10074 = vmatpush1.bf16.msra.mxu0 %v10038
        %10075 = vmatprep.subr.bf16.mxu0 0
        %10076 = vmatpush1.bf16.msra.mxu0 %v10039
        %10077 = vmatprep.subr.bf16.mxu0 0
        %10078 = vmatpush1.bf16.msra.mxu0 %v10040
        %10079 = vmatprep.subr.bf16.mxu0 0
        %10080 = vmatpush1.bf16.msra.mxu0 %v10041
        %10081 = vmatprep.subr.bf16.mxu0 0
        %10082 = vmatpush1.bf16.msra.mxu0 %v10042
        %10083 = vmatprep.subr.bf16.mxu0 0
        %10084 = vmatpush1.bf16.msra.mxu0 %v10043
        %10085 = vmatprep.subr.bf16.mxu0 0
        %10086 = vmatpush1.bf16.msra.mxu0 %v10044
        %10087 = vmatprep.mubr.bf16.mxu0 %v10052
        %10088 = vmatmul.mubr.bf16.gmra.mrb[0].mxu0 %v10051
        %v10089 = vpop.f32.mrb[0].mxu0
        %v10090 = vadd.f32 0.0, %v10089
        %v10091 = vpop.f32.mrb[0].mxu0
        %v10092 = vpop.f32.mrb[0].mxu0
        %v10093 = vadd.f32 0.0, %v10092
        %v10094 = vpop.f32.mrb[0].mxu0
        %10095 = vdwg.mxu0
        %10096 = vset.pattern.permute.xlu0 6
        %10097 = vperm.xlu0 %10096, %v7748
        %v10098 = vpop.permute.xlu0 %10097
        %v10100 = vadd.f32 %v10090, %v10098
        %v10101 = vtanh.pop %v10100
        %v10102 = vmul.f32 %v10101, 2.0
        %10103 = vset.pattern.permute.xlu0 7
        %10104 = vperm.xlu0 %10103, %v7748
        %v10105 = vpop.permute.xlu0 %10104
        %v10107 = vadd.f32 %v10093, %v10105
        %v10108 = vmul.f32 %v10102, 1.442695
        %v10109 = vpow.pop %v10108
        %v10110 = vmul.f32 %v7746, %v10109
        %v10111 = vadd.f32 %v10110, %v10107
        %v10112 = vrot.slane %v10102, 4
        %v10113 = vadd.f32 %v10102, %v10112
        %v10114 = vrot.slane %v10113, 2
        %v10115 = vadd.f32 %v10113, %v10114
        %v10116 = vrot.slane %v10115, 1
        %v10117 = vadd.f32 %v10115, %v10116
        %v10118 = vadd.f32 %v7650, %v10117
        %s10119 = scalar_lea.vmem %s4, 48
        %v10120 = vld [vmem:[%s10119] sm:$0xff]
        %v10121 = vld [vmem:[%s10119 + $0x8] sm:$0xff]
        %v10123 = vsel %vm412, %v10120, 0
        %v10126 = vsel %vm412, %v10121, 0
        %10128 = vmatprep.subr.mxu0 0.0
        %10129 = vmatpush1.msra.mxu0 %v10111
        %10130 = vmatprep.subr.mxu0 0.0
        %10131 = vmatpush1.msra.mxu0 0.0
        %10132 = vmatprep.subr.mxu0 0.0
        %10133 = vmatpush1.msra.mxu0 0.0
        %10134 = vmatprep.subr.mxu0 0.0
        %10135 = vmatpush1.msra.mxu0 0.0
        %10136 = vmatprep.subr.mxu0 0.0
        %10137 = vmatpush1.msra.mxu0 0.0
        %10138 = vmatprep.subr.mxu0 0.0
        %10139 = vmatpush1.msra.mxu0 0.0
        %10140 = vmatprep.subr.mxu0 0.0
        %10141 = vmatpush1.msra.mxu0 0.0
        %10142 = vmatprep.subr.mxu0 0.0
        %10143 = vmatpush1.msra.mxu0 0.0
        %10144 = vmatprep.subr.mxu0 0.0
        %10145 = vmatpush1.msra.mxu0 0.0
        %10146 = vmatprep.subr.mxu0 0.0
        %10147 = vmatpush1.msra.mxu0 0.0
        %10148 = vmatprep.subr.mxu0 0.0
        %10149 = vmatpush1.msra.mxu0 0.0
        %10150 = vmatprep.subr.mxu0 0.0
        %10151 = vmatpush1.msra.mxu0 0.0
        %10152 = vmatprep.subr.mxu0 0.0
        %10153 = vmatpush1.msra.mxu0 0.0
        %10154 = vmatprep.subr.mxu0 0.0
        %10155 = vmatpush1.msra.mxu0 0.0
        %10156 = vmatprep.subr.mxu0 0.0
        %10157 = vmatpush1.msra.mxu0 0.0
        %10158 = vmatprep.subr.mxu0 0.0
        %10159 = vmatpush1.msra.mxu0 0.0
        %10160 = vmatprep.subr.mxu0 0.0
        %10161 = vmatpush1.msra.mxu0 0.0
        %10162 = vmatprep.subr.mxu0 0.0
        %10163 = vmatpush1.msra.mxu0 0.0
        %10164 = vmatprep.subr.mxu0 0.0
        %10165 = vmatpush1.msra.mxu0 0.0
        %10166 = vmatprep.subr.mxu0 0.0
        %10167 = vmatpush1.msra.mxu0 0.0
        %10168 = vmatprep.subr.mxu0 0.0
        %10169 = vmatpush1.msra.mxu0 0.0
        %10170 = vmatprep.subr.mxu0 0.0
        %10171 = vmatpush1.msra.mxu0 0.0
        %10172 = vmatprep.subr.mxu0 0.0
        %10173 = vmatpush1.msra.mxu0 0.0
        %10174 = vmatprep.subr.mxu0 0.0
        %10175 = vmatpush1.msra.mxu0 0.0
        %10176 = vmatprep.subr.mxu0 0.0
        %10177 = vmatpush1.msra.mxu0 0.0
        %10178 = vmatprep.subr.mxu0 0.0
        %10179 = vmatpush1.msra.mxu0 0.0
        %10180 = vmatprep.subr.mxu0 0.0
        %10181 = vmatpush1.msra.mxu0 0.0
        %10182 = vmatprep.subr.mxu0 0.0
        %10183 = vmatpush1.msra.mxu0 0.0
        %10184 = vmatprep.subr.mxu0 0.0
        %10185 = vmatpush1.msra.mxu0 0.0
        %10186 = vmatprep.subr.mxu0 0.0
        %10187 = vmatpush1.msra.mxu0 0.0
        %10188 = vmatprep.subr.mxu0 0.0
        %10189 = vmatpush1.msra.mxu0 0.0
        %10190 = vmatprep.subr.mxu0 0.0
        %10191 = vmatpush1.msra.mxu0 0.0
        %10192 = vmatprep.mubr.f32.mxu0 0.0
        %10193 = vmatmul.mubr.f32.gmra.mrb[0].mxu0 %v10123
        %v10194 = vpop.f32.mrb[0].mxu0
        %v10195 = vadd.f32 0.0, %v10194
        %v10196 = vpop.f32.mrb[0].mxu0
        %10197 = vmatprep.mubr.f32.mxu0 0.0
        %10198 = vmatmul.mubr.f32.gmra.mrb[0].mxu0 %v10126
        %v10199 = vpop.f32.mrb[0].mxu0
        %v10200 = vadd.f32 0.0, %v10199
        %v10201 = vpop.f32.mrb[0].mxu0
        %10202 = vdwg.mxu0
        %v10203 = vadd.f32 %v8144, %v10195
        %v10204 = vadd.f32 %v8149, %v10200
        %10205 = vset.pattern.permute.xlu0 8
        %10206 = vperm.xlu0 %10205, %v7748
        %v10207 = vpop.permute.xlu0 %10206
        %10209 = vset.pattern.permute.xlu0 8
        %10210 = vperm.xlu0 %10209, %v7749
        %v10211 = vpop.permute.xlu0 %10210
        %v10213 = vadd.f32 %v10203, %v10207
        %v10214 = vadd.f32 %v10204, %v10211
        %v10215 = vld [vmem:[%s6] sm:$0xff]
        %v10216 = vld [vmem:[%s6 + $0x8] sm:$0xff]
        %vm10217 = vcmask 130048
        %v10219 = vsel %vm10217, %v10215, 0
        %v10222 = vsel %vm10217, %v10216, 0
        %10224 = vmatprep.subr.mxu0 0.0
        %10225 = vmatpush1.msra.mxu0 %v10213
        %10226 = vmatprep.subr.mxu0 0.0
        %10227 = vmatpush1.msra.mxu0 %v10214
        %10228 = vmatprep.subr.mxu0 0.0
        %10229 = vmatpush1.msra.mxu0 0.0
        %10230 = vmatprep.subr.mxu0 0.0
        %10231 = vmatpush1.msra.mxu0 0.0
        %10232 = vmatprep.subr.mxu0 0.0
        %10233 = vmatpush1.msra.mxu0 0.0
        %10234 = vmatprep.subr.mxu0 0.0
        %10235 = vmatpush1.msra.mxu0 0.0
        %10236 = vmatprep.subr.mxu0 0.0
        %10237 = vmatpush1.msra.mxu0 0.0
        %10238 = vmatprep.subr.mxu0 0.0
        %10239 = vmatpush1.msra.mxu0 0.0
        %10240 = vmatprep.subr.mxu0 0.0
        %10241 = vmatpush1.msra.mxu0 0.0
        %10242 = vmatprep.subr.mxu0 0.0
        %10243 = vmatpush1.msra.mxu0 0.0
        %10244 = vmatprep.subr.mxu0 0.0
        %10245 = vmatpush1.msra.mxu0 0.0
        %10246 = vmatprep.subr.mxu0 0.0
        %10247 = vmatpush1.msra.mxu0 0.0
        %10248 = vmatprep.subr.mxu0 0.0
        %10249 = vmatpush1.msra.mxu0 0.0
        %10250 = vmatprep.subr.mxu0 0.0
        %10251 = vmatpush1.msra.mxu0 0.0
        %10252 = vmatprep.subr.mxu0 0.0
        %10253 = vmatpush1.msra.mxu0 0.0
        %10254 = vmatprep.subr.mxu0 0.0
        %10255 = vmatpush1.msra.mxu0 0.0
        %10256 = vmatprep.subr.mxu0 0.0
        %10257 = vmatpush1.msra.mxu0 0.0
        %10258 = vmatprep.subr.mxu0 0.0
        %10259 = vmatpush1.msra.mxu0 0.0
        %10260 = vmatprep.subr.mxu0 0.0
        %10261 = vmatpush1.msra.mxu0 0.0
        %10262 = vmatprep.subr.mxu0 0.0
        %10263 = vmatpush1.msra.mxu0 0.0
        %10264 = vmatprep.subr.mxu0 0.0
        %10265 = vmatpush1.msra.mxu0 0.0
        %10266 = vmatprep.subr.mxu0 0.0
        %10267 = vmatpush1.msra.mxu0 0.0
        %10268 = vmatprep.subr.mxu0 0.0
        %10269 = vmatpush1.msra.mxu0 0.0
        %10270 = vmatprep.subr.mxu0 0.0
        %10271 = vmatpush1.msra.mxu0 0.0
        %10272 = vmatprep.subr.mxu0 0.0
        %10273 = vmatpush1.msra.mxu0 0.0
        %10274 = vmatprep.subr.mxu0 0.0
        %10275 = vmatpush1.msra.mxu0 0.0
        %10276 = vmatprep.subr.mxu0 0.0
        %10277 = vmatpush1.msra.mxu0 0.0
        %10278 = vmatprep.subr.mxu0 0.0
        %10279 = vmatpush1.msra.mxu0 0.0
        %10280 = vmatprep.subr.mxu0 0.0
        %10281 = vmatpush1.msra.mxu0 0.0
        %10282 = vmatprep.subr.mxu0 0.0
        %10283 = vmatpush1.msra.mxu0 0.0
        %10284 = vmatprep.subr.mxu0 0.0
        %10285 = vmatpush1.msra.mxu0 0.0
        %10286 = vmatprep.subr.mxu0 0.0
        %10287 = vmatpush1.msra.mxu0 0.0
        %10288 = vmatprep.mubr.f32.mxu0 0.0
        %10289 = vmatmul.mubr.f32.gmra.mrb[0].mxu0 %v10219
        %v10290 = vpop.f32.mrb[0].mxu0
        %v10291 = vadd.f32 0.0, %v10290
        %v10292 = vpop.f32.mrb[0].mxu0
        %10293 = vmatprep.mubr.f32.mxu0 0.0
        %10294 = vmatmul.mubr.f32.gmra.mrb[0].mxu0 %v10222
        %v10295 = vpop.f32.mrb[0].mxu0
        %v10296 = vadd.f32 0.0, %v10295
        %v10297 = vpop.f32.mrb[0].mxu0
        %10298 = vdwg.mxu0
        %v10299 = vmul.f32 %v10291, %v10213
        %v10300 = vmul.f32 %v10296, %v10214
        %v10301 = vadd.f32 %v10299, %v10300
        %v10302 = vrot.slane %v10301, 4
        %v10303 = vadd.f32 %v10301, %v10302
        %v10304 = vrot.slane %v10303, 2
        %v10305 = vadd.f32 %v10303, %v10304
        %v10306 = vrot.slane %v10305, 1
        %v10307 = vadd.f32 %v10305, %v10306
        %s10308 = sld [smem:[#allocation2]]
        %v10309 = vstv %s10308
        %v10310 = vadd.f32 %v10309, %v10118
        %v10311 = vmul.f32 %v10307, 0.5
        %v10312 = vsub.f32 %v10310, %v10311
        %10313 = vst [vmem:[%s342] sm:$0xff] %v10312
        %s10314 = sand.u32 %s204, 1
        %s10315 = scalar_lea.sflag [#allocation5], %s10314
        %s10316 = sand.u32 %s204, 1
        %s10317 = smul.addr %s10316, 8
        %s10318 = scalar_lea.vmem [#allocation4], %s10317
        // Predicated region
        $region91: #{tpu_custom_call.1} parent=85 // pred_check
          %p10319 = pneg %p214
        $region92: #{tpu_custom_call.1} parent=85 // pred_check_branch
          %10321 = sbr.rel (%p10319) target = $region94
        $region93: #{tpu_custom_call.1} parent=85 // pred_region
          %s10323 = ssub.s32 128, 128
          %10324 = vsyncadd %s10315, %s10323
          %s10325 = smul.addr %s23, 128
          %s10326 = scalar_lea.hbm %s8, %s10325
          %s10328 = sshll.u32 %s10318, 4
          %s10329 = int_to_ptr.vmem [resolvable:$true] %s10328
          %10331 = dma.vmem_to_hbm [thread:$0]  %s10329, 128, %s10326, %s10315
        $region94: #{tpu_custom_call.1} parent=85 // pred_fallthru
          _
      $region86: #{tpu_custom_call.1} parent=5 // pred_fallthru
        _
      %p10332 = scmp.le.s32.totalorder 2, %s18
      // Predicated region
      $region95: #{tpu_custom_call.1} parent=5 // pred_check
        %p10333 = pneg %p10332
      $region96: #{tpu_custom_call.1} parent=5 // pred_check_branch
        %10335 = sbr.rel (%p10333) target = $region98
      $region97: #{tpu_custom_call.1} parent=5 // pred_region
        %s10336 = ssub.s32 %s18, 2
        // Predicated region
        $region99: #{tpu_custom_call.1} parent=97 // pred_check
          %p10337 = pneg %p220
        $region100: #{tpu_custom_call.1} parent=97 // pred_check_branch
          %10339 = sbr.rel (%p10337) target = $region102
        $region101: #{tpu_custom_call.1} parent=97 // pred_region
          %s10340 = sand.u32 %s205, 1
          %s10341 = scalar_lea.sflag [#allocation5], %s10340
          %s10342 = sand.u32 %s205, 1
          %s10343 = smul.addr %s10342, 8
          %s10344 = scalar_lea.vmem [#allocation4], %s10343
          %10345 = dma.done %s10341, 128
        $region102: #{tpu_custom_call.1} parent=97 // pred_fallthru
          _
      $region98: #{tpu_custom_call.1} parent=5 // pred_fallthru
        _
    $region6: #{tpu_custom_call.1} parent=1 // loop_footer
      %s22 = sadd.s32 1, %s18
    $region7: #{tpu_custom_call.1} parent=1 // loop_footer_branch
      %17 = sbr.rel target = $region3
    $region8: #{tpu_custom_call.1} parent=1 // loop_exit
      _
    %10346 = vsyncpa [#allocation5], 1
    %s10347 = scalar_lea.sflag [#allocation5], 1
    %10348 = vsyncpa %s10347, 1

</llo_original>
